<compile_context>
chip_gen: v5e
topology: v5e:2x2
jax: 0.10.0
libtpu: 0.0.40
codegen_flags: <defaults>
</compile_context>

<pallas_src>
import functools
import math

import jax
import jax.numpy as jnp
from jax.experimental import pallas as pl
from jax.experimental.pallas import tpu as pltpu


# ---------------------------- fused matmul kernel ----------------------------

def _mm_kernel(*refs, act, has_res):
    """out = act(a @ b + bias [+ residual]); bf16 operands, f32 accumulation."""
    if has_res:
        a_ref, b_ref, bias_ref, res_ref, o_ref = refs
    else:
        a_ref, b_ref, bias_ref, o_ref = refs
        res_ref = None
    r = jnp.dot(a_ref[...], b_ref[...], preferred_element_type=jnp.float32)
    r = r + bias_ref[...]                       # bias is f32 (1, N)
    if has_res:
        r = r + res_ref[...].astype(jnp.float32)
    if act == "relu":
        r = jnp.maximum(r, 0.0)
    elif act == "sigmoid":
        r = jax.nn.sigmoid(r)
    o_ref[...] = r.astype(o_ref.dtype)


def pl_matmul(a, b, bias2d, act="none", residual=None,
              out_dtype=jnp.bfloat16, block_m=256):
    """act(a @ b + bias [+ residual]) with a single-K-block Pallas kernel.

    a: (M, K) bf16, b: (K, N) bf16 (pre-packed), bias2d: (1, N) f32,
    residual: optional (M, N) bf16 added before the activation.
    """
    M, K = a.shape
    Kb, N = b.shape
    assert K == Kb
    # Full-extent K and N (no host padding); tile M only when it is big enough.
    tm = block_m if (M > block_m and M % block_m == 0) else M
    grid = (M // tm,)

    in_specs = [
        pl.BlockSpec((tm, K), lambda i: (i, 0)),
        pl.BlockSpec((K, N), lambda i: (0, 0)),
        pl.BlockSpec((1, N), lambda i: (0, 0)),
    ]
    args = [a, b, bias2d]
    has_res = residual is not None
    if has_res:
        in_specs.append(pl.BlockSpec((tm, N), lambda i: (i, 0)))
        args.append(residual)

    return pl.pallas_call(
        functools.partial(_mm_kernel, act=act, has_res=has_res),
        out_shape=jax.ShapeDtypeStruct((M, N), out_dtype),
        grid_spec=pltpu.PrefetchScalarGridSpec(
            num_scalar_prefetch=0,
            grid=grid,
            in_specs=in_specs,
            out_specs=pl.BlockSpec((tm, N), lambda i: (i, 0)),
        ),
        compiler_params=pltpu.CompilerParams(
            dimension_semantics=("parallel",)),
    )(*args)


# ---------------------------- fused transformer-layer kernel ----------------------------

def _ln(v, g, b, eps):
    mu = jnp.mean(v, axis=-1, keepdims=True)
    var = jnp.mean((v - mu) ** 2, axis=-1, keepdims=True)
    return (v - mu) * jax.lax.rsqrt(var + eps) * g + b


def _tf_layer_kernel(x_ref, wqkv_ref, bqkv_ref, wout_ref, bout_ref,
                     g1_ref, be1_ref, w1_ref, bb1_ref, w2_ref, bb2_ref,
                     g2_ref, be2_ref, o_ref, *, batch, seq, nheads, eps):
    """Whole post-norm TransformerEncoderLayer (eval mode) in one kernel.

    All math in f32.  Position-wise matmuls / LayerNorms operate on the full
    (batch*seq, E) slab; only the softmax attention is per (batch, head),
    statically unrolled (no in-kernel dynamic reshapes / transposes needed).
    """
    E = wout_ref.shape[0]
    Dh = E // nheads
    scale = 1.0 / math.sqrt(Dh)

    x = x_ref[...].astype(jnp.float32)                 # (batch*seq, E)
    wqkv = wqkv_ref[...].astype(jnp.float32)           # (E, 3E)
    wout = wout_ref[...].astype(jnp.float32)           # (E, E)
    w1 = w1_ref[...].astype(jnp.float32)               # (E, 4E)
    w2 = w2_ref[...].astype(jnp.float32)               # (4E, E)

    # QKV projection for every token at once.
    qkv = jnp.dot(x, wqkv, preferred_element_type=jnp.float32) + bqkv_ref[...]

    # Attention.  The concat-of-heads is folded into the output projection:
    # attn += o_h @ W_out[h*Dh:(h+1)*Dh, :].
    attn = jnp.zeros_like(x)
    for h in range(nheads):
        qo, ko, vo = h * Dh, E + h * Dh, 2 * E + h * Dh
        oh_rows = []
        for b in range(batch):
            rows = slice(b * seq, (b + 1) * seq)
            qh = qkv[rows, qo:qo + Dh]
            kh = qkv[rows, ko:ko + Dh]
            vh = qkv[rows, vo:vo + Dh]
            s = jax.lax.dot_general(qh, kh, (((1,), (1,)), ((), ())),
                                    preferred_element_type=jnp.float32) * scale
            p = jnp.exp(s - jnp.max(s, axis=-1, keepdims=True))
            p = p / jnp.sum(p, axis=-1, keepdims=True)
            oh_rows.append(jnp.dot(p, vh, preferred_element_type=jnp.float32))
        oh_full = jnp.concatenate(oh_rows, axis=0) if batch > 1 else oh_rows[0]
        attn = attn + jnp.dot(oh_full, wout[h * Dh:(h + 1) * Dh, :],
                              preferred_element_type=jnp.float32)

    y = _ln(x + attn + bout_ref[...], g1_ref[...], be1_ref[...], eps)
    hid = jnp.maximum(
        jnp.dot(y, w1, preferred_element_type=jnp.float32) + bb1_ref[...], 0.0)
    y = _ln(y + jnp.dot(hid, w2, preferred_element_type=jnp.float32) + bb2_ref[...],
            g2_ref[...], be2_ref[...], eps)
    o_ref[...] = y.astype(o_ref.dtype)


def pl_transformer_layer(x2, lp, *, batch, seq, heads):
    E = x2.shape[-1]
    return pl.pallas_call(
        functools.partial(_tf_layer_kernel, batch=batch, seq=seq,
                          nheads=heads, eps=1e-5),
        out_shape=jax.ShapeDtypeStruct((batch * seq, E), jnp.bfloat16),
    )(x2, lp["wqkv"], lp["bqkv"], lp["wout"], lp["bout"],
      lp["g1"], lp["be1"], lp["w1"], lp["bb1"], lp["w2"], lp["bb2"],
      lp["g2"], lp["be2"])


# ---------------------------- conv glue (NHWC im2col -> Pallas matmul) ----------------------------
# TODO(synk): the im2col patch gather / sub-pixel interleave stay as cheap XLA
# glue (lane-contiguous concats, no transposes); a direct Pallas conv with a
# (kh,kw) reduction grid axis would remove even this materialization.

def im2col_nhwc(x, K, stride, pad):
    B, H, W, C = x.shape
    xp = jnp.pad(x, ((0, 0), (pad, pad), (pad, pad), (0, 0)))
    OH = (H + 2 * pad - K) // stride + 1
    OW = (W + 2 * pad - K) // stride + 1
    cols = [xp[:, kh:kh + stride * OH:stride, kw:kw + stride * OW:stride, :]
            for kh in range(K) for kw in range(K)]
    cols = jnp.concatenate(cols, axis=-1)          # (B, OH, OW, K*K*C)
    return cols.reshape(B * OH * OW, K * K * C), OH, OW


def conv2d(x, w_mat, bias2d, K, stride, pad, act="none", residual=None,
           out_dtype=jnp.bfloat16):
    """x: (B,H,W,C) bf16; w_mat: (K*K*C, O) bf16 pre-packed; bias2d: (1,O) f32."""
    B = x.shape[0]
    A, OH, OW = im2col_nhwc(x, K, stride, pad)
    O = w_mat.shape[1]
    res2d = None if residual is None else residual.reshape(B * OH * OW, O)
    out = pl_matmul(A, w_mat, bias2d, act=act, residual=res2d,
                    out_dtype=out_dtype)
    return out.reshape(B, OH, OW, O)


def conv_transpose2d(x, w_comb, bias_comb, act="none"):
    """ConvTranspose2d(k=4, s=2, p=1) as ONE 3x3 conv with packed sub-pixel weights.

    w_comb: (9*C_in, 4*C_out) bf16 — the 4 output parity classes (a, b) are
    stacked along N; the result is interleaved back to (B, 2H, 2W, C_out).
    """
    B, H, W, C = x.shape
    A, _, _ = im2col_nhwc(x, 3, 1, 1)
    out = pl_matmul(A, w_comb, bias_comb, act=act)        # (B*H*W, 4*O)
    O = w_comb.shape[1] // 4
    out = out.reshape(B, H, W, 2, 2, O)
    out = out.transpose(0, 1, 3, 2, 4, 5).reshape(B, 2 * H, 2 * W, O)
    return out


def residual_block(x, p):
    # relu(x + (conv->BN->relu->conv->BN)(x)); BN folded, skip+relu fused in epilogue.
    y = conv2d(x, p["w1"], p["b1"], 3, 1, 1, act="relu")
    return conv2d(y, p["w2"], p["b2"], 3, 1, 1, act="relu", residual=x)


# ---------------------------- forward pass ----------------------------

def depth_star_forward(x, p, *, heads):
    B = x.shape[0]
    h = jnp.transpose(x, (0, 2, 3, 1)).astype(jnp.bfloat16)     # NCHW -> NHWC
    # encoder
    h = conv2d(h, p["enc1"]["w"], p["enc1"]["b"], 3, 1, 1, act="relu")
    h = conv2d(h, p["enc2"]["w"], p["enc2"]["b"], 3, 2, 1, act="relu")
    h = residual_block(h, p["res1"])
    h = conv2d(h, p["enc3"]["w"], p["enc3"]["b"], 3, 2, 1, act="relu")
    h = residual_block(h, p["res2"])
    # transformer bottleneck: NHWC reshape == feat.flatten(2).transpose(1, 2)
    _, Hf, Wf, E = h.shape
    S = Hf * Wf
    t = h.reshape(B * S, E)
    for lp in p["tf"]:
        t = pl_transformer_layer(t, lp, batch=B, seq=S, heads=heads)
    h = t.reshape(B, Hf, Wf, E)
    # decoder
    h = conv_transpose2d(h, p["dec1"]["w"], p["dec1"]["b"], act="relu")
    h = residual_block(h, p["res3"])
    h = conv_transpose2d(h, p["dec2"]["w"], p["dec2"]["b"], act="relu")
    h = conv2d(h, p["dec3"]["w"], p["dec3"]["b"], 3, 1, 1, act="sigmoid",
               out_dtype=jnp.float32)
    return jnp.transpose(h, (0, 3, 1, 2))                        # NHWC -> NCHW


# ---------------------------- one-time param preparation ----------------------------

def _fold_bn(w, b, bn, eps=1e-5):
    scale = bn["g"] / jnp.sqrt(bn["v"] + eps)
    return w * scale[:, None, None, None], (b - bn["m"]) * scale + bn["be"]


def _conv_mat(w, b):
    # (O, C, K, K) torch layout -> (K*K*C, O) matching im2col column order (kh, kw, c).
    O, C, K, _ = w.shape
    wm = jnp.transpose(w, (2, 3, 1, 0)).reshape(K * K * C, O).astype(jnp.bfloat16)
    return {"w": wm, "b": b.reshape(1, O).astype(jnp.float32)}


def _deconv_mat(w_t, b):
    # ConvTranspose2d(k=4, s=2, p=1) weight (C_in, C_out, 4, 4) -> combined
    # sub-pixel weight (9*C_in, 4*C_out) for a single 3x3/pad-1 conv whose N
    # axis enumerates the 4 output parity classes (a, b).
    C_in, C_out = w_t.shape[0], w_t.shape[1]
    wf = jnp.flip(w_t, (2, 3)).transpose(2, 3, 0, 1)    # (kh, kw, c_in, c_out), flipped
    sel = {0: ((0, 0), (1, 2)),      # parity 0: im2col offset dh=0 <- wf[0], dh=1 <- wf[2]
           1: ((1, 1), (2, 3))}      # parity 1: dh=1 <- wf[1], dh=2 <- wf[3]
    Wc = jnp.zeros((3, 3, C_in, 2, 2, C_out), jnp.float32)
    for a in (0, 1):
        for bb in (0, 1):
            for dh, kh in sel[a]:
                for dw, kw in sel[bb]:
                    Wc = Wc.at[dh, dw, :, a, bb, :].set(wf[kh, kw])
    Wc = Wc.reshape(9 * C_in, 4 * C_out).astype(jnp.bfloat16)
    bc = jnp.tile(b, 4).reshape(1, 4 * C_out).astype(jnp.float32)
    return {"w": Wc, "b": bc}


def _res_prep(rp):
    w1, b1 = _fold_bn(rp["c1"]["w"], rp["c1"]["b"], rp["bn1"])
    w2, b2 = _fold_bn(rp["c2"]["w"], rp["c2"]["b"], rp["bn2"])
    m1, m2 = _conv_mat(w1, b1), _conv_mat(w2, b2)
    return {"w1": m1["w"], "b1": m1["b"], "w2": m2["w"], "b2": m2["b"]}


def _tf_prep(lp):
    f32, bf16 = jnp.float32, jnp.bfloat16
    return {
        "wqkv": lp["in_w"].T.astype(bf16), "bqkv": lp["in_b"].reshape(1, -1).astype(f32),
        "wout": lp["out_w"].T.astype(bf16), "bout": lp["out_b"].reshape(1, -1).astype(f32),
        "g1": lp["ln1_g"].reshape(1, -1).astype(f32), "be1": lp["ln1_b"].reshape(1, -1).astype(f32),
        "w1": lp["lin1_w"].T.astype(bf16), "bb1": lp["lin1_b"].reshape(1, -1).astype(f32),
        "w2": lp["lin2_w"].T.astype(bf16), "bb2": lp["lin2_b"].reshape(1, -1).astype(f32),
        "g2": lp["ln2_g"].reshape(1, -1).astype(f32), "be2": lp["ln2_b"].reshape(1, -1).astype(f32),
    }


def prepare_params(raw):
    """One-time: fold BN (eval), re-layout weights for the kernels, cast to bf16."""
    return {
        "enc1": _conv_mat(raw["enc1"]["w"], raw["enc1"]["b"]),
        "enc2": _conv_mat(raw["enc2"]["w"], raw["enc2"]["b"]),
        "enc3": _conv_mat(raw["enc3"]["w"], raw["enc3"]["b"]),
        "dec3": _conv_mat(raw["dec3"]["w"], raw["dec3"]["b"]),
        "res1": _res_prep(raw["res1"]),
        "res2": _res_prep(raw["res2"]),
        "res3": _res_prep(raw["res3"]),
        "dec1": _deconv_mat(raw["dec1"]["w"], raw["dec1"]["b"]),
        "dec2": _deconv_mat(raw["dec2"]["w"], raw["dec2"]["b"]),
        "tf": [_tf_prep(lp) for lp in raw["tf"]],
    }


# ---------------------------- deterministic raw (PyTorch-layout) params ----------------------------

def init_params(key, embed_dim, heads, layers):
    keys = iter(jax.random.split(key, 512))

    def nrm(shape, s=0.05):
        return (s * jax.random.normal(next(keys), shape)).astype(jnp.float32)

    def conv_p(o, c, k):
        return {"w": nrm((o, c, k, k)), "b": nrm((o,), 0.01)}

    def bn_p(c):
        return {"g": 1.0 + nrm((c,), 0.1), "be": nrm((c,), 0.01),
                "m": nrm((c,), 0.01), "v": 1.0 + jnp.abs(nrm((c,), 0.05))}

    def res_p(c):
        return {"c1": conv_p(c, c, 3), "bn1": bn_p(c),
                "c2": conv_p(c, c, 3), "bn2": bn_p(c)}

    def tf_layer_p(E):
        return {"in_w": nrm((3 * E, E)), "in_b": nrm((3 * E,), 0.01),
                "out_w": nrm((E, E)), "out_b": nrm((E,), 0.01),
                "ln1_g": 1.0 + nrm((E,), 0.1), "ln1_b": nrm((E,), 0.01),
                "lin1_w": nrm((4 * E, E)), "lin1_b": nrm((4 * E,), 0.01),
                "lin2_w": nrm((E, 4 * E)), "lin2_b": nrm((E,), 0.01),
                "ln2_g": 1.0 + nrm((E,), 0.1), "ln2_b": nrm((E,), 0.01)}

    E = embed_dim
    return {
        "enc1": conv_p(64, 3, 3),
        "enc2": conv_p(128, 64, 3),
        "res1": res_p(128),
        "enc3": conv_p(E, 128, 3),
        "res2": res_p(E),
        "tf": [tf_layer_p(E) for _ in range(layers)],
        "dec1": {"w": nrm((E, 128, 4, 4)), "b": nrm((128,), 0.01)},   # ConvTranspose2d
        "res3": res_p(128),
        "dec2": {"w": nrm((128, 64, 4, 4)), "b": nrm((64,), 0.01)},   # ConvTranspose2d
        "dec3": conv_p(1, 64, 3),
    }


# ---------------------------- main ----------------------------

if __name__ == "__main__":
    # DepthSTAR(use_residual_blocks=True, use_transformer=True,
    #           transformer_layers=2, transformer_heads=4, embed_dim=32)
    EMBED, HEADS, LAYERS = 32, 4, 2
    key = jax.random.PRNGKey(0)
    kx, kp = jax.random.split(key)
    x = jax.random.normal(kx, (2, 3, 16, 16), jnp.float32)        # NCHW input
    raw = init_params(kp, EMBED, HEADS, LAYERS)
    params = prepare_params(raw)                                   # one-time prep

    fwd = jax.jit(functools.partial(depth_star_forward, heads=HEADS))
    out = fwd(x, params)
    jax.block_until_ready(out)
    assert out.shape == (2, 1, 16, 16), out.shape
    assert bool(jnp.all(jnp.isfinite(out)))
    print("KERNEL_OK")
</pallas_src>

<mosaic_0001>
module attributes {stable_mosaic.version = 11 : i64} {
  func.func @_mm_kernel(%arg0: i32, %arg1: memref<256x27xbf16, #tpu.memory_space<vmem>>, %arg2: memref<27x64xbf16, #tpu.memory_space<vmem>>, %arg3: memref<1x64xf32, #tpu.memory_space<vmem>>, %arg4: memref<256x64xbf16, #tpu.memory_space<vmem>>) attributes {dimension_semantics = [#tpu.dimension_semantics<parallel>], iteration_bounds = array<i64: 2>, scalar_prefetch = 0 : i64, scratch_operands = 0 : i64, tpu.core_type = #tpu.core_type<tc>, window_params = [{transform_indices = @transform_0, window_bounds = array<i64: 256, 27>}, {pipeline_mode = #tpu.pipeline_mode<synchronous>, transform_indices = @transform_1, window_bounds = array<i64: 27, 64>}, {pipeline_mode = #tpu.pipeline_mode<synchronous>, transform_indices = @transform_2, window_bounds = array<i64: 1, 64>}, {transform_indices = @transform_3, window_bounds = array<i64: 256, 64>}]} {
    %c0 = arith.constant 0 : index
    %c0_0 = arith.constant 0 : index
    %0 = vector.load %arg1[%c0, %c0_0] : memref<256x27xbf16, #tpu.memory_space<vmem>>, vector<256x27xbf16>
    %c0_1 = arith.constant 0 : index
    %c0_2 = arith.constant 0 : index
    %1 = vector.load %arg2[%c0_1, %c0_2] : memref<27x64xbf16, #tpu.memory_space<vmem>>, vector<27x64xbf16>
    %cst = arith.constant dense<0.000000e+00> : vector<256x64xf32>
    %2 = tpu.matmul %0, %1, %cst {dimension_numbers = #tpu.dot_dimension_numbers<[1], [0], [0], [1], [0, 0, 1, 1], [], []>} : vector<256x27xbf16>, vector<27x64xbf16>, vector<256x64xf32> -> vector<256x64xf32>
    %c0_3 = arith.constant 0 : index
    %c0_4 = arith.constant 0 : index
    %3 = vector.load %arg3[%c0_3, %c0_4] : memref<1x64xf32, #tpu.memory_space<vmem>>, vector<1x64xf32>
    %4 = vector.broadcast %3 : vector<1x64xf32> to vector<256x64xf32>
    %5 = arith.addf %2, %4 : vector<256x64xf32>
    %cst_5 = arith.constant 0.000000e+00 : f32
    %6 = vector.broadcast %cst_5 : f32 to vector<256x64xf32>
    %7 = arith.maximumf %5, %6 : vector<256x64xf32>
    %8 = arith.truncf %7 : vector<256x64xf32> to vector<256x64xbf16>
    %c0_6 = arith.constant 0 : index
    %c0_7 = arith.constant 0 : index
    %9 = vector.load %arg4[%c0_6, %c0_7] : memref<256x64xbf16, #tpu.memory_space<vmem>>, vector<256x64xbf16>
    tpu.vector_store %arg4[%c0_6, %c0_7], %8 {strides = array<i32>} : memref<256x64xbf16, #tpu.memory_space<vmem>>, vector<256x64xbf16>,
    return
  }
  func.func @transform_0(%arg0: i32) -> (i32, i32) {
    %c0_i32 = arith.constant 0 : i32
    %c0_i32_0 = arith.constant 0 : i32
    return %arg0, %c0_i32 : i32, i32
  }
  func.func @transform_1(%arg0: i32) -> (i32, i32) {
    %c0_i32 = arith.constant 0 : i32
    %c0_i32_0 = arith.constant 0 : i32
    %c0_i32_1 = arith.constant 0 : i32
    return %c0_i32, %c0_i32_0 : i32, i32
  }
  func.func @transform_2(%arg0: i32) -> (i32, i32) {
    %c0_i32 = arith.constant 0 : i32
    %c0_i32_0 = arith.constant 0 : i32
    %c0_i32_1 = arith.constant 0 : i32
    return %c0_i32, %c0_i32_0 : i32, i32
  }
  func.func @transform_3(%arg0: i32) -> (i32, i32) {
    %c0_i32 = arith.constant 0 : i32
    %c0_i32_0 = arith.constant 0 : i32
    return %arg0, %c0_i32 : i32, i32
  }
}

module attributes {stable_mosaic.version = 11 : i64} {
  func.func @_mm_kernel(%arg0: i32, %arg1: memref<128x576xbf16, #tpu.memory_space<vmem>>, %arg2: memref<576x128xbf16, #tpu.memory_space<vmem>>, %arg3: memref<1x128xf32, #tpu.memory_space<vmem>>, %arg4: memref<128x128xbf16, #tpu.memory_space<vmem>>) attributes {dimension_semantics = [#tpu.dimension_semantics<parallel>], iteration_bounds = array<i64: 1>, scalar_prefetch = 0 : i64, scratch_operands = 0 : i64, tpu.core_type = #tpu.core_type<tc>, window_params = [{transform_indices = @transform_0, window_bounds = array<i64: 128, 576>}, {pipeline_mode = #tpu.pipeline_mode<synchronous>, transform_indices = @transform_1, window_bounds = array<i64: 576, 128>}, {pipeline_mode = #tpu.pipeline_mode<synchronous>, transform_indices = @transform_2, window_bounds = array<i64: 1, 128>}, {transform_indices = @transform_3, window_bounds = array<i64: 128, 128>}]} {
    %c0 = arith.constant 0 : index
    %c0_0 = arith.constant 0 : index
    %0 = vector.load %arg1[%c0, %c0_0] : memref<128x576xbf16, #tpu.memory_space<vmem>>, vector<128x576xbf16>
    %c0_1 = arith.constant 0 : index
    %c0_2 = arith.constant 0 : index
    %1 = vector.load %arg2[%c0_1, %c0_2] : memref<576x128xbf16, #tpu.memory_space<vmem>>, vector<576x128xbf16>
    %cst = arith.constant dense<0.000000e+00> : vector<128x128xf32>
    %2 = tpu.matmul %0, %1, %cst {dimension_numbers = #tpu.dot_dimension_numbers<[1], [0], [0], [1], [0, 0, 1, 1], [], []>} : vector<128x576xbf16>, vector<576x128xbf16>, vector<128x128xf32> -> vector<128x128xf32>
    %c0_3 = arith.constant 0 : index
    %c0_4 = arith.constant 0 : index
    %3 = vector.load %arg3[%c0_3, %c0_4] : memref<1x128xf32, #tpu.memory_space<vmem>>, vector<1x128xf32>
    %4 = vector.broadcast %3 : vector<1x128xf32> to vector<128x128xf32>
    %5 = arith.addf %2, %4 : vector<128x128xf32>
    %cst_5 = arith.constant 0.000000e+00 : f32
    %6 = vector.broadcast %cst_5 : f32 to vector<128x128xf32>
    %7 = arith.maximumf %5, %6 : vector<128x128xf32>
    %8 = arith.truncf %7 : vector<128x128xf32> to vector<128x128xbf16>
    %c0_6 = arith.constant 0 : index
    %c0_7 = arith.constant 0 : index
    %9 = vector.load %arg4[%c0_6, %c0_7] : memref<128x128xbf16, #tpu.memory_space<vmem>>, vector<128x128xbf16>
    tpu.vector_store %arg4[%c0_6, %c0_7], %8 {strides = array<i32>} : memref<128x128xbf16, #tpu.memory_space<vmem>>, vector<128x128xbf16>,
    return
  }
  func.func @transform_0(%arg0: i32) -> (i32, i32) {
    %c0_i32 = arith.constant 0 : i32
    %c0_i32_0 = arith.constant 0 : i32
    return %arg0, %c0_i32 : i32, i32
  }
  func.func @transform_1(%arg0: i32) -> (i32, i32) {
    %c0_i32 = arith.constant 0 : i32
    %c0_i32_0 = arith.constant 0 : i32
    %c0_i32_1 = arith.constant 0 : i32
    return %c0_i32, %c0_i32_0 : i32, i32
  }
  func.func @transform_2(%arg0: i32) -> (i32, i32) {
    %c0_i32 = arith.constant 0 : i32
    %c0_i32_0 = arith.constant 0 : i32
    %c0_i32_1 = arith.constant 0 : i32
    return %c0_i32, %c0_i32_0 : i32, i32
  }
  func.func @transform_3(%arg0: i32) -> (i32, i32) {
    %c0_i32 = arith.constant 0 : i32
    %c0_i32_0 = arith.constant 0 : i32
    return %arg0, %c0_i32 : i32, i32
  }
}

module attributes {stable_mosaic.version = 11 : i64} {
  func.func @_mm_kernel(%arg0: i32, %arg1: memref<128x1152xbf16, #tpu.memory_space<vmem>>, %arg2: memref<1152x128xbf16, #tpu.memory_space<vmem>>, %arg3: memref<1x128xf32, #tpu.memory_space<vmem>>, %arg4: memref<128x128xbf16, #tpu.memory_space<vmem>>, %arg5: memref<128x128xbf16, #tpu.memory_space<vmem>>) attributes {dimension_semantics = [#tpu.dimension_semantics<parallel>], iteration_bounds = array<i64: 1>, scalar_prefetch = 0 : i64, scratch_operands = 0 : i64, tpu.core_type = #tpu.core_type<tc>, window_params = [{transform_indices = @transform_0, window_bounds = array<i64: 128, 1152>}, {pipeline_mode = #tpu.pipeline_mode<synchronous>, transform_indices = @transform_1, window_bounds = array<i64: 1152, 128>}, {pipeline_mode = #tpu.pipeline_mode<synchronous>, transform_indices = @transform_2, window_bounds = array<i64: 1, 128>}, {transform_indices = @transform_3, window_bounds = array<i64: 128, 128>}, {transform_indices = @transform_4, window_bounds = array<i64: 128, 128>}]} {
    %c0 = arith.constant 0 : index
    %c0_0 = arith.constant 0 : index
    %0 = vector.load %arg1[%c0, %c0_0] : memref<128x1152xbf16, #tpu.memory_space<vmem>>, vector<128x1152xbf16>
    %c0_1 = arith.constant 0 : index
    %c0_2 = arith.constant 0 : index
    %1 = vector.load %arg2[%c0_1, %c0_2] : memref<1152x128xbf16, #tpu.memory_space<vmem>>, vector<1152x128xbf16>
    %cst = arith.constant dense<0.000000e+00> : vector<128x128xf32>
    %2 = tpu.matmul %0, %1, %cst {dimension_numbers = #tpu.dot_dimension_numbers<[1], [0], [0], [1], [0, 0, 1, 1], [], []>} : vector<128x1152xbf16>, vector<1152x128xbf16>, vector<128x128xf32> -> vector<128x128xf32>
    %c0_3 = arith.constant 0 : index
    %c0_4 = arith.constant 0 : index
    %3 = vector.load %arg3[%c0_3, %c0_4] : memref<1x128xf32, #tpu.memory_space<vmem>>, vector<1x128xf32>
    %4 = vector.broadcast %3 : vector<1x128xf32> to vector<128x128xf32>
    %5 = arith.addf %2, %4 : vector<128x128xf32>
    %c0_5 = arith.constant 0 : index
    %c0_6 = arith.constant 0 : index
    %6 = vector.load %arg4[%c0_5, %c0_6] : memref<128x128xbf16, #tpu.memory_space<vmem>>, vector<128x128xbf16>
    %7 = arith.extf %6 : vector<128x128xbf16> to vector<128x128xf32>
    %8 = arith.addf %5, %7 : vector<128x128xf32>
    %cst_7 = arith.constant 0.000000e+00 : f32
    %9 = vector.broadcast %cst_7 : f32 to vector<128x128xf32>
    %10 = arith.maximumf %8, %9 : vector<128x128xf32>
    %11 = arith.truncf %10 : vector<128x128xf32> to vector<128x128xbf16>
    %c0_8 = arith.constant 0 : index
    %c0_9 = arith.constant 0 : index
    %12 = vector.load %arg5[%c0_8, %c0_9] : memref<128x128xbf16, #tpu.memory_space<vmem>>, vector<128x128xbf16>
    tpu.vector_store %arg5[%c0_8, %c0_9], %11 {strides = array<i32>} : memref<128x128xbf16, #tpu.memory_space<vmem>>, vector<128x128xbf16>,
    return
  }
  func.func @transform_0(%arg0: i32) -> (i32, i32) {
    %c0_i32 = arith.constant 0 : i32
    %c0_i32_0 = arith.constant 0 : i32
    return %arg0, %c0_i32 : i32, i32
  }
  func.func @transform_1(%arg0: i32) -> (i32, i32) {
    %c0_i32 = arith.constant 0 : i32
    %c0_i32_0 = arith.constant 0 : i32
    %c0_i32_1 = arith.constant 0 : i32
    return %c0_i32, %c0_i32_0 : i32, i32
  }
  func.func @transform_2(%arg0: i32) -> (i32, i32) {
    %c0_i32 = arith.constant 0 : i32
    %c0_i32_0 = arith.constant 0 : i32
    %c0_i32_1 = arith.constant 0 : i32
    return %c0_i32, %c0_i32_0 : i32, i32
  }
  func.func @transform_3(%arg0: i32) -> (i32, i32) {
    %c0_i32 = arith.constant 0 : i32
    %c0_i32_0 = arith.constant 0 : i32
    return %arg0, %c0_i32 : i32, i32
  }
  func.func @transform_4(%arg0: i32) -> (i32, i32) {
    %c0_i32 = arith.constant 0 : i32
    %c0_i32_0 = arith.constant 0 : i32
    return %arg0, %c0_i32 : i32, i32
  }
}

module attributes {stable_mosaic.version = 11 : i64} {
  func.func @_mm_kernel(%arg0: i32, %arg1: memref<128x1152xbf16, #tpu.memory_space<vmem>>, %arg2: memref<1152x128xbf16, #tpu.memory_space<vmem>>, %arg3: memref<1x128xf32, #tpu.memory_space<vmem>>, %arg4: memref<128x128xbf16, #tpu.memory_space<vmem>>) attributes {dimension_semantics = [#tpu.dimension_semantics<parallel>], iteration_bounds = array<i64: 1>, scalar_prefetch = 0 : i64, scratch_operands = 0 : i64, tpu.core_type = #tpu.core_type<tc>, window_params = [{transform_indices = @transform_0, window_bounds = array<i64: 128, 1152>}, {pipeline_mode = #tpu.pipeline_mode<synchronous>, transform_indices = @transform_1, window_bounds = array<i64: 1152, 128>}, {pipeline_mode = #tpu.pipeline_mode<synchronous>, transform_indices = @transform_2, window_bounds = array<i64: 1, 128>}, {transform_indices = @transform_3, window_bounds = array<i64: 128, 128>}]} {
    %c0 = arith.constant 0 : index
    %c0_0 = arith.constant 0 : index
    %0 = vector.load %arg1[%c0, %c0_0] : memref<128x1152xbf16, #tpu.memory_space<vmem>>, vector<128x1152xbf16>
    %c0_1 = arith.constant 0 : index
    %c0_2 = arith.constant 0 : index
    %1 = vector.load %arg2[%c0_1, %c0_2] : memref<1152x128xbf16, #tpu.memory_space<vmem>>, vector<1152x128xbf16>
    %cst = arith.constant dense<0.000000e+00> : vector<128x128xf32>
    %2 = tpu.matmul %0, %1, %cst {dimension_numbers = #tpu.dot_dimension_numbers<[1], [0], [0], [1], [0, 0, 1, 1], [], []>} : vector<128x1152xbf16>, vector<1152x128xbf16>, vector<128x128xf32> -> vector<128x128xf32>
    %c0_3 = arith.constant 0 : index
    %c0_4 = arith.constant 0 : index
    %3 = vector.load %arg3[%c0_3, %c0_4] : memref<1x128xf32, #tpu.memory_space<vmem>>, vector<1x128xf32>
    %4 = vector.broadcast %3 : vector<1x128xf32> to vector<128x128xf32>
    %5 = arith.addf %2, %4 : vector<128x128xf32>
    %cst_5 = arith.constant 0.000000e+00 : f32
    %6 = vector.broadcast %cst_5 : f32 to vector<128x128xf32>
    %7 = arith.maximumf %5, %6 : vector<128x128xf32>
    %8 = arith.truncf %7 : vector<128x128xf32> to vector<128x128xbf16>
    %c0_6 = arith.constant 0 : index
    %c0_7 = arith.constant 0 : index
    %9 = vector.load %arg4[%c0_6, %c0_7] : memref<128x128xbf16, #tpu.memory_space<vmem>>, vector<128x128xbf16>
    tpu.vector_store %arg4[%c0_6, %c0_7], %8 {strides = array<i32>} : memref<128x128xbf16, #tpu.memory_space<vmem>>, vector<128x128xbf16>,
    return
  }
  func.func @transform_0(%arg0: i32) -> (i32, i32) {
    %c0_i32 = arith.constant 0 : i32
    %c0_i32_0 = arith.constant 0 : i32
    return %arg0, %c0_i32 : i32, i32
  }
  func.func @transform_1(%arg0: i32) -> (i32, i32) {
    %c0_i32 = arith.constant 0 : i32
    %c0_i32_0 = arith.constant 0 : i32
    %c0_i32_1 = arith.constant 0 : i32
    return %c0_i32, %c0_i32_0 : i32, i32
  }
  func.func @transform_2(%arg0: i32) -> (i32, i32) {
    %c0_i32 = arith.constant 0 : i32
    %c0_i32_0 = arith.constant 0 : i32
    %c0_i32_1 = arith.constant 0 : i32
    return %c0_i32, %c0_i32_0 : i32, i32
  }
  func.func @transform_3(%arg0: i32) -> (i32, i32) {
    %c0_i32 = arith.constant 0 : i32
    %c0_i32_0 = arith.constant 0 : i32
    return %arg0, %c0_i32 : i32, i32
  }
}

module attributes {stable_mosaic.version = 11 : i64} {
  func.func @_mm_kernel(%arg0: i32, %arg1: memref<32x1152xbf16, #tpu.memory_space<vmem>>, %arg2: memref<1152x32xbf16, #tpu.memory_space<vmem>>, %arg3: memref<1x32xf32, #tpu.memory_space<vmem>>, %arg4: memref<32x32xbf16, #tpu.memory_space<vmem>>) attributes {dimension_semantics = [#tpu.dimension_semantics<parallel>], iteration_bounds = array<i64: 1>, scalar_prefetch = 0 : i64, scratch_operands = 0 : i64, tpu.core_type = #tpu.core_type<tc>, window_params = [{transform_indices = @transform_0, window_bounds = array<i64: 32, 1152>}, {pipeline_mode = #tpu.pipeline_mode<synchronous>, transform_indices = @transform_1, window_bounds = array<i64: 1152, 32>}, {pipeline_mode = #tpu.pipeline_mode<synchronous>, transform_indices = @transform_2, window_bounds = array<i64: 1, 32>}, {transform_indices = @transform_3, window_bounds = array<i64: 32, 32>}]} {
    %c0 = arith.constant 0 : index
    %c0_0 = arith.constant 0 : index
    %0 = vector.load %arg1[%c0, %c0_0] : memref<32x1152xbf16, #tpu.memory_space<vmem>>, vector<32x1152xbf16>
    %c0_1 = arith.constant 0 : index
    %c0_2 = arith.constant 0 : index
    %1 = vector.load %arg2[%c0_1, %c0_2] : memref<1152x32xbf16, #tpu.memory_space<vmem>>, vector<1152x32xbf16>
    %cst = arith.constant dense<0.000000e+00> : vector<32x32xf32>
    %2 = tpu.matmul %0, %1, %cst {dimension_numbers = #tpu.dot_dimension_numbers<[1], [0], [0], [1], [0, 0, 1, 1], [], []>} : vector<32x1152xbf16>, vector<1152x32xbf16>, vector<32x32xf32> -> vector<32x32xf32>
    %c0_3 = arith.constant 0 : index
    %c0_4 = arith.constant 0 : index
    %3 = vector.load %arg3[%c0_3, %c0_4] : memref<1x32xf32, #tpu.memory_space<vmem>>, vector<1x32xf32>
    %4 = vector.broadcast %3 : vector<1x32xf32> to vector<32x32xf32>
    %5 = arith.addf %2, %4 : vector<32x32xf32>
    %cst_5 = arith.constant 0.000000e+00 : f32
    %6 = vector.broadcast %cst_5 : f32 to vector<32x32xf32>
    %7 = arith.maximumf %5, %6 : vector<32x32xf32>
    %8 = arith.truncf %7 : vector<32x32xf32> to vector<32x32xbf16>
    %c0_6 = arith.constant 0 : index
    %c0_7 = arith.constant 0 : index
    %9 = vector.load %arg4[%c0_6, %c0_7] : memref<32x32xbf16, #tpu.memory_space<vmem>>, vector<32x32xbf16>
    tpu.vector_store %arg4[%c0_6, %c0_7], %8 {strides = array<i32>} : memref<32x32xbf16, #tpu.memory_space<vmem>>, vector<32x32xbf16>,
    return
  }
  func.func @transform_0(%arg0: i32) -> (i32, i32) {
    %c0_i32 = arith.constant 0 : i32
    %c0_i32_0 = arith.constant 0 : i32
    return %arg0, %c0_i32 : i32, i32
  }
  func.func @transform_1(%arg0: i32) -> (i32, i32) {
    %c0_i32 = arith.constant 0 : i32
    %c0_i32_0 = arith.constant 0 : i32
    %c0_i32_1 = arith.constant 0 : i32
    return %c0_i32, %c0_i32_0 : i32, i32
  }
  func.func @transform_2(%arg0: i32) -> (i32, i32) {
    %c0_i32 = arith.constant 0 : i32
    %c0_i32_0 = arith.constant 0 : i32
    %c0_i32_1 = arith.constant 0 : i32
    return %c0_i32, %c0_i32_0 : i32, i32
  }
  func.func @transform_3(%arg0: i32) -> (i32, i32) {
    %c0_i32 = arith.constant 0 : i32
    %c0_i32_0 = arith.constant 0 : i32
    return %arg0, %c0_i32 : i32, i32
  }
}

module attributes {stable_mosaic.version = 11 : i64} {
  func.func @_mm_kernel(%arg0: i32, %arg1: memref<32x288xbf16, #tpu.memory_space<vmem>>, %arg2: memref<288x32xbf16, #tpu.memory_space<vmem>>, %arg3: memref<1x32xf32, #tpu.memory_space<vmem>>, %arg4: memref<32x32xbf16, #tpu.memory_space<vmem>>) attributes {dimension_semantics = [#tpu.dimension_semantics<parallel>], iteration_bounds = array<i64: 1>, scalar_prefetch = 0 : i64, scratch_operands = 0 : i64, tpu.core_type = #tpu.core_type<tc>, window_params = [{transform_indices = @transform_0, window_bounds = array<i64: 32, 288>}, {pipeline_mode = #tpu.pipeline_mode<synchronous>, transform_indices = @transform_1, window_bounds = array<i64: 288, 32>}, {pipeline_mode = #tpu.pipeline_mode<synchronous>, transform_indices = @transform_2, window_bounds = array<i64: 1, 32>}, {transform_indices = @transform_3, window_bounds = array<i64: 32, 32>}]} {
    %c0 = arith.constant 0 : index
    %c0_0 = arith.constant 0 : index
    %0 = vector.load %arg1[%c0, %c0_0] : memref<32x288xbf16, #tpu.memory_space<vmem>>, vector<32x288xbf16>
    %c0_1 = arith.constant 0 : index
    %c0_2 = arith.constant 0 : index
    %1 = vector.load %arg2[%c0_1, %c0_2] : memref<288x32xbf16, #tpu.memory_space<vmem>>, vector<288x32xbf16>
    %cst = arith.constant dense<0.000000e+00> : vector<32x32xf32>
    %2 = tpu.matmul %0, %1, %cst {dimension_numbers = #tpu.dot_dimension_numbers<[1], [0], [0], [1], [0, 0, 1, 1], [], []>} : vector<32x288xbf16>, vector<288x32xbf16>, vector<32x32xf32> -> vector<32x32xf32>
    %c0_3 = arith.constant 0 : index
    %c0_4 = arith.constant 0 : index
    %3 = vector.load %arg3[%c0_3, %c0_4] : memref<1x32xf32, #tpu.memory_space<vmem>>, vector<1x32xf32>
    %4 = vector.broadcast %3 : vector<1x32xf32> to vector<32x32xf32>
    %5 = arith.addf %2, %4 : vector<32x32xf32>
    %cst_5 = arith.constant 0.000000e+00 : f32
    %6 = vector.broadcast %cst_5 : f32 to vector<32x32xf32>
    %7 = arith.maximumf %5, %6 : vector<32x32xf32>
    %8 = arith.truncf %7 : vector<32x32xf32> to vector<32x32xbf16>
    %c0_6 = arith.constant 0 : index
    %c0_7 = arith.constant 0 : index
    %9 = vector.load %arg4[%c0_6, %c0_7] : memref<32x32xbf16, #tpu.memory_space<vmem>>, vector<32x32xbf16>
    tpu.vector_store %arg4[%c0_6, %c0_7], %8 {strides = array<i32>} : memref<32x32xbf16, #tpu.memory_space<vmem>>, vector<32x32xbf16>,
    return
  }
  func.func @transform_0(%arg0: i32) -> (i32, i32) {
    %c0_i32 = arith.constant 0 : i32
    %c0_i32_0 = arith.constant 0 : i32
    return %arg0, %c0_i32 : i32, i32
  }
  func.func @transform_1(%arg0: i32) -> (i32, i32) {
    %c0_i32 = arith.constant 0 : i32
    %c0_i32_0 = arith.constant 0 : i32
    %c0_i32_1 = arith.constant 0 : i32
    return %c0_i32, %c0_i32_0 : i32, i32
  }
  func.func @transform_2(%arg0: i32) -> (i32, i32) {
    %c0_i32 = arith.constant 0 : i32
    %c0_i32_0 = arith.constant 0 : i32
    %c0_i32_1 = arith.constant 0 : i32
    return %c0_i32, %c0_i32_0 : i32, i32
  }
  func.func @transform_3(%arg0: i32) -> (i32, i32) {
    %c0_i32 = arith.constant 0 : i32
    %c0_i32_0 = arith.constant 0 : i32
    return %arg0, %c0_i32 : i32, i32
  }
}

module attributes {stable_mosaic.version = 11 : i64} {
  func.func @_mm_kernel(%arg0: i32, %arg1: memref<32x288xbf16, #tpu.memory_space<vmem>>, %arg2: memref<288x32xbf16, #tpu.memory_space<vmem>>, %arg3: memref<1x32xf32, #tpu.memory_space<vmem>>, %arg4: memref<32x32xbf16, #tpu.memory_space<vmem>>, %arg5: memref<32x32xbf16, #tpu.memory_space<vmem>>) attributes {dimension_semantics = [#tpu.dimension_semantics<parallel>], iteration_bounds = array<i64: 1>, scalar_prefetch = 0 : i64, scratch_operands = 0 : i64, tpu.core_type = #tpu.core_type<tc>, window_params = [{transform_indices = @transform_0, window_bounds = array<i64: 32, 288>}, {pipeline_mode = #tpu.pipeline_mode<synchronous>, transform_indices = @transform_1, window_bounds = array<i64: 288, 32>}, {pipeline_mode = #tpu.pipeline_mode<synchronous>, transform_indices = @transform_2, window_bounds = array<i64: 1, 32>}, {transform_indices = @transform_3, window_bounds = array<i64: 32, 32>}, {transform_indices = @transform_4, window_bounds = array<i64: 32, 32>}]} {
    %c0 = arith.constant 0 : index
    %c0_0 = arith.constant 0 : index
    %0 = vector.load %arg1[%c0, %c0_0] : memref<32x288xbf16, #tpu.memory_space<vmem>>, vector<32x288xbf16>
    %c0_1 = arith.constant 0 : index
    %c0_2 = arith.constant 0 : index
    %1 = vector.load %arg2[%c0_1, %c0_2] : memref<288x32xbf16, #tpu.memory_space<vmem>>, vector<288x32xbf16>
    %cst = arith.constant dense<0.000000e+00> : vector<32x32xf32>
    %2 = tpu.matmul %0, %1, %cst {dimension_numbers = #tpu.dot_dimension_numbers<[1], [0], [0], [1], [0, 0, 1, 1], [], []>} : vector<32x288xbf16>, vector<288x32xbf16>, vector<32x32xf32> -> vector<32x32xf32>
    %c0_3 = arith.constant 0 : index
    %c0_4 = arith.constant 0 : index
    %3 = vector.load %arg3[%c0_3, %c0_4] : memref<1x32xf32, #tpu.memory_space<vmem>>, vector<1x32xf32>
    %4 = vector.broadcast %3 : vector<1x32xf32> to vector<32x32xf32>
    %5 = arith.addf %2, %4 : vector<32x32xf32>
    %c0_5 = arith.constant 0 : index
    %c0_6 = arith.constant 0 : index
    %6 = vector.load %arg4[%c0_5, %c0_6] : memref<32x32xbf16, #tpu.memory_space<vmem>>, vector<32x32xbf16>
    %7 = arith.extf %6 : vector<32x32xbf16> to vector<32x32xf32>
    %8 = arith.addf %5, %7 : vector<32x32xf32>
    %cst_7 = arith.constant 0.000000e+00 : f32
    %9 = vector.broadcast %cst_7 : f32 to vector<32x32xf32>
    %10 = arith.maximumf %8, %9 : vector<32x32xf32>
    %11 = arith.truncf %10 : vector<32x32xf32> to vector<32x32xbf16>
    %c0_8 = arith.constant 0 : index
    %c0_9 = arith.constant 0 : index
    %12 = vector.load %arg5[%c0_8, %c0_9] : memref<32x32xbf16, #tpu.memory_space<vmem>>, vector<32x32xbf16>
    tpu.vector_store %arg5[%c0_8, %c0_9], %11 {strides = array<i32>} : memref<32x32xbf16, #tpu.memory_space<vmem>>, vector<32x32xbf16>,
    return
  }
  func.func @transform_0(%arg0: i32) -> (i32, i32) {
    %c0_i32 = arith.constant 0 : i32
    %c0_i32_0 = arith.constant 0 : i32
    return %arg0, %c0_i32 : i32, i32
  }
  func.func @transform_1(%arg0: i32) -> (i32, i32) {
    %c0_i32 = arith.constant 0 : i32
    %c0_i32_0 = arith.constant 0 : i32
    %c0_i32_1 = arith.constant 0 : i32
    return %c0_i32, %c0_i32_0 : i32, i32
  }
  func.func @transform_2(%arg0: i32) -> (i32, i32) {
    %c0_i32 = arith.constant 0 : i32
    %c0_i32_0 = arith.constant 0 : i32
    %c0_i32_1 = arith.constant 0 : i32
    return %c0_i32, %c0_i32_0 : i32, i32
  }
  func.func @transform_3(%arg0: i32) -> (i32, i32) {
    %c0_i32 = arith.constant 0 : i32
    %c0_i32_0 = arith.constant 0 : i32
    return %arg0, %c0_i32 : i32, i32
  }
  func.func @transform_4(%arg0: i32) -> (i32, i32) {
    %c0_i32 = arith.constant 0 : i32
    %c0_i32_0 = arith.constant 0 : i32
    return %arg0, %c0_i32 : i32, i32
  }
}

module attributes {stable_mosaic.version = 11 : i64} {
  func.func @_mm_kernel(%arg0: i32, %arg1: memref<32x288xbf16, #tpu.memory_space<vmem>>, %arg2: memref<288x512xbf16, #tpu.memory_space<vmem>>, %arg3: memref<1x512xf32, #tpu.memory_space<vmem>>, %arg4: memref<32x512xbf16, #tpu.memory_space<vmem>>) attributes {dimension_semantics = [#tpu.dimension_semantics<parallel>], iteration_bounds = array<i64: 1>, scalar_prefetch = 0 : i64, scratch_operands = 0 : i64, tpu.core_type = #tpu.core_type<tc>, window_params = [{transform_indices = @transform_0, window_bounds = array<i64: 32, 288>}, {pipeline_mode = #tpu.pipeline_mode<synchronous>, transform_indices = @transform_1, window_bounds = array<i64: 288, 512>}, {pipeline_mode = #tpu.pipeline_mode<synchronous>, transform_indices = @transform_2, window_bounds = array<i64: 1, 512>}, {transform_indices = @transform_3, window_bounds = array<i64: 32, 512>}]} {
    %c0 = arith.constant 0 : index
    %c0_0 = arith.constant 0 : index
    %0 = vector.load %arg1[%c0, %c0_0] : memref<32x288xbf16, #tpu.memory_space<vmem>>, vector<32x288xbf16>
    %c0_1 = arith.constant 0 : index
    %c0_2 = arith.constant 0 : index
    %1 = vector.load %arg2[%c0_1, %c0_2] : memref<288x512xbf16, #tpu.memory_space<vmem>>, vector<288x512xbf16>
    %cst = arith.constant dense<0.000000e+00> : vector<32x512xf32>
    %2 = tpu.matmul %0, %1, %cst {dimension_numbers = #tpu.dot_dimension_numbers<[1], [0], [0], [1], [0, 0, 1, 1], [], []>} : vector<32x288xbf16>, vector<288x512xbf16>, vector<32x512xf32> -> vector<32x512xf32>
    %c0_3 = arith.constant 0 : index
    %c0_4 = arith.constant 0 : index
    %3 = vector.load %arg3[%c0_3, %c0_4] : memref<1x512xf32, #tpu.memory_space<vmem>>, vector<1x512xf32>
    %4 = vector.broadcast %3 : vector<1x512xf32> to vector<32x512xf32>
    %5 = arith.addf %2, %4 : vector<32x512xf32>
    %cst_5 = arith.constant 0.000000e+00 : f32
    %6 = vector.broadcast %cst_5 : f32 to vector<32x512xf32>
    %7 = arith.maximumf %5, %6 : vector<32x512xf32>
    %8 = arith.truncf %7 : vector<32x512xf32> to vector<32x512xbf16>
    %c0_6 = arith.constant 0 : index
    %c0_7 = arith.constant 0 : index
    %9 = vector.load %arg4[%c0_6, %c0_7] : memref<32x512xbf16, #tpu.memory_space<vmem>>, vector<32x512xbf16>
    tpu.vector_store %arg4[%c0_6, %c0_7], %8 {strides = array<i32>} : memref<32x512xbf16, #tpu.memory_space<vmem>>, vector<32x512xbf16>,
    return
  }
  func.func @transform_0(%arg0: i32) -> (i32, i32) {
    %c0_i32 = arith.constant 0 : i32
    %c0_i32_0 = arith.constant 0 : i32
    return %arg0, %c0_i32 : i32, i32
  }
  func.func @transform_1(%arg0: i32) -> (i32, i32) {
    %c0_i32 = arith.constant 0 : i32
    %c0_i32_0 = arith.constant 0 : i32
    %c0_i32_1 = arith.constant 0 : i32
    return %c0_i32, %c0_i32_0 : i32, i32
  }
  func.func @transform_2(%arg0: i32) -> (i32, i32) {
    %c0_i32 = arith.constant 0 : i32
    %c0_i32_0 = arith.constant 0 : i32
    %c0_i32_1 = arith.constant 0 : i32
    return %c0_i32, %c0_i32_0 : i32, i32
  }
  func.func @transform_3(%arg0: i32) -> (i32, i32) {
    %c0_i32 = arith.constant 0 : i32
    %c0_i32_0 = arith.constant 0 : i32
    return %arg0, %c0_i32 : i32, i32
  }
}

module attributes {stable_mosaic.version = 11 : i64} {
  func.func @_tf_layer_kernel(%arg0: memref<32x32xbf16, #tpu.memory_space<vmem>>, %arg1: memref<32x96xbf16, #tpu.memory_space<vmem>>, %arg2: memref<1x96xf32, #tpu.memory_space<vmem>>, %arg3: memref<32x32xbf16, #tpu.memory_space<vmem>>, %arg4: memref<1x32xf32, #tpu.memory_space<vmem>>, %arg5: memref<1x32xf32, #tpu.memory_space<vmem>>, %arg6: memref<1x32xf32, #tpu.memory_space<vmem>>, %arg7: memref<32x128xbf16, #tpu.memory_space<vmem>>, %arg8: memref<1x128xf32, #tpu.memory_space<vmem>>, %arg9: memref<128x32xbf16, #tpu.memory_space<vmem>>, %arg10: memref<1x32xf32, #tpu.memory_space<vmem>>, %arg11: memref<1x32xf32, #tpu.memory_space<vmem>>, %arg12: memref<1x32xf32, #tpu.memory_space<vmem>>, %arg13: memref<32x32xbf16, #tpu.memory_space<vmem>>) attributes {dimension_semantics = [], scalar_prefetch = 0 : i64, scratch_operands = 0 : i64, tpu.core_type = #tpu.core_type<tc>} {
    %c0 = arith.constant 0 : index
    %c0_0 = arith.constant 0 : index
    %0 = vector.load %arg0[%c0, %c0_0] : memref<32x32xbf16, #tpu.memory_space<vmem>>, vector<32x32xbf16>
    %1 = arith.extf %0 : vector<32x32xbf16> to vector<32x32xf32>
    %c0_1 = arith.constant 0 : index
    %c0_2 = arith.constant 0 : index
    %2 = vector.load %arg1[%c0_1, %c0_2] : memref<32x96xbf16, #tpu.memory_space<vmem>>, vector<32x96xbf16>
    %3 = arith.extf %2 : vector<32x96xbf16> to vector<32x96xf32>
    %c0_3 = arith.constant 0 : index
    %c0_4 = arith.constant 0 : index
    %4 = vector.load %arg3[%c0_3, %c0_4] : memref<32x32xbf16, #tpu.memory_space<vmem>>, vector<32x32xbf16>
    %5 = arith.extf %4 : vector<32x32xbf16> to vector<32x32xf32>
    %c0_5 = arith.constant 0 : index
    %c0_6 = arith.constant 0 : index
    %6 = vector.load %arg7[%c0_5, %c0_6] : memref<32x128xbf16, #tpu.memory_space<vmem>>, vector<32x128xbf16>
    %7 = arith.extf %6 : vector<32x128xbf16> to vector<32x128xf32>
    %c0_7 = arith.constant 0 : index
    %c0_8 = arith.constant 0 : index
    %8 = vector.load %arg9[%c0_7, %c0_8] : memref<128x32xbf16, #tpu.memory_space<vmem>>, vector<128x32xbf16>
    %9 = arith.extf %8 : vector<128x32xbf16> to vector<128x32xf32>
    %cst = arith.constant dense<0.000000e+00> : vector<32x96xf32>
    %10 = tpu.matmul %1, %3, %cst {dimension_numbers = #tpu.dot_dimension_numbers<[1], [0], [0], [1], [0, 0, 1, 1], [], []>} : vector<32x32xf32>, vector<32x96xf32>, vector<32x96xf32> -> vector<32x96xf32>
    %c0_9 = arith.constant 0 : index
    %c0_10 = arith.constant 0 : index
    %11 = vector.load %arg2[%c0_9, %c0_10] : memref<1x96xf32, #tpu.memory_space<vmem>>, vector<1x96xf32>
    %12 = vector.broadcast %11 : vector<1x96xf32> to vector<32x96xf32>
    %13 = arith.addf %10, %12 : vector<32x96xf32>
    %cst_11 = arith.constant 0.000000e+00 : f32
    %14 = vector.broadcast %cst_11 : f32 to vector<32x32xf32>
    %15 = vector.extract_strided_slice %13 {offsets = [0, 0], sizes = [16, 8], strides = [1, 1]} : vector<32x96xf32> to vector<16x8xf32>
    %16 = vector.extract_strided_slice %13 {offsets = [0, 32], sizes = [16, 8], strides = [1, 1]} : vector<32x96xf32> to vector<16x8xf32>
    %17 = vector.extract_strided_slice %13 {offsets = [0, 64], sizes = [16, 8], strides = [1, 1]} : vector<32x96xf32> to vector<16x8xf32>
    %cst_12 = arith.constant dense<0.000000e+00> : vector<16x16xf32>
    %18 = tpu.matmul %15, %16, %cst_12 {dimension_numbers = #tpu.dot_dimension_numbers<[1], [1], [0], [0], [0, 0, 1, 0], [], []>} : vector<16x8xf32>, vector<16x8xf32>, vector<16x16xf32> -> vector<16x16xf32>
    %cst_13 = arith.constant 0.353553385 : f32
    %19 = vector.broadcast %cst_13 : f32 to vector<16x16xf32>
    %20 = arith.mulf %18, %19 : vector<16x16xf32>
    %cst_14 = arith.constant dense<0xFF800000> : vector<16xf32>
    %21 = vector.multi_reduction <maximumf>, %20, %cst_14 [1] : vector<16x16xf32> to vector<16xf32>
    %22 = vector.shape_cast %21 : vector<16xf32> to vector<16x1xf32>
    %23 = vector.broadcast %22 : vector<16x1xf32> to vector<16x16xf32>
    %24 = arith.subf %20, %23 : vector<16x16xf32>
    %25 = math.exp %24 : vector<16x16xf32>
    %cst_15 = arith.constant dense<0.000000e+00> : vector<16xf32>
    %26 = vector.multi_reduction <add>, %25, %cst_15 [1] : vector<16x16xf32> to vector<16xf32>
    %27 = vector.shape_cast %26 : vector<16xf32> to vector<16x1xf32>
    %28 = vector.broadcast %27 : vector<16x1xf32> to vector<16x16xf32>
    %29 = arith.divf %25, %28 : vector<16x16xf32>
    %cst_16 = arith.constant dense<0.000000e+00> : vector<16x8xf32>
    %30 = tpu.matmul %29, %17, %cst_16 {dimension_numbers = #tpu.dot_dimension_numbers<[1], [0], [0], [1], [0, 0, 1, 1], [], []>} : vector<16x16xf32>, vector<16x8xf32>, vector<16x8xf32> -> vector<16x8xf32>
    %31 = vector.extract_strided_slice %13 {offsets = [16, 0], sizes = [16, 8], strides = [1, 1]} : vector<32x96xf32> to vector<16x8xf32>
    %32 = vector.extract_strided_slice %13 {offsets = [16, 32], sizes = [16, 8], strides = [1, 1]} : vector<32x96xf32> to vector<16x8xf32>
    %33 = vector.extract_strided_slice %13 {offsets = [16, 64], sizes = [16, 8], strides = [1, 1]} : vector<32x96xf32> to vector<16x8xf32>
    %cst_17 = arith.constant dense<0.000000e+00> : vector<16x16xf32>
    %34 = tpu.matmul %31, %32, %cst_17 {dimension_numbers = #tpu.dot_dimension_numbers<[1], [1], [0], [0], [0, 0, 1, 0], [], []>} : vector<16x8xf32>, vector<16x8xf32>, vector<16x16xf32> -> vector<16x16xf32>
    %cst_18 = arith.constant 0.353553385 : f32
    %35 = vector.broadcast %cst_18 : f32 to vector<16x16xf32>
    %36 = arith.mulf %34, %35 : vector<16x16xf32>
    %cst_19 = arith.constant dense<0xFF800000> : vector<16xf32>
    %37 = vector.multi_reduction <maximumf>, %36, %cst_19 [1] : vector<16x16xf32> to vector<16xf32>
    %38 = vector.shape_cast %37 : vector<16xf32> to vector<16x1xf32>
    %39 = vector.broadcast %38 : vector<16x1xf32> to vector<16x16xf32>
    %40 = arith.subf %36, %39 : vector<16x16xf32>
    %41 = math.exp %40 : vector<16x16xf32>
    %cst_20 = arith.constant dense<0.000000e+00> : vector<16xf32>
    %42 = vector.multi_reduction <add>, %41, %cst_20 [1] : vector<16x16xf32> to vector<16xf32>
    %43 = vector.shape_cast %42 : vector<16xf32> to vector<16x1xf32>
    %44 = vector.broadcast %43 : vector<16x1xf32> to vector<16x16xf32>
    %45 = arith.divf %41, %44 : vector<16x16xf32>
    %cst_21 = arith.constant dense<0.000000e+00> : vector<16x8xf32>
    %46 = tpu.matmul %45, %33, %cst_21 {dimension_numbers = #tpu.dot_dimension_numbers<[1], [0], [0], [1], [0, 0, 1, 1], [], []>} : vector<16x16xf32>, vector<16x8xf32>, vector<16x8xf32> -> vector<16x8xf32>
    %47 = tpu.concatenate %30, %46 in 0 : vector<16x8xf32>, vector<16x8xf32> -> vector<32x8xf32>
    %48 = vector.extract_strided_slice %5 {offsets = [0, 0], sizes = [8, 32], strides = [1, 1]} : vector<32x32xf32> to vector<8x32xf32>
    %cst_22 = arith.constant dense<0.000000e+00> : vector<32x32xf32>
    %49 = tpu.matmul %47, %48, %cst_22 {dimension_numbers = #tpu.dot_dimension_numbers<[1], [0], [0], [1], [0, 0, 1, 1], [], []>} : vector<32x8xf32>, vector<8x32xf32>, vector<32x32xf32> -> vector<32x32xf32>
    %50 = arith.addf %14, %49 : vector<32x32xf32>
    %51 = vector.extract_strided_slice %13 {offsets = [0, 8], sizes = [16, 8], strides = [1, 1]} : vector<32x96xf32> to vector<16x8xf32>
    %52 = vector.extract_strided_slice %13 {offsets = [0, 40], sizes = [16, 8], strides = [1, 1]} : vector<32x96xf32> to vector<16x8xf32>
    %53 = vector.extract_strided_slice %13 {offsets = [0, 72], sizes = [16, 8], strides = [1, 1]} : vector<32x96xf32> to vector<16x8xf32>
    %cst_23 = arith.constant dense<0.000000e+00> : vector<16x16xf32>
    %54 = tpu.matmul %51, %52, %cst_23 {dimension_numbers = #tpu.dot_dimension_numbers<[1], [1], [0], [0], [0, 0, 1, 0], [], []>} : vector<16x8xf32>, vector<16x8xf32>, vector<16x16xf32> -> vector<16x16xf32>
    %cst_24 = arith.constant 0.353553385 : f32
    %55 = vector.broadcast %cst_24 : f32 to vector<16x16xf32>
    %56 = arith.mulf %54, %55 : vector<16x16xf32>
    %cst_25 = arith.constant dense<0xFF800000> : vector<16xf32>
    %57 = vector.multi_reduction <maximumf>, %56, %cst_25 [1] : vector<16x16xf32> to vector<16xf32>
    %58 = vector.shape_cast %57 : vector<16xf32> to vector<16x1xf32>
    %59 = vector.broadcast %58 : vector<16x1xf32> to vector<16x16xf32>
    %60 = arith.subf %56, %59 : vector<16x16xf32>
    %61 = math.exp %60 : vector<16x16xf32>
    %cst_26 = arith.constant dense<0.000000e+00> : vector<16xf32>
    %62 = vector.multi_reduction <add>, %61, %cst_26 [1] : vector<16x16xf32> to vector<16xf32>
    %63 = vector.shape_cast %62 : vector<16xf32> to vector<16x1xf32>
    %64 = vector.broadcast %63 : vector<16x1xf32> to vector<16x16xf32>
    %65 = arith.divf %61, %64 : vector<16x16xf32>
    %cst_27 = arith.constant dense<0.000000e+00> : vector<16x8xf32>
    %66 = tpu.matmul %65, %53, %cst_27 {dimension_numbers = #tpu.dot_dimension_numbers<[1], [0], [0], [1], [0, 0, 1, 1], [], []>} : vector<16x16xf32>, vector<16x8xf32>, vector<16x8xf32> -> vector<16x8xf32>
    %67 = vector.extract_strided_slice %13 {offsets = [16, 8], sizes = [16, 8], strides = [1, 1]} : vector<32x96xf32> to vector<16x8xf32>
    %68 = vector.extract_strided_slice %13 {offsets = [16, 40], sizes = [16, 8], strides = [1, 1]} : vector<32x96xf32> to vector<16x8xf32>
    %69 = vector.extract_strided_slice %13 {offsets = [16, 72], sizes = [16, 8], strides = [1, 1]} : vector<32x96xf32> to vector<16x8xf32>
    %cst_28 = arith.constant dense<0.000000e+00> : vector<16x16xf32>
    %70 = tpu.matmul %67, %68, %cst_28 {dimension_numbers = #tpu.dot_dimension_numbers<[1], [1], [0], [0], [0, 0, 1, 0], [], []>} : vector<16x8xf32>, vector<16x8xf32>, vector<16x16xf32> -> vector<16x16xf32>
    %cst_29 = arith.constant 0.353553385 : f32
    %71 = vector.broadcast %cst_29 : f32 to vector<16x16xf32>
    %72 = arith.mulf %70, %71 : vector<16x16xf32>
    %cst_30 = arith.constant dense<0xFF800000> : vector<16xf32>
    %73 = vector.multi_reduction <maximumf>, %72, %cst_30 [1] : vector<16x16xf32> to vector<16xf32>
    %74 = vector.shape_cast %73 : vector<16xf32> to vector<16x1xf32>
    %75 = vector.broadcast %74 : vector<16x1xf32> to vector<16x16xf32>
    %76 = arith.subf %72, %75 : vector<16x16xf32>
    %77 = math.exp %76 : vector<16x16xf32>
    %cst_31 = arith.constant dense<0.000000e+00> : vector<16xf32>
    %78 = vector.multi_reduction <add>, %77, %cst_31 [1] : vector<16x16xf32> to vector<16xf32>
    %79 = vector.shape_cast %78 : vector<16xf32> to vector<16x1xf32>
    %80 = vector.broadcast %79 : vector<16x1xf32> to vector<16x16xf32>
    %81 = arith.divf %77, %80 : vector<16x16xf32>
    %cst_32 = arith.constant dense<0.000000e+00> : vector<16x8xf32>
    %82 = tpu.matmul %81, %69, %cst_32 {dimension_numbers = #tpu.dot_dimension_numbers<[1], [0], [0], [1], [0, 0, 1, 1], [], []>} : vector<16x16xf32>, vector<16x8xf32>, vector<16x8xf32> -> vector<16x8xf32>
    %83 = tpu.concatenate %66, %82 in 0 : vector<16x8xf32>, vector<16x8xf32> -> vector<32x8xf32>
    %84 = vector.extract_strided_slice %5 {offsets = [8, 0], sizes = [8, 32], strides = [1, 1]} : vector<32x32xf32> to vector<8x32xf32>
    %cst_33 = arith.constant dense<0.000000e+00> : vector<32x32xf32>
    %85 = tpu.matmul %83, %84, %cst_33 {dimension_numbers = #tpu.dot_dimension_numbers<[1], [0], [0], [1], [0, 0, 1, 1], [], []>} : vector<32x8xf32>, vector<8x32xf32>, vector<32x32xf32> -> vector<32x32xf32>
    %86 = arith.addf %50, %85 : vector<32x32xf32>
    %87 = vector.extract_strided_slice %13 {offsets = [0, 16], sizes = [16, 8], strides = [1, 1]} : vector<32x96xf32> to vector<16x8xf32>
    %88 = vector.extract_strided_slice %13 {offsets = [0, 48], sizes = [16, 8], strides = [1, 1]} : vector<32x96xf32> to vector<16x8xf32>
    %89 = vector.extract_strided_slice %13 {offsets = [0, 80], sizes = [16, 8], strides = [1, 1]} : vector<32x96xf32> to vector<16x8xf32>
    %cst_34 = arith.constant dense<0.000000e+00> : vector<16x16xf32>
    %90 = tpu.matmul %87, %88, %cst_34 {dimension_numbers = #tpu.dot_dimension_numbers<[1], [1], [0], [0], [0, 0, 1, 0], [], []>} : vector<16x8xf32>, vector<16x8xf32>, vector<16x16xf32> -> vector<16x16xf32>
    %cst_35 = arith.constant 0.353553385 : f32
    %91 = vector.broadcast %cst_35 : f32 to vector<16x16xf32>
    %92 = arith.mulf %90, %91 : vector<16x16xf32>
    %cst_36 = arith.constant dense<0xFF800000> : vector<16xf32>
    %93 = vector.multi_reduction <maximumf>, %92, %cst_36 [1] : vector<16x16xf32> to vector<16xf32>
    %94 = vector.shape_cast %93 : vector<16xf32> to vector<16x1xf32>
    %95 = vector.broadcast %94 : vector<16x1xf32> to vector<16x16xf32>
    %96 = arith.subf %92, %95 : vector<16x16xf32>
    %97 = math.exp %96 : vector<16x16xf32>
    %cst_37 = arith.constant dense<0.000000e+00> : vector<16xf32>
    %98 = vector.multi_reduction <add>, %97, %cst_37 [1] : vector<16x16xf32> to vector<16xf32>
    %99 = vector.shape_cast %98 : vector<16xf32> to vector<16x1xf32>
    %100 = vector.broadcast %99 : vector<16x1xf32> to vector<16x16xf32>
    %101 = arith.divf %97, %100 : vector<16x16xf32>
    %cst_38 = arith.constant dense<0.000000e+00> : vector<16x8xf32>
    %102 = tpu.matmul %101, %89, %cst_38 {dimension_numbers = #tpu.dot_dimension_numbers<[1], [0], [0], [1], [0, 0, 1, 1], [], []>} : vector<16x16xf32>, vector<16x8xf32>, vector<16x8xf32> -> vector<16x8xf32>
    %103 = vector.extract_strided_slice %13 {offsets = [16, 16], sizes = [16, 8], strides = [1, 1]} : vector<32x96xf32> to vector<16x8xf32>
    %104 = vector.extract_strided_slice %13 {offsets = [16, 48], sizes = [16, 8], strides = [1, 1]} : vector<32x96xf32> to vector<16x8xf32>
    %105 = vector.extract_strided_slice %13 {offsets = [16, 80], sizes = [16, 8], strides = [1, 1]} : vector<32x96xf32> to vector<16x8xf32>
    %cst_39 = arith.constant dense<0.000000e+00> : vector<16x16xf32>
    %106 = tpu.matmul %103, %104, %cst_39 {dimension_numbers = #tpu.dot_dimension_numbers<[1], [1], [0], [0], [0, 0, 1, 0], [], []>} : vector<16x8xf32>, vector<16x8xf32>, vector<16x16xf32> -> vector<16x16xf32>
    %cst_40 = arith.constant 0.353553385 : f32
    %107 = vector.broadcast %cst_40 : f32 to vector<16x16xf32>
    %108 = arith.mulf %106, %107 : vector<16x16xf32>
    %cst_41 = arith.constant dense<0xFF800000> : vector<16xf32>
    %109 = vector.multi_reduction <maximumf>, %108, %cst_41 [1] : vector<16x16xf32> to vector<16xf32>
    %110 = vector.shape_cast %109 : vector<16xf32> to vector<16x1xf32>
    %111 = vector.broadcast %110 : vector<16x1xf32> to vector<16x16xf32>
    %112 = arith.subf %108, %111 : vector<16x16xf32>
    %113 = math.exp %112 : vector<16x16xf32>
    %cst_42 = arith.constant dense<0.000000e+00> : vector<16xf32>
    %114 = vector.multi_reduction <add>, %113, %cst_42 [1] : vector<16x16xf32> to vector<16xf32>
    %115 = vector.shape_cast %114 : vector<16xf32> to vector<16x1xf32>
    %116 = vector.broadcast %115 : vector<16x1xf32> to vector<16x16xf32>
    %117 = arith.divf %113, %116 : vector<16x16xf32>
    %cst_43 = arith.constant dense<0.000000e+00> : vector<16x8xf32>
    %118 = tpu.matmul %117, %105, %cst_43 {dimension_numbers = #tpu.dot_dimension_numbers<[1], [0], [0], [1], [0, 0, 1, 1], [], []>} : vector<16x16xf32>, vector<16x8xf32>, vector<16x8xf32> -> vector<16x8xf32>
    %119 = tpu.concatenate %102, %118 in 0 : vector<16x8xf32>, vector<16x8xf32> -> vector<32x8xf32>
    %120 = vector.extract_strided_slice %5 {offsets = [16, 0], sizes = [8, 32], strides = [1, 1]} : vector<32x32xf32> to vector<8x32xf32>
    %cst_44 = arith.constant dense<0.000000e+00> : vector<32x32xf32>
    %121 = tpu.matmul %119, %120, %cst_44 {dimension_numbers = #tpu.dot_dimension_numbers<[1], [0], [0], [1], [0, 0, 1, 1], [], []>} : vector<32x8xf32>, vector<8x32xf32>, vector<32x32xf32> -> vector<32x32xf32>
    %122 = arith.addf %86, %121 : vector<32x32xf32>
    %123 = vector.extract_strided_slice %13 {offsets = [0, 24], sizes = [16, 8], strides = [1, 1]} : vector<32x96xf32> to vector<16x8xf32>
    %124 = vector.extract_strided_slice %13 {offsets = [0, 56], sizes = [16, 8], strides = [1, 1]} : vector<32x96xf32> to vector<16x8xf32>
    %125 = vector.extract_strided_slice %13 {offsets = [0, 88], sizes = [16, 8], strides = [1, 1]} : vector<32x96xf32> to vector<16x8xf32>
    %cst_45 = arith.constant dense<0.000000e+00> : vector<16x16xf32>
    %126 = tpu.matmul %123, %124, %cst_45 {dimension_numbers = #tpu.dot_dimension_numbers<[1], [1], [0], [0], [0, 0, 1, 0], [], []>} : vector<16x8xf32>, vector<16x8xf32>, vector<16x16xf32> -> vector<16x16xf32>
    %cst_46 = arith.constant 0.353553385 : f32
    %127 = vector.broadcast %cst_46 : f32 to vector<16x16xf32>
    %128 = arith.mulf %126, %127 : vector<16x16xf32>
    %cst_47 = arith.constant dense<0xFF800000> : vector<16xf32>
    %129 = vector.multi_reduction <maximumf>, %128, %cst_47 [1] : vector<16x16xf32> to vector<16xf32>
    %130 = vector.shape_cast %129 : vector<16xf32> to vector<16x1xf32>
    %131 = vector.broadcast %130 : vector<16x1xf32> to vector<16x16xf32>
    %132 = arith.subf %128, %131 : vector<16x16xf32>
    %133 = math.exp %132 : vector<16x16xf32>
    %cst_48 = arith.constant dense<0.000000e+00> : vector<16xf32>
    %134 = vector.multi_reduction <add>, %133, %cst_48 [1] : vector<16x16xf32> to vector<16xf32>
    %135 = vector.shape_cast %134 : vector<16xf32> to vector<16x1xf32>
    %136 = vector.broadcast %135 : vector<16x1xf32> to vector<16x16xf32>
    %137 = arith.divf %133, %136 : vector<16x16xf32>
    %cst_49 = arith.constant dense<0.000000e+00> : vector<16x8xf32>
    %138 = tpu.matmul %137, %125, %cst_49 {dimension_numbers = #tpu.dot_dimension_numbers<[1], [0], [0], [1], [0, 0, 1, 1], [], []>} : vector<16x16xf32>, vector<16x8xf32>, vector<16x8xf32> -> vector<16x8xf32>
    %139 = vector.extract_strided_slice %13 {offsets = [16, 24], sizes = [16, 8], strides = [1, 1]} : vector<32x96xf32> to vector<16x8xf32>
    %140 = vector.extract_strided_slice %13 {offsets = [16, 56], sizes = [16, 8], strides = [1, 1]} : vector<32x96xf32> to vector<16x8xf32>
    %141 = vector.extract_strided_slice %13 {offsets = [16, 88], sizes = [16, 8], strides = [1, 1]} : vector<32x96xf32> to vector<16x8xf32>
    %cst_50 = arith.constant dense<0.000000e+00> : vector<16x16xf32>
    %142 = tpu.matmul %139, %140, %cst_50 {dimension_numbers = #tpu.dot_dimension_numbers<[1], [1], [0], [0], [0, 0, 1, 0], [], []>} : vector<16x8xf32>, vector<16x8xf32>, vector<16x16xf32> -> vector<16x16xf32>
    %cst_51 = arith.constant 0.353553385 : f32
    %143 = vector.broadcast %cst_51 : f32 to vector<16x16xf32>
    %144 = arith.mulf %142, %143 : vector<16x16xf32>
    %cst_52 = arith.constant dense<0xFF800000> : vector<16xf32>
    %145 = vector.multi_reduction <maximumf>, %144, %cst_52 [1] : vector<16x16xf32> to vector<16xf32>
    %146 = vector.shape_cast %145 : vector<16xf32> to vector<16x1xf32>
    %147 = vector.broadcast %146 : vector<16x1xf32> to vector<16x16xf32>
    %148 = arith.subf %144, %147 : vector<16x16xf32>
    %149 = math.exp %148 : vector<16x16xf32>
    %cst_53 = arith.constant dense<0.000000e+00> : vector<16xf32>
    %150 = vector.multi_reduction <add>, %149, %cst_53 [1] : vector<16x16xf32> to vector<16xf32>
    %151 = vector.shape_cast %150 : vector<16xf32> to vector<16x1xf32>
    %152 = vector.broadcast %151 : vector<16x1xf32> to vector<16x16xf32>
    %153 = arith.divf %149, %152 : vector<16x16xf32>
    %cst_54 = arith.constant dense<0.000000e+00> : vector<16x8xf32>
    %154 = tpu.matmul %153, %141, %cst_54 {dimension_numbers = #tpu.dot_dimension_numbers<[1], [0], [0], [1], [0, 0, 1, 1], [], []>} : vector<16x16xf32>, vector<16x8xf32>, vector<16x8xf32> -> vector<16x8xf32>
    %155 = tpu.concatenate %138, %154 in 0 : vector<16x8xf32>, vector<16x8xf32> -> vector<32x8xf32>
    %156 = vector.extract_strided_slice %5 {offsets = [24, 0], sizes = [8, 32], strides = [1, 1]} : vector<32x32xf32> to vector<8x32xf32>
    %cst_55 = arith.constant dense<0.000000e+00> : vector<32x32xf32>
    %157 = tpu.matmul %155, %156, %cst_55 {dimension_numbers = #tpu.dot_dimension_numbers<[1], [0], [0], [1], [0, 0, 1, 1], [], []>} : vector<32x8xf32>, vector<8x32xf32>, vector<32x32xf32> -> vector<32x32xf32>
    %158 = arith.addf %122, %157 : vector<32x32xf32>
    %159 = arith.addf %1, %158 : vector<32x32xf32>
    %c0_56 = arith.constant 0 : index
    %c0_57 = arith.constant 0 : index
    %160 = vector.load %arg4[%c0_56, %c0_57] : memref<1x32xf32, #tpu.memory_space<vmem>>, vector<1x32xf32>
    %161 = vector.broadcast %160 : vector<1x32xf32> to vector<32x32xf32>
    %162 = arith.addf %159, %161 : vector<32x32xf32>
    %c0_58 = arith.constant 0 : index
    %c0_59 = arith.constant 0 : index
    %163 = vector.load %arg5[%c0_58, %c0_59] : memref<1x32xf32, #tpu.memory_space<vmem>>, vector<1x32xf32>
    %c0_60 = arith.constant 0 : index
    %c0_61 = arith.constant 0 : index
    %164 = vector.load %arg6[%c0_60, %c0_61] : memref<1x32xf32, #tpu.memory_space<vmem>>, vector<1x32xf32>
    %cst_62 = arith.constant dense<0.000000e+00> : vector<32xf32>
    %165 = vector.multi_reduction <add>, %162, %cst_62 [1] : vector<32x32xf32> to vector<32xf32>
    %166 = vector.shape_cast %165 : vector<32xf32> to vector<32x1xf32>
    %cst_63 = arith.constant 3.200000e+01 : f32
    %167 = vector.broadcast %cst_63 : f32 to vector<32x1xf32>
    %168 = arith.divf %166, %167 : vector<32x1xf32>
    %169 = vector.broadcast %168 : vector<32x1xf32> to vector<32x32xf32>
    %170 = arith.subf %162, %169 : vector<32x32xf32>
    %171 = arith.mulf %170, %170 : vector<32x32xf32>
    %cst_64 = arith.constant dense<0.000000e+00> : vector<32xf32>
    %172 = vector.multi_reduction <add>, %171, %cst_64 [1] : vector<32x32xf32> to vector<32xf32>
    %173 = vector.shape_cast %172 : vector<32xf32> to vector<32x1xf32>
    %cst_65 = arith.constant 3.200000e+01 : f32
    %174 = vector.broadcast %cst_65 : f32 to vector<32x1xf32>
    %175 = arith.divf %173, %174 : vector<32x1xf32>
    %176 = vector.broadcast %168 : vector<32x1xf32> to vector<32x32xf32>
    %177 = arith.subf %162, %176 : vector<32x32xf32>
    %cst_66 = arith.constant 9.99999974E-6 : f32
    %178 = vector.broadcast %cst_66 : f32 to vector<32x1xf32>
    %179 = arith.addf %175, %178 : vector<32x1xf32>
    %180 = math.rsqrt %179 : vector<32x1xf32>
    %181 = vector.broadcast %180 : vector<32x1xf32> to vector<32x32xf32>
    %182 = arith.mulf %177, %181 : vector<32x32xf32>
    %183 = vector.broadcast %163 : vector<1x32xf32> to vector<32x32xf32>
    %184 = arith.mulf %182, %183 : vector<32x32xf32>
    %185 = vector.broadcast %164 : vector<1x32xf32> to vector<32x32xf32>
    %186 = arith.addf %184, %185 : vector<32x32xf32>
    %cst_67 = arith.constant dense<0.000000e+00> : vector<32x128xf32>
    %187 = tpu.matmul %186, %7, %cst_67 {dimension_numbers = #tpu.dot_dimension_numbers<[1], [0], [0], [1], [0, 0, 1, 1], [], []>} : vector<32x32xf32>, vector<32x128xf32>, vector<32x128xf32> -> vector<32x128xf32>
    %c0_68 = arith.constant 0 : index
    %c0_69 = arith.constant 0 : index
    %188 = vector.load %arg8[%c0_68, %c0_69] : memref<1x128xf32, #tpu.memory_space<vmem>>, vector<1x128xf32>
    %189 = vector.broadcast %188 : vector<1x128xf32> to vector<32x128xf32>
    %190 = arith.addf %187, %189 : vector<32x128xf32>
    %cst_70 = arith.constant 0.000000e+00 : f32
    %191 = vector.broadcast %cst_70 : f32 to vector<32x128xf32>
    %192 = arith.maximumf %190, %191 : vector<32x128xf32>
    %cst_71 = arith.constant dense<0.000000e+00> : vector<32x32xf32>
    %193 = tpu.matmul %192, %9, %cst_71 {dimension_numbers = #tpu.dot_dimension_numbers<[1], [0], [0], [1], [0, 0, 1, 1], [], []>} : vector<32x128xf32>, vector<128x32xf32>, vector<32x32xf32> -> vector<32x32xf32>
    %194 = arith.addf %186, %193 : vector<32x32xf32>
    %c0_72 = arith.constant 0 : index
    %c0_73 = arith.constant 0 : index
    %195 = vector.load %arg10[%c0_72, %c0_73] : memref<1x32xf32, #tpu.memory_space<vmem>>, vector<1x32xf32>
    %196 = vector.broadcast %195 : vector<1x32xf32> to vector<32x32xf32>
    %197 = arith.addf %194, %196 : vector<32x32xf32>
    %c0_74 = arith.constant 0 : index
    %c0_75 = arith.constant 0 : index
    %198 = vector.load %arg11[%c0_74, %c0_75] : memref<1x32xf32, #tpu.memory_space<vmem>>, vector<1x32xf32>
    %c0_76 = arith.constant 0 : index
    %c0_77 = arith.constant 0 : index
    %199 = vector.load %arg12[%c0_76, %c0_77] : memref<1x32xf32, #tpu.memory_space<vmem>>, vector<1x32xf32>
    %cst_78 = arith.constant dense<0.000000e+00> : vector<32xf32>
    %200 = vector.multi_reduction <add>, %197, %cst_78 [1] : vector<32x32xf32> to vector<32xf32>
    %201 = vector.shape_cast %200 : vector<32xf32> to vector<32x1xf32>
    %cst_79 = arith.constant 3.200000e+01 : f32
    %202 = vector.broadcast %cst_79 : f32 to vector<32x1xf32>
    %203 = arith.divf %201, %202 : vector<32x1xf32>
    %204 = vector.broadcast %203 : vector<32x1xf32> to vector<32x32xf32>
    %205 = arith.subf %197, %204 : vector<32x32xf32>
    %206 = arith.mulf %205, %205 : vector<32x32xf32>
    %cst_80 = arith.constant dense<0.000000e+00> : vector<32xf32>
    %207 = vector.multi_reduction <add>, %206, %cst_80 [1] : vector<32x32xf32> to vector<32xf32>
    %208 = vector.shape_cast %207 : vector<32xf32> to vector<32x1xf32>
    %cst_81 = arith.constant 3.200000e+01 : f32
    %209 = vector.broadcast %cst_81 : f32 to vector<32x1xf32>
    %210 = arith.divf %208, %209 : vector<32x1xf32>
    %211 = vector.broadcast %203 : vector<32x1xf32> to vector<32x32xf32>
    %212 = arith.subf %197, %211 : vector<32x32xf32>
    %cst_82 = arith.constant 9.99999974E-6 : f32
    %213 = vector.broadcast %cst_82 : f32 to vector<32x1xf32>
    %214 = arith.addf %210, %213 : vector<32x1xf32>
    %215 = math.rsqrt %214 : vector<32x1xf32>
    %216 = vector.broadcast %215 : vector<32x1xf32> to vector<32x32xf32>
    %217 = arith.mulf %212, %216 : vector<32x32xf32>
    %218 = vector.broadcast %198 : vector<1x32xf32> to vector<32x32xf32>
    %219 = arith.mulf %217, %218 : vector<32x32xf32>
    %220 = vector.broadcast %199 : vector<1x32xf32> to vector<32x32xf32>
    %221 = arith.addf %219, %220 : vector<32x32xf32>
    %222 = arith.truncf %221 : vector<32x32xf32> to vector<32x32xbf16>
    %c0_83 = arith.constant 0 : index
    %c0_84 = arith.constant 0 : index
    %223 = vector.load %arg13[%c0_83, %c0_84] : memref<32x32xbf16, #tpu.memory_space<vmem>>, vector<32x32xbf16>
    tpu.vector_store %arg13[%c0_83, %c0_84], %222 {strides = array<i32>} : memref<32x32xbf16, #tpu.memory_space<vmem>>, vector<32x32xbf16>,
    return
  }
}

module attributes {stable_mosaic.version = 11 : i64} {
  func.func @_mm_kernel(%arg0: i32, %arg1: memref<128x1152xbf16, #tpu.memory_space<vmem>>, %arg2: memref<1152x256xbf16, #tpu.memory_space<vmem>>, %arg3: memref<1x256xf32, #tpu.memory_space<vmem>>, %arg4: memref<128x256xbf16, #tpu.memory_space<vmem>>) attributes {dimension_semantics = [#tpu.dimension_semantics<parallel>], iteration_bounds = array<i64: 1>, scalar_prefetch = 0 : i64, scratch_operands = 0 : i64, tpu.core_type = #tpu.core_type<tc>, window_params = [{transform_indices = @transform_0, window_bounds = array<i64: 128, 1152>}, {pipeline_mode = #tpu.pipeline_mode<synchronous>, transform_indices = @transform_1, window_bounds = array<i64: 1152, 256>}, {pipeline_mode = #tpu.pipeline_mode<synchronous>, transform_indices = @transform_2, window_bounds = array<i64: 1, 256>}, {transform_indices = @transform_3, window_bounds = array<i64: 128, 256>}]} {
    %c0 = arith.constant 0 : index
    %c0_0 = arith.constant 0 : index
    %0 = vector.load %arg1[%c0, %c0_0] : memref<128x1152xbf16, #tpu.memory_space<vmem>>, vector<128x1152xbf16>
    %c0_1 = arith.constant 0 : index
    %c0_2 = arith.constant 0 : index
    %1 = vector.load %arg2[%c0_1, %c0_2] : memref<1152x256xbf16, #tpu.memory_space<vmem>>, vector<1152x256xbf16>
    %cst = arith.constant dense<0.000000e+00> : vector<128x256xf32>
    %2 = tpu.matmul %0, %1, %cst {dimension_numbers = #tpu.dot_dimension_numbers<[1], [0], [0], [1], [0, 0, 1, 1], [], []>} : vector<128x1152xbf16>, vector<1152x256xbf16>, vector<128x256xf32> -> vector<128x256xf32>
    %c0_3 = arith.constant 0 : index
    %c0_4 = arith.constant 0 : index
    %3 = vector.load %arg3[%c0_3, %c0_4] : memref<1x256xf32, #tpu.memory_space<vmem>>, vector<1x256xf32>
    %4 = vector.broadcast %3 : vector<1x256xf32> to vector<128x256xf32>
    %5 = arith.addf %2, %4 : vector<128x256xf32>
    %cst_5 = arith.constant 0.000000e+00 : f32
    %6 = vector.broadcast %cst_5 : f32 to vector<128x256xf32>
    %7 = arith.maximumf %5, %6 : vector<128x256xf32>
    %8 = arith.truncf %7 : vector<128x256xf32> to vector<128x256xbf16>
    %c0_6 = arith.constant 0 : index
    %c0_7 = arith.constant 0 : index
    %9 = vector.load %arg4[%c0_6, %c0_7] : memref<128x256xbf16, #tpu.memory_space<vmem>>, vector<128x256xbf16>
    tpu.vector_store %arg4[%c0_6, %c0_7], %8 {strides = array<i32>} : memref<128x256xbf16, #tpu.memory_space<vmem>>, vector<128x256xbf16>,
    return
  }
  func.func @transform_0(%arg0: i32) -> (i32, i32) {
    %c0_i32 = arith.constant 0 : i32
    %c0_i32_0 = arith.constant 0 : i32
    return %arg0, %c0_i32 : i32, i32
  }
  func.func @transform_1(%arg0: i32) -> (i32, i32) {
    %c0_i32 = arith.constant 0 : i32
    %c0_i32_0 = arith.constant 0 : i32
    %c0_i32_1 = arith.constant 0 : i32
    return %c0_i32, %c0_i32_0 : i32, i32
  }
  func.func @transform_2(%arg0: i32) -> (i32, i32) {
    %c0_i32 = arith.constant 0 : i32
    %c0_i32_0 = arith.constant 0 : i32
    %c0_i32_1 = arith.constant 0 : i32
    return %c0_i32, %c0_i32_0 : i32, i32
  }
  func.func @transform_3(%arg0: i32) -> (i32, i32) {
    %c0_i32 = arith.constant 0 : i32
    %c0_i32_0 = arith.constant 0 : i32
    return %arg0, %c0_i32 : i32, i32
  }
}

module attributes {stable_mosaic.version = 11 : i64} {
  func.func @_mm_kernel(%arg0: i32, %arg1: memref<256x576xbf16, #tpu.memory_space<vmem>>, %arg2: memref<576x1xbf16, #tpu.memory_space<vmem>>, %arg3: memref<1x1xf32, #tpu.memory_space<vmem>>, %arg4: memref<256x1xf32, #tpu.memory_space<vmem>>) attributes {dimension_semantics = [#tpu.dimension_semantics<parallel>], iteration_bounds = array<i64: 2>, scalar_prefetch = 0 : i64, scratch_operands = 0 : i64, tpu.core_type = #tpu.core_type<tc>, window_params = [{transform_indices = @transform_0, window_bounds = array<i64: 256, 576>}, {pipeline_mode = #tpu.pipeline_mode<synchronous>, transform_indices = @transform_1, window_bounds = array<i64: 576, 1>}, {pipeline_mode = #tpu.pipeline_mode<synchronous>, transform_indices = @transform_2, window_bounds = array<i64: 1, 1>}, {transform_indices = @transform_3, window_bounds = array<i64: 256, 1>}]} {
    %c0 = arith.constant 0 : index
    %c0_0 = arith.constant 0 : index
    %0 = vector.load %arg1[%c0, %c0_0] : memref<256x576xbf16, #tpu.memory_space<vmem>>, vector<256x576xbf16>
    %c0_1 = arith.constant 0 : index
    %c0_2 = arith.constant 0 : index
    %1 = vector.load %arg2[%c0_1, %c0_2] : memref<576x1xbf16, #tpu.memory_space<vmem>>, vector<576x1xbf16>
    %cst = arith.constant dense<0.000000e+00> : vector<256x1xf32>
    %2 = tpu.matmul %0, %1, %cst {dimension_numbers = #tpu.dot_dimension_numbers<[1], [0], [0], [1], [0, 0, 1, 1], [], []>} : vector<256x576xbf16>, vector<576x1xbf16>, vector<256x1xf32> -> vector<256x1xf32>
    %c0_3 = arith.constant 0 : index
    %c0_4 = arith.constant 0 : index
    %3 = vector.load %arg3[%c0_3, %c0_4] : memref<1x1xf32, #tpu.memory_space<vmem>>, vector<1x1xf32>
    %4 = vector.broadcast %3 : vector<1x1xf32> to vector<256x1xf32>
    %5 = arith.addf %2, %4 : vector<256x1xf32>
    %6 = arith.negf %5 : vector<256x1xf32>
    %7 = math.exp %6 : vector<256x1xf32>
    %cst_5 = arith.constant 1.000000e+00 : f32
    %8 = vector.broadcast %cst_5 : f32 to vector<256x1xf32>
    %9 = arith.addf %8, %7 : vector<256x1xf32>
    %10 = arith.divf %8, %9 : vector<256x1xf32>
    %c0_6 = arith.constant 0 : index
    %c0_7 = arith.constant 0 : index
    %11 = vector.load %arg4[%c0_6, %c0_7] : memref<256x1xf32, #tpu.memory_space<vmem>>, vector<256x1xf32>
    tpu.vector_store %arg4[%c0_6, %c0_7], %10 {strides = array<i32>} : memref<256x1xf32, #tpu.memory_space<vmem>>, vector<256x1xf32>,
    return
  }
  func.func @transform_0(%arg0: i32) -> (i32, i32) {
    %c0_i32 = arith.constant 0 : i32
    %c0_i32_0 = arith.constant 0 : i32
    return %arg0, %c0_i32 : i32, i32
  }
  func.func @transform_1(%arg0: i32) -> (i32, i32) {
    %c0_i32 = arith.constant 0 : i32
    %c0_i32_0 = arith.constant 0 : i32
    %c0_i32_1 = arith.constant 0 : i32
    return %c0_i32, %c0_i32_0 : i32, i32
  }
  func.func @transform_2(%arg0: i32) -> (i32, i32) {
    %c0_i32 = arith.constant 0 : i32
    %c0_i32_0 = arith.constant 0 : i32
    %c0_i32_1 = arith.constant 0 : i32
    return %c0_i32, %c0_i32_0 : i32, i32
  }
  func.func @transform_3(%arg0: i32) -> (i32, i32) {
    %c0_i32 = arith.constant 0 : i32
    %c0_i32_0 = arith.constant 0 : i32
    return %arg0, %c0_i32 : i32, i32
  }
}

</mosaic_0001>

<llo_original>
// kernel: depth_star_forward.14
$region0: #{depth_star_forward.14}
  #allocation0 [shape = 'u32[]', space=smem, size = 0x4, offset = 0x4, fixed_abs, tag = 'smem constant byte address 0x4 - core index']
  #allocation1 [shape = 'u32[72,128]{1,0:T(1,128)}', space=vmem, size = 0x9000, scoped, tag = 'internal scratch']
  %s0 = inlined_call_operand.vmem [shape: bf16[512,27], index: 0, kind: input, shape index: {}]
  %s1 = inlined_call_operand.vmem [shape: bf16[27,64], index: 1, kind: input, shape index: {}]
  %s2 = inlined_call_operand.vmem [shape: f32[1,64], index: 2, kind: input, shape index: {}]
  %s3 = inlined_call_operand.vmem [shape: bf16[512,64], index: 3, kind: output, shape index: {}]
  %s4 = sld [smem:[#allocation0]]
  $region45: #{depth_star_forward.14} parent=0
    _
  %s6 = ssub.s32 1, %s4
  %s7 = scalar_select 0, %s6, %s4
  loop: start=0, step=1, limit=4
  $region2: #{depth_star_forward.14} parent=0 // loop_pre_header
    _
  $region3: #{depth_star_forward.14} parent=0 // loop_header
    %s9 = sphi 0, %s13
    %p10 = scmp.ge.s32.totalorder %s9, 4
    %s19 = sphi 0, %s21
    %s22 = sphi 0, %s19
    %s23 = sphi 0, %s22
    %s39 = sphi 0, %s23
    %s43 = sphi 0, %s43
    %s45 = sphi 0, %s43
    %s46 = sphi 0, %s45
    %s60 = sphi 0, %s46
    %s64 = sphi 0, %s64
    %s66 = sphi 0, %s64
    %s67 = sphi 0, %s66
    %s81 = sphi 0, %s67
    %s87 = sphi 0, %s89
    %s90 = sphi 0, %s87
    %s91 = sphi 0, %s90
    %s107 = sphi 0, %s91
  $region4: #{depth_star_forward.14} parent=0 // loop_header_branch
    %12 = sbr.rel (%p10) target = $region8
  $region5: #{depth_star_forward.14} parent=0 // loop_body
    %s14 = ssub.s32 %s9, 1
    %s15 = ssub.s32 %s9, 2
    %s16 = sadd.s32 %s9, 1
    %s17 = ssub.s32 %s9, %s16
    %p18 = scmp.eq.s32.totalorder %s17, 0
    %s20 = sadd.s32 %s19, 1
    %s21 = scalar_select %p18, %s19, %s20
    %p24 = pneg %p18
    %p25 = scmp.eq.s32.totalorder %s9, 1
    %p26 = por %p24, %p25
    %p27 = scmp.ne.s32.totalorder %s19, %s22
    %p28 = scmp.eq.s32.totalorder %s9, 0
    %p29 = por %p27, %p28
    %p30 = scmp.ne.s32.totalorder %s19, %s22
    %p31 = scmp.eq.s32.totalorder %s14, 1
    %p32 = por %p30, %p31
    %p33 = scmp.ne.s32.totalorder %s22, %s23
    %p34 = scmp.eq.s32.totalorder %s14, 0
    %p35 = por %p33, %p34
    %p36 = scmp.ne.s32.totalorder %s22, %s23
    %p37 = scmp.eq.s32.totalorder %s15, 1
    %p38 = por %p36, %p37
    %p40 = scmp.ne.s32.totalorder %s23, %s39
    %p41 = scmp.eq.s32.totalorder %s15, 0
    %p42 = por %p40, %p41
    %s44 = sadd.s32 %s43, 1
    %p47 = scmp.eq.s32.totalorder %s9, 1
    %p48 = scmp.ne.s32.totalorder %s43, %s45
    %p49 = scmp.eq.s32.totalorder %s9, 0
    %p50 = por %p48, %p49
    %p51 = scmp.ne.s32.totalorder %s43, %s45
    %p52 = scmp.eq.s32.totalorder %s14, 1
    %p53 = por %p51, %p52
    %p54 = scmp.ne.s32.totalorder %s45, %s46
    %p55 = scmp.eq.s32.totalorder %s14, 0
    %p56 = por %p54, %p55
    %p57 = scmp.ne.s32.totalorder %s45, %s46
    %p58 = scmp.eq.s32.totalorder %s15, 1
    %p59 = por %p57, %p58
    %p61 = scmp.ne.s32.totalorder %s46, %s60
    %p62 = scmp.eq.s32.totalorder %s15, 0
    %p63 = por %p61, %p62
    %s65 = sadd.s32 %s64, 1
    %p68 = scmp.eq.s32.totalorder %s9, 1
    %p69 = scmp.ne.s32.totalorder %s64, %s66
    %p70 = scmp.eq.s32.totalorder %s9, 0
    %p71 = por %p69, %p70
    %p72 = scmp.ne.s32.totalorder %s64, %s66
    %p73 = scmp.eq.s32.totalorder %s14, 1
    %p74 = por %p72, %p73
    %p75 = scmp.ne.s32.totalorder %s66, %s67
    %p76 = scmp.eq.s32.totalorder %s14, 0
    %p77 = por %p75, %p76
    %p78 = scmp.ne.s32.totalorder %s66, %s67
    %p79 = scmp.eq.s32.totalorder %s15, 1
    %p80 = por %p78, %p79
    %p82 = scmp.ne.s32.totalorder %s67, %s81
    %p83 = scmp.eq.s32.totalorder %s15, 0
    %p84 = por %p82, %p83
    %s85 = ssub.s32 %s9, %s16
    %p86 = scmp.eq.s32.totalorder %s85, 0
    %s88 = sadd.s32 %s87, 1
    %s89 = scalar_select %p86, %s87, %s88
    %p92 = pneg %p86
    %p93 = scmp.eq.s32.totalorder %s9, 1
    %p94 = por %p92, %p93
    %p95 = scmp.ne.s32.totalorder %s87, %s90
    %p96 = scmp.eq.s32.totalorder %s9, 0
    %p97 = por %p95, %p96
    %p98 = scmp.ne.s32.totalorder %s87, %s90
    %p99 = scmp.eq.s32.totalorder %s14, 1
    %p100 = por %p98, %p99
    %p101 = scmp.ne.s32.totalorder %s90, %s91
    %p102 = scmp.eq.s32.totalorder %s14, 0
    %p103 = por %p101, %p102
    %p104 = scmp.ne.s32.totalorder %s90, %s91
    %p105 = scmp.eq.s32.totalorder %s15, 1
    %p106 = por %p104, %p105
    %p108 = scmp.ne.s32.totalorder %s91, %s107
    %p109 = scmp.eq.s32.totalorder %s15, 0
    %p110 = por %p108, %p109
    %p111 = scmp.le.s32.totalorder 1, %s9
    %p112 = scmp.lt.s32.totalorder %s9, 3
    %p113 = pnand %p111, %p112
    %p114 = pneg %p113
    // Predicated region
    $region9: #{depth_star_forward.14} parent=5 // pred_check
      _
    $region10: #{depth_star_forward.14} parent=5 // pred_check_branch
      %116 = sbr.rel (%p113) target = $region12
    $region11: #{depth_star_forward.14} parent=5 // pred_region
      %s117 = ssub.s32 %s9, 1
      // Predicated region
      $region13: #{depth_star_forward.14} parent=11 // pred_check
        %p118 = pneg %p56
      $region14: #{depth_star_forward.14} parent=11 // pred_check_branch
        %120 = sbr.rel (%p118) target = $region16
      $region15: #{depth_star_forward.14} parent=11 // pred_region
        _
      $region16: #{depth_star_forward.14} parent=11 // pred_fallthru
        _
      // Predicated region
      $region17: #{depth_star_forward.14} parent=11 // pred_check
        %p121 = pneg %p77
      $region18: #{depth_star_forward.14} parent=11 // pred_check_branch
        %123 = sbr.rel (%p121) target = $region20
      $region19: #{depth_star_forward.14} parent=11 // pred_region
        _
      $region20: #{depth_star_forward.14} parent=11 // pred_fallthru
        _
    $region12: #{depth_star_forward.14} parent=5 // pred_fallthru
      _
    %p124 = scmp.lt.s32.totalorder %s9, 2
    // Predicated region
    $region21: #{depth_star_forward.14} parent=5 // pred_check
      %p125 = pneg %p124
    $region22: #{depth_star_forward.14} parent=5 // pred_check_branch
      %127 = sbr.rel (%p125) target = $region24
    $region23: #{depth_star_forward.14} parent=5 // pred_region
      // Predicated region
      $region25: #{depth_star_forward.14} parent=23 // pred_check
        %p128 = pneg %p29
      $region26: #{depth_star_forward.14} parent=23 // pred_check_branch
        %130 = sbr.rel (%p128) target = $region28
      $region27: #{depth_star_forward.14} parent=23 // pred_region
        %s131 = smul.u32 32, %s9
        %p132 = scmp.lt.s32.totalorder %s131, 63
        %s133 = scalar_select %p132, %s131, 63
        %s134 = smul.addr %s133, 4
        %s135 = scalar_lea.vmem %s0, %s134
        %s136 = smul.u32 32, %s9
      $region28: #{depth_star_forward.14} parent=23 // pred_fallthru
        _
    $region24: #{depth_star_forward.14} parent=5 // pred_fallthru
      _
    %p137 = scmp.le.s32.totalorder 1, %s9
    %p138 = scmp.lt.s32.totalorder %s9, 3
    %p139 = pnand %p137, %p138
    %p140 = pneg %p139
    // Predicated region
    $region29: #{depth_star_forward.14} parent=5 // pred_check
      _
    $region30: #{depth_star_forward.14} parent=5 // pred_check_branch
      %142 = sbr.rel (%p139) target = $region32
    $region31: #{depth_star_forward.14} parent=5 // pred_region
      %s143 = ssub.s32 %s9, 1
      %s144 = smul.u32 32, %s14
      %p145 = scmp.lt.s32.totalorder %s144, 63
      %s146 = scalar_select %p145, %s144, 63
      %s147 = smul.addr %s146, 4
      %s148 = scalar_lea.vmem %s0, %s147
      %p149 = pneg %p35
      %p150 = pneg %p32
      %p151 = pneg %p56
      %p152 = pneg %p53
      %p153 = pneg %p77
      %p154 = pneg %p74
      %p155 = pneg %p103
      %p156 = pneg %p100
      %s157 = smul.u32 32, %s14
      %p158 = scmp.lt.s32.totalorder %s157, 63
      %s159 = scalar_select %p158, %s157, 63
      %s160 = smul.addr %s159, 4
      %s161 = scalar_lea.vmem %s3, %s160
      %s162 = smul.u32 32, %s14
      %p163 = scmp.lt.s32.totalorder %s162, 63
      %s164 = scalar_select %p163, %s162, 63
      %s165 = smul.addr %s164, 4
      %s166 = scalar_lea.vmem %s0, %s165
      %s167 = smul.u32 32, %s14
      %s168 = smul.u32 32, %s14
      %p169 = scmp.lt.s32.totalorder %s168, 63
      %s170 = scalar_select %p169, %s168, 63
      %s171 = smul.addr %s170, 4
      %s172 = scalar_lea.vmem %s3, %s171
      %s173 = smul.u32 32, %s14
      %v175 = vld [vmem:[%s166] sm:$0xf]
      %v176 = vld [vmem:[%s166 + $0x4] sm:$0xf]
      %v177 = vld [vmem:[%s166 + $0x8] sm:$0xf]
      %v178 = vld [vmem:[%s166 + $0xc] sm:$0xf]
      %v179 = vld [vmem:[%s166 + $0x10] sm:$0xf]
      %v180 = vld [vmem:[%s166 + $0x14] sm:$0xf]
      %v181 = vld [vmem:[%s166 + $0x18] sm:$0xf]
      %v182 = vld [vmem:[%s166 + $0x1c] sm:$0xf]
      %v183 = vld [vmem:[%s166 + $0x20] sm:$0xf]
      %v184 = vld [vmem:[%s166 + $0x24] sm:$0xf]
      %v185 = vld [vmem:[%s166 + $0x28] sm:$0xf]
      %v186 = vld [vmem:[%s166 + $0x2c] sm:$0xf]
      %v187 = vld [vmem:[%s166 + $0x30] sm:$0xf]
      %v188 = vld [vmem:[%s166 + $0x34] sm:$0xf]
      %v189 = vld [vmem:[%s166 + $0x38] sm:$0xf]
      %v190 = vld [vmem:[%s166 + $0x3c] sm:$0xf]
      %v191 = vld [vmem:[%s166 + $0x40] sm:$0xf]
      %v192 = vld [vmem:[%s166 + $0x44] sm:$0xf]
      %v193 = vld [vmem:[%s166 + $0x48] sm:$0xf]
      %v194 = vld [vmem:[%s166 + $0x4c] sm:$0xf]
      %v195 = vld [vmem:[%s166 + $0x50] sm:$0xf]
      %v196 = vld [vmem:[%s166 + $0x54] sm:$0xf]
      %v197 = vld [vmem:[%s166 + $0x58] sm:$0xf]
      %v198 = vld [vmem:[%s166 + $0x5c] sm:$0xf]
      %v199 = vld [vmem:[%s166 + $0x60] sm:$0xf]
      %v200 = vld [vmem:[%s166 + $0x64] sm:$0xf]
      %v201 = vld [vmem:[%s166 + $0x68] sm:$0xf]
      %v202 = vld [vmem:[%s166 + $0x6c] sm:$0xf]
      %v203 = vld [vmem:[%s166 + $0x70] sm:$0xf]
      %v204 = vld [vmem:[%s166 + $0x74] sm:$0xf]
      %v205 = vld [vmem:[%s166 + $0x78] sm:$0xf]
      %v206 = vld [vmem:[%s166 + $0x7c] sm:$0xf]
      %v207 = vld [vmem:[%s1] sm:$0xf]
      %v208 = vld [vmem:[%s1 + $0x4] sm:$0xf]
      %v209 = vld [vmem:[%s1 + $0x8] sm:$0xf]
      %v210 = vld [vmem:[%s1 + $0xc] sm:$0x3]
      %v211 = vld [vmem:[%s2] sm:$0x1]
      %v213 = vperm.slane %v211, 0
      %v247 = vunpack.c.l.b16 %v175
      %v248 = vunpack.c.l.b16 %v176
      %v249 = vunpack.c.l.b16 %v177
      %v250 = vunpack.c.l.b16 %v178
      %v251 = vunpack.c.l.b16 %v179
      %v252 = vunpack.c.l.b16 %v180
      %v253 = vunpack.c.l.b16 %v181
      %v254 = vunpack.c.l.b16 %v182
      %v255 = vunpack.c.l.b16 %v183
      %v256 = vunpack.c.l.b16 %v184
      %v257 = vunpack.c.l.b16 %v185
      %v258 = vunpack.c.l.b16 %v186
      %v259 = vunpack.c.l.b16 %v187
      %v260 = vunpack.c.l.b16 %v188
      %v261 = vunpack.c.l.b16 %v189
      %v262 = vunpack.c.l.b16 %v190
      %v263 = vunpack.c.l.b16 %v191
      %v264 = vunpack.c.l.b16 %v192
      %v265 = vunpack.c.l.b16 %v193
      %v266 = vunpack.c.l.b16 %v194
      %v267 = vunpack.c.l.b16 %v195
      %v268 = vunpack.c.l.b16 %v196
      %v269 = vunpack.c.l.b16 %v197
      %v270 = vunpack.c.l.b16 %v198
      %v271 = vunpack.c.l.b16 %v199
      %v272 = vunpack.c.l.b16 %v200
      %v273 = vunpack.c.l.b16 %v201
      %v274 = vunpack.c.l.b16 %v202
      %v275 = vunpack.c.l.b16 %v203
      %v276 = vunpack.c.l.b16 %v204
      %v277 = vunpack.c.l.b16 %v205
      %v278 = vunpack.c.l.b16 %v206
      %v279 = vpack.c.b16 %v248, %v247
      %v280 = vpack.c.b16 %v250, %v249
      %v281 = vpack.c.b16 %v252, %v251
      %v282 = vpack.c.b16 %v254, %v253
      %v283 = vpack.c.b16 %v256, %v255
      %v284 = vpack.c.b16 %v258, %v257
      %v285 = vpack.c.b16 %v260, %v259
      %v286 = vpack.c.b16 %v262, %v261
      %v287 = vpack.c.b16 %v264, %v263
      %v288 = vpack.c.b16 %v266, %v265
      %v289 = vpack.c.b16 %v268, %v267
      %v290 = vpack.c.b16 %v270, %v269
      %v291 = vpack.c.b16 %v272, %v271
      %v292 = vpack.c.b16 %v274, %v273
      %v293 = vpack.c.b16 %v276, %v275
      %v294 = vpack.c.b16 %v278, %v277
      %v299 = vunpack.c.l.b16 %v207
      %v300 = vunpack.c.l.b16 %v208
      %v301 = vunpack.c.l.b16 %v209
      %v302 = vunpack.c.l.b16 %v210
      %v303 = vpack.c.b16 %v300, %v299
      %v304 = vpack.c.b16 %v302, %v301
      %vm306 = vcmask 220160
      %v308 = vsel %vm306, %v279, 0
      %v311 = vsel %vm306, %v280, 0
      %v314 = vsel %vm306, %v281, 0
      %v317 = vsel %vm306, %v282, 0
      %v320 = vsel %vm306, %v283, 0
      %v323 = vsel %vm306, %v284, 0
      %v326 = vsel %vm306, %v285, 0
      %v329 = vsel %vm306, %v286, 0
      %v332 = vsel %vm306, %v287, 0
      %v335 = vsel %vm306, %v288, 0
      %v338 = vsel %vm306, %v289, 0
      %v341 = vsel %vm306, %v290, 0
      %v344 = vsel %vm306, %v291, 0
      %v347 = vsel %vm306, %v292, 0
      %v350 = vsel %vm306, %v293, 0
      %v353 = vsel %vm306, %v294, 0
      %vm355 = vcmask 1044480
      %vm356 = vcmask 1045504
      %v357 = vsel %vm355, 4294967295, 65535
      %v358 = vsel %vm356, %v357, 0
      %v360 = vand.u32 %v304, %v358
      %362 = vmatpush.bf16.msra.mxu0 0
      %363 = vmatpush.bf16.msra.mxu0 0
      %364 = vmatpush.bf16.msra.mxu0 0
      %365 = vmatpush.bf16.msra.mxu0 0
      %366 = vmatpush.bf16.msra.mxu0 0
      %367 = vmatpush.bf16.msra.mxu0 0
      %368 = vmatpush.bf16.msra.mxu0 %v360
      %369 = vmatpush.bf16.msra.mxu0 %v303
      %370 = vmatmul.bf16.gmra.mxu0 %v308
      %v371 = vpop.f32.mrf.mxu0
      %v372 = vadd.f32 %v213, %v371
      %v373 = vpop.f32.mrf.mxu0
      %v374 = vadd.f32 %v213, %v373
      %375 = vmatmul.bf16.gmra.mxu0 %v311
      %v376 = vpop.f32.mrf.mxu0
      %v377 = vadd.f32 %v213, %v376
      %v378 = vpop.f32.mrf.mxu0
      %v379 = vadd.f32 %v213, %v378
      %380 = vmatmul.bf16.gmra.mxu0 %v314
      %v381 = vpop.f32.mrf.mxu0
      %v382 = vadd.f32 %v213, %v381
      %v383 = vpop.f32.mrf.mxu0
      %v384 = vadd.f32 %v213, %v383
      %385 = vmatmul.bf16.gmra.mxu0 %v317
      %v386 = vpop.f32.mrf.mxu0
      %v387 = vadd.f32 %v213, %v386
      %v388 = vpop.f32.mrf.mxu0
      %v389 = vadd.f32 %v213, %v388
      %390 = vmatmul.bf16.gmra.mxu0 %v320
      %v391 = vpop.f32.mrf.mxu0
      %v392 = vadd.f32 %v213, %v391
      %v393 = vpop.f32.mrf.mxu0
      %v394 = vadd.f32 %v213, %v393
      %395 = vmatmul.bf16.gmra.mxu0 %v323
      %v396 = vpop.f32.mrf.mxu0
      %v397 = vadd.f32 %v213, %v396
      %v398 = vpop.f32.mrf.mxu0
      %v399 = vadd.f32 %v213, %v398
      %400 = vmatmul.bf16.gmra.mxu0 %v326
      %v401 = vpop.f32.mrf.mxu0
      %v402 = vadd.f32 %v213, %v401
      %v403 = vpop.f32.mrf.mxu0
      %v404 = vadd.f32 %v213, %v403
      %405 = vmatmul.bf16.gmra.mxu0 %v329
      %v406 = vpop.f32.mrf.mxu0
      %v407 = vadd.f32 %v213, %v406
      %v408 = vpop.f32.mrf.mxu0
      %v409 = vadd.f32 %v213, %v408
      %410 = vmatmul.bf16.gmra.mxu0 %v332
      %v411 = vpop.f32.mrf.mxu0
      %v412 = vadd.f32 %v213, %v411
      %v413 = vpop.f32.mrf.mxu0
      %v414 = vadd.f32 %v213, %v413
      %415 = vmatmul.bf16.gmra.mxu0 %v335
      %v416 = vpop.f32.mrf.mxu0
      %v417 = vadd.f32 %v213, %v416
      %v418 = vpop.f32.mrf.mxu0
      %v419 = vadd.f32 %v213, %v418
      %420 = vmatmul.bf16.gmra.mxu0 %v338
      %v421 = vpop.f32.mrf.mxu0
      %v422 = vadd.f32 %v213, %v421
      %v423 = vpop.f32.mrf.mxu0
      %v424 = vadd.f32 %v213, %v423
      %425 = vmatmul.bf16.gmra.mxu0 %v341
      %v426 = vpop.f32.mrf.mxu0
      %v427 = vadd.f32 %v213, %v426
      %v428 = vpop.f32.mrf.mxu0
      %v429 = vadd.f32 %v213, %v428
      %430 = vmatmul.bf16.gmra.mxu0 %v344
      %v431 = vpop.f32.mrf.mxu0
      %v432 = vadd.f32 %v213, %v431
      %v433 = vpop.f32.mrf.mxu0
      %v434 = vadd.f32 %v213, %v433
      %435 = vmatmul.bf16.gmra.mxu0 %v347
      %v436 = vpop.f32.mrf.mxu0
      %v437 = vadd.f32 %v213, %v436
      %v438 = vpop.f32.mrf.mxu0
      %v439 = vadd.f32 %v213, %v438
      %440 = vmatmul.bf16.gmra.mxu0 %v350
      %v441 = vpop.f32.mrf.mxu0
      %v442 = vadd.f32 %v213, %v441
      %v443 = vpop.f32.mrf.mxu0
      %v444 = vadd.f32 %v213, %v443
      %445 = vmatmul.bf16.gmra.mxu0 %v353
      %v446 = vpop.f32.mrf.mxu0
      %v447 = vadd.f32 %v213, %v446
      %v448 = vpop.f32.mrf.mxu0
      %v449 = vadd.f32 %v213, %v448
      %450 = vdwg.mxu0
      %v451 = vmax.f32 %v372, 0.0
      %v452 = vmax.f32 %v374, 0.0
      %v453 = vmax.f32 %v377, 0.0
      %v454 = vmax.f32 %v379, 0.0
      %v455 = vmax.f32 %v382, 0.0
      %v456 = vmax.f32 %v384, 0.0
      %v457 = vmax.f32 %v387, 0.0
      %v458 = vmax.f32 %v389, 0.0
      %v459 = vmax.f32 %v392, 0.0
      %v460 = vmax.f32 %v394, 0.0
      %v461 = vmax.f32 %v397, 0.0
      %v462 = vmax.f32 %v399, 0.0
      %v463 = vmax.f32 %v402, 0.0
      %v464 = vmax.f32 %v404, 0.0
      %v465 = vmax.f32 %v407, 0.0
      %v466 = vmax.f32 %v409, 0.0
      %v467 = vmax.f32 %v412, 0.0
      %v468 = vmax.f32 %v414, 0.0
      %v469 = vmax.f32 %v417, 0.0
      %v470 = vmax.f32 %v419, 0.0
      %v471 = vmax.f32 %v422, 0.0
      %v472 = vmax.f32 %v424, 0.0
      %v473 = vmax.f32 %v427, 0.0
      %v474 = vmax.f32 %v429, 0.0
      %v475 = vmax.f32 %v432, 0.0
      %v476 = vmax.f32 %v434, 0.0
      %v477 = vmax.f32 %v437, 0.0
      %v478 = vmax.f32 %v439, 0.0
      %v479 = vmax.f32 %v442, 0.0
      %v480 = vmax.f32 %v444, 0.0
      %v481 = vmax.f32 %v447, 0.0
      %v482 = vmax.f32 %v449, 0.0
      %v483 = vpack.c.bf16 %v451, %v451
      %v484 = vpack.c.bf16 %v452, %v452
      %v485 = vpack.c.bf16 %v453, %v453
      %v486 = vpack.c.bf16 %v454, %v454
      %v487 = vpack.c.bf16 %v455, %v455
      %v488 = vpack.c.bf16 %v456, %v456
      %v489 = vpack.c.bf16 %v457, %v457
      %v490 = vpack.c.bf16 %v458, %v458
      %v491 = vpack.c.bf16 %v459, %v459
      %v492 = vpack.c.bf16 %v460, %v460
      %v493 = vpack.c.bf16 %v461, %v461
      %v494 = vpack.c.bf16 %v462, %v462
      %v495 = vpack.c.bf16 %v463, %v463
      %v496 = vpack.c.bf16 %v464, %v464
      %v497 = vpack.c.bf16 %v465, %v465
      %v498 = vpack.c.bf16 %v466, %v466
      %v499 = vpack.c.bf16 %v467, %v467
      %v500 = vpack.c.bf16 %v468, %v468
      %v501 = vpack.c.bf16 %v469, %v469
      %v502 = vpack.c.bf16 %v470, %v470
      %v503 = vpack.c.bf16 %v471, %v471
      %v504 = vpack.c.bf16 %v472, %v472
      %v505 = vpack.c.bf16 %v473, %v473
      %v506 = vpack.c.bf16 %v474, %v474
      %v507 = vpack.c.bf16 %v475, %v475
      %v508 = vpack.c.bf16 %v476, %v476
      %v509 = vpack.c.bf16 %v477, %v477
      %v510 = vpack.c.bf16 %v478, %v478
      %v511 = vpack.c.bf16 %v479, %v479
      %v512 = vpack.c.bf16 %v480, %v480
      %v513 = vpack.c.bf16 %v481, %v481
      %v514 = vpack.c.bf16 %v482, %v482
      %vm515 = vcmask 519168
      %516 = vst.msk [vmem:[%s172] sm:$0xf] %vm515, %v483
      %517 = vst.msk [vmem:[%s172 + $0x4] sm:$0xf] %vm515, %v484
      %518 = vst.msk [vmem:[%s172 + $0x8] sm:$0xf] %vm515, %v485
      %519 = vst.msk [vmem:[%s172 + $0xc] sm:$0xf] %vm515, %v486
      %520 = vst.msk [vmem:[%s172 + $0x10] sm:$0xf] %vm515, %v487
      %521 = vst.msk [vmem:[%s172 + $0x14] sm:$0xf] %vm515, %v488
      %522 = vst.msk [vmem:[%s172 + $0x18] sm:$0xf] %vm515, %v489
      %523 = vst.msk [vmem:[%s172 + $0x1c] sm:$0xf] %vm515, %v490
      %524 = vst.msk [vmem:[%s172 + $0x20] sm:$0xf] %vm515, %v491
      %525 = vst.msk [vmem:[%s172 + $0x24] sm:$0xf] %vm515, %v492
      %526 = vst.msk [vmem:[%s172 + $0x28] sm:$0xf] %vm515, %v493
      %527 = vst.msk [vmem:[%s172 + $0x2c] sm:$0xf] %vm515, %v494
      %528 = vst.msk [vmem:[%s172 + $0x30] sm:$0xf] %vm515, %v495
      %529 = vst.msk [vmem:[%s172 + $0x34] sm:$0xf] %vm515, %v496
      %530 = vst.msk [vmem:[%s172 + $0x38] sm:$0xf] %vm515, %v497
      %531 = vst.msk [vmem:[%s172 + $0x3c] sm:$0xf] %vm515, %v498
      %532 = vst.msk [vmem:[%s172 + $0x40] sm:$0xf] %vm515, %v499
      %533 = vst.msk [vmem:[%s172 + $0x44] sm:$0xf] %vm515, %v500
      %534 = vst.msk [vmem:[%s172 + $0x48] sm:$0xf] %vm515, %v501
      %535 = vst.msk [vmem:[%s172 + $0x4c] sm:$0xf] %vm515, %v502
      %536 = vst.msk [vmem:[%s172 + $0x50] sm:$0xf] %vm515, %v503
      %537 = vst.msk [vmem:[%s172 + $0x54] sm:$0xf] %vm515, %v504
      %538 = vst.msk [vmem:[%s172 + $0x58] sm:$0xf] %vm515, %v505
      %539 = vst.msk [vmem:[%s172 + $0x5c] sm:$0xf] %vm515, %v506
      %540 = vst.msk [vmem:[%s172 + $0x60] sm:$0xf] %vm515, %v507
      %541 = vst.msk [vmem:[%s172 + $0x64] sm:$0xf] %vm515, %v508
      %542 = vst.msk [vmem:[%s172 + $0x68] sm:$0xf] %vm515, %v509
      %543 = vst.msk [vmem:[%s172 + $0x6c] sm:$0xf] %vm515, %v510
      %544 = vst.msk [vmem:[%s172 + $0x70] sm:$0xf] %vm515, %v511
      %545 = vst.msk [vmem:[%s172 + $0x74] sm:$0xf] %vm515, %v512
      %546 = vst.msk [vmem:[%s172 + $0x78] sm:$0xf] %vm515, %v513
      %547 = vst.msk [vmem:[%s172 + $0x7c] sm:$0xf] %vm515, %v514
      %s548 = smul.u32 32, %s14
      %p549 = scmp.lt.s32.totalorder %s548, 63
      %s550 = scalar_select %p549, %s548, 63
      %s551 = smul.addr %s550, 4
      %s552 = scalar_lea.vmem %s3, %s551
      // Predicated region
      $region33: #{depth_star_forward.14} parent=31 // pred_check
        %p553 = pneg %p100
      $region34: #{depth_star_forward.14} parent=31 // pred_check_branch
        %555 = sbr.rel (%p553) target = $region36
      $region35: #{depth_star_forward.14} parent=31 // pred_region
        %s556 = smul.u32 32, %s14
      $region36: #{depth_star_forward.14} parent=31 // pred_fallthru
        _
    $region32: #{depth_star_forward.14} parent=5 // pred_fallthru
      _
    %p557 = scmp.le.s32.totalorder 2, %s9
    // Predicated region
    $region37: #{depth_star_forward.14} parent=5 // pred_check
      %p558 = pneg %p557
    $region38: #{depth_star_forward.14} parent=5 // pred_check_branch
      %560 = sbr.rel (%p558) target = $region40
    $region39: #{depth_star_forward.14} parent=5 // pred_region
      %s561 = ssub.s32 %s9, 2
      // Predicated region
      $region41: #{depth_star_forward.14} parent=39 // pred_check
        %p562 = pneg %p106
      $region42: #{depth_star_forward.14} parent=39 // pred_check_branch
        %564 = sbr.rel (%p562) target = $region44
      $region43: #{depth_star_forward.14} parent=39 // pred_region
        %s565 = smul.u32 32, %s15
        %p566 = scmp.lt.s32.totalorder %s565, 63
        %s567 = scalar_select %p566, %s565, 63
        %s568 = smul.addr %s567, 4
        %s569 = scalar_lea.vmem %s3, %s568
      $region44: #{depth_star_forward.14} parent=39 // pred_fallthru
        _
    $region40: #{depth_star_forward.14} parent=5 // pred_fallthru
      _
  $region6: #{depth_star_forward.14} parent=0 // loop_footer
    %s13 = sadd.s32 1, %s9
  $region7: #{depth_star_forward.14} parent=0 // loop_footer_branch
    %8 = sbr.rel target = $region3
  $region8: #{depth_star_forward.14} parent=0 // loop_exit
    _

// kernel: depth_star_forward.15
$region0: #{depth_star_forward.15}
  #allocation0 [shape = 'u32[]', space=smem, size = 0x4, offset = 0x4, fixed_abs, tag = 'smem constant byte address 0x4 - core index']
  #allocation1 [shape = 'u32[72,128]{1,0:T(1,128)}', space=vmem, size = 0x9000, scoped, tag = 'internal scratch']
  %s0 = inlined_call_operand.vmem [shape: bf16[128,576], index: 0, kind: input, shape index: {}]
  %s1 = inlined_call_operand.vmem [shape: bf16[576,128], index: 1, kind: input, shape index: {}]
  %s2 = inlined_call_operand.vmem [shape: f32[1,128], index: 2, kind: input, shape index: {}]
  %s3 = inlined_call_operand.vmem [shape: bf16[128,128], index: 3, kind: output, shape index: {}]
  %s4 = sld [smem:[#allocation0]]
  $region22: #{depth_star_forward.15} parent=0
    _
  %s6 = ssub.s32 1, %s4
  %s7 = scalar_select 0, %s6, %s4
  // Predicated region
  $region2: #{depth_star_forward.15} parent=0 // pred_check
    _
  $region3: #{depth_star_forward.15} parent=0 // pred_check_branch
    %9 = sbr.rel (0) target = $region5
  $region4: #{depth_star_forward.15} parent=0 // pred_region
    _
  $region5: #{depth_star_forward.15} parent=0 // pred_fallthru
    _
  // Predicated region
  $region6: #{depth_star_forward.15} parent=0 // pred_check
    _
  $region7: #{depth_star_forward.15} parent=0 // pred_check_branch
    %11 = sbr.rel (0) target = $region9
  $region8: #{depth_star_forward.15} parent=0 // pred_region
    _
  $region9: #{depth_star_forward.15} parent=0 // pred_fallthru
    _
  // Predicated region
  $region10: #{depth_star_forward.15} parent=0 // pred_check
    _
  $region11: #{depth_star_forward.15} parent=0 // pred_check_branch
    %13 = sbr.rel (0) target = $region13
  $region12: #{depth_star_forward.15} parent=0 // pred_region
    _
  $region13: #{depth_star_forward.15} parent=0 // pred_fallthru
    _
  %v15 = vld [vmem:[%s0] sm:$0xff]
  %v16 = vld [vmem:[%s0 + $0x8] sm:$0xff]
  %v17 = vld [vmem:[%s0 + $0x10] sm:$0xf]
  %v18 = vld [vmem:[%s0 + $0x14] sm:$0xff]
  %v19 = vld [vmem:[%s0 + $0x1c] sm:$0xff]
  %v20 = vld [vmem:[%s0 + $0x24] sm:$0xf]
  %v21 = vld [vmem:[%s0 + $0x28] sm:$0xff]
  %v22 = vld [vmem:[%s0 + $0x30] sm:$0xff]
  %v23 = vld [vmem:[%s0 + $0x38] sm:$0xf]
  %v24 = vld [vmem:[%s0 + $0x3c] sm:$0xff]
  %v25 = vld [vmem:[%s0 + $0x44] sm:$0xff]
  %v26 = vld [vmem:[%s0 + $0x4c] sm:$0xf]
  %v27 = vld [vmem:[%s0 + $0x50] sm:$0xff]
  %v28 = vld [vmem:[%s0 + $0x58] sm:$0xff]
  %v29 = vld [vmem:[%s0 + $0x60] sm:$0xf]
  %v30 = vld [vmem:[%s0 + $0x64] sm:$0xff]
  %v31 = vld [vmem:[%s0 + $0x6c] sm:$0xff]
  %v32 = vld [vmem:[%s0 + $0x74] sm:$0xf]
  %v33 = vld [vmem:[%s0 + $0x78] sm:$0xff]
  %v34 = vld [vmem:[%s0 + $0x80] sm:$0xff]
  %v35 = vld [vmem:[%s0 + $0x88] sm:$0xf]
  %v36 = vld [vmem:[%s0 + $0x8c] sm:$0xff]
  %v37 = vld [vmem:[%s0 + $0x94] sm:$0xff]
  %v38 = vld [vmem:[%s0 + $0x9c] sm:$0xf]
  %v39 = vld [vmem:[%s0 + $0xa0] sm:$0xff]
  %v40 = vld [vmem:[%s0 + $0xa8] sm:$0xff]
  %v41 = vld [vmem:[%s0 + $0xb0] sm:$0xf]
  %v42 = vld [vmem:[%s0 + $0xb4] sm:$0xff]
  %v43 = vld [vmem:[%s0 + $0xbc] sm:$0xff]
  %v44 = vld [vmem:[%s0 + $0xc4] sm:$0xf]
  %v45 = vld [vmem:[%s0 + $0xc8] sm:$0xff]
  %v46 = vld [vmem:[%s0 + $0xd0] sm:$0xff]
  %v47 = vld [vmem:[%s0 + $0xd8] sm:$0xf]
  %v48 = vld [vmem:[%s0 + $0xdc] sm:$0xff]
  %v49 = vld [vmem:[%s0 + $0xe4] sm:$0xff]
  %v50 = vld [vmem:[%s0 + $0xec] sm:$0xf]
  %v51 = vld [vmem:[%s0 + $0xf0] sm:$0xff]
  %v52 = vld [vmem:[%s0 + $0xf8] sm:$0xff]
  %v53 = vld [vmem:[%s0 + $0x100] sm:$0xf]
  %v54 = vld [vmem:[%s0 + $0x104] sm:$0xff]
  %v55 = vld [vmem:[%s0 + $0x10c] sm:$0xff]
  %v56 = vld [vmem:[%s0 + $0x114] sm:$0xf]
  %v57 = vld [vmem:[%s0 + $0x118] sm:$0xff]
  %v58 = vld [vmem:[%s0 + $0x120] sm:$0xff]
  %v59 = vld [vmem:[%s0 + $0x128] sm:$0xf]
  %v60 = vld [vmem:[%s0 + $0x12c] sm:$0xff]
  %v61 = vld [vmem:[%s0 + $0x134] sm:$0xff]
  %v62 = vld [vmem:[%s0 + $0x13c] sm:$0xf]
  %v63 = vld [vmem:[%s1] sm:$0xf]
  %v64 = vld [vmem:[%s1 + $0x4] sm:$0xf]
  %v65 = vld [vmem:[%s1 + $0x8] sm:$0xf]
  %v66 = vld [vmem:[%s1 + $0xc] sm:$0xf]
  %v67 = vld [vmem:[%s1 + $0x10] sm:$0xf]
  %v68 = vld [vmem:[%s1 + $0x14] sm:$0xf]
  %v69 = vld [vmem:[%s1 + $0x18] sm:$0xf]
  %v70 = vld [vmem:[%s1 + $0x1c] sm:$0xf]
  %v71 = vld [vmem:[%s1 + $0x20] sm:$0xf]
  %v72 = vld [vmem:[%s1 + $0x24] sm:$0xf]
  %v73 = vld [vmem:[%s1 + $0x28] sm:$0xf]
  %v74 = vld [vmem:[%s1 + $0x2c] sm:$0xf]
  %v75 = vld [vmem:[%s1 + $0x30] sm:$0xf]
  %v76 = vld [vmem:[%s1 + $0x34] sm:$0xf]
  %v77 = vld [vmem:[%s1 + $0x38] sm:$0xf]
  %v78 = vld [vmem:[%s1 + $0x3c] sm:$0xf]
  %v79 = vld [vmem:[%s1 + $0x40] sm:$0xf]
  %v80 = vld [vmem:[%s1 + $0x44] sm:$0xf]
  %v81 = vld [vmem:[%s1 + $0x48] sm:$0xf]
  %v82 = vld [vmem:[%s1 + $0x4c] sm:$0xf]
  %v83 = vld [vmem:[%s1 + $0x50] sm:$0xf]
  %v84 = vld [vmem:[%s1 + $0x54] sm:$0xf]
  %v85 = vld [vmem:[%s1 + $0x58] sm:$0xf]
  %v86 = vld [vmem:[%s1 + $0x5c] sm:$0xf]
  %v87 = vld [vmem:[%s1 + $0x60] sm:$0xf]
  %v88 = vld [vmem:[%s1 + $0x64] sm:$0xf]
  %v89 = vld [vmem:[%s1 + $0x68] sm:$0xf]
  %v90 = vld [vmem:[%s1 + $0x6c] sm:$0xf]
  %v91 = vld [vmem:[%s1 + $0x70] sm:$0xf]
  %v92 = vld [vmem:[%s1 + $0x74] sm:$0xf]
  %v93 = vld [vmem:[%s1 + $0x78] sm:$0xf]
  %v94 = vld [vmem:[%s1 + $0x7c] sm:$0xf]
  %v95 = vld [vmem:[%s1 + $0x80] sm:$0xf]
  %v96 = vld [vmem:[%s1 + $0x84] sm:$0xf]
  %v97 = vld [vmem:[%s1 + $0x88] sm:$0xf]
  %v98 = vld [vmem:[%s1 + $0x8c] sm:$0xf]
  %v99 = vld [vmem:[%s1 + $0x90] sm:$0xf]
  %v100 = vld [vmem:[%s1 + $0x94] sm:$0xf]
  %v101 = vld [vmem:[%s1 + $0x98] sm:$0xf]
  %v102 = vld [vmem:[%s1 + $0x9c] sm:$0xf]
  %v103 = vld [vmem:[%s1 + $0xa0] sm:$0xf]
  %v104 = vld [vmem:[%s1 + $0xa4] sm:$0xf]
  %v105 = vld [vmem:[%s1 + $0xa8] sm:$0xf]
  %v106 = vld [vmem:[%s1 + $0xac] sm:$0xf]
  %v107 = vld [vmem:[%s1 + $0xb0] sm:$0xf]
  %v108 = vld [vmem:[%s1 + $0xb4] sm:$0xf]
  %v109 = vld [vmem:[%s1 + $0xb8] sm:$0xf]
  %v110 = vld [vmem:[%s1 + $0xbc] sm:$0xf]
  %v111 = vld [vmem:[%s1 + $0xc0] sm:$0xf]
  %v112 = vld [vmem:[%s1 + $0xc4] sm:$0xf]
  %v113 = vld [vmem:[%s1 + $0xc8] sm:$0xf]
  %v114 = vld [vmem:[%s1 + $0xcc] sm:$0xf]
  %v115 = vld [vmem:[%s1 + $0xd0] sm:$0xf]
  %v116 = vld [vmem:[%s1 + $0xd4] sm:$0xf]
  %v117 = vld [vmem:[%s1 + $0xd8] sm:$0xf]
  %v118 = vld [vmem:[%s1 + $0xdc] sm:$0xf]
  %v119 = vld [vmem:[%s1 + $0xe0] sm:$0xf]
  %v120 = vld [vmem:[%s1 + $0xe4] sm:$0xf]
  %v121 = vld [vmem:[%s1 + $0xe8] sm:$0xf]
  %v122 = vld [vmem:[%s1 + $0xec] sm:$0xf]
  %v123 = vld [vmem:[%s1 + $0xf0] sm:$0xf]
  %v124 = vld [vmem:[%s1 + $0xf4] sm:$0xf]
  %v125 = vld [vmem:[%s1 + $0xf8] sm:$0xf]
  %v126 = vld [vmem:[%s1 + $0xfc] sm:$0xf]
  %v127 = vld [vmem:[%s1 + $0x100] sm:$0xf]
  %v128 = vld [vmem:[%s1 + $0x104] sm:$0xf]
  %v129 = vld [vmem:[%s1 + $0x108] sm:$0xf]
  %v130 = vld [vmem:[%s1 + $0x10c] sm:$0xf]
  %v131 = vld [vmem:[%s1 + $0x110] sm:$0xf]
  %v132 = vld [vmem:[%s1 + $0x114] sm:$0xf]
  %v133 = vld [vmem:[%s1 + $0x118] sm:$0xf]
  %v134 = vld [vmem:[%s1 + $0x11c] sm:$0xf]
  %v135 = vld [vmem:[%s2] sm:$0x1]
  %v137 = vperm.slane %v135, 0
  %v187 = vunpack.c.l.b16 %v15
  %v188 = vunpack.c.h.b16 %v15
  %v189 = vunpack.c.l.b16 %v16
  %v190 = vunpack.c.h.b16 %v16
  %v191 = vunpack.c.l.b16 %v17
  %v192 = vunpack.c.l.b16 %v18
  %v193 = vunpack.c.h.b16 %v18
  %v194 = vunpack.c.l.b16 %v19
  %v195 = vunpack.c.h.b16 %v19
  %v196 = vunpack.c.l.b16 %v20
  %v197 = vunpack.c.l.b16 %v21
  %v198 = vunpack.c.h.b16 %v21
  %v199 = vunpack.c.l.b16 %v22
  %v200 = vunpack.c.h.b16 %v22
  %v201 = vunpack.c.l.b16 %v23
  %v202 = vunpack.c.l.b16 %v24
  %v203 = vunpack.c.h.b16 %v24
  %v204 = vunpack.c.l.b16 %v25
  %v205 = vunpack.c.h.b16 %v25
  %v206 = vunpack.c.l.b16 %v26
  %v207 = vunpack.c.l.b16 %v27
  %v208 = vunpack.c.h.b16 %v27
  %v209 = vunpack.c.l.b16 %v28
  %v210 = vunpack.c.h.b16 %v28
  %v211 = vunpack.c.l.b16 %v29
  %v212 = vunpack.c.l.b16 %v30
  %v213 = vunpack.c.h.b16 %v30
  %v214 = vunpack.c.l.b16 %v31
  %v215 = vunpack.c.h.b16 %v31
  %v216 = vunpack.c.l.b16 %v32
  %v217 = vunpack.c.l.b16 %v33
  %v218 = vunpack.c.h.b16 %v33
  %v219 = vunpack.c.l.b16 %v34
  %v220 = vunpack.c.h.b16 %v34
  %v221 = vunpack.c.l.b16 %v35
  %v222 = vunpack.c.l.b16 %v36
  %v223 = vunpack.c.h.b16 %v36
  %v224 = vunpack.c.l.b16 %v37
  %v225 = vunpack.c.h.b16 %v37
  %v226 = vunpack.c.l.b16 %v38
  %v227 = vunpack.c.l.b16 %v39
  %v228 = vunpack.c.h.b16 %v39
  %v229 = vunpack.c.l.b16 %v40
  %v230 = vunpack.c.h.b16 %v40
  %v231 = vunpack.c.l.b16 %v41
  %v232 = vunpack.c.l.b16 %v42
  %v233 = vunpack.c.h.b16 %v42
  %v234 = vunpack.c.l.b16 %v43
  %v235 = vunpack.c.h.b16 %v43
  %v236 = vunpack.c.l.b16 %v44
  %v237 = vunpack.c.l.b16 %v45
  %v238 = vunpack.c.h.b16 %v45
  %v239 = vunpack.c.l.b16 %v46
  %v240 = vunpack.c.h.b16 %v46
  %v241 = vunpack.c.l.b16 %v47
  %v242 = vunpack.c.l.b16 %v48
  %v243 = vunpack.c.h.b16 %v48
  %v244 = vunpack.c.l.b16 %v49
  %v245 = vunpack.c.h.b16 %v49
  %v246 = vunpack.c.l.b16 %v50
  %v247 = vunpack.c.l.b16 %v51
  %v248 = vunpack.c.h.b16 %v51
  %v249 = vunpack.c.l.b16 %v52
  %v250 = vunpack.c.h.b16 %v52
  %v251 = vunpack.c.l.b16 %v53
  %v252 = vunpack.c.l.b16 %v54
  %v253 = vunpack.c.h.b16 %v54
  %v254 = vunpack.c.l.b16 %v55
  %v255 = vunpack.c.h.b16 %v55
  %v256 = vunpack.c.l.b16 %v56
  %v257 = vunpack.c.l.b16 %v57
  %v258 = vunpack.c.h.b16 %v57
  %v259 = vunpack.c.l.b16 %v58
  %v260 = vunpack.c.h.b16 %v58
  %v261 = vunpack.c.l.b16 %v59
  %v262 = vunpack.c.l.b16 %v60
  %v263 = vunpack.c.h.b16 %v60
  %v264 = vunpack.c.l.b16 %v61
  %v265 = vunpack.c.h.b16 %v61
  %v266 = vunpack.c.l.b16 %v62
  %v267 = vpack.c.b16 %v192, %v187
  %v268 = vpack.c.b16 %v193, %v188
  %v269 = vpack.c.b16 %v194, %v189
  %v270 = vpack.c.b16 %v195, %v190
  %v271 = vpack.c.b16 %v196, %v191
  %v272 = vpack.c.b16 %v202, %v197
  %v273 = vpack.c.b16 %v203, %v198
  %v274 = vpack.c.b16 %v204, %v199
  %v275 = vpack.c.b16 %v205, %v200
  %v276 = vpack.c.b16 %v206, %v201
  %v277 = vpack.c.b16 %v212, %v207
  %v278 = vpack.c.b16 %v213, %v208
  %v279 = vpack.c.b16 %v214, %v209
  %v280 = vpack.c.b16 %v215, %v210
  %v281 = vpack.c.b16 %v216, %v211
  %v282 = vpack.c.b16 %v222, %v217
  %v283 = vpack.c.b16 %v223, %v218
  %v284 = vpack.c.b16 %v224, %v219
  %v285 = vpack.c.b16 %v225, %v220
  %v286 = vpack.c.b16 %v226, %v221
  %v287 = vpack.c.b16 %v232, %v227
  %v288 = vpack.c.b16 %v233, %v228
  %v289 = vpack.c.b16 %v234, %v229
  %v290 = vpack.c.b16 %v235, %v230
  %v291 = vpack.c.b16 %v236, %v231
  %v292 = vpack.c.b16 %v242, %v237
  %v293 = vpack.c.b16 %v243, %v238
  %v294 = vpack.c.b16 %v244, %v239
  %v295 = vpack.c.b16 %v245, %v240
  %v296 = vpack.c.b16 %v246, %v241
  %v297 = vpack.c.b16 %v252, %v247
  %v298 = vpack.c.b16 %v253, %v248
  %v299 = vpack.c.b16 %v254, %v249
  %v300 = vpack.c.b16 %v255, %v250
  %v301 = vpack.c.b16 %v256, %v251
  %v302 = vpack.c.b16 %v262, %v257
  %v303 = vpack.c.b16 %v263, %v258
  %v304 = vpack.c.b16 %v264, %v259
  %v305 = vpack.c.b16 %v265, %v260
  %v306 = vpack.c.b16 %v266, %v261
  %v411 = vunpack.c.l.b16 %v63
  %v412 = vunpack.c.l.b16 %v64
  %v413 = vunpack.c.l.b16 %v65
  %v414 = vunpack.c.l.b16 %v66
  %v415 = vunpack.c.l.b16 %v67
  %v416 = vunpack.c.l.b16 %v68
  %v417 = vunpack.c.l.b16 %v69
  %v418 = vunpack.c.l.b16 %v70
  %v419 = vunpack.c.l.b16 %v71
  %v420 = vunpack.c.l.b16 %v72
  %v421 = vunpack.c.l.b16 %v73
  %v422 = vunpack.c.l.b16 %v74
  %v423 = vunpack.c.l.b16 %v75
  %v424 = vunpack.c.l.b16 %v76
  %v425 = vunpack.c.l.b16 %v77
  %v426 = vunpack.c.l.b16 %v78
  %v427 = vunpack.c.l.b16 %v79
  %v428 = vunpack.c.l.b16 %v80
  %v429 = vunpack.c.l.b16 %v81
  %v430 = vunpack.c.l.b16 %v82
  %v431 = vunpack.c.l.b16 %v83
  %v432 = vunpack.c.l.b16 %v84
  %v433 = vunpack.c.l.b16 %v85
  %v434 = vunpack.c.l.b16 %v86
  %v435 = vunpack.c.l.b16 %v87
  %v436 = vunpack.c.l.b16 %v88
  %v437 = vunpack.c.l.b16 %v89
  %v438 = vunpack.c.l.b16 %v90
  %v439 = vunpack.c.l.b16 %v91
  %v440 = vunpack.c.l.b16 %v92
  %v441 = vunpack.c.l.b16 %v93
  %v442 = vunpack.c.l.b16 %v94
  %v443 = vunpack.c.l.b16 %v95
  %v444 = vunpack.c.l.b16 %v96
  %v445 = vunpack.c.l.b16 %v97
  %v446 = vunpack.c.l.b16 %v98
  %v447 = vunpack.c.l.b16 %v99
  %v448 = vunpack.c.l.b16 %v100
  %v449 = vunpack.c.l.b16 %v101
  %v450 = vunpack.c.l.b16 %v102
  %v451 = vunpack.c.l.b16 %v103
  %v452 = vunpack.c.l.b16 %v104
  %v453 = vunpack.c.l.b16 %v105
  %v454 = vunpack.c.l.b16 %v106
  %v455 = vunpack.c.l.b16 %v107
  %v456 = vunpack.c.l.b16 %v108
  %v457 = vunpack.c.l.b16 %v109
  %v458 = vunpack.c.l.b16 %v110
  %v459 = vunpack.c.l.b16 %v111
  %v460 = vunpack.c.l.b16 %v112
  %v461 = vunpack.c.l.b16 %v113
  %v462 = vunpack.c.l.b16 %v114
  %v463 = vunpack.c.l.b16 %v115
  %v464 = vunpack.c.l.b16 %v116
  %v465 = vunpack.c.l.b16 %v117
  %v466 = vunpack.c.l.b16 %v118
  %v467 = vunpack.c.l.b16 %v119
  %v468 = vunpack.c.l.b16 %v120
  %v469 = vunpack.c.l.b16 %v121
  %v470 = vunpack.c.l.b16 %v122
  %v471 = vunpack.c.l.b16 %v123
  %v472 = vunpack.c.l.b16 %v124
  %v473 = vunpack.c.l.b16 %v125
  %v474 = vunpack.c.l.b16 %v126
  %v475 = vunpack.c.l.b16 %v127
  %v476 = vunpack.c.l.b16 %v128
  %v477 = vunpack.c.l.b16 %v129
  %v478 = vunpack.c.l.b16 %v130
  %v479 = vunpack.c.l.b16 %v131
  %v480 = vunpack.c.l.b16 %v132
  %v481 = vunpack.c.l.b16 %v133
  %v482 = vunpack.c.l.b16 %v134
  %v483 = vpack.c.b16 %v412, %v411
  %v484 = vpack.c.b16 %v414, %v413
  %v485 = vpack.c.b16 %v416, %v415
  %v486 = vpack.c.b16 %v418, %v417
  %v487 = vpack.c.b16 %v420, %v419
  %v488 = vpack.c.b16 %v422, %v421
  %v489 = vpack.c.b16 %v424, %v423
  %v490 = vpack.c.b16 %v426, %v425
  %v491 = vpack.c.b16 %v428, %v427
  %v492 = vpack.c.b16 %v430, %v429
  %v493 = vpack.c.b16 %v432, %v431
  %v494 = vpack.c.b16 %v434, %v433
  %v495 = vpack.c.b16 %v436, %v435
  %v496 = vpack.c.b16 %v438, %v437
  %v497 = vpack.c.b16 %v440, %v439
  %v498 = vpack.c.b16 %v442, %v441
  %v499 = vpack.c.b16 %v444, %v443
  %v500 = vpack.c.b16 %v446, %v445
  %v501 = vpack.c.b16 %v448, %v447
  %v502 = vpack.c.b16 %v450, %v449
  %v503 = vpack.c.b16 %v452, %v451
  %v504 = vpack.c.b16 %v454, %v453
  %v505 = vpack.c.b16 %v456, %v455
  %v506 = vpack.c.b16 %v458, %v457
  %v507 = vpack.c.b16 %v460, %v459
  %v508 = vpack.c.b16 %v462, %v461
  %v509 = vpack.c.b16 %v464, %v463
  %v510 = vpack.c.b16 %v466, %v465
  %v511 = vpack.c.b16 %v468, %v467
  %v512 = vpack.c.b16 %v470, %v469
  %v513 = vpack.c.b16 %v472, %v471
  %v514 = vpack.c.b16 %v474, %v473
  %v515 = vpack.c.b16 %v476, %v475
  %v516 = vpack.c.b16 %v478, %v477
  %v517 = vpack.c.b16 %v480, %v479
  %v518 = vpack.c.b16 %v482, %v481
  %vm555 = vcmask 523264
  %v557 = vsel %vm555, %v271, 0
  %v560 = vsel %vm555, %v276, 0
  %v563 = vsel %vm555, %v281, 0
  %v566 = vsel %vm555, %v286, 0
  %v569 = vsel %vm555, %v291, 0
  %v572 = vsel %vm555, %v296, 0
  %v575 = vsel %vm555, %v301, 0
  %v578 = vsel %vm555, %v306, 0
  %580 = vmatpush.bf16.msra.mxu0 %v490
  %581 = vmatpush.bf16.msra.mxu0 %v489
  %582 = vmatpush.bf16.msra.mxu0 %v488
  %583 = vmatpush.bf16.msra.mxu0 %v487
  %584 = vmatpush.bf16.msra.mxu0 %v486
  %585 = vmatpush.bf16.msra.mxu0 %v485
  %586 = vmatpush.bf16.msra.mxu0 %v484
  %587 = vmatpush.bf16.msra.mxu0 %v483
  %588 = vmatmul.bf16.gmra.mxu0 %v267
  %v589 = vpop.f32.mrf.mxu0
  %v590 = vadd.f32 %v137, %v589
  %v591 = vpop.f32.mrf.mxu0
  %v592 = vadd.f32 %v137, %v591
  %593 = vmatmul.bf16.gmra.mxu0 %v272
  %v594 = vpop.f32.mrf.mxu0
  %v595 = vadd.f32 %v137, %v594
  %v596 = vpop.f32.mrf.mxu0
  %v597 = vadd.f32 %v137, %v596
  %598 = vmatmul.bf16.gmra.mxu0 %v277
  %v599 = vpop.f32.mrf.mxu0
  %v600 = vadd.f32 %v137, %v599
  %v601 = vpop.f32.mrf.mxu0
  %v602 = vadd.f32 %v137, %v601
  %603 = vmatmul.bf16.gmra.mxu0 %v282
  %v604 = vpop.f32.mrf.mxu0
  %v605 = vadd.f32 %v137, %v604
  %v606 = vpop.f32.mrf.mxu0
  %v607 = vadd.f32 %v137, %v606
  %608 = vmatmul.bf16.gmra.mxu0 %v287
  %v609 = vpop.f32.mrf.mxu0
  %v610 = vadd.f32 %v137, %v609
  %v611 = vpop.f32.mrf.mxu0
  %v612 = vadd.f32 %v137, %v611
  %613 = vmatmul.bf16.gmra.mxu0 %v292
  %v614 = vpop.f32.mrf.mxu0
  %v615 = vadd.f32 %v137, %v614
  %v616 = vpop.f32.mrf.mxu0
  %v617 = vadd.f32 %v137, %v616
  %618 = vmatmul.bf16.gmra.mxu0 %v297
  %v619 = vpop.f32.mrf.mxu0
  %v620 = vadd.f32 %v137, %v619
  %v621 = vpop.f32.mrf.mxu0
  %v622 = vadd.f32 %v137, %v621
  %623 = vmatmul.bf16.gmra.mxu0 %v302
  %v624 = vpop.f32.mrf.mxu0
  %v625 = vadd.f32 %v137, %v624
  %v626 = vpop.f32.mrf.mxu0
  %v627 = vadd.f32 %v137, %v626
  %628 = vdwg.mxu0
  %629 = vmatpush.bf16.msra.mxu0 %v498
  %630 = vmatpush.bf16.msra.mxu0 %v497
  %631 = vmatpush.bf16.msra.mxu0 %v496
  %632 = vmatpush.bf16.msra.mxu0 %v495
  %633 = vmatpush.bf16.msra.mxu0 %v494
  %634 = vmatpush.bf16.msra.mxu0 %v493
  %635 = vmatpush.bf16.msra.mxu0 %v492
  %636 = vmatpush.bf16.msra.mxu0 %v491
  %637 = vmatmul.bf16.gmra.mxu0 %v268
  %v638 = vpop.f32.mrf.mxu0
  %v639 = vadd.f32 %v590, %v638
  %v640 = vpop.f32.mrf.mxu0
  %v641 = vadd.f32 %v592, %v640
  %642 = vmatmul.bf16.gmra.mxu0 %v273
  %v643 = vpop.f32.mrf.mxu0
  %v644 = vadd.f32 %v595, %v643
  %v645 = vpop.f32.mrf.mxu0
  %v646 = vadd.f32 %v597, %v645
  %647 = vmatmul.bf16.gmra.mxu0 %v278
  %v648 = vpop.f32.mrf.mxu0
  %v649 = vadd.f32 %v600, %v648
  %v650 = vpop.f32.mrf.mxu0
  %v651 = vadd.f32 %v602, %v650
  %652 = vmatmul.bf16.gmra.mxu0 %v283
  %v653 = vpop.f32.mrf.mxu0
  %v654 = vadd.f32 %v605, %v653
  %v655 = vpop.f32.mrf.mxu0
  %v656 = vadd.f32 %v607, %v655
  %657 = vmatmul.bf16.gmra.mxu0 %v288
  %v658 = vpop.f32.mrf.mxu0
  %v659 = vadd.f32 %v610, %v658
  %v660 = vpop.f32.mrf.mxu0
  %v661 = vadd.f32 %v612, %v660
  %662 = vmatmul.bf16.gmra.mxu0 %v293
  %v663 = vpop.f32.mrf.mxu0
  %v664 = vadd.f32 %v615, %v663
  %v665 = vpop.f32.mrf.mxu0
  %v666 = vadd.f32 %v617, %v665
  %667 = vmatmul.bf16.gmra.mxu0 %v298
  %v668 = vpop.f32.mrf.mxu0
  %v669 = vadd.f32 %v620, %v668
  %v670 = vpop.f32.mrf.mxu0
  %v671 = vadd.f32 %v622, %v670
  %672 = vmatmul.bf16.gmra.mxu0 %v303
  %v673 = vpop.f32.mrf.mxu0
  %v674 = vadd.f32 %v625, %v673
  %v675 = vpop.f32.mrf.mxu0
  %v676 = vadd.f32 %v627, %v675
  %677 = vdwg.mxu0
  %678 = vmatpush.bf16.msra.mxu0 %v506
  %679 = vmatpush.bf16.msra.mxu0 %v505
  %680 = vmatpush.bf16.msra.mxu0 %v504
  %681 = vmatpush.bf16.msra.mxu0 %v503
  %682 = vmatpush.bf16.msra.mxu0 %v502
  %683 = vmatpush.bf16.msra.mxu0 %v501
  %684 = vmatpush.bf16.msra.mxu0 %v500
  %685 = vmatpush.bf16.msra.mxu0 %v499
  %686 = vmatmul.bf16.gmra.mxu0 %v269
  %v687 = vpop.f32.mrf.mxu0
  %v688 = vadd.f32 %v639, %v687
  %v689 = vpop.f32.mrf.mxu0
  %v690 = vadd.f32 %v641, %v689
  %691 = vmatmul.bf16.gmra.mxu0 %v274
  %v692 = vpop.f32.mrf.mxu0
  %v693 = vadd.f32 %v644, %v692
  %v694 = vpop.f32.mrf.mxu0
  %v695 = vadd.f32 %v646, %v694
  %696 = vmatmul.bf16.gmra.mxu0 %v279
  %v697 = vpop.f32.mrf.mxu0
  %v698 = vadd.f32 %v649, %v697
  %v699 = vpop.f32.mrf.mxu0
  %v700 = vadd.f32 %v651, %v699
  %701 = vmatmul.bf16.gmra.mxu0 %v284
  %v702 = vpop.f32.mrf.mxu0
  %v703 = vadd.f32 %v654, %v702
  %v704 = vpop.f32.mrf.mxu0
  %v705 = vadd.f32 %v656, %v704
  %706 = vmatmul.bf16.gmra.mxu0 %v289
  %v707 = vpop.f32.mrf.mxu0
  %v708 = vadd.f32 %v659, %v707
  %v709 = vpop.f32.mrf.mxu0
  %v710 = vadd.f32 %v661, %v709
  %711 = vmatmul.bf16.gmra.mxu0 %v294
  %v712 = vpop.f32.mrf.mxu0
  %v713 = vadd.f32 %v664, %v712
  %v714 = vpop.f32.mrf.mxu0
  %v715 = vadd.f32 %v666, %v714
  %716 = vmatmul.bf16.gmra.mxu0 %v299
  %v717 = vpop.f32.mrf.mxu0
  %v718 = vadd.f32 %v669, %v717
  %v719 = vpop.f32.mrf.mxu0
  %v720 = vadd.f32 %v671, %v719
  %721 = vmatmul.bf16.gmra.mxu0 %v304
  %v722 = vpop.f32.mrf.mxu0
  %v723 = vadd.f32 %v674, %v722
  %v724 = vpop.f32.mrf.mxu0
  %v725 = vadd.f32 %v676, %v724
  %726 = vdwg.mxu0
  %727 = vmatpush.bf16.msra.mxu0 %v514
  %728 = vmatpush.bf16.msra.mxu0 %v513
  %729 = vmatpush.bf16.msra.mxu0 %v512
  %730 = vmatpush.bf16.msra.mxu0 %v511
  %731 = vmatpush.bf16.msra.mxu0 %v510
  %732 = vmatpush.bf16.msra.mxu0 %v509
  %733 = vmatpush.bf16.msra.mxu0 %v508
  %734 = vmatpush.bf16.msra.mxu0 %v507
  %735 = vmatmul.bf16.gmra.mxu0 %v270
  %v736 = vpop.f32.mrf.mxu0
  %v737 = vadd.f32 %v688, %v736
  %v738 = vpop.f32.mrf.mxu0
  %v739 = vadd.f32 %v690, %v738
  %740 = vmatmul.bf16.gmra.mxu0 %v275
  %v741 = vpop.f32.mrf.mxu0
  %v742 = vadd.f32 %v693, %v741
  %v743 = vpop.f32.mrf.mxu0
  %v744 = vadd.f32 %v695, %v743
  %745 = vmatmul.bf16.gmra.mxu0 %v280
  %v746 = vpop.f32.mrf.mxu0
  %v747 = vadd.f32 %v698, %v746
  %v748 = vpop.f32.mrf.mxu0
  %v749 = vadd.f32 %v700, %v748
  %750 = vmatmul.bf16.gmra.mxu0 %v285
  %v751 = vpop.f32.mrf.mxu0
  %v752 = vadd.f32 %v703, %v751
  %v753 = vpop.f32.mrf.mxu0
  %v754 = vadd.f32 %v705, %v753
  %755 = vmatmul.bf16.gmra.mxu0 %v290
  %v756 = vpop.f32.mrf.mxu0
  %v757 = vadd.f32 %v708, %v756
  %v758 = vpop.f32.mrf.mxu0
  %v759 = vadd.f32 %v710, %v758
  %760 = vmatmul.bf16.gmra.mxu0 %v295
  %v761 = vpop.f32.mrf.mxu0
  %v762 = vadd.f32 %v713, %v761
  %v763 = vpop.f32.mrf.mxu0
  %v764 = vadd.f32 %v715, %v763
  %765 = vmatmul.bf16.gmra.mxu0 %v300
  %v766 = vpop.f32.mrf.mxu0
  %v767 = vadd.f32 %v718, %v766
  %v768 = vpop.f32.mrf.mxu0
  %v769 = vadd.f32 %v720, %v768
  %770 = vmatmul.bf16.gmra.mxu0 %v305
  %v771 = vpop.f32.mrf.mxu0
  %v772 = vadd.f32 %v723, %v771
  %v773 = vpop.f32.mrf.mxu0
  %v774 = vadd.f32 %v725, %v773
  %775 = vdwg.mxu0
  %776 = vmatpush.bf16.msra.mxu0 0
  %777 = vmatpush.bf16.msra.mxu0 0
  %778 = vmatpush.bf16.msra.mxu0 0
  %779 = vmatpush.bf16.msra.mxu0 0
  %780 = vmatpush.bf16.msra.mxu0 %v518
  %781 = vmatpush.bf16.msra.mxu0 %v517
  %782 = vmatpush.bf16.msra.mxu0 %v516
  %783 = vmatpush.bf16.msra.mxu0 %v515
  %784 = vmatmul.bf16.gmra.mxu0 %v557
  %v785 = vpop.f32.mrf.mxu0
  %v786 = vadd.f32 %v737, %v785
  %v787 = vpop.f32.mrf.mxu0
  %v788 = vadd.f32 %v739, %v787
  %789 = vmatmul.bf16.gmra.mxu0 %v560
  %v790 = vpop.f32.mrf.mxu0
  %v791 = vadd.f32 %v742, %v790
  %v792 = vpop.f32.mrf.mxu0
  %v793 = vadd.f32 %v744, %v792
  %794 = vmatmul.bf16.gmra.mxu0 %v563
  %v795 = vpop.f32.mrf.mxu0
  %v796 = vadd.f32 %v747, %v795
  %v797 = vpop.f32.mrf.mxu0
  %v798 = vadd.f32 %v749, %v797
  %799 = vmatmul.bf16.gmra.mxu0 %v566
  %v800 = vpop.f32.mrf.mxu0
  %v801 = vadd.f32 %v752, %v800
  %v802 = vpop.f32.mrf.mxu0
  %v803 = vadd.f32 %v754, %v802
  %804 = vmatmul.bf16.gmra.mxu0 %v569
  %v805 = vpop.f32.mrf.mxu0
  %v806 = vadd.f32 %v757, %v805
  %v807 = vpop.f32.mrf.mxu0
  %v808 = vadd.f32 %v759, %v807
  %809 = vmatmul.bf16.gmra.mxu0 %v572
  %v810 = vpop.f32.mrf.mxu0
  %v811 = vadd.f32 %v762, %v810
  %v812 = vpop.f32.mrf.mxu0
  %v813 = vadd.f32 %v764, %v812
  %814 = vmatmul.bf16.gmra.mxu0 %v575
  %v815 = vpop.f32.mrf.mxu0
  %v816 = vadd.f32 %v767, %v815
  %v817 = vpop.f32.mrf.mxu0
  %v818 = vadd.f32 %v769, %v817
  %819 = vmatmul.bf16.gmra.mxu0 %v578
  %v820 = vpop.f32.mrf.mxu0
  %v821 = vadd.f32 %v772, %v820
  %v822 = vpop.f32.mrf.mxu0
  %v823 = vadd.f32 %v774, %v822
  %824 = vdwg.mxu0
  %v825 = vmax.f32 %v786, 0.0
  %v826 = vmax.f32 %v788, 0.0
  %v827 = vmax.f32 %v791, 0.0
  %v828 = vmax.f32 %v793, 0.0
  %v829 = vmax.f32 %v796, 0.0
  %v830 = vmax.f32 %v798, 0.0
  %v831 = vmax.f32 %v801, 0.0
  %v832 = vmax.f32 %v803, 0.0
  %v833 = vmax.f32 %v806, 0.0
  %v834 = vmax.f32 %v808, 0.0
  %v835 = vmax.f32 %v811, 0.0
  %v836 = vmax.f32 %v813, 0.0
  %v837 = vmax.f32 %v816, 0.0
  %v838 = vmax.f32 %v818, 0.0
  %v839 = vmax.f32 %v821, 0.0
  %v840 = vmax.f32 %v823, 0.0
  %v841 = vpack.c.bf16 %v825, %v825
  %v842 = vpack.c.bf16 %v826, %v826
  %v843 = vpack.c.bf16 %v827, %v827
  %v844 = vpack.c.bf16 %v828, %v828
  %v845 = vpack.c.bf16 %v829, %v829
  %v846 = vpack.c.bf16 %v830, %v830
  %v847 = vpack.c.bf16 %v831, %v831
  %v848 = vpack.c.bf16 %v832, %v832
  %v849 = vpack.c.bf16 %v833, %v833
  %v850 = vpack.c.bf16 %v834, %v834
  %v851 = vpack.c.bf16 %v835, %v835
  %v852 = vpack.c.bf16 %v836, %v836
  %v853 = vpack.c.bf16 %v837, %v837
  %v854 = vpack.c.bf16 %v838, %v838
  %v855 = vpack.c.bf16 %v839, %v839
  %v856 = vpack.c.bf16 %v840, %v840
  %857 = vst [vmem:[%s3] sm:$0xf] %v841
  %858 = vst [vmem:[%s3 + $0x4] sm:$0xf] %v842
  %859 = vst [vmem:[%s3 + $0x8] sm:$0xf] %v843
  %860 = vst [vmem:[%s3 + $0xc] sm:$0xf] %v844
  %861 = vst [vmem:[%s3 + $0x10] sm:$0xf] %v845
  %862 = vst [vmem:[%s3 + $0x14] sm:$0xf] %v846
  %863 = vst [vmem:[%s3 + $0x18] sm:$0xf] %v847
  %864 = vst [vmem:[%s3 + $0x1c] sm:$0xf] %v848
  %865 = vst [vmem:[%s3 + $0x20] sm:$0xf] %v849
  %866 = vst [vmem:[%s3 + $0x24] sm:$0xf] %v850
  %867 = vst [vmem:[%s3 + $0x28] sm:$0xf] %v851
  %868 = vst [vmem:[%s3 + $0x2c] sm:$0xf] %v852
  %869 = vst [vmem:[%s3 + $0x30] sm:$0xf] %v853
  %870 = vst [vmem:[%s3 + $0x34] sm:$0xf] %v854
  %871 = vst [vmem:[%s3 + $0x38] sm:$0xf] %v855
  %872 = vst [vmem:[%s3 + $0x3c] sm:$0xf] %v856
  // Predicated region
  $region14: #{depth_star_forward.15} parent=0 // pred_check
    _
  $region15: #{depth_star_forward.15} parent=0 // pred_check_branch
    %874 = sbr.rel (0) target = $region17
  $region16: #{depth_star_forward.15} parent=0 // pred_region
    _
  $region17: #{depth_star_forward.15} parent=0 // pred_fallthru
    _
  // Predicated region
  $region18: #{depth_star_forward.15} parent=0 // pred_check
    _
  $region19: #{depth_star_forward.15} parent=0 // pred_check_branch
    %876 = sbr.rel (0) target = $region21
  $region20: #{depth_star_forward.15} parent=0 // pred_region
    _
  $region21: #{depth_star_forward.15} parent=0 // pred_fallthru
    _

// kernel: depth_star_forward.17
$region0: #{depth_star_forward.17}
  #allocation0 [shape = 'u32[]', space=smem, size = 0x4, offset = 0x4, fixed_abs, tag = 'smem constant byte address 0x4 - core index']
  #allocation1 [shape = 'u32[72,128]{1,0:T(1,128)}', space=vmem, size = 0x9000, scoped, tag = 'internal scratch']
  %s0 = inlined_call_operand.vmem [shape: bf16[128,1152], index: 0, kind: input, shape index: {}]
  %s1 = inlined_call_operand.vmem [shape: bf16[1152,128], index: 1, kind: input, shape index: {}]
  %s2 = inlined_call_operand.vmem [shape: f32[1,128], index: 2, kind: input, shape index: {}]
  %s3 = inlined_call_operand.vmem [shape: bf16[128,128], index: 3, kind: input, shape index: {}]
  %s4 = inlined_call_operand.vmem [shape: bf16[128,128], index: 4, kind: output, shape index: {}]
  %s5 = sld [smem:[#allocation0]]
  $region26: #{depth_star_forward.17} parent=0
    _
  %s7 = ssub.s32 1, %s5
  %s8 = scalar_select 0, %s7, %s5
  // Predicated region
  $region2: #{depth_star_forward.17} parent=0 // pred_check
    _
  $region3: #{depth_star_forward.17} parent=0 // pred_check_branch
    %10 = sbr.rel (0) target = $region5
  $region4: #{depth_star_forward.17} parent=0 // pred_region
    _
  $region5: #{depth_star_forward.17} parent=0 // pred_fallthru
    _
  // Predicated region
  $region6: #{depth_star_forward.17} parent=0 // pred_check
    _
  $region7: #{depth_star_forward.17} parent=0 // pred_check_branch
    %12 = sbr.rel (0) target = $region9
  $region8: #{depth_star_forward.17} parent=0 // pred_region
    _
  $region9: #{depth_star_forward.17} parent=0 // pred_fallthru
    _
  // Predicated region
  $region10: #{depth_star_forward.17} parent=0 // pred_check
    _
  $region11: #{depth_star_forward.17} parent=0 // pred_check_branch
    %14 = sbr.rel (0) target = $region13
  $region12: #{depth_star_forward.17} parent=0 // pred_region
    _
  $region13: #{depth_star_forward.17} parent=0 // pred_fallthru
    _
  // Predicated region
  $region14: #{depth_star_forward.17} parent=0 // pred_check
    _
  $region15: #{depth_star_forward.17} parent=0 // pred_check_branch
    %16 = sbr.rel (0) target = $region17
  $region16: #{depth_star_forward.17} parent=0 // pred_region
    _
  $region17: #{depth_star_forward.17} parent=0 // pred_fallthru
    _
  %v17 = vld [vmem:[%s0] sm:$0xff]
  %v18 = vld [vmem:[%s0 + $0x8] sm:$0xff]
  %v19 = vld [vmem:[%s0 + $0x10] sm:$0xff]
  %v20 = vld [vmem:[%s0 + $0x18] sm:$0xff]
  %v21 = vld [vmem:[%s0 + $0x20] sm:$0xf]
  %v22 = vld [vmem:[%s0 + $0x24] sm:$0xff]
  %v23 = vld [vmem:[%s0 + $0x2c] sm:$0xff]
  %v24 = vld [vmem:[%s0 + $0x34] sm:$0xff]
  %v25 = vld [vmem:[%s0 + $0x3c] sm:$0xff]
  %v26 = vld [vmem:[%s0 + $0x44] sm:$0xf]
  %v27 = vld [vmem:[%s0 + $0x48] sm:$0xff]
  %v28 = vld [vmem:[%s0 + $0x50] sm:$0xff]
  %v29 = vld [vmem:[%s0 + $0x58] sm:$0xff]
  %v30 = vld [vmem:[%s0 + $0x60] sm:$0xff]
  %v31 = vld [vmem:[%s0 + $0x68] sm:$0xf]
  %v32 = vld [vmem:[%s0 + $0x6c] sm:$0xff]
  %v33 = vld [vmem:[%s0 + $0x74] sm:$0xff]
  %v34 = vld [vmem:[%s0 + $0x7c] sm:$0xff]
  %v35 = vld [vmem:[%s0 + $0x84] sm:$0xff]
  %v36 = vld [vmem:[%s0 + $0x8c] sm:$0xf]
  %v37 = vld [vmem:[%s0 + $0x90] sm:$0xff]
  %v38 = vld [vmem:[%s0 + $0x98] sm:$0xff]
  %v39 = vld [vmem:[%s0 + $0xa0] sm:$0xff]
  %v40 = vld [vmem:[%s0 + $0xa8] sm:$0xff]
  %v41 = vld [vmem:[%s0 + $0xb0] sm:$0xf]
  %v42 = vld [vmem:[%s0 + $0xb4] sm:$0xff]
  %v43 = vld [vmem:[%s0 + $0xbc] sm:$0xff]
  %v44 = vld [vmem:[%s0 + $0xc4] sm:$0xff]
  %v45 = vld [vmem:[%s0 + $0xcc] sm:$0xff]
  %v46 = vld [vmem:[%s0 + $0xd4] sm:$0xf]
  %v47 = vld [vmem:[%s0 + $0xd8] sm:$0xff]
  %v48 = vld [vmem:[%s0 + $0xe0] sm:$0xff]
  %v49 = vld [vmem:[%s0 + $0xe8] sm:$0xff]
  %v50 = vld [vmem:[%s0 + $0xf0] sm:$0xff]
  %v51 = vld [vmem:[%s0 + $0xf8] sm:$0xf]
  %v52 = vld [vmem:[%s0 + $0xfc] sm:$0xff]
  %v53 = vld [vmem:[%s0 + $0x104] sm:$0xff]
  %v54 = vld [vmem:[%s0 + $0x10c] sm:$0xff]
  %v55 = vld [vmem:[%s0 + $0x114] sm:$0xff]
  %v56 = vld [vmem:[%s0 + $0x11c] sm:$0xf]
  %v57 = vld [vmem:[%s0 + $0x120] sm:$0xff]
  %v58 = vld [vmem:[%s0 + $0x128] sm:$0xff]
  %v59 = vld [vmem:[%s0 + $0x130] sm:$0xff]
  %v60 = vld [vmem:[%s0 + $0x138] sm:$0xff]
  %v61 = vld [vmem:[%s0 + $0x140] sm:$0xf]
  %v62 = vld [vmem:[%s0 + $0x144] sm:$0xff]
  %v63 = vld [vmem:[%s0 + $0x14c] sm:$0xff]
  %v64 = vld [vmem:[%s0 + $0x154] sm:$0xff]
  %v65 = vld [vmem:[%s0 + $0x15c] sm:$0xff]
  %v66 = vld [vmem:[%s0 + $0x164] sm:$0xf]
  %v67 = vld [vmem:[%s0 + $0x168] sm:$0xff]
  %v68 = vld [vmem:[%s0 + $0x170] sm:$0xff]
  %v69 = vld [vmem:[%s0 + $0x178] sm:$0xff]
  %v70 = vld [vmem:[%s0 + $0x180] sm:$0xff]
  %v71 = vld [vmem:[%s0 + $0x188] sm:$0xf]
  %v72 = vld [vmem:[%s0 + $0x18c] sm:$0xff]
  %v73 = vld [vmem:[%s0 + $0x194] sm:$0xff]
  %v74 = vld [vmem:[%s0 + $0x19c] sm:$0xff]
  %v75 = vld [vmem:[%s0 + $0x1a4] sm:$0xff]
  %v76 = vld [vmem:[%s0 + $0x1ac] sm:$0xf]
  %v77 = vld [vmem:[%s0 + $0x1b0] sm:$0xff]
  %v78 = vld [vmem:[%s0 + $0x1b8] sm:$0xff]
  %v79 = vld [vmem:[%s0 + $0x1c0] sm:$0xff]
  %v80 = vld [vmem:[%s0 + $0x1c8] sm:$0xff]
  %v81 = vld [vmem:[%s0 + $0x1d0] sm:$0xf]
  %v82 = vld [vmem:[%s0 + $0x1d4] sm:$0xff]
  %v83 = vld [vmem:[%s0 + $0x1dc] sm:$0xff]
  %v84 = vld [vmem:[%s0 + $0x1e4] sm:$0xff]
  %v85 = vld [vmem:[%s0 + $0x1ec] sm:$0xff]
  %v86 = vld [vmem:[%s0 + $0x1f4] sm:$0xf]
  %v87 = vld [vmem:[%s0 + $0x1f8] sm:$0xff]
  %v88 = vld [vmem:[%s0 + $0x200] sm:$0xff]
  %v89 = vld [vmem:[%s0 + $0x208] sm:$0xff]
  %v90 = vld [vmem:[%s0 + $0x210] sm:$0xff]
  %v91 = vld [vmem:[%s0 + $0x218] sm:$0xf]
  %v92 = vld [vmem:[%s0 + $0x21c] sm:$0xff]
  %v93 = vld [vmem:[%s0 + $0x224] sm:$0xff]
  %v94 = vld [vmem:[%s0 + $0x22c] sm:$0xff]
  %v95 = vld [vmem:[%s0 + $0x234] sm:$0xff]
  %v96 = vld [vmem:[%s0 + $0x23c] sm:$0xf]
  %v97 = vld [vmem:[%s1] sm:$0xf]
  %v98 = vld [vmem:[%s1 + $0x4] sm:$0xf]
  %v99 = vld [vmem:[%s1 + $0x8] sm:$0xf]
  %v100 = vld [vmem:[%s1 + $0xc] sm:$0xf]
  %v101 = vld [vmem:[%s1 + $0x10] sm:$0xf]
  %v102 = vld [vmem:[%s1 + $0x14] sm:$0xf]
  %v103 = vld [vmem:[%s1 + $0x18] sm:$0xf]
  %v104 = vld [vmem:[%s1 + $0x1c] sm:$0xf]
  %v105 = vld [vmem:[%s1 + $0x20] sm:$0xf]
  %v106 = vld [vmem:[%s1 + $0x24] sm:$0xf]
  %v107 = vld [vmem:[%s1 + $0x28] sm:$0xf]
  %v108 = vld [vmem:[%s1 + $0x2c] sm:$0xf]
  %v109 = vld [vmem:[%s1 + $0x30] sm:$0xf]
  %v110 = vld [vmem:[%s1 + $0x34] sm:$0xf]
  %v111 = vld [vmem:[%s1 + $0x38] sm:$0xf]
  %v112 = vld [vmem:[%s1 + $0x3c] sm:$0xf]
  %v113 = vld [vmem:[%s1 + $0x40] sm:$0xf]
  %v114 = vld [vmem:[%s1 + $0x44] sm:$0xf]
  %v115 = vld [vmem:[%s1 + $0x48] sm:$0xf]
  %v116 = vld [vmem:[%s1 + $0x4c] sm:$0xf]
  %v117 = vld [vmem:[%s1 + $0x50] sm:$0xf]
  %v118 = vld [vmem:[%s1 + $0x54] sm:$0xf]
  %v119 = vld [vmem:[%s1 + $0x58] sm:$0xf]
  %v120 = vld [vmem:[%s1 + $0x5c] sm:$0xf]
  %v121 = vld [vmem:[%s1 + $0x60] sm:$0xf]
  %v122 = vld [vmem:[%s1 + $0x64] sm:$0xf]
  %v123 = vld [vmem:[%s1 + $0x68] sm:$0xf]
  %v124 = vld [vmem:[%s1 + $0x6c] sm:$0xf]
  %v125 = vld [vmem:[%s1 + $0x70] sm:$0xf]
  %v126 = vld [vmem:[%s1 + $0x74] sm:$0xf]
  %v127 = vld [vmem:[%s1 + $0x78] sm:$0xf]
  %v128 = vld [vmem:[%s1 + $0x7c] sm:$0xf]
  %v129 = vld [vmem:[%s1 + $0x80] sm:$0xf]
  %v130 = vld [vmem:[%s1 + $0x84] sm:$0xf]
  %v131 = vld [vmem:[%s1 + $0x88] sm:$0xf]
  %v132 = vld [vmem:[%s1 + $0x8c] sm:$0xf]
  %v133 = vld [vmem:[%s1 + $0x90] sm:$0xf]
  %v134 = vld [vmem:[%s1 + $0x94] sm:$0xf]
  %v135 = vld [vmem:[%s1 + $0x98] sm:$0xf]
  %v136 = vld [vmem:[%s1 + $0x9c] sm:$0xf]
  %v137 = vld [vmem:[%s1 + $0xa0] sm:$0xf]
  %v138 = vld [vmem:[%s1 + $0xa4] sm:$0xf]
  %v139 = vld [vmem:[%s1 + $0xa8] sm:$0xf]
  %v140 = vld [vmem:[%s1 + $0xac] sm:$0xf]
  %v141 = vld [vmem:[%s1 + $0xb0] sm:$0xf]
  %v142 = vld [vmem:[%s1 + $0xb4] sm:$0xf]
  %v143 = vld [vmem:[%s1 + $0xb8] sm:$0xf]
  %v144 = vld [vmem:[%s1 + $0xbc] sm:$0xf]
  %v145 = vld [vmem:[%s1 + $0xc0] sm:$0xf]
  %v146 = vld [vmem:[%s1 + $0xc4] sm:$0xf]
  %v147 = vld [vmem:[%s1 + $0xc8] sm:$0xf]
  %v148 = vld [vmem:[%s1 + $0xcc] sm:$0xf]
  %v149 = vld [vmem:[%s1 + $0xd0] sm:$0xf]
  %v150 = vld [vmem:[%s1 + $0xd4] sm:$0xf]
  %v151 = vld [vmem:[%s1 + $0xd8] sm:$0xf]
  %v152 = vld [vmem:[%s1 + $0xdc] sm:$0xf]
  %v153 = vld [vmem:[%s1 + $0xe0] sm:$0xf]
  %v154 = vld [vmem:[%s1 + $0xe4] sm:$0xf]
  %v155 = vld [vmem:[%s1 + $0xe8] sm:$0xf]
  %v156 = vld [vmem:[%s1 + $0xec] sm:$0xf]
  %v157 = vld [vmem:[%s1 + $0xf0] sm:$0xf]
  %v158 = vld [vmem:[%s1 + $0xf4] sm:$0xf]
  %v159 = vld [vmem:[%s1 + $0xf8] sm:$0xf]
  %v160 = vld [vmem:[%s1 + $0xfc] sm:$0xf]
  %v161 = vld [vmem:[%s1 + $0x100] sm:$0xf]
  %v162 = vld [vmem:[%s1 + $0x104] sm:$0xf]
  %v163 = vld [vmem:[%s1 + $0x108] sm:$0xf]
  %v164 = vld [vmem:[%s1 + $0x10c] sm:$0xf]
  %v165 = vld [vmem:[%s1 + $0x110] sm:$0xf]
  %v166 = vld [vmem:[%s1 + $0x114] sm:$0xf]
  %v167 = vld [vmem:[%s1 + $0x118] sm:$0xf]
  %v168 = vld [vmem:[%s1 + $0x11c] sm:$0xf]
  %v169 = vld [vmem:[%s1 + $0x120] sm:$0xf]
  %v170 = vld [vmem:[%s1 + $0x124] sm:$0xf]
  %v171 = vld [vmem:[%s1 + $0x128] sm:$0xf]
  %v172 = vld [vmem:[%s1 + $0x12c] sm:$0xf]
  %v173 = vld [vmem:[%s1 + $0x130] sm:$0xf]
  %v174 = vld [vmem:[%s1 + $0x134] sm:$0xf]
  %v175 = vld [vmem:[%s1 + $0x138] sm:$0xf]
  %v176 = vld [vmem:[%s1 + $0x13c] sm:$0xf]
  %v177 = vld [vmem:[%s1 + $0x140] sm:$0xf]
  %v178 = vld [vmem:[%s1 + $0x144] sm:$0xf]
  %v179 = vld [vmem:[%s1 + $0x148] sm:$0xf]
  %v180 = vld [vmem:[%s1 + $0x14c] sm:$0xf]
  %v181 = vld [vmem:[%s1 + $0x150] sm:$0xf]
  %v182 = vld [vmem:[%s1 + $0x154] sm:$0xf]
  %v183 = vld [vmem:[%s1 + $0x158] sm:$0xf]
  %v184 = vld [vmem:[%s1 + $0x15c] sm:$0xf]
  %v185 = vld [vmem:[%s1 + $0x160] sm:$0xf]
  %v186 = vld [vmem:[%s1 + $0x164] sm:$0xf]
  %v187 = vld [vmem:[%s1 + $0x168] sm:$0xf]
  %v188 = vld [vmem:[%s1 + $0x16c] sm:$0xf]
  %v189 = vld [vmem:[%s1 + $0x170] sm:$0xf]
  %v190 = vld [vmem:[%s1 + $0x174] sm:$0xf]
  %v191 = vld [vmem:[%s1 + $0x178] sm:$0xf]
  %v192 = vld [vmem:[%s1 + $0x17c] sm:$0xf]
  %v193 = vld [vmem:[%s1 + $0x180] sm:$0xf]
  %v194 = vld [vmem:[%s1 + $0x184] sm:$0xf]
  %v195 = vld [vmem:[%s1 + $0x188] sm:$0xf]
  %v196 = vld [vmem:[%s1 + $0x18c] sm:$0xf]
  %v197 = vld [vmem:[%s1 + $0x190] sm:$0xf]
  %v198 = vld [vmem:[%s1 + $0x194] sm:$0xf]
  %v199 = vld [vmem:[%s1 + $0x198] sm:$0xf]
  %v200 = vld [vmem:[%s1 + $0x19c] sm:$0xf]
  %v201 = vld [vmem:[%s1 + $0x1a0] sm:$0xf]
  %v202 = vld [vmem:[%s1 + $0x1a4] sm:$0xf]
  %v203 = vld [vmem:[%s1 + $0x1a8] sm:$0xf]
  %v204 = vld [vmem:[%s1 + $0x1ac] sm:$0xf]
  %v205 = vld [vmem:[%s1 + $0x1b0] sm:$0xf]
  %v206 = vld [vmem:[%s1 + $0x1b4] sm:$0xf]
  %v207 = vld [vmem:[%s1 + $0x1b8] sm:$0xf]
  %v208 = vld [vmem:[%s1 + $0x1bc] sm:$0xf]
  %v209 = vld [vmem:[%s1 + $0x1c0] sm:$0xf]
  %v210 = vld [vmem:[%s1 + $0x1c4] sm:$0xf]
  %v211 = vld [vmem:[%s1 + $0x1c8] sm:$0xf]
  %v212 = vld [vmem:[%s1 + $0x1cc] sm:$0xf]
  %v213 = vld [vmem:[%s1 + $0x1d0] sm:$0xf]
  %v214 = vld [vmem:[%s1 + $0x1d4] sm:$0xf]
  %v215 = vld [vmem:[%s1 + $0x1d8] sm:$0xf]
  %v216 = vld [vmem:[%s1 + $0x1dc] sm:$0xf]
  %v217 = vld [vmem:[%s1 + $0x1e0] sm:$0xf]
  %v218 = vld [vmem:[%s1 + $0x1e4] sm:$0xf]
  %v219 = vld [vmem:[%s1 + $0x1e8] sm:$0xf]
  %v220 = vld [vmem:[%s1 + $0x1ec] sm:$0xf]
  %v221 = vld [vmem:[%s1 + $0x1f0] sm:$0xf]
  %v222 = vld [vmem:[%s1 + $0x1f4] sm:$0xf]
  %v223 = vld [vmem:[%s1 + $0x1f8] sm:$0xf]
  %v224 = vld [vmem:[%s1 + $0x1fc] sm:$0xf]
  %v225 = vld [vmem:[%s1 + $0x200] sm:$0xf]
  %v226 = vld [vmem:[%s1 + $0x204] sm:$0xf]
  %v227 = vld [vmem:[%s1 + $0x208] sm:$0xf]
  %v228 = vld [vmem:[%s1 + $0x20c] sm:$0xf]
  %v229 = vld [vmem:[%s1 + $0x210] sm:$0xf]
  %v230 = vld [vmem:[%s1 + $0x214] sm:$0xf]
  %v231 = vld [vmem:[%s1 + $0x218] sm:$0xf]
  %v232 = vld [vmem:[%s1 + $0x21c] sm:$0xf]
  %v233 = vld [vmem:[%s1 + $0x220] sm:$0xf]
  %v234 = vld [vmem:[%s1 + $0x224] sm:$0xf]
  %v235 = vld [vmem:[%s1 + $0x228] sm:$0xf]
  %v236 = vld [vmem:[%s1 + $0x22c] sm:$0xf]
  %v237 = vld [vmem:[%s1 + $0x230] sm:$0xf]
  %v238 = vld [vmem:[%s1 + $0x234] sm:$0xf]
  %v239 = vld [vmem:[%s1 + $0x238] sm:$0xf]
  %v240 = vld [vmem:[%s1 + $0x23c] sm:$0xf]
  %v241 = vld [vmem:[%s2] sm:$0x1]
  %v243 = vperm.slane %v241, 0
  %v325 = vunpack.c.l.b16 %v17
  %v326 = vunpack.c.h.b16 %v17
  %v327 = vunpack.c.l.b16 %v18
  %v328 = vunpack.c.h.b16 %v18
  %v329 = vunpack.c.l.b16 %v19
  %v330 = vunpack.c.h.b16 %v19
  %v331 = vunpack.c.l.b16 %v20
  %v332 = vunpack.c.h.b16 %v20
  %v333 = vunpack.c.l.b16 %v21
  %v334 = vunpack.c.l.b16 %v22
  %v335 = vunpack.c.h.b16 %v22
  %v336 = vunpack.c.l.b16 %v23
  %v337 = vunpack.c.h.b16 %v23
  %v338 = vunpack.c.l.b16 %v24
  %v339 = vunpack.c.h.b16 %v24
  %v340 = vunpack.c.l.b16 %v25
  %v341 = vunpack.c.h.b16 %v25
  %v342 = vunpack.c.l.b16 %v26
  %v343 = vunpack.c.l.b16 %v27
  %v344 = vunpack.c.h.b16 %v27
  %v345 = vunpack.c.l.b16 %v28
  %v346 = vunpack.c.h.b16 %v28
  %v347 = vunpack.c.l.b16 %v29
  %v348 = vunpack.c.h.b16 %v29
  %v349 = vunpack.c.l.b16 %v30
  %v350 = vunpack.c.h.b16 %v30
  %v351 = vunpack.c.l.b16 %v31
  %v352 = vunpack.c.l.b16 %v32
  %v353 = vunpack.c.h.b16 %v32
  %v354 = vunpack.c.l.b16 %v33
  %v355 = vunpack.c.h.b16 %v33
  %v356 = vunpack.c.l.b16 %v34
  %v357 = vunpack.c.h.b16 %v34
  %v358 = vunpack.c.l.b16 %v35
  %v359 = vunpack.c.h.b16 %v35
  %v360 = vunpack.c.l.b16 %v36
  %v361 = vunpack.c.l.b16 %v37
  %v362 = vunpack.c.h.b16 %v37
  %v363 = vunpack.c.l.b16 %v38
  %v364 = vunpack.c.h.b16 %v38
  %v365 = vunpack.c.l.b16 %v39
  %v366 = vunpack.c.h.b16 %v39
  %v367 = vunpack.c.l.b16 %v40
  %v368 = vunpack.c.h.b16 %v40
  %v369 = vunpack.c.l.b16 %v41
  %v370 = vunpack.c.l.b16 %v42
  %v371 = vunpack.c.h.b16 %v42
  %v372 = vunpack.c.l.b16 %v43
  %v373 = vunpack.c.h.b16 %v43
  %v374 = vunpack.c.l.b16 %v44
  %v375 = vunpack.c.h.b16 %v44
  %v376 = vunpack.c.l.b16 %v45
  %v377 = vunpack.c.h.b16 %v45
  %v378 = vunpack.c.l.b16 %v46
  %v379 = vunpack.c.l.b16 %v47
  %v380 = vunpack.c.h.b16 %v47
  %v381 = vunpack.c.l.b16 %v48
  %v382 = vunpack.c.h.b16 %v48
  %v383 = vunpack.c.l.b16 %v49
  %v384 = vunpack.c.h.b16 %v49
  %v385 = vunpack.c.l.b16 %v50
  %v386 = vunpack.c.h.b16 %v50
  %v387 = vunpack.c.l.b16 %v51
  %v388 = vunpack.c.l.b16 %v52
  %v389 = vunpack.c.h.b16 %v52
  %v390 = vunpack.c.l.b16 %v53
  %v391 = vunpack.c.h.b16 %v53
  %v392 = vunpack.c.l.b16 %v54
  %v393 = vunpack.c.h.b16 %v54
  %v394 = vunpack.c.l.b16 %v55
  %v395 = vunpack.c.h.b16 %v55
  %v396 = vunpack.c.l.b16 %v56
  %v397 = vunpack.c.l.b16 %v57
  %v398 = vunpack.c.h.b16 %v57
  %v399 = vunpack.c.l.b16 %v58
  %v400 = vunpack.c.h.b16 %v58
  %v401 = vunpack.c.l.b16 %v59
  %v402 = vunpack.c.h.b16 %v59
  %v403 = vunpack.c.l.b16 %v60
  %v404 = vunpack.c.h.b16 %v60
  %v405 = vunpack.c.l.b16 %v61
  %v406 = vunpack.c.l.b16 %v62
  %v407 = vunpack.c.h.b16 %v62
  %v408 = vunpack.c.l.b16 %v63
  %v409 = vunpack.c.h.b16 %v63
  %v410 = vunpack.c.l.b16 %v64
  %v411 = vunpack.c.h.b16 %v64
  %v412 = vunpack.c.l.b16 %v65
  %v413 = vunpack.c.h.b16 %v65
  %v414 = vunpack.c.l.b16 %v66
  %v415 = vunpack.c.l.b16 %v67
  %v416 = vunpack.c.h.b16 %v67
  %v417 = vunpack.c.l.b16 %v68
  %v418 = vunpack.c.h.b16 %v68
  %v419 = vunpack.c.l.b16 %v69
  %v420 = vunpack.c.h.b16 %v69
  %v421 = vunpack.c.l.b16 %v70
  %v422 = vunpack.c.h.b16 %v70
  %v423 = vunpack.c.l.b16 %v71
  %v424 = vunpack.c.l.b16 %v72
  %v425 = vunpack.c.h.b16 %v72
  %v426 = vunpack.c.l.b16 %v73
  %v427 = vunpack.c.h.b16 %v73
  %v428 = vunpack.c.l.b16 %v74
  %v429 = vunpack.c.h.b16 %v74
  %v430 = vunpack.c.l.b16 %v75
  %v431 = vunpack.c.h.b16 %v75
  %v432 = vunpack.c.l.b16 %v76
  %v433 = vunpack.c.l.b16 %v77
  %v434 = vunpack.c.h.b16 %v77
  %v435 = vunpack.c.l.b16 %v78
  %v436 = vunpack.c.h.b16 %v78
  %v437 = vunpack.c.l.b16 %v79
  %v438 = vunpack.c.h.b16 %v79
  %v439 = vunpack.c.l.b16 %v80
  %v440 = vunpack.c.h.b16 %v80
  %v441 = vunpack.c.l.b16 %v81
  %v442 = vunpack.c.l.b16 %v82
  %v443 = vunpack.c.h.b16 %v82
  %v444 = vunpack.c.l.b16 %v83
  %v445 = vunpack.c.h.b16 %v83
  %v446 = vunpack.c.l.b16 %v84
  %v447 = vunpack.c.h.b16 %v84
  %v448 = vunpack.c.l.b16 %v85
  %v449 = vunpack.c.h.b16 %v85
  %v450 = vunpack.c.l.b16 %v86
  %v451 = vunpack.c.l.b16 %v87
  %v452 = vunpack.c.h.b16 %v87
  %v453 = vunpack.c.l.b16 %v88
  %v454 = vunpack.c.h.b16 %v88
  %v455 = vunpack.c.l.b16 %v89
  %v456 = vunpack.c.h.b16 %v89
  %v457 = vunpack.c.l.b16 %v90
  %v458 = vunpack.c.h.b16 %v90
  %v459 = vunpack.c.l.b16 %v91
  %v460 = vunpack.c.l.b16 %v92
  %v461 = vunpack.c.h.b16 %v92
  %v462 = vunpack.c.l.b16 %v93
  %v463 = vunpack.c.h.b16 %v93
  %v464 = vunpack.c.l.b16 %v94
  %v465 = vunpack.c.h.b16 %v94
  %v466 = vunpack.c.l.b16 %v95
  %v467 = vunpack.c.h.b16 %v95
  %v468 = vunpack.c.l.b16 %v96
  %v469 = vpack.c.b16 %v334, %v325
  %v470 = vpack.c.b16 %v335, %v326
  %v471 = vpack.c.b16 %v336, %v327
  %v472 = vpack.c.b16 %v337, %v328
  %v473 = vpack.c.b16 %v338, %v329
  %v474 = vpack.c.b16 %v339, %v330
  %v475 = vpack.c.b16 %v340, %v331
  %v476 = vpack.c.b16 %v341, %v332
  %v477 = vpack.c.b16 %v342, %v333
  %v478 = vpack.c.b16 %v352, %v343
  %v479 = vpack.c.b16 %v353, %v344
  %v480 = vpack.c.b16 %v354, %v345
  %v481 = vpack.c.b16 %v355, %v346
  %v482 = vpack.c.b16 %v356, %v347
  %v483 = vpack.c.b16 %v357, %v348
  %v484 = vpack.c.b16 %v358, %v349
  %v485 = vpack.c.b16 %v359, %v350
  %v486 = vpack.c.b16 %v360, %v351
  %v487 = vpack.c.b16 %v370, %v361
  %v488 = vpack.c.b16 %v371, %v362
  %v489 = vpack.c.b16 %v372, %v363
  %v490 = vpack.c.b16 %v373, %v364
  %v491 = vpack.c.b16 %v374, %v365
  %v492 = vpack.c.b16 %v375, %v366
  %v493 = vpack.c.b16 %v376, %v367
  %v494 = vpack.c.b16 %v377, %v368
  %v495 = vpack.c.b16 %v378, %v369
  %v496 = vpack.c.b16 %v388, %v379
  %v497 = vpack.c.b16 %v389, %v380
  %v498 = vpack.c.b16 %v390, %v381
  %v499 = vpack.c.b16 %v391, %v382
  %v500 = vpack.c.b16 %v392, %v383
  %v501 = vpack.c.b16 %v393, %v384
  %v502 = vpack.c.b16 %v394, %v385
  %v503 = vpack.c.b16 %v395, %v386
  %v504 = vpack.c.b16 %v396, %v387
  %v505 = vpack.c.b16 %v406, %v397
  %v506 = vpack.c.b16 %v407, %v398
  %v507 = vpack.c.b16 %v408, %v399
  %v508 = vpack.c.b16 %v409, %v400
  %v509 = vpack.c.b16 %v410, %v401
  %v510 = vpack.c.b16 %v411, %v402
  %v511 = vpack.c.b16 %v412, %v403
  %v512 = vpack.c.b16 %v413, %v404
  %v513 = vpack.c.b16 %v414, %v405
  %v514 = vpack.c.b16 %v424, %v415
  %v515 = vpack.c.b16 %v425, %v416
  %v516 = vpack.c.b16 %v426, %v417
  %v517 = vpack.c.b16 %v427, %v418
  %v518 = vpack.c.b16 %v428, %v419
  %v519 = vpack.c.b16 %v429, %v420
  %v520 = vpack.c.b16 %v430, %v421
  %v521 = vpack.c.b16 %v431, %v422
  %v522 = vpack.c.b16 %v432, %v423
  %v523 = vpack.c.b16 %v442, %v433
  %v524 = vpack.c.b16 %v443, %v434
  %v525 = vpack.c.b16 %v444, %v435
  %v526 = vpack.c.b16 %v445, %v436
  %v527 = vpack.c.b16 %v446, %v437
  %v528 = vpack.c.b16 %v447, %v438
  %v529 = vpack.c.b16 %v448, %v439
  %v530 = vpack.c.b16 %v449, %v440
  %v531 = vpack.c.b16 %v450, %v441
  %v532 = vpack.c.b16 %v460, %v451
  %v533 = vpack.c.b16 %v461, %v452
  %v534 = vpack.c.b16 %v462, %v453
  %v535 = vpack.c.b16 %v463, %v454
  %v536 = vpack.c.b16 %v464, %v455
  %v537 = vpack.c.b16 %v465, %v456
  %v538 = vpack.c.b16 %v466, %v457
  %v539 = vpack.c.b16 %v467, %v458
  %v540 = vpack.c.b16 %v468, %v459
  %v757 = vunpack.c.l.b16 %v97
  %v758 = vunpack.c.l.b16 %v98
  %v759 = vunpack.c.l.b16 %v99
  %v760 = vunpack.c.l.b16 %v100
  %v761 = vunpack.c.l.b16 %v101
  %v762 = vunpack.c.l.b16 %v102
  %v763 = vunpack.c.l.b16 %v103
  %v764 = vunpack.c.l.b16 %v104
  %v765 = vunpack.c.l.b16 %v105
  %v766 = vunpack.c.l.b16 %v106
  %v767 = vunpack.c.l.b16 %v107
  %v768 = vunpack.c.l.b16 %v108
  %v769 = vunpack.c.l.b16 %v109
  %v770 = vunpack.c.l.b16 %v110
  %v771 = vunpack.c.l.b16 %v111
  %v772 = vunpack.c.l.b16 %v112
  %v773 = vunpack.c.l.b16 %v113
  %v774 = vunpack.c.l.b16 %v114
  %v775 = vunpack.c.l.b16 %v115
  %v776 = vunpack.c.l.b16 %v116
  %v777 = vunpack.c.l.b16 %v117
  %v778 = vunpack.c.l.b16 %v118
  %v779 = vunpack.c.l.b16 %v119
  %v780 = vunpack.c.l.b16 %v120
  %v781 = vunpack.c.l.b16 %v121
  %v782 = vunpack.c.l.b16 %v122
  %v783 = vunpack.c.l.b16 %v123
  %v784 = vunpack.c.l.b16 %v124
  %v785 = vunpack.c.l.b16 %v125
  %v786 = vunpack.c.l.b16 %v126
  %v787 = vunpack.c.l.b16 %v127
  %v788 = vunpack.c.l.b16 %v128
  %v789 = vunpack.c.l.b16 %v129
  %v790 = vunpack.c.l.b16 %v130
  %v791 = vunpack.c.l.b16 %v131
  %v792 = vunpack.c.l.b16 %v132
  %v793 = vunpack.c.l.b16 %v133
  %v794 = vunpack.c.l.b16 %v134
  %v795 = vunpack.c.l.b16 %v135
  %v796 = vunpack.c.l.b16 %v136
  %v797 = vunpack.c.l.b16 %v137
  %v798 = vunpack.c.l.b16 %v138
  %v799 = vunpack.c.l.b16 %v139
  %v800 = vunpack.c.l.b16 %v140
  %v801 = vunpack.c.l.b16 %v141
  %v802 = vunpack.c.l.b16 %v142
  %v803 = vunpack.c.l.b16 %v143
  %v804 = vunpack.c.l.b16 %v144
  %v805 = vunpack.c.l.b16 %v145
  %v806 = vunpack.c.l.b16 %v146
  %v807 = vunpack.c.l.b16 %v147
  %v808 = vunpack.c.l.b16 %v148
  %v809 = vunpack.c.l.b16 %v149
  %v810 = vunpack.c.l.b16 %v150
  %v811 = vunpack.c.l.b16 %v151
  %v812 = vunpack.c.l.b16 %v152
  %v813 = vunpack.c.l.b16 %v153
  %v814 = vunpack.c.l.b16 %v154
  %v815 = vunpack.c.l.b16 %v155
  %v816 = vunpack.c.l.b16 %v156
  %v817 = vunpack.c.l.b16 %v157
  %v818 = vunpack.c.l.b16 %v158
  %v819 = vunpack.c.l.b16 %v159
  %v820 = vunpack.c.l.b16 %v160
  %v821 = vunpack.c.l.b16 %v161
  %v822 = vunpack.c.l.b16 %v162
  %v823 = vunpack.c.l.b16 %v163
  %v824 = vunpack.c.l.b16 %v164
  %v825 = vunpack.c.l.b16 %v165
  %v826 = vunpack.c.l.b16 %v166
  %v827 = vunpack.c.l.b16 %v167
  %v828 = vunpack.c.l.b16 %v168
  %v829 = vunpack.c.l.b16 %v169
  %v830 = vunpack.c.l.b16 %v170
  %v831 = vunpack.c.l.b16 %v171
  %v832 = vunpack.c.l.b16 %v172
  %v833 = vunpack.c.l.b16 %v173
  %v834 = vunpack.c.l.b16 %v174
  %v835 = vunpack.c.l.b16 %v175
  %v836 = vunpack.c.l.b16 %v176
  %v837 = vunpack.c.l.b16 %v177
  %v838 = vunpack.c.l.b16 %v178
  %v839 = vunpack.c.l.b16 %v179
  %v840 = vunpack.c.l.b16 %v180
  %v841 = vunpack.c.l.b16 %v181
  %v842 = vunpack.c.l.b16 %v182
  %v843 = vunpack.c.l.b16 %v183
  %v844 = vunpack.c.l.b16 %v184
  %v845 = vunpack.c.l.b16 %v185
  %v846 = vunpack.c.l.b16 %v186
  %v847 = vunpack.c.l.b16 %v187
  %v848 = vunpack.c.l.b16 %v188
  %v849 = vunpack.c.l.b16 %v189
  %v850 = vunpack.c.l.b16 %v190
  %v851 = vunpack.c.l.b16 %v191
  %v852 = vunpack.c.l.b16 %v192
  %v853 = vunpack.c.l.b16 %v193
  %v854 = vunpack.c.l.b16 %v194
  %v855 = vunpack.c.l.b16 %v195
  %v856 = vunpack.c.l.b16 %v196
  %v857 = vunpack.c.l.b16 %v197
  %v858 = vunpack.c.l.b16 %v198
  %v859 = vunpack.c.l.b16 %v199
  %v860 = vunpack.c.l.b16 %v200
  %v861 = vunpack.c.l.b16 %v201
  %v862 = vunpack.c.l.b16 %v202
  %v863 = vunpack.c.l.b16 %v203
  %v864 = vunpack.c.l.b16 %v204
  %v865 = vunpack.c.l.b16 %v205
  %v866 = vunpack.c.l.b16 %v206
  %v867 = vunpack.c.l.b16 %v207
  %v868 = vunpack.c.l.b16 %v208
  %v869 = vunpack.c.l.b16 %v209
  %v870 = vunpack.c.l.b16 %v210
  %v871 = vunpack.c.l.b16 %v211
  %v872 = vunpack.c.l.b16 %v212
  %v873 = vunpack.c.l.b16 %v213
  %v874 = vunpack.c.l.b16 %v214
  %v875 = vunpack.c.l.b16 %v215
  %v876 = vunpack.c.l.b16 %v216
  %v877 = vunpack.c.l.b16 %v217
  %v878 = vunpack.c.l.b16 %v218
  %v879 = vunpack.c.l.b16 %v219
  %v880 = vunpack.c.l.b16 %v220
  %v881 = vunpack.c.l.b16 %v221
  %v882 = vunpack.c.l.b16 %v222
  %v883 = vunpack.c.l.b16 %v223
  %v884 = vunpack.c.l.b16 %v224
  %v885 = vunpack.c.l.b16 %v225
  %v886 = vunpack.c.l.b16 %v226
  %v887 = vunpack.c.l.b16 %v227
  %v888 = vunpack.c.l.b16 %v228
  %v889 = vunpack.c.l.b16 %v229
  %v890 = vunpack.c.l.b16 %v230
  %v891 = vunpack.c.l.b16 %v231
  %v892 = vunpack.c.l.b16 %v232
  %v893 = vunpack.c.l.b16 %v233
  %v894 = vunpack.c.l.b16 %v234
  %v895 = vunpack.c.l.b16 %v235
  %v896 = vunpack.c.l.b16 %v236
  %v897 = vunpack.c.l.b16 %v237
  %v898 = vunpack.c.l.b16 %v238
  %v899 = vunpack.c.l.b16 %v239
  %v900 = vunpack.c.l.b16 %v240
  %v901 = vpack.c.b16 %v758, %v757
  %v902 = vpack.c.b16 %v760, %v759
  %v903 = vpack.c.b16 %v762, %v761
  %v904 = vpack.c.b16 %v764, %v763
  %v905 = vpack.c.b16 %v766, %v765
  %v906 = vpack.c.b16 %v768, %v767
  %v907 = vpack.c.b16 %v770, %v769
  %v908 = vpack.c.b16 %v772, %v771
  %v909 = vpack.c.b16 %v774, %v773
  %v910 = vpack.c.b16 %v776, %v775
  %v911 = vpack.c.b16 %v778, %v777
  %v912 = vpack.c.b16 %v780, %v779
  %v913 = vpack.c.b16 %v782, %v781
  %v914 = vpack.c.b16 %v784, %v783
  %v915 = vpack.c.b16 %v786, %v785
  %v916 = vpack.c.b16 %v788, %v787
  %v917 = vpack.c.b16 %v790, %v789
  %v918 = vpack.c.b16 %v792, %v791
  %v919 = vpack.c.b16 %v794, %v793
  %v920 = vpack.c.b16 %v796, %v795
  %v921 = vpack.c.b16 %v798, %v797
  %v922 = vpack.c.b16 %v800, %v799
  %v923 = vpack.c.b16 %v802, %v801
  %v924 = vpack.c.b16 %v804, %v803
  %v925 = vpack.c.b16 %v806, %v805
  %v926 = vpack.c.b16 %v808, %v807
  %v927 = vpack.c.b16 %v810, %v809
  %v928 = vpack.c.b16 %v812, %v811
  %v929 = vpack.c.b16 %v814, %v813
  %v930 = vpack.c.b16 %v816, %v815
  %v931 = vpack.c.b16 %v818, %v817
  %v932 = vpack.c.b16 %v820, %v819
  %v933 = vpack.c.b16 %v822, %v821
  %v934 = vpack.c.b16 %v824, %v823
  %v935 = vpack.c.b16 %v826, %v825
  %v936 = vpack.c.b16 %v828, %v827
  %v937 = vpack.c.b16 %v830, %v829
  %v938 = vpack.c.b16 %v832, %v831
  %v939 = vpack.c.b16 %v834, %v833
  %v940 = vpack.c.b16 %v836, %v835
  %v941 = vpack.c.b16 %v838, %v837
  %v942 = vpack.c.b16 %v840, %v839
  %v943 = vpack.c.b16 %v842, %v841
  %v944 = vpack.c.b16 %v844, %v843
  %v945 = vpack.c.b16 %v846, %v845
  %v946 = vpack.c.b16 %v848, %v847
  %v947 = vpack.c.b16 %v850, %v849
  %v948 = vpack.c.b16 %v852, %v851
  %v949 = vpack.c.b16 %v854, %v853
  %v950 = vpack.c.b16 %v856, %v855
  %v951 = vpack.c.b16 %v858, %v857
  %v952 = vpack.c.b16 %v860, %v859
  %v953 = vpack.c.b16 %v862, %v861
  %v954 = vpack.c.b16 %v864, %v863
  %v955 = vpack.c.b16 %v866, %v865
  %v956 = vpack.c.b16 %v868, %v867
  %v957 = vpack.c.b16 %v870, %v869
  %v958 = vpack.c.b16 %v872, %v871
  %v959 = vpack.c.b16 %v874, %v873
  %v960 = vpack.c.b16 %v876, %v875
  %v961 = vpack.c.b16 %v878, %v877
  %v962 = vpack.c.b16 %v880, %v879
  %v963 = vpack.c.b16 %v882, %v881
  %v964 = vpack.c.b16 %v884, %v883
  %v965 = vpack.c.b16 %v886, %v885
  %v966 = vpack.c.b16 %v888, %v887
  %v967 = vpack.c.b16 %v890, %v889
  %v968 = vpack.c.b16 %v892, %v891
  %v969 = vpack.c.b16 %v894, %v893
  %v970 = vpack.c.b16 %v896, %v895
  %v971 = vpack.c.b16 %v898, %v897
  %v972 = vpack.c.b16 %v900, %v899
  %1045 = vmatpush.bf16.msra.mxu0 %v908
  %1046 = vmatpush.bf16.msra.mxu0 %v907
  %1047 = vmatpush.bf16.msra.mxu0 %v906
  %1048 = vmatpush.bf16.msra.mxu0 %v905
  %1049 = vmatpush.bf16.msra.mxu0 %v904
  %1050 = vmatpush.bf16.msra.mxu0 %v903
  %1051 = vmatpush.bf16.msra.mxu0 %v902
  %1052 = vmatpush.bf16.msra.mxu0 %v901
  %1053 = vmatmul.bf16.gmra.mxu0 %v469
  %v1054 = vpop.f32.mrf.mxu0
  %v1055 = vadd.f32 %v243, %v1054
  %v1056 = vpop.f32.mrf.mxu0
  %v1057 = vadd.f32 %v243, %v1056
  %1058 = vmatmul.bf16.gmra.mxu0 %v478
  %v1059 = vpop.f32.mrf.mxu0
  %v1060 = vadd.f32 %v243, %v1059
  %v1061 = vpop.f32.mrf.mxu0
  %v1062 = vadd.f32 %v243, %v1061
  %1063 = vmatmul.bf16.gmra.mxu0 %v487
  %v1064 = vpop.f32.mrf.mxu0
  %v1065 = vadd.f32 %v243, %v1064
  %v1066 = vpop.f32.mrf.mxu0
  %v1067 = vadd.f32 %v243, %v1066
  %1068 = vmatmul.bf16.gmra.mxu0 %v496
  %v1069 = vpop.f32.mrf.mxu0
  %v1070 = vadd.f32 %v243, %v1069
  %v1071 = vpop.f32.mrf.mxu0
  %v1072 = vadd.f32 %v243, %v1071
  %1073 = vmatmul.bf16.gmra.mxu0 %v505
  %v1074 = vpop.f32.mrf.mxu0
  %v1075 = vadd.f32 %v243, %v1074
  %v1076 = vpop.f32.mrf.mxu0
  %v1077 = vadd.f32 %v243, %v1076
  %1078 = vmatmul.bf16.gmra.mxu0 %v514
  %v1079 = vpop.f32.mrf.mxu0
  %v1080 = vadd.f32 %v243, %v1079
  %v1081 = vpop.f32.mrf.mxu0
  %v1082 = vadd.f32 %v243, %v1081
  %1083 = vmatmul.bf16.gmra.mxu0 %v523
  %v1084 = vpop.f32.mrf.mxu0
  %v1085 = vadd.f32 %v243, %v1084
  %v1086 = vpop.f32.mrf.mxu0
  %v1087 = vadd.f32 %v243, %v1086
  %1088 = vmatmul.bf16.gmra.mxu0 %v532
  %v1089 = vpop.f32.mrf.mxu0
  %v1090 = vadd.f32 %v243, %v1089
  %v1091 = vpop.f32.mrf.mxu0
  %v1092 = vadd.f32 %v243, %v1091
  %1093 = vdwg.mxu0
  %1094 = vmatpush.bf16.msra.mxu0 %v916
  %1095 = vmatpush.bf16.msra.mxu0 %v915
  %1096 = vmatpush.bf16.msra.mxu0 %v914
  %1097 = vmatpush.bf16.msra.mxu0 %v913
  %1098 = vmatpush.bf16.msra.mxu0 %v912
  %1099 = vmatpush.bf16.msra.mxu0 %v911
  %1100 = vmatpush.bf16.msra.mxu0 %v910
  %1101 = vmatpush.bf16.msra.mxu0 %v909
  %1102 = vmatmul.bf16.gmra.mxu0 %v470
  %v1103 = vpop.f32.mrf.mxu0
  %v1104 = vadd.f32 %v1055, %v1103
  %v1105 = vpop.f32.mrf.mxu0
  %v1106 = vadd.f32 %v1057, %v1105
  %1107 = vmatmul.bf16.gmra.mxu0 %v479
  %v1108 = vpop.f32.mrf.mxu0
  %v1109 = vadd.f32 %v1060, %v1108
  %v1110 = vpop.f32.mrf.mxu0
  %v1111 = vadd.f32 %v1062, %v1110
  %1112 = vmatmul.bf16.gmra.mxu0 %v488
  %v1113 = vpop.f32.mrf.mxu0
  %v1114 = vadd.f32 %v1065, %v1113
  %v1115 = vpop.f32.mrf.mxu0
  %v1116 = vadd.f32 %v1067, %v1115
  %1117 = vmatmul.bf16.gmra.mxu0 %v497
  %v1118 = vpop.f32.mrf.mxu0
  %v1119 = vadd.f32 %v1070, %v1118
  %v1120 = vpop.f32.mrf.mxu0
  %v1121 = vadd.f32 %v1072, %v1120
  %1122 = vmatmul.bf16.gmra.mxu0 %v506
  %v1123 = vpop.f32.mrf.mxu0
  %v1124 = vadd.f32 %v1075, %v1123
  %v1125 = vpop.f32.mrf.mxu0
  %v1126 = vadd.f32 %v1077, %v1125
  %1127 = vmatmul.bf16.gmra.mxu0 %v515
  %v1128 = vpop.f32.mrf.mxu0
  %v1129 = vadd.f32 %v1080, %v1128
  %v1130 = vpop.f32.mrf.mxu0
  %v1131 = vadd.f32 %v1082, %v1130
  %1132 = vmatmul.bf16.gmra.mxu0 %v524
  %v1133 = vpop.f32.mrf.mxu0
  %v1134 = vadd.f32 %v1085, %v1133
  %v1135 = vpop.f32.mrf.mxu0
  %v1136 = vadd.f32 %v1087, %v1135
  %1137 = vmatmul.bf16.gmra.mxu0 %v533
  %v1138 = vpop.f32.mrf.mxu0
  %v1139 = vadd.f32 %v1090, %v1138
  %v1140 = vpop.f32.mrf.mxu0
  %v1141 = vadd.f32 %v1092, %v1140
  %1142 = vdwg.mxu0
  %1143 = vmatpush.bf16.msra.mxu0 %v924
  %1144 = vmatpush.bf16.msra.mxu0 %v923
  %1145 = vmatpush.bf16.msra.mxu0 %v922
  %1146 = vmatpush.bf16.msra.mxu0 %v921
  %1147 = vmatpush.bf16.msra.mxu0 %v920
  %1148 = vmatpush.bf16.msra.mxu0 %v919
  %1149 = vmatpush.bf16.msra.mxu0 %v918
  %1150 = vmatpush.bf16.msra.mxu0 %v917
  %1151 = vmatmul.bf16.gmra.mxu0 %v471
  %v1152 = vpop.f32.mrf.mxu0
  %v1153 = vadd.f32 %v1104, %v1152
  %v1154 = vpop.f32.mrf.mxu0
  %v1155 = vadd.f32 %v1106, %v1154
  %1156 = vmatmul.bf16.gmra.mxu0 %v480
  %v1157 = vpop.f32.mrf.mxu0
  %v1158 = vadd.f32 %v1109, %v1157
  %v1159 = vpop.f32.mrf.mxu0
  %v1160 = vadd.f32 %v1111, %v1159
  %1161 = vmatmul.bf16.gmra.mxu0 %v489
  %v1162 = vpop.f32.mrf.mxu0
  %v1163 = vadd.f32 %v1114, %v1162
  %v1164 = vpop.f32.mrf.mxu0
  %v1165 = vadd.f32 %v1116, %v1164
  %1166 = vmatmul.bf16.gmra.mxu0 %v498
  %v1167 = vpop.f32.mrf.mxu0
  %v1168 = vadd.f32 %v1119, %v1167
  %v1169 = vpop.f32.mrf.mxu0
  %v1170 = vadd.f32 %v1121, %v1169
  %1171 = vmatmul.bf16.gmra.mxu0 %v507
  %v1172 = vpop.f32.mrf.mxu0
  %v1173 = vadd.f32 %v1124, %v1172
  %v1174 = vpop.f32.mrf.mxu0
  %v1175 = vadd.f32 %v1126, %v1174
  %1176 = vmatmul.bf16.gmra.mxu0 %v516
  %v1177 = vpop.f32.mrf.mxu0
  %v1178 = vadd.f32 %v1129, %v1177
  %v1179 = vpop.f32.mrf.mxu0
  %v1180 = vadd.f32 %v1131, %v1179
  %1181 = vmatmul.bf16.gmra.mxu0 %v525
  %v1182 = vpop.f32.mrf.mxu0
  %v1183 = vadd.f32 %v1134, %v1182
  %v1184 = vpop.f32.mrf.mxu0
  %v1185 = vadd.f32 %v1136, %v1184
  %1186 = vmatmul.bf16.gmra.mxu0 %v534
  %v1187 = vpop.f32.mrf.mxu0
  %v1188 = vadd.f32 %v1139, %v1187
  %v1189 = vpop.f32.mrf.mxu0
  %v1190 = vadd.f32 %v1141, %v1189
  %1191 = vdwg.mxu0
  %1192 = vmatpush.bf16.msra.mxu0 %v932
  %1193 = vmatpush.bf16.msra.mxu0 %v931
  %1194 = vmatpush.bf16.msra.mxu0 %v930
  %1195 = vmatpush.bf16.msra.mxu0 %v929
  %1196 = vmatpush.bf16.msra.mxu0 %v928
  %1197 = vmatpush.bf16.msra.mxu0 %v927
  %1198 = vmatpush.bf16.msra.mxu0 %v926
  %1199 = vmatpush.bf16.msra.mxu0 %v925
  %1200 = vmatmul.bf16.gmra.mxu0 %v472
  %v1201 = vpop.f32.mrf.mxu0
  %v1202 = vadd.f32 %v1153, %v1201
  %v1203 = vpop.f32.mrf.mxu0
  %v1204 = vadd.f32 %v1155, %v1203
  %1205 = vmatmul.bf16.gmra.mxu0 %v481
  %v1206 = vpop.f32.mrf.mxu0
  %v1207 = vadd.f32 %v1158, %v1206
  %v1208 = vpop.f32.mrf.mxu0
  %v1209 = vadd.f32 %v1160, %v1208
  %1210 = vmatmul.bf16.gmra.mxu0 %v490
  %v1211 = vpop.f32.mrf.mxu0
  %v1212 = vadd.f32 %v1163, %v1211
  %v1213 = vpop.f32.mrf.mxu0
  %v1214 = vadd.f32 %v1165, %v1213
  %1215 = vmatmul.bf16.gmra.mxu0 %v499
  %v1216 = vpop.f32.mrf.mxu0
  %v1217 = vadd.f32 %v1168, %v1216
  %v1218 = vpop.f32.mrf.mxu0
  %v1219 = vadd.f32 %v1170, %v1218
  %1220 = vmatmul.bf16.gmra.mxu0 %v508
  %v1221 = vpop.f32.mrf.mxu0
  %v1222 = vadd.f32 %v1173, %v1221
  %v1223 = vpop.f32.mrf.mxu0
  %v1224 = vadd.f32 %v1175, %v1223
  %1225 = vmatmul.bf16.gmra.mxu0 %v517
  %v1226 = vpop.f32.mrf.mxu0
  %v1227 = vadd.f32 %v1178, %v1226
  %v1228 = vpop.f32.mrf.mxu0
  %v1229 = vadd.f32 %v1180, %v1228
  %1230 = vmatmul.bf16.gmra.mxu0 %v526
  %v1231 = vpop.f32.mrf.mxu0
  %v1232 = vadd.f32 %v1183, %v1231
  %v1233 = vpop.f32.mrf.mxu0
  %v1234 = vadd.f32 %v1185, %v1233
  %1235 = vmatmul.bf16.gmra.mxu0 %v535
  %v1236 = vpop.f32.mrf.mxu0
  %v1237 = vadd.f32 %v1188, %v1236
  %v1238 = vpop.f32.mrf.mxu0
  %v1239 = vadd.f32 %v1190, %v1238
  %1240 = vdwg.mxu0
  %1241 = vmatpush.bf16.msra.mxu0 %v940
  %1242 = vmatpush.bf16.msra.mxu0 %v939
  %1243 = vmatpush.bf16.msra.mxu0 %v938
  %1244 = vmatpush.bf16.msra.mxu0 %v937
  %1245 = vmatpush.bf16.msra.mxu0 %v936
  %1246 = vmatpush.bf16.msra.mxu0 %v935
  %1247 = vmatpush.bf16.msra.mxu0 %v934
  %1248 = vmatpush.bf16.msra.mxu0 %v933
  %1249 = vmatmul.bf16.gmra.mxu0 %v473
  %v1250 = vpop.f32.mrf.mxu0
  %v1251 = vadd.f32 %v1202, %v1250
  %v1252 = vpop.f32.mrf.mxu0
  %v1253 = vadd.f32 %v1204, %v1252
  %1254 = vmatmul.bf16.gmra.mxu0 %v482
  %v1255 = vpop.f32.mrf.mxu0
  %v1256 = vadd.f32 %v1207, %v1255
  %v1257 = vpop.f32.mrf.mxu0
  %v1258 = vadd.f32 %v1209, %v1257
  %1259 = vmatmul.bf16.gmra.mxu0 %v491
  %v1260 = vpop.f32.mrf.mxu0
  %v1261 = vadd.f32 %v1212, %v1260
  %v1262 = vpop.f32.mrf.mxu0
  %v1263 = vadd.f32 %v1214, %v1262
  %1264 = vmatmul.bf16.gmra.mxu0 %v500
  %v1265 = vpop.f32.mrf.mxu0
  %v1266 = vadd.f32 %v1217, %v1265
  %v1267 = vpop.f32.mrf.mxu0
  %v1268 = vadd.f32 %v1219, %v1267
  %1269 = vmatmul.bf16.gmra.mxu0 %v509
  %v1270 = vpop.f32.mrf.mxu0
  %v1271 = vadd.f32 %v1222, %v1270
  %v1272 = vpop.f32.mrf.mxu0
  %v1273 = vadd.f32 %v1224, %v1272
  %1274 = vmatmul.bf16.gmra.mxu0 %v518
  %v1275 = vpop.f32.mrf.mxu0
  %v1276 = vadd.f32 %v1227, %v1275
  %v1277 = vpop.f32.mrf.mxu0
  %v1278 = vadd.f32 %v1229, %v1277
  %1279 = vmatmul.bf16.gmra.mxu0 %v527
  %v1280 = vpop.f32.mrf.mxu0
  %v1281 = vadd.f32 %v1232, %v1280
  %v1282 = vpop.f32.mrf.mxu0
  %v1283 = vadd.f32 %v1234, %v1282
  %1284 = vmatmul.bf16.gmra.mxu0 %v536
  %v1285 = vpop.f32.mrf.mxu0
  %v1286 = vadd.f32 %v1237, %v1285
  %v1287 = vpop.f32.mrf.mxu0
  %v1288 = vadd.f32 %v1239, %v1287
  %1289 = vdwg.mxu0
  %1290 = vmatpush.bf16.msra.mxu0 %v948
  %1291 = vmatpush.bf16.msra.mxu0 %v947
  %1292 = vmatpush.bf16.msra.mxu0 %v946
  %1293 = vmatpush.bf16.msra.mxu0 %v945
  %1294 = vmatpush.bf16.msra.mxu0 %v944
  %1295 = vmatpush.bf16.msra.mxu0 %v943
  %1296 = vmatpush.bf16.msra.mxu0 %v942
  %1297 = vmatpush.bf16.msra.mxu0 %v941
  %1298 = vmatmul.bf16.gmra.mxu0 %v474
  %v1299 = vpop.f32.mrf.mxu0
  %v1300 = vadd.f32 %v1251, %v1299
  %v1301 = vpop.f32.mrf.mxu0
  %v1302 = vadd.f32 %v1253, %v1301
  %1303 = vmatmul.bf16.gmra.mxu0 %v483
  %v1304 = vpop.f32.mrf.mxu0
  %v1305 = vadd.f32 %v1256, %v1304
  %v1306 = vpop.f32.mrf.mxu0
  %v1307 = vadd.f32 %v1258, %v1306
  %1308 = vmatmul.bf16.gmra.mxu0 %v492
  %v1309 = vpop.f32.mrf.mxu0
  %v1310 = vadd.f32 %v1261, %v1309
  %v1311 = vpop.f32.mrf.mxu0
  %v1312 = vadd.f32 %v1263, %v1311
  %1313 = vmatmul.bf16.gmra.mxu0 %v501
  %v1314 = vpop.f32.mrf.mxu0
  %v1315 = vadd.f32 %v1266, %v1314
  %v1316 = vpop.f32.mrf.mxu0
  %v1317 = vadd.f32 %v1268, %v1316
  %1318 = vmatmul.bf16.gmra.mxu0 %v510
  %v1319 = vpop.f32.mrf.mxu0
  %v1320 = vadd.f32 %v1271, %v1319
  %v1321 = vpop.f32.mrf.mxu0
  %v1322 = vadd.f32 %v1273, %v1321
  %1323 = vmatmul.bf16.gmra.mxu0 %v519
  %v1324 = vpop.f32.mrf.mxu0
  %v1325 = vadd.f32 %v1276, %v1324
  %v1326 = vpop.f32.mrf.mxu0
  %v1327 = vadd.f32 %v1278, %v1326
  %1328 = vmatmul.bf16.gmra.mxu0 %v528
  %v1329 = vpop.f32.mrf.mxu0
  %v1330 = vadd.f32 %v1281, %v1329
  %v1331 = vpop.f32.mrf.mxu0
  %v1332 = vadd.f32 %v1283, %v1331
  %1333 = vmatmul.bf16.gmra.mxu0 %v537
  %v1334 = vpop.f32.mrf.mxu0
  %v1335 = vadd.f32 %v1286, %v1334
  %v1336 = vpop.f32.mrf.mxu0
  %v1337 = vadd.f32 %v1288, %v1336
  %1338 = vdwg.mxu0
  %1339 = vmatpush.bf16.msra.mxu0 %v956
  %1340 = vmatpush.bf16.msra.mxu0 %v955
  %1341 = vmatpush.bf16.msra.mxu0 %v954
  %1342 = vmatpush.bf16.msra.mxu0 %v953
  %1343 = vmatpush.bf16.msra.mxu0 %v952
  %1344 = vmatpush.bf16.msra.mxu0 %v951
  %1345 = vmatpush.bf16.msra.mxu0 %v950
  %1346 = vmatpush.bf16.msra.mxu0 %v949
  %1347 = vmatmul.bf16.gmra.mxu0 %v475
  %v1348 = vpop.f32.mrf.mxu0
  %v1349 = vadd.f32 %v1300, %v1348
  %v1350 = vpop.f32.mrf.mxu0
  %v1351 = vadd.f32 %v1302, %v1350
  %1352 = vmatmul.bf16.gmra.mxu0 %v484
  %v1353 = vpop.f32.mrf.mxu0
  %v1354 = vadd.f32 %v1305, %v1353
  %v1355 = vpop.f32.mrf.mxu0
  %v1356 = vadd.f32 %v1307, %v1355
  %1357 = vmatmul.bf16.gmra.mxu0 %v493
  %v1358 = vpop.f32.mrf.mxu0
  %v1359 = vadd.f32 %v1310, %v1358
  %v1360 = vpop.f32.mrf.mxu0
  %v1361 = vadd.f32 %v1312, %v1360
  %1362 = vmatmul.bf16.gmra.mxu0 %v502
  %v1363 = vpop.f32.mrf.mxu0
  %v1364 = vadd.f32 %v1315, %v1363
  %v1365 = vpop.f32.mrf.mxu0
  %v1366 = vadd.f32 %v1317, %v1365
  %1367 = vmatmul.bf16.gmra.mxu0 %v511
  %v1368 = vpop.f32.mrf.mxu0
  %v1369 = vadd.f32 %v1320, %v1368
  %v1370 = vpop.f32.mrf.mxu0
  %v1371 = vadd.f32 %v1322, %v1370
  %1372 = vmatmul.bf16.gmra.mxu0 %v520
  %v1373 = vpop.f32.mrf.mxu0
  %v1374 = vadd.f32 %v1325, %v1373
  %v1375 = vpop.f32.mrf.mxu0
  %v1376 = vadd.f32 %v1327, %v1375
  %1377 = vmatmul.bf16.gmra.mxu0 %v529
  %v1378 = vpop.f32.mrf.mxu0
  %v1379 = vadd.f32 %v1330, %v1378
  %v1380 = vpop.f32.mrf.mxu0
  %v1381 = vadd.f32 %v1332, %v1380
  %1382 = vmatmul.bf16.gmra.mxu0 %v538
  %v1383 = vpop.f32.mrf.mxu0
  %v1384 = vadd.f32 %v1335, %v1383
  %v1385 = vpop.f32.mrf.mxu0
  %v1386 = vadd.f32 %v1337, %v1385
  %1387 = vdwg.mxu0
  %1388 = vmatpush.bf16.msra.mxu0 %v964
  %1389 = vmatpush.bf16.msra.mxu0 %v963
  %1390 = vmatpush.bf16.msra.mxu0 %v962
  %1391 = vmatpush.bf16.msra.mxu0 %v961
  %1392 = vmatpush.bf16.msra.mxu0 %v960
  %1393 = vmatpush.bf16.msra.mxu0 %v959
  %1394 = vmatpush.bf16.msra.mxu0 %v958
  %1395 = vmatpush.bf16.msra.mxu0 %v957
  %1396 = vmatmul.bf16.gmra.mxu0 %v476
  %v1397 = vpop.f32.mrf.mxu0
  %v1398 = vadd.f32 %v1349, %v1397
  %v1399 = vpop.f32.mrf.mxu0
  %v1400 = vadd.f32 %v1351, %v1399
  %1401 = vmatmul.bf16.gmra.mxu0 %v485
  %v1402 = vpop.f32.mrf.mxu0
  %v1403 = vadd.f32 %v1354, %v1402
  %v1404 = vpop.f32.mrf.mxu0
  %v1405 = vadd.f32 %v1356, %v1404
  %1406 = vmatmul.bf16.gmra.mxu0 %v494
  %v1407 = vpop.f32.mrf.mxu0
  %v1408 = vadd.f32 %v1359, %v1407
  %v1409 = vpop.f32.mrf.mxu0
  %v1410 = vadd.f32 %v1361, %v1409
  %1411 = vmatmul.bf16.gmra.mxu0 %v503
  %v1412 = vpop.f32.mrf.mxu0
  %v1413 = vadd.f32 %v1364, %v1412
  %v1414 = vpop.f32.mrf.mxu0
  %v1415 = vadd.f32 %v1366, %v1414
  %1416 = vmatmul.bf16.gmra.mxu0 %v512
  %v1417 = vpop.f32.mrf.mxu0
  %v1418 = vadd.f32 %v1369, %v1417
  %v1419 = vpop.f32.mrf.mxu0
  %v1420 = vadd.f32 %v1371, %v1419
  %1421 = vmatmul.bf16.gmra.mxu0 %v521
  %v1422 = vpop.f32.mrf.mxu0
  %v1423 = vadd.f32 %v1374, %v1422
  %v1424 = vpop.f32.mrf.mxu0
  %v1425 = vadd.f32 %v1376, %v1424
  %1426 = vmatmul.bf16.gmra.mxu0 %v530
  %v1427 = vpop.f32.mrf.mxu0
  %v1428 = vadd.f32 %v1379, %v1427
  %v1429 = vpop.f32.mrf.mxu0
  %v1430 = vadd.f32 %v1381, %v1429
  %1431 = vmatmul.bf16.gmra.mxu0 %v539
  %v1432 = vpop.f32.mrf.mxu0
  %v1433 = vadd.f32 %v1384, %v1432
  %v1434 = vpop.f32.mrf.mxu0
  %v1435 = vadd.f32 %v1386, %v1434
  %1436 = vdwg.mxu0
  %1437 = vmatpush.bf16.msra.mxu0 %v972
  %1438 = vmatpush.bf16.msra.mxu0 %v971
  %1439 = vmatpush.bf16.msra.mxu0 %v970
  %1440 = vmatpush.bf16.msra.mxu0 %v969
  %1441 = vmatpush.bf16.msra.mxu0 %v968
  %1442 = vmatpush.bf16.msra.mxu0 %v967
  %1443 = vmatpush.bf16.msra.mxu0 %v966
  %1444 = vmatpush.bf16.msra.mxu0 %v965
  %1445 = vmatmul.bf16.gmra.mxu0 %v477
  %v1446 = vpop.f32.mrf.mxu0
  %v1447 = vadd.f32 %v1398, %v1446
  %v1448 = vpop.f32.mrf.mxu0
  %v1449 = vadd.f32 %v1400, %v1448
  %1450 = vmatmul.bf16.gmra.mxu0 %v486
  %v1451 = vpop.f32.mrf.mxu0
  %v1452 = vadd.f32 %v1403, %v1451
  %v1453 = vpop.f32.mrf.mxu0
  %v1454 = vadd.f32 %v1405, %v1453
  %1455 = vmatmul.bf16.gmra.mxu0 %v495
  %v1456 = vpop.f32.mrf.mxu0
  %v1457 = vadd.f32 %v1408, %v1456
  %v1458 = vpop.f32.mrf.mxu0
  %v1459 = vadd.f32 %v1410, %v1458
  %1460 = vmatmul.bf16.gmra.mxu0 %v504
  %v1461 = vpop.f32.mrf.mxu0
  %v1462 = vadd.f32 %v1413, %v1461
  %v1463 = vpop.f32.mrf.mxu0
  %v1464 = vadd.f32 %v1415, %v1463
  %1465 = vmatmul.bf16.gmra.mxu0 %v513
  %v1466 = vpop.f32.mrf.mxu0
  %v1467 = vadd.f32 %v1418, %v1466
  %v1468 = vpop.f32.mrf.mxu0
  %v1469 = vadd.f32 %v1420, %v1468
  %1470 = vmatmul.bf16.gmra.mxu0 %v522
  %v1471 = vpop.f32.mrf.mxu0
  %v1472 = vadd.f32 %v1423, %v1471
  %v1473 = vpop.f32.mrf.mxu0
  %v1474 = vadd.f32 %v1425, %v1473
  %1475 = vmatmul.bf16.gmra.mxu0 %v531
  %v1476 = vpop.f32.mrf.mxu0
  %v1477 = vadd.f32 %v1428, %v1476
  %v1478 = vpop.f32.mrf.mxu0
  %v1479 = vadd.f32 %v1430, %v1478
  %1480 = vmatmul.bf16.gmra.mxu0 %v540
  %v1481 = vpop.f32.mrf.mxu0
  %v1482 = vadd.f32 %v1433, %v1481
  %v1483 = vpop.f32.mrf.mxu0
  %v1484 = vadd.f32 %v1435, %v1483
  %1485 = vdwg.mxu0
  %v1486 = vld [vmem:[%s3] sm:$0xf]
  %v1487 = vld [vmem:[%s3 + $0x4] sm:$0xf]
  %v1488 = vld [vmem:[%s3 + $0x8] sm:$0xf]
  %v1489 = vld [vmem:[%s3 + $0xc] sm:$0xf]
  %v1490 = vld [vmem:[%s3 + $0x10] sm:$0xf]
  %v1491 = vld [vmem:[%s3 + $0x14] sm:$0xf]
  %v1492 = vld [vmem:[%s3 + $0x18] sm:$0xf]
  %v1493 = vld [vmem:[%s3 + $0x1c] sm:$0xf]
  %v1494 = vld [vmem:[%s3 + $0x20] sm:$0xf]
  %v1495 = vld [vmem:[%s3 + $0x24] sm:$0xf]
  %v1496 = vld [vmem:[%s3 + $0x28] sm:$0xf]
  %v1497 = vld [vmem:[%s3 + $0x2c] sm:$0xf]
  %v1498 = vld [vmem:[%s3 + $0x30] sm:$0xf]
  %v1499 = vld [vmem:[%s3 + $0x34] sm:$0xf]
  %v1500 = vld [vmem:[%s3 + $0x38] sm:$0xf]
  %v1501 = vld [vmem:[%s3 + $0x3c] sm:$0xf]
  %v1502 = vunpack.c.l.bf16 %v1486
  %v1503 = vunpack.c.l.bf16 %v1487
  %v1504 = vunpack.c.l.bf16 %v1488
  %v1505 = vunpack.c.l.bf16 %v1489
  %v1506 = vunpack.c.l.bf16 %v1490
  %v1507 = vunpack.c.l.bf16 %v1491
  %v1508 = vunpack.c.l.bf16 %v1492
  %v1509 = vunpack.c.l.bf16 %v1493
  %v1510 = vunpack.c.l.bf16 %v1494
  %v1511 = vunpack.c.l.bf16 %v1495
  %v1512 = vunpack.c.l.bf16 %v1496
  %v1513 = vunpack.c.l.bf16 %v1497
  %v1514 = vunpack.c.l.bf16 %v1498
  %v1515 = vunpack.c.l.bf16 %v1499
  %v1516 = vunpack.c.l.bf16 %v1500
  %v1517 = vunpack.c.l.bf16 %v1501
  %v1518 = vadd.f32 %v1447, %v1502
  %v1519 = vadd.f32 %v1449, %v1503
  %v1520 = vadd.f32 %v1452, %v1504
  %v1521 = vadd.f32 %v1454, %v1505
  %v1522 = vadd.f32 %v1457, %v1506
  %v1523 = vadd.f32 %v1459, %v1507
  %v1524 = vadd.f32 %v1462, %v1508
  %v1525 = vadd.f32 %v1464, %v1509
  %v1526 = vadd.f32 %v1467, %v1510
  %v1527 = vadd.f32 %v1469, %v1511
  %v1528 = vadd.f32 %v1472, %v1512
  %v1529 = vadd.f32 %v1474, %v1513
  %v1530 = vadd.f32 %v1477, %v1514
  %v1531 = vadd.f32 %v1479, %v1515
  %v1532 = vadd.f32 %v1482, %v1516
  %v1533 = vadd.f32 %v1484, %v1517
  %v1534 = vmax.f32 %v1518, 0.0
  %v1535 = vmax.f32 %v1519, 0.0
  %v1536 = vmax.f32 %v1520, 0.0
  %v1537 = vmax.f32 %v1521, 0.0
  %v1538 = vmax.f32 %v1522, 0.0
  %v1539 = vmax.f32 %v1523, 0.0
  %v1540 = vmax.f32 %v1524, 0.0
  %v1541 = vmax.f32 %v1525, 0.0
  %v1542 = vmax.f32 %v1526, 0.0
  %v1543 = vmax.f32 %v1527, 0.0
  %v1544 = vmax.f32 %v1528, 0.0
  %v1545 = vmax.f32 %v1529, 0.0
  %v1546 = vmax.f32 %v1530, 0.0
  %v1547 = vmax.f32 %v1531, 0.0
  %v1548 = vmax.f32 %v1532, 0.0
  %v1549 = vmax.f32 %v1533, 0.0
  %v1550 = vpack.c.bf16 %v1534, %v1534
  %v1551 = vpack.c.bf16 %v1535, %v1535
  %v1552 = vpack.c.bf16 %v1536, %v1536
  %v1553 = vpack.c.bf16 %v1537, %v1537
  %v1554 = vpack.c.bf16 %v1538, %v1538
  %v1555 = vpack.c.bf16 %v1539, %v1539
  %v1556 = vpack.c.bf16 %v1540, %v1540
  %v1557 = vpack.c.bf16 %v1541, %v1541
  %v1558 = vpack.c.bf16 %v1542, %v1542
  %v1559 = vpack.c.bf16 %v1543, %v1543
  %v1560 = vpack.c.bf16 %v1544, %v1544
  %v1561 = vpack.c.bf16 %v1545, %v1545
  %v1562 = vpack.c.bf16 %v1546, %v1546
  %v1563 = vpack.c.bf16 %v1547, %v1547
  %v1564 = vpack.c.bf16 %v1548, %v1548
  %v1565 = vpack.c.bf16 %v1549, %v1549
  %1566 = vst [vmem:[%s4] sm:$0xf] %v1550
  %1567 = vst [vmem:[%s4 + $0x4] sm:$0xf] %v1551
  %1568 = vst [vmem:[%s4 + $0x8] sm:$0xf] %v1552
  %1569 = vst [vmem:[%s4 + $0xc] sm:$0xf] %v1553
  %1570 = vst [vmem:[%s4 + $0x10] sm:$0xf] %v1554
  %1571 = vst [vmem:[%s4 + $0x14] sm:$0xf] %v1555
  %1572 = vst [vmem:[%s4 + $0x18] sm:$0xf] %v1556
  %1573 = vst [vmem:[%s4 + $0x1c] sm:$0xf] %v1557
  %1574 = vst [vmem:[%s4 + $0x20] sm:$0xf] %v1558
  %1575 = vst [vmem:[%s4 + $0x24] sm:$0xf] %v1559
  %1576 = vst [vmem:[%s4 + $0x28] sm:$0xf] %v1560
  %1577 = vst [vmem:[%s4 + $0x2c] sm:$0xf] %v1561
  %1578 = vst [vmem:[%s4 + $0x30] sm:$0xf] %v1562
  %1579 = vst [vmem:[%s4 + $0x34] sm:$0xf] %v1563
  %1580 = vst [vmem:[%s4 + $0x38] sm:$0xf] %v1564
  %1581 = vst [vmem:[%s4 + $0x3c] sm:$0xf] %v1565
  // Predicated region
  $region18: #{depth_star_forward.17} parent=0 // pred_check
    _
  $region19: #{depth_star_forward.17} parent=0 // pred_check_branch
    %1583 = sbr.rel (0) target = $region21
  $region20: #{depth_star_forward.17} parent=0 // pred_region
    _
  $region21: #{depth_star_forward.17} parent=0 // pred_fallthru
    _
  // Predicated region
  $region22: #{depth_star_forward.17} parent=0 // pred_check
    _
  $region23: #{depth_star_forward.17} parent=0 // pred_check_branch
    %1585 = sbr.rel (0) target = $region25
  $region24: #{depth_star_forward.17} parent=0 // pred_region
    _
  $region25: #{depth_star_forward.17} parent=0 // pred_fallthru
    _

// kernel: depth_star_forward.16
$region0: #{depth_star_forward.16}
  #allocation0 [shape = 'u32[]', space=smem, size = 0x4, offset = 0x4, fixed_abs, tag = 'smem constant byte address 0x4 - core index']
  #allocation1 [shape = 'u32[72,128]{1,0:T(1,128)}', space=vmem, size = 0x9000, scoped, tag = 'internal scratch']
  %s0 = inlined_call_operand.vmem [shape: bf16[128,1152], index: 0, kind: input, shape index: {}]
  %s1 = inlined_call_operand.vmem [shape: bf16[1152,128], index: 1, kind: input, shape index: {}]
  %s2 = inlined_call_operand.vmem [shape: f32[1,128], index: 2, kind: input, shape index: {}]
  %s3 = inlined_call_operand.vmem [shape: bf16[128,128], index: 3, kind: output, shape index: {}]
  %s4 = sld [smem:[#allocation0]]
  $region22: #{depth_star_forward.16} parent=0
    _
  %s6 = ssub.s32 1, %s4
  %s7 = scalar_select 0, %s6, %s4
  // Predicated region
  $region2: #{depth_star_forward.16} parent=0 // pred_check
    _
  $region3: #{depth_star_forward.16} parent=0 // pred_check_branch
    %9 = sbr.rel (0) target = $region5
  $region4: #{depth_star_forward.16} parent=0 // pred_region
    _
  $region5: #{depth_star_forward.16} parent=0 // pred_fallthru
    _
  // Predicated region
  $region6: #{depth_star_forward.16} parent=0 // pred_check
    _
  $region7: #{depth_star_forward.16} parent=0 // pred_check_branch
    %11 = sbr.rel (0) target = $region9
  $region8: #{depth_star_forward.16} parent=0 // pred_region
    _
  $region9: #{depth_star_forward.16} parent=0 // pred_fallthru
    _
  // Predicated region
  $region10: #{depth_star_forward.16} parent=0 // pred_check
    _
  $region11: #{depth_star_forward.16} parent=0 // pred_check_branch
    %13 = sbr.rel (0) target = $region13
  $region12: #{depth_star_forward.16} parent=0 // pred_region
    _
  $region13: #{depth_star_forward.16} parent=0 // pred_fallthru
    _
  %v14 = vld [vmem:[%s0] sm:$0xff]
  %v15 = vld [vmem:[%s0 + $0x8] sm:$0xff]
  %v16 = vld [vmem:[%s0 + $0x10] sm:$0xff]
  %v17 = vld [vmem:[%s0 + $0x18] sm:$0xff]
  %v18 = vld [vmem:[%s0 + $0x20] sm:$0xf]
  %v19 = vld [vmem:[%s0 + $0x24] sm:$0xff]
  %v20 = vld [vmem:[%s0 + $0x2c] sm:$0xff]
  %v21 = vld [vmem:[%s0 + $0x34] sm:$0xff]
  %v22 = vld [vmem:[%s0 + $0x3c] sm:$0xff]
  %v23 = vld [vmem:[%s0 + $0x44] sm:$0xf]
  %v24 = vld [vmem:[%s0 + $0x48] sm:$0xff]
  %v25 = vld [vmem:[%s0 + $0x50] sm:$0xff]
  %v26 = vld [vmem:[%s0 + $0x58] sm:$0xff]
  %v27 = vld [vmem:[%s0 + $0x60] sm:$0xff]
  %v28 = vld [vmem:[%s0 + $0x68] sm:$0xf]
  %v29 = vld [vmem:[%s0 + $0x6c] sm:$0xff]
  %v30 = vld [vmem:[%s0 + $0x74] sm:$0xff]
  %v31 = vld [vmem:[%s0 + $0x7c] sm:$0xff]
  %v32 = vld [vmem:[%s0 + $0x84] sm:$0xff]
  %v33 = vld [vmem:[%s0 + $0x8c] sm:$0xf]
  %v34 = vld [vmem:[%s0 + $0x90] sm:$0xff]
  %v35 = vld [vmem:[%s0 + $0x98] sm:$0xff]
  %v36 = vld [vmem:[%s0 + $0xa0] sm:$0xff]
  %v37 = vld [vmem:[%s0 + $0xa8] sm:$0xff]
  %v38 = vld [vmem:[%s0 + $0xb0] sm:$0xf]
  %v39 = vld [vmem:[%s0 + $0xb4] sm:$0xff]
  %v40 = vld [vmem:[%s0 + $0xbc] sm:$0xff]
  %v41 = vld [vmem:[%s0 + $0xc4] sm:$0xff]
  %v42 = vld [vmem:[%s0 + $0xcc] sm:$0xff]
  %v43 = vld [vmem:[%s0 + $0xd4] sm:$0xf]
  %v44 = vld [vmem:[%s0 + $0xd8] sm:$0xff]
  %v45 = vld [vmem:[%s0 + $0xe0] sm:$0xff]
  %v46 = vld [vmem:[%s0 + $0xe8] sm:$0xff]
  %v47 = vld [vmem:[%s0 + $0xf0] sm:$0xff]
  %v48 = vld [vmem:[%s0 + $0xf8] sm:$0xf]
  %v49 = vld [vmem:[%s0 + $0xfc] sm:$0xff]
  %v50 = vld [vmem:[%s0 + $0x104] sm:$0xff]
  %v51 = vld [vmem:[%s0 + $0x10c] sm:$0xff]
  %v52 = vld [vmem:[%s0 + $0x114] sm:$0xff]
  %v53 = vld [vmem:[%s0 + $0x11c] sm:$0xf]
  %v54 = vld [vmem:[%s0 + $0x120] sm:$0xff]
  %v55 = vld [vmem:[%s0 + $0x128] sm:$0xff]
  %v56 = vld [vmem:[%s0 + $0x130] sm:$0xff]
  %v57 = vld [vmem:[%s0 + $0x138] sm:$0xff]
  %v58 = vld [vmem:[%s0 + $0x140] sm:$0xf]
  %v59 = vld [vmem:[%s0 + $0x144] sm:$0xff]
  %v60 = vld [vmem:[%s0 + $0x14c] sm:$0xff]
  %v61 = vld [vmem:[%s0 + $0x154] sm:$0xff]
  %v62 = vld [vmem:[%s0 + $0x15c] sm:$0xff]
  %v63 = vld [vmem:[%s0 + $0x164] sm:$0xf]
  %v64 = vld [vmem:[%s0 + $0x168] sm:$0xff]
  %v65 = vld [vmem:[%s0 + $0x170] sm:$0xff]
  %v66 = vld [vmem:[%s0 + $0x178] sm:$0xff]
  %v67 = vld [vmem:[%s0 + $0x180] sm:$0xff]
  %v68 = vld [vmem:[%s0 + $0x188] sm:$0xf]
  %v69 = vld [vmem:[%s0 + $0x18c] sm:$0xff]
  %v70 = vld [vmem:[%s0 + $0x194] sm:$0xff]
  %v71 = vld [vmem:[%s0 + $0x19c] sm:$0xff]
  %v72 = vld [vmem:[%s0 + $0x1a4] sm:$0xff]
  %v73 = vld [vmem:[%s0 + $0x1ac] sm:$0xf]
  %v74 = vld [vmem:[%s0 + $0x1b0] sm:$0xff]
  %v75 = vld [vmem:[%s0 + $0x1b8] sm:$0xff]
  %v76 = vld [vmem:[%s0 + $0x1c0] sm:$0xff]
  %v77 = vld [vmem:[%s0 + $0x1c8] sm:$0xff]
  %v78 = vld [vmem:[%s0 + $0x1d0] sm:$0xf]
  %v79 = vld [vmem:[%s0 + $0x1d4] sm:$0xff]
  %v80 = vld [vmem:[%s0 + $0x1dc] sm:$0xff]
  %v81 = vld [vmem:[%s0 + $0x1e4] sm:$0xff]
  %v82 = vld [vmem:[%s0 + $0x1ec] sm:$0xff]
  %v83 = vld [vmem:[%s0 + $0x1f4] sm:$0xf]
  %v84 = vld [vmem:[%s0 + $0x1f8] sm:$0xff]
  %v85 = vld [vmem:[%s0 + $0x200] sm:$0xff]
  %v86 = vld [vmem:[%s0 + $0x208] sm:$0xff]
  %v87 = vld [vmem:[%s0 + $0x210] sm:$0xff]
  %v88 = vld [vmem:[%s0 + $0x218] sm:$0xf]
  %v89 = vld [vmem:[%s0 + $0x21c] sm:$0xff]
  %v90 = vld [vmem:[%s0 + $0x224] sm:$0xff]
  %v91 = vld [vmem:[%s0 + $0x22c] sm:$0xff]
  %v92 = vld [vmem:[%s0 + $0x234] sm:$0xff]
  %v93 = vld [vmem:[%s0 + $0x23c] sm:$0xf]
  %v94 = vld [vmem:[%s1] sm:$0xf]
  %v95 = vld [vmem:[%s1 + $0x4] sm:$0xf]
  %v96 = vld [vmem:[%s1 + $0x8] sm:$0xf]
  %v97 = vld [vmem:[%s1 + $0xc] sm:$0xf]
  %v98 = vld [vmem:[%s1 + $0x10] sm:$0xf]
  %v99 = vld [vmem:[%s1 + $0x14] sm:$0xf]
  %v100 = vld [vmem:[%s1 + $0x18] sm:$0xf]
  %v101 = vld [vmem:[%s1 + $0x1c] sm:$0xf]
  %v102 = vld [vmem:[%s1 + $0x20] sm:$0xf]
  %v103 = vld [vmem:[%s1 + $0x24] sm:$0xf]
  %v104 = vld [vmem:[%s1 + $0x28] sm:$0xf]
  %v105 = vld [vmem:[%s1 + $0x2c] sm:$0xf]
  %v106 = vld [vmem:[%s1 + $0x30] sm:$0xf]
  %v107 = vld [vmem:[%s1 + $0x34] sm:$0xf]
  %v108 = vld [vmem:[%s1 + $0x38] sm:$0xf]
  %v109 = vld [vmem:[%s1 + $0x3c] sm:$0xf]
  %v110 = vld [vmem:[%s1 + $0x40] sm:$0xf]
  %v111 = vld [vmem:[%s1 + $0x44] sm:$0xf]
  %v112 = vld [vmem:[%s1 + $0x48] sm:$0xf]
  %v113 = vld [vmem:[%s1 + $0x4c] sm:$0xf]
  %v114 = vld [vmem:[%s1 + $0x50] sm:$0xf]
  %v115 = vld [vmem:[%s1 + $0x54] sm:$0xf]
  %v116 = vld [vmem:[%s1 + $0x58] sm:$0xf]
  %v117 = vld [vmem:[%s1 + $0x5c] sm:$0xf]
  %v118 = vld [vmem:[%s1 + $0x60] sm:$0xf]
  %v119 = vld [vmem:[%s1 + $0x64] sm:$0xf]
  %v120 = vld [vmem:[%s1 + $0x68] sm:$0xf]
  %v121 = vld [vmem:[%s1 + $0x6c] sm:$0xf]
  %v122 = vld [vmem:[%s1 + $0x70] sm:$0xf]
  %v123 = vld [vmem:[%s1 + $0x74] sm:$0xf]
  %v124 = vld [vmem:[%s1 + $0x78] sm:$0xf]
  %v125 = vld [vmem:[%s1 + $0x7c] sm:$0xf]
  %v126 = vld [vmem:[%s1 + $0x80] sm:$0xf]
  %v127 = vld [vmem:[%s1 + $0x84] sm:$0xf]
  %v128 = vld [vmem:[%s1 + $0x88] sm:$0xf]
  %v129 = vld [vmem:[%s1 + $0x8c] sm:$0xf]
  %v130 = vld [vmem:[%s1 + $0x90] sm:$0xf]
  %v131 = vld [vmem:[%s1 + $0x94] sm:$0xf]
  %v132 = vld [vmem:[%s1 + $0x98] sm:$0xf]
  %v133 = vld [vmem:[%s1 + $0x9c] sm:$0xf]
  %v134 = vld [vmem:[%s1 + $0xa0] sm:$0xf]
  %v135 = vld [vmem:[%s1 + $0xa4] sm:$0xf]
  %v136 = vld [vmem:[%s1 + $0xa8] sm:$0xf]
  %v137 = vld [vmem:[%s1 + $0xac] sm:$0xf]
  %v138 = vld [vmem:[%s1 + $0xb0] sm:$0xf]
  %v139 = vld [vmem:[%s1 + $0xb4] sm:$0xf]
  %v140 = vld [vmem:[%s1 + $0xb8] sm:$0xf]
  %v141 = vld [vmem:[%s1 + $0xbc] sm:$0xf]
  %v142 = vld [vmem:[%s1 + $0xc0] sm:$0xf]
  %v143 = vld [vmem:[%s1 + $0xc4] sm:$0xf]
  %v144 = vld [vmem:[%s1 + $0xc8] sm:$0xf]
  %v145 = vld [vmem:[%s1 + $0xcc] sm:$0xf]
  %v146 = vld [vmem:[%s1 + $0xd0] sm:$0xf]
  %v147 = vld [vmem:[%s1 + $0xd4] sm:$0xf]
  %v148 = vld [vmem:[%s1 + $0xd8] sm:$0xf]
  %v149 = vld [vmem:[%s1 + $0xdc] sm:$0xf]
  %v150 = vld [vmem:[%s1 + $0xe0] sm:$0xf]
  %v151 = vld [vmem:[%s1 + $0xe4] sm:$0xf]
  %v152 = vld [vmem:[%s1 + $0xe8] sm:$0xf]
  %v153 = vld [vmem:[%s1 + $0xec] sm:$0xf]
  %v154 = vld [vmem:[%s1 + $0xf0] sm:$0xf]
  %v155 = vld [vmem:[%s1 + $0xf4] sm:$0xf]
  %v156 = vld [vmem:[%s1 + $0xf8] sm:$0xf]
  %v157 = vld [vmem:[%s1 + $0xfc] sm:$0xf]
  %v158 = vld [vmem:[%s1 + $0x100] sm:$0xf]
  %v159 = vld [vmem:[%s1 + $0x104] sm:$0xf]
  %v160 = vld [vmem:[%s1 + $0x108] sm:$0xf]
  %v161 = vld [vmem:[%s1 + $0x10c] sm:$0xf]
  %v162 = vld [vmem:[%s1 + $0x110] sm:$0xf]
  %v163 = vld [vmem:[%s1 + $0x114] sm:$0xf]
  %v164 = vld [vmem:[%s1 + $0x118] sm:$0xf]
  %v165 = vld [vmem:[%s1 + $0x11c] sm:$0xf]
  %v166 = vld [vmem:[%s1 + $0x120] sm:$0xf]
  %v167 = vld [vmem:[%s1 + $0x124] sm:$0xf]
  %v168 = vld [vmem:[%s1 + $0x128] sm:$0xf]
  %v169 = vld [vmem:[%s1 + $0x12c] sm:$0xf]
  %v170 = vld [vmem:[%s1 + $0x130] sm:$0xf]
  %v171 = vld [vmem:[%s1 + $0x134] sm:$0xf]
  %v172 = vld [vmem:[%s1 + $0x138] sm:$0xf]
  %v173 = vld [vmem:[%s1 + $0x13c] sm:$0xf]
  %v174 = vld [vmem:[%s1 + $0x140] sm:$0xf]
  %v175 = vld [vmem:[%s1 + $0x144] sm:$0xf]
  %v176 = vld [vmem:[%s1 + $0x148] sm:$0xf]
  %v177 = vld [vmem:[%s1 + $0x14c] sm:$0xf]
  %v178 = vld [vmem:[%s1 + $0x150] sm:$0xf]
  %v179 = vld [vmem:[%s1 + $0x154] sm:$0xf]
  %v180 = vld [vmem:[%s1 + $0x158] sm:$0xf]
  %v181 = vld [vmem:[%s1 + $0x15c] sm:$0xf]
  %v182 = vld [vmem:[%s1 + $0x160] sm:$0xf]
  %v183 = vld [vmem:[%s1 + $0x164] sm:$0xf]
  %v184 = vld [vmem:[%s1 + $0x168] sm:$0xf]
  %v185 = vld [vmem:[%s1 + $0x16c] sm:$0xf]
  %v186 = vld [vmem:[%s1 + $0x170] sm:$0xf]
  %v187 = vld [vmem:[%s1 + $0x174] sm:$0xf]
  %v188 = vld [vmem:[%s1 + $0x178] sm:$0xf]
  %v189 = vld [vmem:[%s1 + $0x17c] sm:$0xf]
  %v190 = vld [vmem:[%s1 + $0x180] sm:$0xf]
  %v191 = vld [vmem:[%s1 + $0x184] sm:$0xf]
  %v192 = vld [vmem:[%s1 + $0x188] sm:$0xf]
  %v193 = vld [vmem:[%s1 + $0x18c] sm:$0xf]
  %v194 = vld [vmem:[%s1 + $0x190] sm:$0xf]
  %v195 = vld [vmem:[%s1 + $0x194] sm:$0xf]
  %v196 = vld [vmem:[%s1 + $0x198] sm:$0xf]
  %v197 = vld [vmem:[%s1 + $0x19c] sm:$0xf]
  %v198 = vld [vmem:[%s1 + $0x1a0] sm:$0xf]
  %v199 = vld [vmem:[%s1 + $0x1a4] sm:$0xf]
  %v200 = vld [vmem:[%s1 + $0x1a8] sm:$0xf]
  %v201 = vld [vmem:[%s1 + $0x1ac] sm:$0xf]
  %v202 = vld [vmem:[%s1 + $0x1b0] sm:$0xf]
  %v203 = vld [vmem:[%s1 + $0x1b4] sm:$0xf]
  %v204 = vld [vmem:[%s1 + $0x1b8] sm:$0xf]
  %v205 = vld [vmem:[%s1 + $0x1bc] sm:$0xf]
  %v206 = vld [vmem:[%s1 + $0x1c0] sm:$0xf]
  %v207 = vld [vmem:[%s1 + $0x1c4] sm:$0xf]
  %v208 = vld [vmem:[%s1 + $0x1c8] sm:$0xf]
  %v209 = vld [vmem:[%s1 + $0x1cc] sm:$0xf]
  %v210 = vld [vmem:[%s1 + $0x1d0] sm:$0xf]
  %v211 = vld [vmem:[%s1 + $0x1d4] sm:$0xf]
  %v212 = vld [vmem:[%s1 + $0x1d8] sm:$0xf]
  %v213 = vld [vmem:[%s1 + $0x1dc] sm:$0xf]
  %v214 = vld [vmem:[%s1 + $0x1e0] sm:$0xf]
  %v215 = vld [vmem:[%s1 + $0x1e4] sm:$0xf]
  %v216 = vld [vmem:[%s1 + $0x1e8] sm:$0xf]
  %v217 = vld [vmem:[%s1 + $0x1ec] sm:$0xf]
  %v218 = vld [vmem:[%s1 + $0x1f0] sm:$0xf]
  %v219 = vld [vmem:[%s1 + $0x1f4] sm:$0xf]
  %v220 = vld [vmem:[%s1 + $0x1f8] sm:$0xf]
  %v221 = vld [vmem:[%s1 + $0x1fc] sm:$0xf]
  %v222 = vld [vmem:[%s1 + $0x200] sm:$0xf]
  %v223 = vld [vmem:[%s1 + $0x204] sm:$0xf]
  %v224 = vld [vmem:[%s1 + $0x208] sm:$0xf]
  %v225 = vld [vmem:[%s1 + $0x20c] sm:$0xf]
  %v226 = vld [vmem:[%s1 + $0x210] sm:$0xf]
  %v227 = vld [vmem:[%s1 + $0x214] sm:$0xf]
  %v228 = vld [vmem:[%s1 + $0x218] sm:$0xf]
  %v229 = vld [vmem:[%s1 + $0x21c] sm:$0xf]
  %v230 = vld [vmem:[%s1 + $0x220] sm:$0xf]
  %v231 = vld [vmem:[%s1 + $0x224] sm:$0xf]
  %v232 = vld [vmem:[%s1 + $0x228] sm:$0xf]
  %v233 = vld [vmem:[%s1 + $0x22c] sm:$0xf]
  %v234 = vld [vmem:[%s1 + $0x230] sm:$0xf]
  %v235 = vld [vmem:[%s1 + $0x234] sm:$0xf]
  %v236 = vld [vmem:[%s1 + $0x238] sm:$0xf]
  %v237 = vld [vmem:[%s1 + $0x23c] sm:$0xf]
  %v238 = vld [vmem:[%s2] sm:$0x1]
  %v240 = vperm.slane %v238, 0
  %v322 = vunpack.c.l.b16 %v14
  %v323 = vunpack.c.h.b16 %v14
  %v324 = vunpack.c.l.b16 %v15
  %v325 = vunpack.c.h.b16 %v15
  %v326 = vunpack.c.l.b16 %v16
  %v327 = vunpack.c.h.b16 %v16
  %v328 = vunpack.c.l.b16 %v17
  %v329 = vunpack.c.h.b16 %v17
  %v330 = vunpack.c.l.b16 %v18
  %v331 = vunpack.c.l.b16 %v19
  %v332 = vunpack.c.h.b16 %v19
  %v333 = vunpack.c.l.b16 %v20
  %v334 = vunpack.c.h.b16 %v20
  %v335 = vunpack.c.l.b16 %v21
  %v336 = vunpack.c.h.b16 %v21
  %v337 = vunpack.c.l.b16 %v22
  %v338 = vunpack.c.h.b16 %v22
  %v339 = vunpack.c.l.b16 %v23
  %v340 = vunpack.c.l.b16 %v24
  %v341 = vunpack.c.h.b16 %v24
  %v342 = vunpack.c.l.b16 %v25
  %v343 = vunpack.c.h.b16 %v25
  %v344 = vunpack.c.l.b16 %v26
  %v345 = vunpack.c.h.b16 %v26
  %v346 = vunpack.c.l.b16 %v27
  %v347 = vunpack.c.h.b16 %v27
  %v348 = vunpack.c.l.b16 %v28
  %v349 = vunpack.c.l.b16 %v29
  %v350 = vunpack.c.h.b16 %v29
  %v351 = vunpack.c.l.b16 %v30
  %v352 = vunpack.c.h.b16 %v30
  %v353 = vunpack.c.l.b16 %v31
  %v354 = vunpack.c.h.b16 %v31
  %v355 = vunpack.c.l.b16 %v32
  %v356 = vunpack.c.h.b16 %v32
  %v357 = vunpack.c.l.b16 %v33
  %v358 = vunpack.c.l.b16 %v34
  %v359 = vunpack.c.h.b16 %v34
  %v360 = vunpack.c.l.b16 %v35
  %v361 = vunpack.c.h.b16 %v35
  %v362 = vunpack.c.l.b16 %v36
  %v363 = vunpack.c.h.b16 %v36
  %v364 = vunpack.c.l.b16 %v37
  %v365 = vunpack.c.h.b16 %v37
  %v366 = vunpack.c.l.b16 %v38
  %v367 = vunpack.c.l.b16 %v39
  %v368 = vunpack.c.h.b16 %v39
  %v369 = vunpack.c.l.b16 %v40
  %v370 = vunpack.c.h.b16 %v40
  %v371 = vunpack.c.l.b16 %v41
  %v372 = vunpack.c.h.b16 %v41
  %v373 = vunpack.c.l.b16 %v42
  %v374 = vunpack.c.h.b16 %v42
  %v375 = vunpack.c.l.b16 %v43
  %v376 = vunpack.c.l.b16 %v44
  %v377 = vunpack.c.h.b16 %v44
  %v378 = vunpack.c.l.b16 %v45
  %v379 = vunpack.c.h.b16 %v45
  %v380 = vunpack.c.l.b16 %v46
  %v381 = vunpack.c.h.b16 %v46
  %v382 = vunpack.c.l.b16 %v47
  %v383 = vunpack.c.h.b16 %v47
  %v384 = vunpack.c.l.b16 %v48
  %v385 = vunpack.c.l.b16 %v49
  %v386 = vunpack.c.h.b16 %v49
  %v387 = vunpack.c.l.b16 %v50
  %v388 = vunpack.c.h.b16 %v50
  %v389 = vunpack.c.l.b16 %v51
  %v390 = vunpack.c.h.b16 %v51
  %v391 = vunpack.c.l.b16 %v52
  %v392 = vunpack.c.h.b16 %v52
  %v393 = vunpack.c.l.b16 %v53
  %v394 = vunpack.c.l.b16 %v54
  %v395 = vunpack.c.h.b16 %v54
  %v396 = vunpack.c.l.b16 %v55
  %v397 = vunpack.c.h.b16 %v55
  %v398 = vunpack.c.l.b16 %v56
  %v399 = vunpack.c.h.b16 %v56
  %v400 = vunpack.c.l.b16 %v57
  %v401 = vunpack.c.h.b16 %v57
  %v402 = vunpack.c.l.b16 %v58
  %v403 = vunpack.c.l.b16 %v59
  %v404 = vunpack.c.h.b16 %v59
  %v405 = vunpack.c.l.b16 %v60
  %v406 = vunpack.c.h.b16 %v60
  %v407 = vunpack.c.l.b16 %v61
  %v408 = vunpack.c.h.b16 %v61
  %v409 = vunpack.c.l.b16 %v62
  %v410 = vunpack.c.h.b16 %v62
  %v411 = vunpack.c.l.b16 %v63
  %v412 = vunpack.c.l.b16 %v64
  %v413 = vunpack.c.h.b16 %v64
  %v414 = vunpack.c.l.b16 %v65
  %v415 = vunpack.c.h.b16 %v65
  %v416 = vunpack.c.l.b16 %v66
  %v417 = vunpack.c.h.b16 %v66
  %v418 = vunpack.c.l.b16 %v67
  %v419 = vunpack.c.h.b16 %v67
  %v420 = vunpack.c.l.b16 %v68
  %v421 = vunpack.c.l.b16 %v69
  %v422 = vunpack.c.h.b16 %v69
  %v423 = vunpack.c.l.b16 %v70
  %v424 = vunpack.c.h.b16 %v70
  %v425 = vunpack.c.l.b16 %v71
  %v426 = vunpack.c.h.b16 %v71
  %v427 = vunpack.c.l.b16 %v72
  %v428 = vunpack.c.h.b16 %v72
  %v429 = vunpack.c.l.b16 %v73
  %v430 = vunpack.c.l.b16 %v74
  %v431 = vunpack.c.h.b16 %v74
  %v432 = vunpack.c.l.b16 %v75
  %v433 = vunpack.c.h.b16 %v75
  %v434 = vunpack.c.l.b16 %v76
  %v435 = vunpack.c.h.b16 %v76
  %v436 = vunpack.c.l.b16 %v77
  %v437 = vunpack.c.h.b16 %v77
  %v438 = vunpack.c.l.b16 %v78
  %v439 = vunpack.c.l.b16 %v79
  %v440 = vunpack.c.h.b16 %v79
  %v441 = vunpack.c.l.b16 %v80
  %v442 = vunpack.c.h.b16 %v80
  %v443 = vunpack.c.l.b16 %v81
  %v444 = vunpack.c.h.b16 %v81
  %v445 = vunpack.c.l.b16 %v82
  %v446 = vunpack.c.h.b16 %v82
  %v447 = vunpack.c.l.b16 %v83
  %v448 = vunpack.c.l.b16 %v84
  %v449 = vunpack.c.h.b16 %v84
  %v450 = vunpack.c.l.b16 %v85
  %v451 = vunpack.c.h.b16 %v85
  %v452 = vunpack.c.l.b16 %v86
  %v453 = vunpack.c.h.b16 %v86
  %v454 = vunpack.c.l.b16 %v87
  %v455 = vunpack.c.h.b16 %v87
  %v456 = vunpack.c.l.b16 %v88
  %v457 = vunpack.c.l.b16 %v89
  %v458 = vunpack.c.h.b16 %v89
  %v459 = vunpack.c.l.b16 %v90
  %v460 = vunpack.c.h.b16 %v90
  %v461 = vunpack.c.l.b16 %v91
  %v462 = vunpack.c.h.b16 %v91
  %v463 = vunpack.c.l.b16 %v92
  %v464 = vunpack.c.h.b16 %v92
  %v465 = vunpack.c.l.b16 %v93
  %v466 = vpack.c.b16 %v331, %v322
  %v467 = vpack.c.b16 %v332, %v323
  %v468 = vpack.c.b16 %v333, %v324
  %v469 = vpack.c.b16 %v334, %v325
  %v470 = vpack.c.b16 %v335, %v326
  %v471 = vpack.c.b16 %v336, %v327
  %v472 = vpack.c.b16 %v337, %v328
  %v473 = vpack.c.b16 %v338, %v329
  %v474 = vpack.c.b16 %v339, %v330
  %v475 = vpack.c.b16 %v349, %v340
  %v476 = vpack.c.b16 %v350, %v341
  %v477 = vpack.c.b16 %v351, %v342
  %v478 = vpack.c.b16 %v352, %v343
  %v479 = vpack.c.b16 %v353, %v344
  %v480 = vpack.c.b16 %v354, %v345
  %v481 = vpack.c.b16 %v355, %v346
  %v482 = vpack.c.b16 %v356, %v347
  %v483 = vpack.c.b16 %v357, %v348
  %v484 = vpack.c.b16 %v367, %v358
  %v485 = vpack.c.b16 %v368, %v359
  %v486 = vpack.c.b16 %v369, %v360
  %v487 = vpack.c.b16 %v370, %v361
  %v488 = vpack.c.b16 %v371, %v362
  %v489 = vpack.c.b16 %v372, %v363
  %v490 = vpack.c.b16 %v373, %v364
  %v491 = vpack.c.b16 %v374, %v365
  %v492 = vpack.c.b16 %v375, %v366
  %v493 = vpack.c.b16 %v385, %v376
  %v494 = vpack.c.b16 %v386, %v377
  %v495 = vpack.c.b16 %v387, %v378
  %v496 = vpack.c.b16 %v388, %v379
  %v497 = vpack.c.b16 %v389, %v380
  %v498 = vpack.c.b16 %v390, %v381
  %v499 = vpack.c.b16 %v391, %v382
  %v500 = vpack.c.b16 %v392, %v383
  %v501 = vpack.c.b16 %v393, %v384
  %v502 = vpack.c.b16 %v403, %v394
  %v503 = vpack.c.b16 %v404, %v395
  %v504 = vpack.c.b16 %v405, %v396
  %v505 = vpack.c.b16 %v406, %v397
  %v506 = vpack.c.b16 %v407, %v398
  %v507 = vpack.c.b16 %v408, %v399
  %v508 = vpack.c.b16 %v409, %v400
  %v509 = vpack.c.b16 %v410, %v401
  %v510 = vpack.c.b16 %v411, %v402
  %v511 = vpack.c.b16 %v421, %v412
  %v512 = vpack.c.b16 %v422, %v413
  %v513 = vpack.c.b16 %v423, %v414
  %v514 = vpack.c.b16 %v424, %v415
  %v515 = vpack.c.b16 %v425, %v416
  %v516 = vpack.c.b16 %v426, %v417
  %v517 = vpack.c.b16 %v427, %v418
  %v518 = vpack.c.b16 %v428, %v419
  %v519 = vpack.c.b16 %v429, %v420
  %v520 = vpack.c.b16 %v439, %v430
  %v521 = vpack.c.b16 %v440, %v431
  %v522 = vpack.c.b16 %v441, %v432
  %v523 = vpack.c.b16 %v442, %v433
  %v524 = vpack.c.b16 %v443, %v434
  %v525 = vpack.c.b16 %v444, %v435
  %v526 = vpack.c.b16 %v445, %v436
  %v527 = vpack.c.b16 %v446, %v437
  %v528 = vpack.c.b16 %v447, %v438
  %v529 = vpack.c.b16 %v457, %v448
  %v530 = vpack.c.b16 %v458, %v449
  %v531 = vpack.c.b16 %v459, %v450
  %v532 = vpack.c.b16 %v460, %v451
  %v533 = vpack.c.b16 %v461, %v452
  %v534 = vpack.c.b16 %v462, %v453
  %v535 = vpack.c.b16 %v463, %v454
  %v536 = vpack.c.b16 %v464, %v455
  %v537 = vpack.c.b16 %v465, %v456
  %v754 = vunpack.c.l.b16 %v94
  %v755 = vunpack.c.l.b16 %v95
  %v756 = vunpack.c.l.b16 %v96
  %v757 = vunpack.c.l.b16 %v97
  %v758 = vunpack.c.l.b16 %v98
  %v759 = vunpack.c.l.b16 %v99
  %v760 = vunpack.c.l.b16 %v100
  %v761 = vunpack.c.l.b16 %v101
  %v762 = vunpack.c.l.b16 %v102
  %v763 = vunpack.c.l.b16 %v103
  %v764 = vunpack.c.l.b16 %v104
  %v765 = vunpack.c.l.b16 %v105
  %v766 = vunpack.c.l.b16 %v106
  %v767 = vunpack.c.l.b16 %v107
  %v768 = vunpack.c.l.b16 %v108
  %v769 = vunpack.c.l.b16 %v109
  %v770 = vunpack.c.l.b16 %v110
  %v771 = vunpack.c.l.b16 %v111
  %v772 = vunpack.c.l.b16 %v112
  %v773 = vunpack.c.l.b16 %v113
  %v774 = vunpack.c.l.b16 %v114
  %v775 = vunpack.c.l.b16 %v115
  %v776 = vunpack.c.l.b16 %v116
  %v777 = vunpack.c.l.b16 %v117
  %v778 = vunpack.c.l.b16 %v118
  %v779 = vunpack.c.l.b16 %v119
  %v780 = vunpack.c.l.b16 %v120
  %v781 = vunpack.c.l.b16 %v121
  %v782 = vunpack.c.l.b16 %v122
  %v783 = vunpack.c.l.b16 %v123
  %v784 = vunpack.c.l.b16 %v124
  %v785 = vunpack.c.l.b16 %v125
  %v786 = vunpack.c.l.b16 %v126
  %v787 = vunpack.c.l.b16 %v127
  %v788 = vunpack.c.l.b16 %v128
  %v789 = vunpack.c.l.b16 %v129
  %v790 = vunpack.c.l.b16 %v130
  %v791 = vunpack.c.l.b16 %v131
  %v792 = vunpack.c.l.b16 %v132
  %v793 = vunpack.c.l.b16 %v133
  %v794 = vunpack.c.l.b16 %v134
  %v795 = vunpack.c.l.b16 %v135
  %v796 = vunpack.c.l.b16 %v136
  %v797 = vunpack.c.l.b16 %v137
  %v798 = vunpack.c.l.b16 %v138
  %v799 = vunpack.c.l.b16 %v139
  %v800 = vunpack.c.l.b16 %v140
  %v801 = vunpack.c.l.b16 %v141
  %v802 = vunpack.c.l.b16 %v142
  %v803 = vunpack.c.l.b16 %v143
  %v804 = vunpack.c.l.b16 %v144
  %v805 = vunpack.c.l.b16 %v145
  %v806 = vunpack.c.l.b16 %v146
  %v807 = vunpack.c.l.b16 %v147
  %v808 = vunpack.c.l.b16 %v148
  %v809 = vunpack.c.l.b16 %v149
  %v810 = vunpack.c.l.b16 %v150
  %v811 = vunpack.c.l.b16 %v151
  %v812 = vunpack.c.l.b16 %v152
  %v813 = vunpack.c.l.b16 %v153
  %v814 = vunpack.c.l.b16 %v154
  %v815 = vunpack.c.l.b16 %v155
  %v816 = vunpack.c.l.b16 %v156
  %v817 = vunpack.c.l.b16 %v157
  %v818 = vunpack.c.l.b16 %v158
  %v819 = vunpack.c.l.b16 %v159
  %v820 = vunpack.c.l.b16 %v160
  %v821 = vunpack.c.l.b16 %v161
  %v822 = vunpack.c.l.b16 %v162
  %v823 = vunpack.c.l.b16 %v163
  %v824 = vunpack.c.l.b16 %v164
  %v825 = vunpack.c.l.b16 %v165
  %v826 = vunpack.c.l.b16 %v166
  %v827 = vunpack.c.l.b16 %v167
  %v828 = vunpack.c.l.b16 %v168
  %v829 = vunpack.c.l.b16 %v169
  %v830 = vunpack.c.l.b16 %v170
  %v831 = vunpack.c.l.b16 %v171
  %v832 = vunpack.c.l.b16 %v172
  %v833 = vunpack.c.l.b16 %v173
  %v834 = vunpack.c.l.b16 %v174
  %v835 = vunpack.c.l.b16 %v175
  %v836 = vunpack.c.l.b16 %v176
  %v837 = vunpack.c.l.b16 %v177
  %v838 = vunpack.c.l.b16 %v178
  %v839 = vunpack.c.l.b16 %v179
  %v840 = vunpack.c.l.b16 %v180
  %v841 = vunpack.c.l.b16 %v181
  %v842 = vunpack.c.l.b16 %v182
  %v843 = vunpack.c.l.b16 %v183
  %v844 = vunpack.c.l.b16 %v184
  %v845 = vunpack.c.l.b16 %v185
  %v846 = vunpack.c.l.b16 %v186
  %v847 = vunpack.c.l.b16 %v187
  %v848 = vunpack.c.l.b16 %v188
  %v849 = vunpack.c.l.b16 %v189
  %v850 = vunpack.c.l.b16 %v190
  %v851 = vunpack.c.l.b16 %v191
  %v852 = vunpack.c.l.b16 %v192
  %v853 = vunpack.c.l.b16 %v193
  %v854 = vunpack.c.l.b16 %v194
  %v855 = vunpack.c.l.b16 %v195
  %v856 = vunpack.c.l.b16 %v196
  %v857 = vunpack.c.l.b16 %v197
  %v858 = vunpack.c.l.b16 %v198
  %v859 = vunpack.c.l.b16 %v199
  %v860 = vunpack.c.l.b16 %v200
  %v861 = vunpack.c.l.b16 %v201
  %v862 = vunpack.c.l.b16 %v202
  %v863 = vunpack.c.l.b16 %v203
  %v864 = vunpack.c.l.b16 %v204
  %v865 = vunpack.c.l.b16 %v205
  %v866 = vunpack.c.l.b16 %v206
  %v867 = vunpack.c.l.b16 %v207
  %v868 = vunpack.c.l.b16 %v208
  %v869 = vunpack.c.l.b16 %v209
  %v870 = vunpack.c.l.b16 %v210
  %v871 = vunpack.c.l.b16 %v211
  %v872 = vunpack.c.l.b16 %v212
  %v873 = vunpack.c.l.b16 %v213
  %v874 = vunpack.c.l.b16 %v214
  %v875 = vunpack.c.l.b16 %v215
  %v876 = vunpack.c.l.b16 %v216
  %v877 = vunpack.c.l.b16 %v217
  %v878 = vunpack.c.l.b16 %v218
  %v879 = vunpack.c.l.b16 %v219
  %v880 = vunpack.c.l.b16 %v220
  %v881 = vunpack.c.l.b16 %v221
  %v882 = vunpack.c.l.b16 %v222
  %v883 = vunpack.c.l.b16 %v223
  %v884 = vunpack.c.l.b16 %v224
  %v885 = vunpack.c.l.b16 %v225
  %v886 = vunpack.c.l.b16 %v226
  %v887 = vunpack.c.l.b16 %v227
  %v888 = vunpack.c.l.b16 %v228
  %v889 = vunpack.c.l.b16 %v229
  %v890 = vunpack.c.l.b16 %v230
  %v891 = vunpack.c.l.b16 %v231
  %v892 = vunpack.c.l.b16 %v232
  %v893 = vunpack.c.l.b16 %v233
  %v894 = vunpack.c.l.b16 %v234
  %v895 = vunpack.c.l.b16 %v235
  %v896 = vunpack.c.l.b16 %v236
  %v897 = vunpack.c.l.b16 %v237
  %v898 = vpack.c.b16 %v755, %v754
  %v899 = vpack.c.b16 %v757, %v756
  %v900 = vpack.c.b16 %v759, %v758
  %v901 = vpack.c.b16 %v761, %v760
  %v902 = vpack.c.b16 %v763, %v762
  %v903 = vpack.c.b16 %v765, %v764
  %v904 = vpack.c.b16 %v767, %v766
  %v905 = vpack.c.b16 %v769, %v768
  %v906 = vpack.c.b16 %v771, %v770
  %v907 = vpack.c.b16 %v773, %v772
  %v908 = vpack.c.b16 %v775, %v774
  %v909 = vpack.c.b16 %v777, %v776
  %v910 = vpack.c.b16 %v779, %v778
  %v911 = vpack.c.b16 %v781, %v780
  %v912 = vpack.c.b16 %v783, %v782
  %v913 = vpack.c.b16 %v785, %v784
  %v914 = vpack.c.b16 %v787, %v786
  %v915 = vpack.c.b16 %v789, %v788
  %v916 = vpack.c.b16 %v791, %v790
  %v917 = vpack.c.b16 %v793, %v792
  %v918 = vpack.c.b16 %v795, %v794
  %v919 = vpack.c.b16 %v797, %v796
  %v920 = vpack.c.b16 %v799, %v798
  %v921 = vpack.c.b16 %v801, %v800
  %v922 = vpack.c.b16 %v803, %v802
  %v923 = vpack.c.b16 %v805, %v804
  %v924 = vpack.c.b16 %v807, %v806
  %v925 = vpack.c.b16 %v809, %v808
  %v926 = vpack.c.b16 %v811, %v810
  %v927 = vpack.c.b16 %v813, %v812
  %v928 = vpack.c.b16 %v815, %v814
  %v929 = vpack.c.b16 %v817, %v816
  %v930 = vpack.c.b16 %v819, %v818
  %v931 = vpack.c.b16 %v821, %v820
  %v932 = vpack.c.b16 %v823, %v822
  %v933 = vpack.c.b16 %v825, %v824
  %v934 = vpack.c.b16 %v827, %v826
  %v935 = vpack.c.b16 %v829, %v828
  %v936 = vpack.c.b16 %v831, %v830
  %v937 = vpack.c.b16 %v833, %v832
  %v938 = vpack.c.b16 %v835, %v834
  %v939 = vpack.c.b16 %v837, %v836
  %v940 = vpack.c.b16 %v839, %v838
  %v941 = vpack.c.b16 %v841, %v840
  %v942 = vpack.c.b16 %v843, %v842
  %v943 = vpack.c.b16 %v845, %v844
  %v944 = vpack.c.b16 %v847, %v846
  %v945 = vpack.c.b16 %v849, %v848
  %v946 = vpack.c.b16 %v851, %v850
  %v947 = vpack.c.b16 %v853, %v852
  %v948 = vpack.c.b16 %v855, %v854
  %v949 = vpack.c.b16 %v857, %v856
  %v950 = vpack.c.b16 %v859, %v858
  %v951 = vpack.c.b16 %v861, %v860
  %v952 = vpack.c.b16 %v863, %v862
  %v953 = vpack.c.b16 %v865, %v864
  %v954 = vpack.c.b16 %v867, %v866
  %v955 = vpack.c.b16 %v869, %v868
  %v956 = vpack.c.b16 %v871, %v870
  %v957 = vpack.c.b16 %v873, %v872
  %v958 = vpack.c.b16 %v875, %v874
  %v959 = vpack.c.b16 %v877, %v876
  %v960 = vpack.c.b16 %v879, %v878
  %v961 = vpack.c.b16 %v881, %v880
  %v962 = vpack.c.b16 %v883, %v882
  %v963 = vpack.c.b16 %v885, %v884
  %v964 = vpack.c.b16 %v887, %v886
  %v965 = vpack.c.b16 %v889, %v888
  %v966 = vpack.c.b16 %v891, %v890
  %v967 = vpack.c.b16 %v893, %v892
  %v968 = vpack.c.b16 %v895, %v894
  %v969 = vpack.c.b16 %v897, %v896
  %1042 = vmatpush.bf16.msra.mxu0 %v905
  %1043 = vmatpush.bf16.msra.mxu0 %v904
  %1044 = vmatpush.bf16.msra.mxu0 %v903
  %1045 = vmatpush.bf16.msra.mxu0 %v902
  %1046 = vmatpush.bf16.msra.mxu0 %v901
  %1047 = vmatpush.bf16.msra.mxu0 %v900
  %1048 = vmatpush.bf16.msra.mxu0 %v899
  %1049 = vmatpush.bf16.msra.mxu0 %v898
  %1050 = vmatmul.bf16.gmra.mxu0 %v466
  %v1051 = vpop.f32.mrf.mxu0
  %v1052 = vadd.f32 %v240, %v1051
  %v1053 = vpop.f32.mrf.mxu0
  %v1054 = vadd.f32 %v240, %v1053
  %1055 = vmatmul.bf16.gmra.mxu0 %v475
  %v1056 = vpop.f32.mrf.mxu0
  %v1057 = vadd.f32 %v240, %v1056
  %v1058 = vpop.f32.mrf.mxu0
  %v1059 = vadd.f32 %v240, %v1058
  %1060 = vmatmul.bf16.gmra.mxu0 %v484
  %v1061 = vpop.f32.mrf.mxu0
  %v1062 = vadd.f32 %v240, %v1061
  %v1063 = vpop.f32.mrf.mxu0
  %v1064 = vadd.f32 %v240, %v1063
  %1065 = vmatmul.bf16.gmra.mxu0 %v493
  %v1066 = vpop.f32.mrf.mxu0
  %v1067 = vadd.f32 %v240, %v1066
  %v1068 = vpop.f32.mrf.mxu0
  %v1069 = vadd.f32 %v240, %v1068
  %1070 = vmatmul.bf16.gmra.mxu0 %v502
  %v1071 = vpop.f32.mrf.mxu0
  %v1072 = vadd.f32 %v240, %v1071
  %v1073 = vpop.f32.mrf.mxu0
  %v1074 = vadd.f32 %v240, %v1073
  %1075 = vmatmul.bf16.gmra.mxu0 %v511
  %v1076 = vpop.f32.mrf.mxu0
  %v1077 = vadd.f32 %v240, %v1076
  %v1078 = vpop.f32.mrf.mxu0
  %v1079 = vadd.f32 %v240, %v1078
  %1080 = vmatmul.bf16.gmra.mxu0 %v520
  %v1081 = vpop.f32.mrf.mxu0
  %v1082 = vadd.f32 %v240, %v1081
  %v1083 = vpop.f32.mrf.mxu0
  %v1084 = vadd.f32 %v240, %v1083
  %1085 = vmatmul.bf16.gmra.mxu0 %v529
  %v1086 = vpop.f32.mrf.mxu0
  %v1087 = vadd.f32 %v240, %v1086
  %v1088 = vpop.f32.mrf.mxu0
  %v1089 = vadd.f32 %v240, %v1088
  %1090 = vdwg.mxu0
  %1091 = vmatpush.bf16.msra.mxu0 %v913
  %1092 = vmatpush.bf16.msra.mxu0 %v912
  %1093 = vmatpush.bf16.msra.mxu0 %v911
  %1094 = vmatpush.bf16.msra.mxu0 %v910
  %1095 = vmatpush.bf16.msra.mxu0 %v909
  %1096 = vmatpush.bf16.msra.mxu0 %v908
  %1097 = vmatpush.bf16.msra.mxu0 %v907
  %1098 = vmatpush.bf16.msra.mxu0 %v906
  %1099 = vmatmul.bf16.gmra.mxu0 %v467
  %v1100 = vpop.f32.mrf.mxu0
  %v1101 = vadd.f32 %v1052, %v1100
  %v1102 = vpop.f32.mrf.mxu0
  %v1103 = vadd.f32 %v1054, %v1102
  %1104 = vmatmul.bf16.gmra.mxu0 %v476
  %v1105 = vpop.f32.mrf.mxu0
  %v1106 = vadd.f32 %v1057, %v1105
  %v1107 = vpop.f32.mrf.mxu0
  %v1108 = vadd.f32 %v1059, %v1107
  %1109 = vmatmul.bf16.gmra.mxu0 %v485
  %v1110 = vpop.f32.mrf.mxu0
  %v1111 = vadd.f32 %v1062, %v1110
  %v1112 = vpop.f32.mrf.mxu0
  %v1113 = vadd.f32 %v1064, %v1112
  %1114 = vmatmul.bf16.gmra.mxu0 %v494
  %v1115 = vpop.f32.mrf.mxu0
  %v1116 = vadd.f32 %v1067, %v1115
  %v1117 = vpop.f32.mrf.mxu0
  %v1118 = vadd.f32 %v1069, %v1117
  %1119 = vmatmul.bf16.gmra.mxu0 %v503
  %v1120 = vpop.f32.mrf.mxu0
  %v1121 = vadd.f32 %v1072, %v1120
  %v1122 = vpop.f32.mrf.mxu0
  %v1123 = vadd.f32 %v1074, %v1122
  %1124 = vmatmul.bf16.gmra.mxu0 %v512
  %v1125 = vpop.f32.mrf.mxu0
  %v1126 = vadd.f32 %v1077, %v1125
  %v1127 = vpop.f32.mrf.mxu0
  %v1128 = vadd.f32 %v1079, %v1127
  %1129 = vmatmul.bf16.gmra.mxu0 %v521
  %v1130 = vpop.f32.mrf.mxu0
  %v1131 = vadd.f32 %v1082, %v1130
  %v1132 = vpop.f32.mrf.mxu0
  %v1133 = vadd.f32 %v1084, %v1132
  %1134 = vmatmul.bf16.gmra.mxu0 %v530
  %v1135 = vpop.f32.mrf.mxu0
  %v1136 = vadd.f32 %v1087, %v1135
  %v1137 = vpop.f32.mrf.mxu0
  %v1138 = vadd.f32 %v1089, %v1137
  %1139 = vdwg.mxu0
  %1140 = vmatpush.bf16.msra.mxu0 %v921
  %1141 = vmatpush.bf16.msra.mxu0 %v920
  %1142 = vmatpush.bf16.msra.mxu0 %v919
  %1143 = vmatpush.bf16.msra.mxu0 %v918
  %1144 = vmatpush.bf16.msra.mxu0 %v917
  %1145 = vmatpush.bf16.msra.mxu0 %v916
  %1146 = vmatpush.bf16.msra.mxu0 %v915
  %1147 = vmatpush.bf16.msra.mxu0 %v914
  %1148 = vmatmul.bf16.gmra.mxu0 %v468
  %v1149 = vpop.f32.mrf.mxu0
  %v1150 = vadd.f32 %v1101, %v1149
  %v1151 = vpop.f32.mrf.mxu0
  %v1152 = vadd.f32 %v1103, %v1151
  %1153 = vmatmul.bf16.gmra.mxu0 %v477
  %v1154 = vpop.f32.mrf.mxu0
  %v1155 = vadd.f32 %v1106, %v1154
  %v1156 = vpop.f32.mrf.mxu0
  %v1157 = vadd.f32 %v1108, %v1156
  %1158 = vmatmul.bf16.gmra.mxu0 %v486
  %v1159 = vpop.f32.mrf.mxu0
  %v1160 = vadd.f32 %v1111, %v1159
  %v1161 = vpop.f32.mrf.mxu0
  %v1162 = vadd.f32 %v1113, %v1161
  %1163 = vmatmul.bf16.gmra.mxu0 %v495
  %v1164 = vpop.f32.mrf.mxu0
  %v1165 = vadd.f32 %v1116, %v1164
  %v1166 = vpop.f32.mrf.mxu0
  %v1167 = vadd.f32 %v1118, %v1166
  %1168 = vmatmul.bf16.gmra.mxu0 %v504
  %v1169 = vpop.f32.mrf.mxu0
  %v1170 = vadd.f32 %v1121, %v1169
  %v1171 = vpop.f32.mrf.mxu0
  %v1172 = vadd.f32 %v1123, %v1171
  %1173 = vmatmul.bf16.gmra.mxu0 %v513
  %v1174 = vpop.f32.mrf.mxu0
  %v1175 = vadd.f32 %v1126, %v1174
  %v1176 = vpop.f32.mrf.mxu0
  %v1177 = vadd.f32 %v1128, %v1176
  %1178 = vmatmul.bf16.gmra.mxu0 %v522
  %v1179 = vpop.f32.mrf.mxu0
  %v1180 = vadd.f32 %v1131, %v1179
  %v1181 = vpop.f32.mrf.mxu0
  %v1182 = vadd.f32 %v1133, %v1181
  %1183 = vmatmul.bf16.gmra.mxu0 %v531
  %v1184 = vpop.f32.mrf.mxu0
  %v1185 = vadd.f32 %v1136, %v1184
  %v1186 = vpop.f32.mrf.mxu0
  %v1187 = vadd.f32 %v1138, %v1186
  %1188 = vdwg.mxu0
  %1189 = vmatpush.bf16.msra.mxu0 %v929
  %1190 = vmatpush.bf16.msra.mxu0 %v928
  %1191 = vmatpush.bf16.msra.mxu0 %v927
  %1192 = vmatpush.bf16.msra.mxu0 %v926
  %1193 = vmatpush.bf16.msra.mxu0 %v925
  %1194 = vmatpush.bf16.msra.mxu0 %v924
  %1195 = vmatpush.bf16.msra.mxu0 %v923
  %1196 = vmatpush.bf16.msra.mxu0 %v922
  %1197 = vmatmul.bf16.gmra.mxu0 %v469
  %v1198 = vpop.f32.mrf.mxu0
  %v1199 = vadd.f32 %v1150, %v1198
  %v1200 = vpop.f32.mrf.mxu0
  %v1201 = vadd.f32 %v1152, %v1200
  %1202 = vmatmul.bf16.gmra.mxu0 %v478
  %v1203 = vpop.f32.mrf.mxu0
  %v1204 = vadd.f32 %v1155, %v1203
  %v1205 = vpop.f32.mrf.mxu0
  %v1206 = vadd.f32 %v1157, %v1205
  %1207 = vmatmul.bf16.gmra.mxu0 %v487
  %v1208 = vpop.f32.mrf.mxu0
  %v1209 = vadd.f32 %v1160, %v1208
  %v1210 = vpop.f32.mrf.mxu0
  %v1211 = vadd.f32 %v1162, %v1210
  %1212 = vmatmul.bf16.gmra.mxu0 %v496
  %v1213 = vpop.f32.mrf.mxu0
  %v1214 = vadd.f32 %v1165, %v1213
  %v1215 = vpop.f32.mrf.mxu0
  %v1216 = vadd.f32 %v1167, %v1215
  %1217 = vmatmul.bf16.gmra.mxu0 %v505
  %v1218 = vpop.f32.mrf.mxu0
  %v1219 = vadd.f32 %v1170, %v1218
  %v1220 = vpop.f32.mrf.mxu0
  %v1221 = vadd.f32 %v1172, %v1220
  %1222 = vmatmul.bf16.gmra.mxu0 %v514
  %v1223 = vpop.f32.mrf.mxu0
  %v1224 = vadd.f32 %v1175, %v1223
  %v1225 = vpop.f32.mrf.mxu0
  %v1226 = vadd.f32 %v1177, %v1225
  %1227 = vmatmul.bf16.gmra.mxu0 %v523
  %v1228 = vpop.f32.mrf.mxu0
  %v1229 = vadd.f32 %v1180, %v1228
  %v1230 = vpop.f32.mrf.mxu0
  %v1231 = vadd.f32 %v1182, %v1230
  %1232 = vmatmul.bf16.gmra.mxu0 %v532
  %v1233 = vpop.f32.mrf.mxu0
  %v1234 = vadd.f32 %v1185, %v1233
  %v1235 = vpop.f32.mrf.mxu0
  %v1236 = vadd.f32 %v1187, %v1235
  %1237 = vdwg.mxu0
  %1238 = vmatpush.bf16.msra.mxu0 %v937
  %1239 = vmatpush.bf16.msra.mxu0 %v936
  %1240 = vmatpush.bf16.msra.mxu0 %v935
  %1241 = vmatpush.bf16.msra.mxu0 %v934
  %1242 = vmatpush.bf16.msra.mxu0 %v933
  %1243 = vmatpush.bf16.msra.mxu0 %v932
  %1244 = vmatpush.bf16.msra.mxu0 %v931
  %1245 = vmatpush.bf16.msra.mxu0 %v930
  %1246 = vmatmul.bf16.gmra.mxu0 %v470
  %v1247 = vpop.f32.mrf.mxu0
  %v1248 = vadd.f32 %v1199, %v1247
  %v1249 = vpop.f32.mrf.mxu0
  %v1250 = vadd.f32 %v1201, %v1249
  %1251 = vmatmul.bf16.gmra.mxu0 %v479
  %v1252 = vpop.f32.mrf.mxu0
  %v1253 = vadd.f32 %v1204, %v1252
  %v1254 = vpop.f32.mrf.mxu0
  %v1255 = vadd.f32 %v1206, %v1254
  %1256 = vmatmul.bf16.gmra.mxu0 %v488
  %v1257 = vpop.f32.mrf.mxu0
  %v1258 = vadd.f32 %v1209, %v1257
  %v1259 = vpop.f32.mrf.mxu0
  %v1260 = vadd.f32 %v1211, %v1259
  %1261 = vmatmul.bf16.gmra.mxu0 %v497
  %v1262 = vpop.f32.mrf.mxu0
  %v1263 = vadd.f32 %v1214, %v1262
  %v1264 = vpop.f32.mrf.mxu0
  %v1265 = vadd.f32 %v1216, %v1264
  %1266 = vmatmul.bf16.gmra.mxu0 %v506
  %v1267 = vpop.f32.mrf.mxu0
  %v1268 = vadd.f32 %v1219, %v1267
  %v1269 = vpop.f32.mrf.mxu0
  %v1270 = vadd.f32 %v1221, %v1269
  %1271 = vmatmul.bf16.gmra.mxu0 %v515
  %v1272 = vpop.f32.mrf.mxu0
  %v1273 = vadd.f32 %v1224, %v1272
  %v1274 = vpop.f32.mrf.mxu0
  %v1275 = vadd.f32 %v1226, %v1274
  %1276 = vmatmul.bf16.gmra.mxu0 %v524
  %v1277 = vpop.f32.mrf.mxu0
  %v1278 = vadd.f32 %v1229, %v1277
  %v1279 = vpop.f32.mrf.mxu0
  %v1280 = vadd.f32 %v1231, %v1279
  %1281 = vmatmul.bf16.gmra.mxu0 %v533
  %v1282 = vpop.f32.mrf.mxu0
  %v1283 = vadd.f32 %v1234, %v1282
  %v1284 = vpop.f32.mrf.mxu0
  %v1285 = vadd.f32 %v1236, %v1284
  %1286 = vdwg.mxu0
  %1287 = vmatpush.bf16.msra.mxu0 %v945
  %1288 = vmatpush.bf16.msra.mxu0 %v944
  %1289 = vmatpush.bf16.msra.mxu0 %v943
  %1290 = vmatpush.bf16.msra.mxu0 %v942
  %1291 = vmatpush.bf16.msra.mxu0 %v941
  %1292 = vmatpush.bf16.msra.mxu0 %v940
  %1293 = vmatpush.bf16.msra.mxu0 %v939
  %1294 = vmatpush.bf16.msra.mxu0 %v938
  %1295 = vmatmul.bf16.gmra.mxu0 %v471
  %v1296 = vpop.f32.mrf.mxu0
  %v1297 = vadd.f32 %v1248, %v1296
  %v1298 = vpop.f32.mrf.mxu0
  %v1299 = vadd.f32 %v1250, %v1298
  %1300 = vmatmul.bf16.gmra.mxu0 %v480
  %v1301 = vpop.f32.mrf.mxu0
  %v1302 = vadd.f32 %v1253, %v1301
  %v1303 = vpop.f32.mrf.mxu0
  %v1304 = vadd.f32 %v1255, %v1303
  %1305 = vmatmul.bf16.gmra.mxu0 %v489
  %v1306 = vpop.f32.mrf.mxu0
  %v1307 = vadd.f32 %v1258, %v1306
  %v1308 = vpop.f32.mrf.mxu0
  %v1309 = vadd.f32 %v1260, %v1308
  %1310 = vmatmul.bf16.gmra.mxu0 %v498
  %v1311 = vpop.f32.mrf.mxu0
  %v1312 = vadd.f32 %v1263, %v1311
  %v1313 = vpop.f32.mrf.mxu0
  %v1314 = vadd.f32 %v1265, %v1313
  %1315 = vmatmul.bf16.gmra.mxu0 %v507
  %v1316 = vpop.f32.mrf.mxu0
  %v1317 = vadd.f32 %v1268, %v1316
  %v1318 = vpop.f32.mrf.mxu0
  %v1319 = vadd.f32 %v1270, %v1318
  %1320 = vmatmul.bf16.gmra.mxu0 %v516
  %v1321 = vpop.f32.mrf.mxu0
  %v1322 = vadd.f32 %v1273, %v1321
  %v1323 = vpop.f32.mrf.mxu0
  %v1324 = vadd.f32 %v1275, %v1323
  %1325 = vmatmul.bf16.gmra.mxu0 %v525
  %v1326 = vpop.f32.mrf.mxu0
  %v1327 = vadd.f32 %v1278, %v1326
  %v1328 = vpop.f32.mrf.mxu0
  %v1329 = vadd.f32 %v1280, %v1328
  %1330 = vmatmul.bf16.gmra.mxu0 %v534
  %v1331 = vpop.f32.mrf.mxu0
  %v1332 = vadd.f32 %v1283, %v1331
  %v1333 = vpop.f32.mrf.mxu0
  %v1334 = vadd.f32 %v1285, %v1333
  %1335 = vdwg.mxu0
  %1336 = vmatpush.bf16.msra.mxu0 %v953
  %1337 = vmatpush.bf16.msra.mxu0 %v952
  %1338 = vmatpush.bf16.msra.mxu0 %v951
  %1339 = vmatpush.bf16.msra.mxu0 %v950
  %1340 = vmatpush.bf16.msra.mxu0 %v949
  %1341 = vmatpush.bf16.msra.mxu0 %v948
  %1342 = vmatpush.bf16.msra.mxu0 %v947
  %1343 = vmatpush.bf16.msra.mxu0 %v946
  %1344 = vmatmul.bf16.gmra.mxu0 %v472
  %v1345 = vpop.f32.mrf.mxu0
  %v1346 = vadd.f32 %v1297, %v1345
  %v1347 = vpop.f32.mrf.mxu0
  %v1348 = vadd.f32 %v1299, %v1347
  %1349 = vmatmul.bf16.gmra.mxu0 %v481
  %v1350 = vpop.f32.mrf.mxu0
  %v1351 = vadd.f32 %v1302, %v1350
  %v1352 = vpop.f32.mrf.mxu0
  %v1353 = vadd.f32 %v1304, %v1352
  %1354 = vmatmul.bf16.gmra.mxu0 %v490
  %v1355 = vpop.f32.mrf.mxu0
  %v1356 = vadd.f32 %v1307, %v1355
  %v1357 = vpop.f32.mrf.mxu0
  %v1358 = vadd.f32 %v1309, %v1357
  %1359 = vmatmul.bf16.gmra.mxu0 %v499
  %v1360 = vpop.f32.mrf.mxu0
  %v1361 = vadd.f32 %v1312, %v1360
  %v1362 = vpop.f32.mrf.mxu0
  %v1363 = vadd.f32 %v1314, %v1362
  %1364 = vmatmul.bf16.gmra.mxu0 %v508
  %v1365 = vpop.f32.mrf.mxu0
  %v1366 = vadd.f32 %v1317, %v1365
  %v1367 = vpop.f32.mrf.mxu0
  %v1368 = vadd.f32 %v1319, %v1367
  %1369 = vmatmul.bf16.gmra.mxu0 %v517
  %v1370 = vpop.f32.mrf.mxu0
  %v1371 = vadd.f32 %v1322, %v1370
  %v1372 = vpop.f32.mrf.mxu0
  %v1373 = vadd.f32 %v1324, %v1372
  %1374 = vmatmul.bf16.gmra.mxu0 %v526
  %v1375 = vpop.f32.mrf.mxu0
  %v1376 = vadd.f32 %v1327, %v1375
  %v1377 = vpop.f32.mrf.mxu0
  %v1378 = vadd.f32 %v1329, %v1377
  %1379 = vmatmul.bf16.gmra.mxu0 %v535
  %v1380 = vpop.f32.mrf.mxu0
  %v1381 = vadd.f32 %v1332, %v1380
  %v1382 = vpop.f32.mrf.mxu0
  %v1383 = vadd.f32 %v1334, %v1382
  %1384 = vdwg.mxu0
  %1385 = vmatpush.bf16.msra.mxu0 %v961
  %1386 = vmatpush.bf16.msra.mxu0 %v960
  %1387 = vmatpush.bf16.msra.mxu0 %v959
  %1388 = vmatpush.bf16.msra.mxu0 %v958
  %1389 = vmatpush.bf16.msra.mxu0 %v957
  %1390 = vmatpush.bf16.msra.mxu0 %v956
  %1391 = vmatpush.bf16.msra.mxu0 %v955
  %1392 = vmatpush.bf16.msra.mxu0 %v954
  %1393 = vmatmul.bf16.gmra.mxu0 %v473
  %v1394 = vpop.f32.mrf.mxu0
  %v1395 = vadd.f32 %v1346, %v1394
  %v1396 = vpop.f32.mrf.mxu0
  %v1397 = vadd.f32 %v1348, %v1396
  %1398 = vmatmul.bf16.gmra.mxu0 %v482
  %v1399 = vpop.f32.mrf.mxu0
  %v1400 = vadd.f32 %v1351, %v1399
  %v1401 = vpop.f32.mrf.mxu0
  %v1402 = vadd.f32 %v1353, %v1401
  %1403 = vmatmul.bf16.gmra.mxu0 %v491
  %v1404 = vpop.f32.mrf.mxu0
  %v1405 = vadd.f32 %v1356, %v1404
  %v1406 = vpop.f32.mrf.mxu0
  %v1407 = vadd.f32 %v1358, %v1406
  %1408 = vmatmul.bf16.gmra.mxu0 %v500
  %v1409 = vpop.f32.mrf.mxu0
  %v1410 = vadd.f32 %v1361, %v1409
  %v1411 = vpop.f32.mrf.mxu0
  %v1412 = vadd.f32 %v1363, %v1411
  %1413 = vmatmul.bf16.gmra.mxu0 %v509
  %v1414 = vpop.f32.mrf.mxu0
  %v1415 = vadd.f32 %v1366, %v1414
  %v1416 = vpop.f32.mrf.mxu0
  %v1417 = vadd.f32 %v1368, %v1416
  %1418 = vmatmul.bf16.gmra.mxu0 %v518
  %v1419 = vpop.f32.mrf.mxu0
  %v1420 = vadd.f32 %v1371, %v1419
  %v1421 = vpop.f32.mrf.mxu0
  %v1422 = vadd.f32 %v1373, %v1421
  %1423 = vmatmul.bf16.gmra.mxu0 %v527
  %v1424 = vpop.f32.mrf.mxu0
  %v1425 = vadd.f32 %v1376, %v1424
  %v1426 = vpop.f32.mrf.mxu0
  %v1427 = vadd.f32 %v1378, %v1426
  %1428 = vmatmul.bf16.gmra.mxu0 %v536
  %v1429 = vpop.f32.mrf.mxu0
  %v1430 = vadd.f32 %v1381, %v1429
  %v1431 = vpop.f32.mrf.mxu0
  %v1432 = vadd.f32 %v1383, %v1431
  %1433 = vdwg.mxu0
  %1434 = vmatpush.bf16.msra.mxu0 %v969
  %1435 = vmatpush.bf16.msra.mxu0 %v968
  %1436 = vmatpush.bf16.msra.mxu0 %v967
  %1437 = vmatpush.bf16.msra.mxu0 %v966
  %1438 = vmatpush.bf16.msra.mxu0 %v965
  %1439 = vmatpush.bf16.msra.mxu0 %v964
  %1440 = vmatpush.bf16.msra.mxu0 %v963
  %1441 = vmatpush.bf16.msra.mxu0 %v962
  %1442 = vmatmul.bf16.gmra.mxu0 %v474
  %v1443 = vpop.f32.mrf.mxu0
  %v1444 = vadd.f32 %v1395, %v1443
  %v1445 = vpop.f32.mrf.mxu0
  %v1446 = vadd.f32 %v1397, %v1445
  %1447 = vmatmul.bf16.gmra.mxu0 %v483
  %v1448 = vpop.f32.mrf.mxu0
  %v1449 = vadd.f32 %v1400, %v1448
  %v1450 = vpop.f32.mrf.mxu0
  %v1451 = vadd.f32 %v1402, %v1450
  %1452 = vmatmul.bf16.gmra.mxu0 %v492
  %v1453 = vpop.f32.mrf.mxu0
  %v1454 = vadd.f32 %v1405, %v1453
  %v1455 = vpop.f32.mrf.mxu0
  %v1456 = vadd.f32 %v1407, %v1455
  %1457 = vmatmul.bf16.gmra.mxu0 %v501
  %v1458 = vpop.f32.mrf.mxu0
  %v1459 = vadd.f32 %v1410, %v1458
  %v1460 = vpop.f32.mrf.mxu0
  %v1461 = vadd.f32 %v1412, %v1460
  %1462 = vmatmul.bf16.gmra.mxu0 %v510
  %v1463 = vpop.f32.mrf.mxu0
  %v1464 = vadd.f32 %v1415, %v1463
  %v1465 = vpop.f32.mrf.mxu0
  %v1466 = vadd.f32 %v1417, %v1465
  %1467 = vmatmul.bf16.gmra.mxu0 %v519
  %v1468 = vpop.f32.mrf.mxu0
  %v1469 = vadd.f32 %v1420, %v1468
  %v1470 = vpop.f32.mrf.mxu0
  %v1471 = vadd.f32 %v1422, %v1470
  %1472 = vmatmul.bf16.gmra.mxu0 %v528
  %v1473 = vpop.f32.mrf.mxu0
  %v1474 = vadd.f32 %v1425, %v1473
  %v1475 = vpop.f32.mrf.mxu0
  %v1476 = vadd.f32 %v1427, %v1475
  %1477 = vmatmul.bf16.gmra.mxu0 %v537
  %v1478 = vpop.f32.mrf.mxu0
  %v1479 = vadd.f32 %v1430, %v1478
  %v1480 = vpop.f32.mrf.mxu0
  %v1481 = vadd.f32 %v1432, %v1480
  %1482 = vdwg.mxu0
  %v1483 = vmax.f32 %v1444, 0.0
  %v1484 = vmax.f32 %v1446, 0.0
  %v1485 = vmax.f32 %v1449, 0.0
  %v1486 = vmax.f32 %v1451, 0.0
  %v1487 = vmax.f32 %v1454, 0.0
  %v1488 = vmax.f32 %v1456, 0.0
  %v1489 = vmax.f32 %v1459, 0.0
  %v1490 = vmax.f32 %v1461, 0.0
  %v1491 = vmax.f32 %v1464, 0.0
  %v1492 = vmax.f32 %v1466, 0.0
  %v1493 = vmax.f32 %v1469, 0.0
  %v1494 = vmax.f32 %v1471, 0.0
  %v1495 = vmax.f32 %v1474, 0.0
  %v1496 = vmax.f32 %v1476, 0.0
  %v1497 = vmax.f32 %v1479, 0.0
  %v1498 = vmax.f32 %v1481, 0.0
  %v1499 = vpack.c.bf16 %v1483, %v1483
  %v1500 = vpack.c.bf16 %v1484, %v1484
  %v1501 = vpack.c.bf16 %v1485, %v1485
  %v1502 = vpack.c.bf16 %v1486, %v1486
  %v1503 = vpack.c.bf16 %v1487, %v1487
  %v1504 = vpack.c.bf16 %v1488, %v1488
  %v1505 = vpack.c.bf16 %v1489, %v1489
  %v1506 = vpack.c.bf16 %v1490, %v1490
  %v1507 = vpack.c.bf16 %v1491, %v1491
  %v1508 = vpack.c.bf16 %v1492, %v1492
  %v1509 = vpack.c.bf16 %v1493, %v1493
  %v1510 = vpack.c.bf16 %v1494, %v1494
  %v1511 = vpack.c.bf16 %v1495, %v1495
  %v1512 = vpack.c.bf16 %v1496, %v1496
  %v1513 = vpack.c.bf16 %v1497, %v1497
  %v1514 = vpack.c.bf16 %v1498, %v1498
  %1515 = vst [vmem:[%s3] sm:$0xf] %v1499
  %1516 = vst [vmem:[%s3 + $0x4] sm:$0xf] %v1500
  %1517 = vst [vmem:[%s3 + $0x8] sm:$0xf] %v1501
  %1518 = vst [vmem:[%s3 + $0xc] sm:$0xf] %v1502
  %1519 = vst [vmem:[%s3 + $0x10] sm:$0xf] %v1503
  %1520 = vst [vmem:[%s3 + $0x14] sm:$0xf] %v1504
  %1521 = vst [vmem:[%s3 + $0x18] sm:$0xf] %v1505
  %1522 = vst [vmem:[%s3 + $0x1c] sm:$0xf] %v1506
  %1523 = vst [vmem:[%s3 + $0x20] sm:$0xf] %v1507
  %1524 = vst [vmem:[%s3 + $0x24] sm:$0xf] %v1508
  %1525 = vst [vmem:[%s3 + $0x28] sm:$0xf] %v1509
  %1526 = vst [vmem:[%s3 + $0x2c] sm:$0xf] %v1510
  %1527 = vst [vmem:[%s3 + $0x30] sm:$0xf] %v1511
  %1528 = vst [vmem:[%s3 + $0x34] sm:$0xf] %v1512
  %1529 = vst [vmem:[%s3 + $0x38] sm:$0xf] %v1513
  %1530 = vst [vmem:[%s3 + $0x3c] sm:$0xf] %v1514
  // Predicated region
  $region14: #{depth_star_forward.16} parent=0 // pred_check
    _
  $region15: #{depth_star_forward.16} parent=0 // pred_check_branch
    %1532 = sbr.rel (0) target = $region17
  $region16: #{depth_star_forward.16} parent=0 // pred_region
    _
  $region17: #{depth_star_forward.16} parent=0 // pred_fallthru
    _
  // Predicated region
  $region18: #{depth_star_forward.16} parent=0 // pred_check
    _
  $region19: #{depth_star_forward.16} parent=0 // pred_check_branch
    %1534 = sbr.rel (0) target = $region21
  $region20: #{depth_star_forward.16} parent=0 // pred_region
    _
  $region21: #{depth_star_forward.16} parent=0 // pred_fallthru
    _

// kernel: depth_star_forward.18
$region0: #{depth_star_forward.18}
  #allocation0 [shape = 'u32[]', space=smem, size = 0x4, offset = 0x4, fixed_abs, tag = 'smem constant byte address 0x4 - core index']
  #allocation1 [shape = 'u32[72,128]{1,0:T(1,128)}', space=vmem, size = 0x9000, scoped, tag = 'internal scratch']
  %s0 = inlined_call_operand.vmem [shape: bf16[32,1152], index: 0, kind: input, shape index: {}]
  %s1 = inlined_call_operand.vmem [shape: bf16[1152,32], index: 1, kind: input, shape index: {}]
  %s2 = inlined_call_operand.vmem [shape: f32[1,32], index: 2, kind: input, shape index: {}]
  %s3 = inlined_call_operand.vmem [shape: bf16[32,32], index: 3, kind: output, shape index: {}]
  %s4 = sld [smem:[#allocation0]]
  $region22: #{depth_star_forward.18} parent=0
    _
  %s6 = ssub.s32 1, %s4
  %s7 = scalar_select 0, %s6, %s4
  // Predicated region
  $region2: #{depth_star_forward.18} parent=0 // pred_check
    _
  $region3: #{depth_star_forward.18} parent=0 // pred_check_branch
    %9 = sbr.rel (0) target = $region5
  $region4: #{depth_star_forward.18} parent=0 // pred_region
    _
  $region5: #{depth_star_forward.18} parent=0 // pred_fallthru
    _
  // Predicated region
  $region6: #{depth_star_forward.18} parent=0 // pred_check
    _
  $region7: #{depth_star_forward.18} parent=0 // pred_check_branch
    %11 = sbr.rel (0) target = $region9
  $region8: #{depth_star_forward.18} parent=0 // pred_region
    _
  $region9: #{depth_star_forward.18} parent=0 // pred_fallthru
    _
  // Predicated region
  $region10: #{depth_star_forward.18} parent=0 // pred_check
    _
  $region11: #{depth_star_forward.18} parent=0 // pred_check_branch
    %13 = sbr.rel (0) target = $region13
  $region12: #{depth_star_forward.18} parent=0 // pred_region
    _
  $region13: #{depth_star_forward.18} parent=0 // pred_fallthru
    _
  %v14 = vld [vmem:[%s0] sm:$0xff]
  %v15 = vld [vmem:[%s0 + $0x8] sm:$0xff]
  %v16 = vld [vmem:[%s0 + $0x10] sm:$0xff]
  %v17 = vld [vmem:[%s0 + $0x18] sm:$0xff]
  %v18 = vld [vmem:[%s0 + $0x20] sm:$0xf]
  %v19 = vld [vmem:[%s0 + $0x24] sm:$0xff]
  %v20 = vld [vmem:[%s0 + $0x2c] sm:$0xff]
  %v21 = vld [vmem:[%s0 + $0x34] sm:$0xff]
  %v22 = vld [vmem:[%s0 + $0x3c] sm:$0xff]
  %v23 = vld [vmem:[%s0 + $0x44] sm:$0xf]
  %v24 = vld [vmem:[%s0 + $0x48] sm:$0xff]
  %v25 = vld [vmem:[%s0 + $0x50] sm:$0xff]
  %v26 = vld [vmem:[%s0 + $0x58] sm:$0xff]
  %v27 = vld [vmem:[%s0 + $0x60] sm:$0xff]
  %v28 = vld [vmem:[%s0 + $0x68] sm:$0xf]
  %v29 = vld [vmem:[%s0 + $0x6c] sm:$0xff]
  %v30 = vld [vmem:[%s0 + $0x74] sm:$0xff]
  %v31 = vld [vmem:[%s0 + $0x7c] sm:$0xff]
  %v32 = vld [vmem:[%s0 + $0x84] sm:$0xff]
  %v33 = vld [vmem:[%s0 + $0x8c] sm:$0xf]
  %v34 = vld [vmem:[%s1] sm:$0xf]
  %v35 = vld [vmem:[%s1 + $0x4] sm:$0xf]
  %v36 = vld [vmem:[%s1 + $0x8] sm:$0xf]
  %v37 = vld [vmem:[%s1 + $0xc] sm:$0xf]
  %v38 = vld [vmem:[%s1 + $0x10] sm:$0xf]
  %v39 = vld [vmem:[%s1 + $0x14] sm:$0xf]
  %v40 = vld [vmem:[%s1 + $0x18] sm:$0xf]
  %v41 = vld [vmem:[%s1 + $0x1c] sm:$0xf]
  %v42 = vld [vmem:[%s1 + $0x20] sm:$0xf]
  %v43 = vld [vmem:[%s1 + $0x24] sm:$0xf]
  %v44 = vld [vmem:[%s1 + $0x28] sm:$0xf]
  %v45 = vld [vmem:[%s1 + $0x2c] sm:$0xf]
  %v46 = vld [vmem:[%s1 + $0x30] sm:$0xf]
  %v47 = vld [vmem:[%s1 + $0x34] sm:$0xf]
  %v48 = vld [vmem:[%s1 + $0x38] sm:$0xf]
  %v49 = vld [vmem:[%s1 + $0x3c] sm:$0xf]
  %v50 = vld [vmem:[%s1 + $0x40] sm:$0xf]
  %v51 = vld [vmem:[%s1 + $0x44] sm:$0xf]
  %v52 = vld [vmem:[%s1 + $0x48] sm:$0xf]
  %v53 = vld [vmem:[%s1 + $0x4c] sm:$0xf]
  %v54 = vld [vmem:[%s1 + $0x50] sm:$0xf]
  %v55 = vld [vmem:[%s1 + $0x54] sm:$0xf]
  %v56 = vld [vmem:[%s1 + $0x58] sm:$0xf]
  %v57 = vld [vmem:[%s1 + $0x5c] sm:$0xf]
  %v58 = vld [vmem:[%s1 + $0x60] sm:$0xf]
  %v59 = vld [vmem:[%s1 + $0x64] sm:$0xf]
  %v60 = vld [vmem:[%s1 + $0x68] sm:$0xf]
  %v61 = vld [vmem:[%s1 + $0x6c] sm:$0xf]
  %v62 = vld [vmem:[%s1 + $0x70] sm:$0xf]
  %v63 = vld [vmem:[%s1 + $0x74] sm:$0xf]
  %v64 = vld [vmem:[%s1 + $0x78] sm:$0xf]
  %v65 = vld [vmem:[%s1 + $0x7c] sm:$0xf]
  %v66 = vld [vmem:[%s1 + $0x80] sm:$0xf]
  %v67 = vld [vmem:[%s1 + $0x84] sm:$0xf]
  %v68 = vld [vmem:[%s1 + $0x88] sm:$0xf]
  %v69 = vld [vmem:[%s1 + $0x8c] sm:$0xf]
  %v70 = vld [vmem:[%s1 + $0x90] sm:$0xf]
  %v71 = vld [vmem:[%s1 + $0x94] sm:$0xf]
  %v72 = vld [vmem:[%s1 + $0x98] sm:$0xf]
  %v73 = vld [vmem:[%s1 + $0x9c] sm:$0xf]
  %v74 = vld [vmem:[%s1 + $0xa0] sm:$0xf]
  %v75 = vld [vmem:[%s1 + $0xa4] sm:$0xf]
  %v76 = vld [vmem:[%s1 + $0xa8] sm:$0xf]
  %v77 = vld [vmem:[%s1 + $0xac] sm:$0xf]
  %v78 = vld [vmem:[%s1 + $0xb0] sm:$0xf]
  %v79 = vld [vmem:[%s1 + $0xb4] sm:$0xf]
  %v80 = vld [vmem:[%s1 + $0xb8] sm:$0xf]
  %v81 = vld [vmem:[%s1 + $0xbc] sm:$0xf]
  %v82 = vld [vmem:[%s1 + $0xc0] sm:$0xf]
  %v83 = vld [vmem:[%s1 + $0xc4] sm:$0xf]
  %v84 = vld [vmem:[%s1 + $0xc8] sm:$0xf]
  %v85 = vld [vmem:[%s1 + $0xcc] sm:$0xf]
  %v86 = vld [vmem:[%s1 + $0xd0] sm:$0xf]
  %v87 = vld [vmem:[%s1 + $0xd4] sm:$0xf]
  %v88 = vld [vmem:[%s1 + $0xd8] sm:$0xf]
  %v89 = vld [vmem:[%s1 + $0xdc] sm:$0xf]
  %v90 = vld [vmem:[%s1 + $0xe0] sm:$0xf]
  %v91 = vld [vmem:[%s1 + $0xe4] sm:$0xf]
  %v92 = vld [vmem:[%s1 + $0xe8] sm:$0xf]
  %v93 = vld [vmem:[%s1 + $0xec] sm:$0xf]
  %v94 = vld [vmem:[%s1 + $0xf0] sm:$0xf]
  %v95 = vld [vmem:[%s1 + $0xf4] sm:$0xf]
  %v96 = vld [vmem:[%s1 + $0xf8] sm:$0xf]
  %v97 = vld [vmem:[%s1 + $0xfc] sm:$0xf]
  %v98 = vld [vmem:[%s1 + $0x100] sm:$0xf]
  %v99 = vld [vmem:[%s1 + $0x104] sm:$0xf]
  %v100 = vld [vmem:[%s1 + $0x108] sm:$0xf]
  %v101 = vld [vmem:[%s1 + $0x10c] sm:$0xf]
  %v102 = vld [vmem:[%s1 + $0x110] sm:$0xf]
  %v103 = vld [vmem:[%s1 + $0x114] sm:$0xf]
  %v104 = vld [vmem:[%s1 + $0x118] sm:$0xf]
  %v105 = vld [vmem:[%s1 + $0x11c] sm:$0xf]
  %v106 = vld [vmem:[%s1 + $0x120] sm:$0xf]
  %v107 = vld [vmem:[%s1 + $0x124] sm:$0xf]
  %v108 = vld [vmem:[%s1 + $0x128] sm:$0xf]
  %v109 = vld [vmem:[%s1 + $0x12c] sm:$0xf]
  %v110 = vld [vmem:[%s1 + $0x130] sm:$0xf]
  %v111 = vld [vmem:[%s1 + $0x134] sm:$0xf]
  %v112 = vld [vmem:[%s1 + $0x138] sm:$0xf]
  %v113 = vld [vmem:[%s1 + $0x13c] sm:$0xf]
  %v114 = vld [vmem:[%s1 + $0x140] sm:$0xf]
  %v115 = vld [vmem:[%s1 + $0x144] sm:$0xf]
  %v116 = vld [vmem:[%s1 + $0x148] sm:$0xf]
  %v117 = vld [vmem:[%s1 + $0x14c] sm:$0xf]
  %v118 = vld [vmem:[%s1 + $0x150] sm:$0xf]
  %v119 = vld [vmem:[%s1 + $0x154] sm:$0xf]
  %v120 = vld [vmem:[%s1 + $0x158] sm:$0xf]
  %v121 = vld [vmem:[%s1 + $0x15c] sm:$0xf]
  %v122 = vld [vmem:[%s1 + $0x160] sm:$0xf]
  %v123 = vld [vmem:[%s1 + $0x164] sm:$0xf]
  %v124 = vld [vmem:[%s1 + $0x168] sm:$0xf]
  %v125 = vld [vmem:[%s1 + $0x16c] sm:$0xf]
  %v126 = vld [vmem:[%s1 + $0x170] sm:$0xf]
  %v127 = vld [vmem:[%s1 + $0x174] sm:$0xf]
  %v128 = vld [vmem:[%s1 + $0x178] sm:$0xf]
  %v129 = vld [vmem:[%s1 + $0x17c] sm:$0xf]
  %v130 = vld [vmem:[%s1 + $0x180] sm:$0xf]
  %v131 = vld [vmem:[%s1 + $0x184] sm:$0xf]
  %v132 = vld [vmem:[%s1 + $0x188] sm:$0xf]
  %v133 = vld [vmem:[%s1 + $0x18c] sm:$0xf]
  %v134 = vld [vmem:[%s1 + $0x190] sm:$0xf]
  %v135 = vld [vmem:[%s1 + $0x194] sm:$0xf]
  %v136 = vld [vmem:[%s1 + $0x198] sm:$0xf]
  %v137 = vld [vmem:[%s1 + $0x19c] sm:$0xf]
  %v138 = vld [vmem:[%s1 + $0x1a0] sm:$0xf]
  %v139 = vld [vmem:[%s1 + $0x1a4] sm:$0xf]
  %v140 = vld [vmem:[%s1 + $0x1a8] sm:$0xf]
  %v141 = vld [vmem:[%s1 + $0x1ac] sm:$0xf]
  %v142 = vld [vmem:[%s1 + $0x1b0] sm:$0xf]
  %v143 = vld [vmem:[%s1 + $0x1b4] sm:$0xf]
  %v144 = vld [vmem:[%s1 + $0x1b8] sm:$0xf]
  %v145 = vld [vmem:[%s1 + $0x1bc] sm:$0xf]
  %v146 = vld [vmem:[%s1 + $0x1c0] sm:$0xf]
  %v147 = vld [vmem:[%s1 + $0x1c4] sm:$0xf]
  %v148 = vld [vmem:[%s1 + $0x1c8] sm:$0xf]
  %v149 = vld [vmem:[%s1 + $0x1cc] sm:$0xf]
  %v150 = vld [vmem:[%s1 + $0x1d0] sm:$0xf]
  %v151 = vld [vmem:[%s1 + $0x1d4] sm:$0xf]
  %v152 = vld [vmem:[%s1 + $0x1d8] sm:$0xf]
  %v153 = vld [vmem:[%s1 + $0x1dc] sm:$0xf]
  %v154 = vld [vmem:[%s1 + $0x1e0] sm:$0xf]
  %v155 = vld [vmem:[%s1 + $0x1e4] sm:$0xf]
  %v156 = vld [vmem:[%s1 + $0x1e8] sm:$0xf]
  %v157 = vld [vmem:[%s1 + $0x1ec] sm:$0xf]
  %v158 = vld [vmem:[%s1 + $0x1f0] sm:$0xf]
  %v159 = vld [vmem:[%s1 + $0x1f4] sm:$0xf]
  %v160 = vld [vmem:[%s1 + $0x1f8] sm:$0xf]
  %v161 = vld [vmem:[%s1 + $0x1fc] sm:$0xf]
  %v162 = vld [vmem:[%s1 + $0x200] sm:$0xf]
  %v163 = vld [vmem:[%s1 + $0x204] sm:$0xf]
  %v164 = vld [vmem:[%s1 + $0x208] sm:$0xf]
  %v165 = vld [vmem:[%s1 + $0x20c] sm:$0xf]
  %v166 = vld [vmem:[%s1 + $0x210] sm:$0xf]
  %v167 = vld [vmem:[%s1 + $0x214] sm:$0xf]
  %v168 = vld [vmem:[%s1 + $0x218] sm:$0xf]
  %v169 = vld [vmem:[%s1 + $0x21c] sm:$0xf]
  %v170 = vld [vmem:[%s1 + $0x220] sm:$0xf]
  %v171 = vld [vmem:[%s1 + $0x224] sm:$0xf]
  %v172 = vld [vmem:[%s1 + $0x228] sm:$0xf]
  %v173 = vld [vmem:[%s1 + $0x22c] sm:$0xf]
  %v174 = vld [vmem:[%s1 + $0x230] sm:$0xf]
  %v175 = vld [vmem:[%s1 + $0x234] sm:$0xf]
  %v176 = vld [vmem:[%s1 + $0x238] sm:$0xf]
  %v177 = vld [vmem:[%s1 + $0x23c] sm:$0xf]
  %v178 = vld [vmem:[%s2] sm:$0x1]
  %v180 = vperm.slane %v178, 0
  %v202 = vunpack.c.l.b16 %v14
  %v203 = vunpack.c.h.b16 %v14
  %v204 = vunpack.c.l.b16 %v15
  %v205 = vunpack.c.h.b16 %v15
  %v206 = vunpack.c.l.b16 %v16
  %v207 = vunpack.c.h.b16 %v16
  %v208 = vunpack.c.l.b16 %v17
  %v209 = vunpack.c.h.b16 %v17
  %v210 = vunpack.c.l.b16 %v18
  %v211 = vunpack.c.l.b16 %v19
  %v212 = vunpack.c.h.b16 %v19
  %v213 = vunpack.c.l.b16 %v20
  %v214 = vunpack.c.h.b16 %v20
  %v215 = vunpack.c.l.b16 %v21
  %v216 = vunpack.c.h.b16 %v21
  %v217 = vunpack.c.l.b16 %v22
  %v218 = vunpack.c.h.b16 %v22
  %v219 = vunpack.c.l.b16 %v23
  %v220 = vunpack.c.l.b16 %v24
  %v221 = vunpack.c.h.b16 %v24
  %v222 = vunpack.c.l.b16 %v25
  %v223 = vunpack.c.h.b16 %v25
  %v224 = vunpack.c.l.b16 %v26
  %v225 = vunpack.c.h.b16 %v26
  %v226 = vunpack.c.l.b16 %v27
  %v227 = vunpack.c.h.b16 %v27
  %v228 = vunpack.c.l.b16 %v28
  %v229 = vunpack.c.l.b16 %v29
  %v230 = vunpack.c.h.b16 %v29
  %v231 = vunpack.c.l.b16 %v30
  %v232 = vunpack.c.h.b16 %v30
  %v233 = vunpack.c.l.b16 %v31
  %v234 = vunpack.c.h.b16 %v31
  %v235 = vunpack.c.l.b16 %v32
  %v236 = vunpack.c.h.b16 %v32
  %v237 = vunpack.c.l.b16 %v33
  %v238 = vpack.c.b16 %v211, %v202
  %v239 = vpack.c.b16 %v212, %v203
  %v240 = vpack.c.b16 %v213, %v204
  %v241 = vpack.c.b16 %v214, %v205
  %v242 = vpack.c.b16 %v215, %v206
  %v243 = vpack.c.b16 %v216, %v207
  %v244 = vpack.c.b16 %v217, %v208
  %v245 = vpack.c.b16 %v218, %v209
  %v246 = vpack.c.b16 %v219, %v210
  %v247 = vpack.c.b16 %v229, %v220
  %v248 = vpack.c.b16 %v230, %v221
  %v249 = vpack.c.b16 %v231, %v222
  %v250 = vpack.c.b16 %v232, %v223
  %v251 = vpack.c.b16 %v233, %v224
  %v252 = vpack.c.b16 %v234, %v225
  %v253 = vpack.c.b16 %v235, %v226
  %v254 = vpack.c.b16 %v236, %v227
  %v255 = vpack.c.b16 %v237, %v228
  %v418 = vunpack.c.l.b16 %v34
  %v419 = vunpack.c.l.b16 %v35
  %v420 = vunpack.c.l.b16 %v36
  %v421 = vunpack.c.l.b16 %v37
  %v422 = vunpack.c.l.b16 %v38
  %v423 = vunpack.c.l.b16 %v39
  %v424 = vunpack.c.l.b16 %v40
  %v425 = vunpack.c.l.b16 %v41
  %v426 = vunpack.c.l.b16 %v42
  %v427 = vunpack.c.l.b16 %v43
  %v428 = vunpack.c.l.b16 %v44
  %v429 = vunpack.c.l.b16 %v45
  %v430 = vunpack.c.l.b16 %v46
  %v431 = vunpack.c.l.b16 %v47
  %v432 = vunpack.c.l.b16 %v48
  %v433 = vunpack.c.l.b16 %v49
  %v434 = vunpack.c.l.b16 %v50
  %v435 = vunpack.c.l.b16 %v51
  %v436 = vunpack.c.l.b16 %v52
  %v437 = vunpack.c.l.b16 %v53
  %v438 = vunpack.c.l.b16 %v54
  %v439 = vunpack.c.l.b16 %v55
  %v440 = vunpack.c.l.b16 %v56
  %v441 = vunpack.c.l.b16 %v57
  %v442 = vunpack.c.l.b16 %v58
  %v443 = vunpack.c.l.b16 %v59
  %v444 = vunpack.c.l.b16 %v60
  %v445 = vunpack.c.l.b16 %v61
  %v446 = vunpack.c.l.b16 %v62
  %v447 = vunpack.c.l.b16 %v63
  %v448 = vunpack.c.l.b16 %v64
  %v449 = vunpack.c.l.b16 %v65
  %v450 = vunpack.c.l.b16 %v66
  %v451 = vunpack.c.l.b16 %v67
  %v452 = vunpack.c.l.b16 %v68
  %v453 = vunpack.c.l.b16 %v69
  %v454 = vunpack.c.l.b16 %v70
  %v455 = vunpack.c.l.b16 %v71
  %v456 = vunpack.c.l.b16 %v72
  %v457 = vunpack.c.l.b16 %v73
  %v458 = vunpack.c.l.b16 %v74
  %v459 = vunpack.c.l.b16 %v75
  %v460 = vunpack.c.l.b16 %v76
  %v461 = vunpack.c.l.b16 %v77
  %v462 = vunpack.c.l.b16 %v78
  %v463 = vunpack.c.l.b16 %v79
  %v464 = vunpack.c.l.b16 %v80
  %v465 = vunpack.c.l.b16 %v81
  %v466 = vunpack.c.l.b16 %v82
  %v467 = vunpack.c.l.b16 %v83
  %v468 = vunpack.c.l.b16 %v84
  %v469 = vunpack.c.l.b16 %v85
  %v470 = vunpack.c.l.b16 %v86
  %v471 = vunpack.c.l.b16 %v87
  %v472 = vunpack.c.l.b16 %v88
  %v473 = vunpack.c.l.b16 %v89
  %v474 = vunpack.c.l.b16 %v90
  %v475 = vunpack.c.l.b16 %v91
  %v476 = vunpack.c.l.b16 %v92
  %v477 = vunpack.c.l.b16 %v93
  %v478 = vunpack.c.l.b16 %v94
  %v479 = vunpack.c.l.b16 %v95
  %v480 = vunpack.c.l.b16 %v96
  %v481 = vunpack.c.l.b16 %v97
  %v482 = vunpack.c.l.b16 %v98
  %v483 = vunpack.c.l.b16 %v99
  %v484 = vunpack.c.l.b16 %v100
  %v485 = vunpack.c.l.b16 %v101
  %v486 = vunpack.c.l.b16 %v102
  %v487 = vunpack.c.l.b16 %v103
  %v488 = vunpack.c.l.b16 %v104
  %v489 = vunpack.c.l.b16 %v105
  %v490 = vunpack.c.l.b16 %v106
  %v491 = vunpack.c.l.b16 %v107
  %v492 = vunpack.c.l.b16 %v108
  %v493 = vunpack.c.l.b16 %v109
  %v494 = vunpack.c.l.b16 %v110
  %v495 = vunpack.c.l.b16 %v111
  %v496 = vunpack.c.l.b16 %v112
  %v497 = vunpack.c.l.b16 %v113
  %v498 = vunpack.c.l.b16 %v114
  %v499 = vunpack.c.l.b16 %v115
  %v500 = vunpack.c.l.b16 %v116
  %v501 = vunpack.c.l.b16 %v117
  %v502 = vunpack.c.l.b16 %v118
  %v503 = vunpack.c.l.b16 %v119
  %v504 = vunpack.c.l.b16 %v120
  %v505 = vunpack.c.l.b16 %v121
  %v506 = vunpack.c.l.b16 %v122
  %v507 = vunpack.c.l.b16 %v123
  %v508 = vunpack.c.l.b16 %v124
  %v509 = vunpack.c.l.b16 %v125
  %v510 = vunpack.c.l.b16 %v126
  %v511 = vunpack.c.l.b16 %v127
  %v512 = vunpack.c.l.b16 %v128
  %v513 = vunpack.c.l.b16 %v129
  %v514 = vunpack.c.l.b16 %v130
  %v515 = vunpack.c.l.b16 %v131
  %v516 = vunpack.c.l.b16 %v132
  %v517 = vunpack.c.l.b16 %v133
  %v518 = vunpack.c.l.b16 %v134
  %v519 = vunpack.c.l.b16 %v135
  %v520 = vunpack.c.l.b16 %v136
  %v521 = vunpack.c.l.b16 %v137
  %v522 = vunpack.c.l.b16 %v138
  %v523 = vunpack.c.l.b16 %v139
  %v524 = vunpack.c.l.b16 %v140
  %v525 = vunpack.c.l.b16 %v141
  %v526 = vunpack.c.l.b16 %v142
  %v527 = vunpack.c.l.b16 %v143
  %v528 = vunpack.c.l.b16 %v144
  %v529 = vunpack.c.l.b16 %v145
  %v530 = vunpack.c.l.b16 %v146
  %v531 = vunpack.c.l.b16 %v147
  %v532 = vunpack.c.l.b16 %v148
  %v533 = vunpack.c.l.b16 %v149
  %v534 = vunpack.c.l.b16 %v150
  %v535 = vunpack.c.l.b16 %v151
  %v536 = vunpack.c.l.b16 %v152
  %v537 = vunpack.c.l.b16 %v153
  %v538 = vunpack.c.l.b16 %v154
  %v539 = vunpack.c.l.b16 %v155
  %v540 = vunpack.c.l.b16 %v156
  %v541 = vunpack.c.l.b16 %v157
  %v542 = vunpack.c.l.b16 %v158
  %v543 = vunpack.c.l.b16 %v159
  %v544 = vunpack.c.l.b16 %v160
  %v545 = vunpack.c.l.b16 %v161
  %v546 = vunpack.c.l.b16 %v162
  %v547 = vunpack.c.l.b16 %v163
  %v548 = vunpack.c.l.b16 %v164
  %v549 = vunpack.c.l.b16 %v165
  %v550 = vunpack.c.l.b16 %v166
  %v551 = vunpack.c.l.b16 %v167
  %v552 = vunpack.c.l.b16 %v168
  %v553 = vunpack.c.l.b16 %v169
  %v554 = vunpack.c.l.b16 %v170
  %v555 = vunpack.c.l.b16 %v171
  %v556 = vunpack.c.l.b16 %v172
  %v557 = vunpack.c.l.b16 %v173
  %v558 = vunpack.c.l.b16 %v174
  %v559 = vunpack.c.l.b16 %v175
  %v560 = vunpack.c.l.b16 %v176
  %v561 = vunpack.c.l.b16 %v177
  %v562 = vpack.c.b16 %v419, %v418
  %v563 = vpack.c.b16 %v421, %v420
  %v564 = vpack.c.b16 %v423, %v422
  %v565 = vpack.c.b16 %v425, %v424
  %v566 = vpack.c.b16 %v427, %v426
  %v567 = vpack.c.b16 %v429, %v428
  %v568 = vpack.c.b16 %v431, %v430
  %v569 = vpack.c.b16 %v433, %v432
  %v570 = vpack.c.b16 %v435, %v434
  %v571 = vpack.c.b16 %v437, %v436
  %v572 = vpack.c.b16 %v439, %v438
  %v573 = vpack.c.b16 %v441, %v440
  %v574 = vpack.c.b16 %v443, %v442
  %v575 = vpack.c.b16 %v445, %v444
  %v576 = vpack.c.b16 %v447, %v446
  %v577 = vpack.c.b16 %v449, %v448
  %v578 = vpack.c.b16 %v451, %v450
  %v579 = vpack.c.b16 %v453, %v452
  %v580 = vpack.c.b16 %v455, %v454
  %v581 = vpack.c.b16 %v457, %v456
  %v582 = vpack.c.b16 %v459, %v458
  %v583 = vpack.c.b16 %v461, %v460
  %v584 = vpack.c.b16 %v463, %v462
  %v585 = vpack.c.b16 %v465, %v464
  %v586 = vpack.c.b16 %v467, %v466
  %v587 = vpack.c.b16 %v469, %v468
  %v588 = vpack.c.b16 %v471, %v470
  %v589 = vpack.c.b16 %v473, %v472
  %v590 = vpack.c.b16 %v475, %v474
  %v591 = vpack.c.b16 %v477, %v476
  %v592 = vpack.c.b16 %v479, %v478
  %v593 = vpack.c.b16 %v481, %v480
  %v594 = vpack.c.b16 %v483, %v482
  %v595 = vpack.c.b16 %v485, %v484
  %v596 = vpack.c.b16 %v487, %v486
  %v597 = vpack.c.b16 %v489, %v488
  %v598 = vpack.c.b16 %v491, %v490
  %v599 = vpack.c.b16 %v493, %v492
  %v600 = vpack.c.b16 %v495, %v494
  %v601 = vpack.c.b16 %v497, %v496
  %v602 = vpack.c.b16 %v499, %v498
  %v603 = vpack.c.b16 %v501, %v500
  %v604 = vpack.c.b16 %v503, %v502
  %v605 = vpack.c.b16 %v505, %v504
  %v606 = vpack.c.b16 %v507, %v506
  %v607 = vpack.c.b16 %v509, %v508
  %v608 = vpack.c.b16 %v511, %v510
  %v609 = vpack.c.b16 %v513, %v512
  %v610 = vpack.c.b16 %v515, %v514
  %v611 = vpack.c.b16 %v517, %v516
  %v612 = vpack.c.b16 %v519, %v518
  %v613 = vpack.c.b16 %v521, %v520
  %v614 = vpack.c.b16 %v523, %v522
  %v615 = vpack.c.b16 %v525, %v524
  %v616 = vpack.c.b16 %v527, %v526
  %v617 = vpack.c.b16 %v529, %v528
  %v618 = vpack.c.b16 %v531, %v530
  %v619 = vpack.c.b16 %v533, %v532
  %v620 = vpack.c.b16 %v535, %v534
  %v621 = vpack.c.b16 %v537, %v536
  %v622 = vpack.c.b16 %v539, %v538
  %v623 = vpack.c.b16 %v541, %v540
  %v624 = vpack.c.b16 %v543, %v542
  %v625 = vpack.c.b16 %v545, %v544
  %v626 = vpack.c.b16 %v547, %v546
  %v627 = vpack.c.b16 %v549, %v548
  %v628 = vpack.c.b16 %v551, %v550
  %v629 = vpack.c.b16 %v553, %v552
  %v630 = vpack.c.b16 %v555, %v554
  %v631 = vpack.c.b16 %v557, %v556
  %v632 = vpack.c.b16 %v559, %v558
  %v633 = vpack.c.b16 %v561, %v560
  %706 = vmatpush.bf16.msra.mxu0 %v569
  %707 = vmatpush.bf16.msra.mxu0 %v568
  %708 = vmatpush.bf16.msra.mxu0 %v567
  %709 = vmatpush.bf16.msra.mxu0 %v566
  %710 = vmatpush.bf16.msra.mxu0 %v565
  %711 = vmatpush.bf16.msra.mxu0 %v564
  %712 = vmatpush.bf16.msra.mxu0 %v563
  %713 = vmatpush.bf16.msra.mxu0 %v562
  %714 = vmatmul.bf16.gmra.mxu0 %v238
  %v715 = vpop.f32.mrf.mxu0
  %v716 = vadd.f32 %v180, %v715
  %v717 = vpop.f32.mrf.mxu0
  %v718 = vadd.f32 %v180, %v717
  %719 = vmatmul.bf16.gmra.mxu0 %v247
  %v720 = vpop.f32.mrf.mxu0
  %v721 = vadd.f32 %v180, %v720
  %v722 = vpop.f32.mrf.mxu0
  %v723 = vadd.f32 %v180, %v722
  %724 = vdwg.mxu0
  %725 = vmatpush.bf16.msra.mxu0 %v577
  %726 = vmatpush.bf16.msra.mxu0 %v576
  %727 = vmatpush.bf16.msra.mxu0 %v575
  %728 = vmatpush.bf16.msra.mxu0 %v574
  %729 = vmatpush.bf16.msra.mxu0 %v573
  %730 = vmatpush.bf16.msra.mxu0 %v572
  %731 = vmatpush.bf16.msra.mxu0 %v571
  %732 = vmatpush.bf16.msra.mxu0 %v570
  %733 = vmatmul.bf16.gmra.mxu0 %v239
  %v734 = vpop.f32.mrf.mxu0
  %v735 = vadd.f32 %v716, %v734
  %v736 = vpop.f32.mrf.mxu0
  %v737 = vadd.f32 %v718, %v736
  %738 = vmatmul.bf16.gmra.mxu0 %v248
  %v739 = vpop.f32.mrf.mxu0
  %v740 = vadd.f32 %v721, %v739
  %v741 = vpop.f32.mrf.mxu0
  %v742 = vadd.f32 %v723, %v741
  %743 = vdwg.mxu0
  %744 = vmatpush.bf16.msra.mxu0 %v585
  %745 = vmatpush.bf16.msra.mxu0 %v584
  %746 = vmatpush.bf16.msra.mxu0 %v583
  %747 = vmatpush.bf16.msra.mxu0 %v582
  %748 = vmatpush.bf16.msra.mxu0 %v581
  %749 = vmatpush.bf16.msra.mxu0 %v580
  %750 = vmatpush.bf16.msra.mxu0 %v579
  %751 = vmatpush.bf16.msra.mxu0 %v578
  %752 = vmatmul.bf16.gmra.mxu0 %v240
  %v753 = vpop.f32.mrf.mxu0
  %v754 = vadd.f32 %v735, %v753
  %v755 = vpop.f32.mrf.mxu0
  %v756 = vadd.f32 %v737, %v755
  %757 = vmatmul.bf16.gmra.mxu0 %v249
  %v758 = vpop.f32.mrf.mxu0
  %v759 = vadd.f32 %v740, %v758
  %v760 = vpop.f32.mrf.mxu0
  %v761 = vadd.f32 %v742, %v760
  %762 = vdwg.mxu0
  %763 = vmatpush.bf16.msra.mxu0 %v593
  %764 = vmatpush.bf16.msra.mxu0 %v592
  %765 = vmatpush.bf16.msra.mxu0 %v591
  %766 = vmatpush.bf16.msra.mxu0 %v590
  %767 = vmatpush.bf16.msra.mxu0 %v589
  %768 = vmatpush.bf16.msra.mxu0 %v588
  %769 = vmatpush.bf16.msra.mxu0 %v587
  %770 = vmatpush.bf16.msra.mxu0 %v586
  %771 = vmatmul.bf16.gmra.mxu0 %v241
  %v772 = vpop.f32.mrf.mxu0
  %v773 = vadd.f32 %v754, %v772
  %v774 = vpop.f32.mrf.mxu0
  %v775 = vadd.f32 %v756, %v774
  %776 = vmatmul.bf16.gmra.mxu0 %v250
  %v777 = vpop.f32.mrf.mxu0
  %v778 = vadd.f32 %v759, %v777
  %v779 = vpop.f32.mrf.mxu0
  %v780 = vadd.f32 %v761, %v779
  %781 = vdwg.mxu0
  %782 = vmatpush.bf16.msra.mxu0 %v601
  %783 = vmatpush.bf16.msra.mxu0 %v600
  %784 = vmatpush.bf16.msra.mxu0 %v599
  %785 = vmatpush.bf16.msra.mxu0 %v598
  %786 = vmatpush.bf16.msra.mxu0 %v597
  %787 = vmatpush.bf16.msra.mxu0 %v596
  %788 = vmatpush.bf16.msra.mxu0 %v595
  %789 = vmatpush.bf16.msra.mxu0 %v594
  %790 = vmatmul.bf16.gmra.mxu0 %v242
  %v791 = vpop.f32.mrf.mxu0
  %v792 = vadd.f32 %v773, %v791
  %v793 = vpop.f32.mrf.mxu0
  %v794 = vadd.f32 %v775, %v793
  %795 = vmatmul.bf16.gmra.mxu0 %v251
  %v796 = vpop.f32.mrf.mxu0
  %v797 = vadd.f32 %v778, %v796
  %v798 = vpop.f32.mrf.mxu0
  %v799 = vadd.f32 %v780, %v798
  %800 = vdwg.mxu0
  %801 = vmatpush.bf16.msra.mxu0 %v609
  %802 = vmatpush.bf16.msra.mxu0 %v608
  %803 = vmatpush.bf16.msra.mxu0 %v607
  %804 = vmatpush.bf16.msra.mxu0 %v606
  %805 = vmatpush.bf16.msra.mxu0 %v605
  %806 = vmatpush.bf16.msra.mxu0 %v604
  %807 = vmatpush.bf16.msra.mxu0 %v603
  %808 = vmatpush.bf16.msra.mxu0 %v602
  %809 = vmatmul.bf16.gmra.mxu0 %v243
  %v810 = vpop.f32.mrf.mxu0
  %v811 = vadd.f32 %v792, %v810
  %v812 = vpop.f32.mrf.mxu0
  %v813 = vadd.f32 %v794, %v812
  %814 = vmatmul.bf16.gmra.mxu0 %v252
  %v815 = vpop.f32.mrf.mxu0
  %v816 = vadd.f32 %v797, %v815
  %v817 = vpop.f32.mrf.mxu0
  %v818 = vadd.f32 %v799, %v817
  %819 = vdwg.mxu0
  %820 = vmatpush.bf16.msra.mxu0 %v617
  %821 = vmatpush.bf16.msra.mxu0 %v616
  %822 = vmatpush.bf16.msra.mxu0 %v615
  %823 = vmatpush.bf16.msra.mxu0 %v614
  %824 = vmatpush.bf16.msra.mxu0 %v613
  %825 = vmatpush.bf16.msra.mxu0 %v612
  %826 = vmatpush.bf16.msra.mxu0 %v611
  %827 = vmatpush.bf16.msra.mxu0 %v610
  %828 = vmatmul.bf16.gmra.mxu0 %v244
  %v829 = vpop.f32.mrf.mxu0
  %v830 = vadd.f32 %v811, %v829
  %v831 = vpop.f32.mrf.mxu0
  %v832 = vadd.f32 %v813, %v831
  %833 = vmatmul.bf16.gmra.mxu0 %v253
  %v834 = vpop.f32.mrf.mxu0
  %v835 = vadd.f32 %v816, %v834
  %v836 = vpop.f32.mrf.mxu0
  %v837 = vadd.f32 %v818, %v836
  %838 = vdwg.mxu0
  %839 = vmatpush.bf16.msra.mxu0 %v625
  %840 = vmatpush.bf16.msra.mxu0 %v624
  %841 = vmatpush.bf16.msra.mxu0 %v623
  %842 = vmatpush.bf16.msra.mxu0 %v622
  %843 = vmatpush.bf16.msra.mxu0 %v621
  %844 = vmatpush.bf16.msra.mxu0 %v620
  %845 = vmatpush.bf16.msra.mxu0 %v619
  %846 = vmatpush.bf16.msra.mxu0 %v618
  %847 = vmatmul.bf16.gmra.mxu0 %v245
  %v848 = vpop.f32.mrf.mxu0
  %v849 = vadd.f32 %v830, %v848
  %v850 = vpop.f32.mrf.mxu0
  %v851 = vadd.f32 %v832, %v850
  %852 = vmatmul.bf16.gmra.mxu0 %v254
  %v853 = vpop.f32.mrf.mxu0
  %v854 = vadd.f32 %v835, %v853
  %v855 = vpop.f32.mrf.mxu0
  %v856 = vadd.f32 %v837, %v855
  %857 = vdwg.mxu0
  %858 = vmatpush.bf16.msra.mxu0 %v633
  %859 = vmatpush.bf16.msra.mxu0 %v632
  %860 = vmatpush.bf16.msra.mxu0 %v631
  %861 = vmatpush.bf16.msra.mxu0 %v630
  %862 = vmatpush.bf16.msra.mxu0 %v629
  %863 = vmatpush.bf16.msra.mxu0 %v628
  %864 = vmatpush.bf16.msra.mxu0 %v627
  %865 = vmatpush.bf16.msra.mxu0 %v626
  %866 = vmatmul.bf16.gmra.mxu0 %v246
  %v867 = vpop.f32.mrf.mxu0
  %v868 = vadd.f32 %v849, %v867
  %v869 = vpop.f32.mrf.mxu0
  %v870 = vadd.f32 %v851, %v869
  %871 = vmatmul.bf16.gmra.mxu0 %v255
  %v872 = vpop.f32.mrf.mxu0
  %v873 = vadd.f32 %v854, %v872
  %v874 = vpop.f32.mrf.mxu0
  %v875 = vadd.f32 %v856, %v874
  %876 = vdwg.mxu0
  %v877 = vmax.f32 %v868, 0.0
  %v878 = vmax.f32 %v870, 0.0
  %v879 = vmax.f32 %v873, 0.0
  %v880 = vmax.f32 %v875, 0.0
  %v881 = vpack.c.bf16 %v877, %v877
  %v882 = vpack.c.bf16 %v878, %v878
  %v883 = vpack.c.bf16 %v879, %v879
  %v884 = vpack.c.bf16 %v880, %v880
  %vm885 = vcmask 257024
  %886 = vst.msk [vmem:[%s3] sm:$0xf] %vm885, %v881
  %887 = vst.msk [vmem:[%s3 + $0x4] sm:$0xf] %vm885, %v882
  %888 = vst.msk [vmem:[%s3 + $0x8] sm:$0xf] %vm885, %v883
  %889 = vst.msk [vmem:[%s3 + $0xc] sm:$0xf] %vm885, %v884
  // Predicated region
  $region14: #{depth_star_forward.18} parent=0 // pred_check
    _
  $region15: #{depth_star_forward.18} parent=0 // pred_check_branch
    %891 = sbr.rel (0) target = $region17
  $region16: #{depth_star_forward.18} parent=0 // pred_region
    _
  $region17: #{depth_star_forward.18} parent=0 // pred_fallthru
    _
  // Predicated region
  $region18: #{depth_star_forward.18} parent=0 // pred_check
    _
  $region19: #{depth_star_forward.18} parent=0 // pred_check_branch
    %893 = sbr.rel (0) target = $region21
  $region20: #{depth_star_forward.18} parent=0 // pred_region
    _
  $region21: #{depth_star_forward.18} parent=0 // pred_fallthru
    _

// kernel: depth_star_forward.19
$region0: #{depth_star_forward.19}
  #allocation0 [shape = 'u32[]', space=smem, size = 0x4, offset = 0x4, fixed_abs, tag = 'smem constant byte address 0x4 - core index']
  #allocation1 [shape = 'u32[72,128]{1,0:T(1,128)}', space=vmem, size = 0x9000, scoped, tag = 'internal scratch']
  %s0 = inlined_call_operand.vmem [shape: bf16[32,288], index: 0, kind: input, shape index: {}]
  %s1 = inlined_call_operand.vmem [shape: bf16[288,32], index: 1, kind: input, shape index: {}]
  %s2 = inlined_call_operand.vmem [shape: f32[1,32], index: 2, kind: input, shape index: {}]
  %s3 = inlined_call_operand.vmem [shape: bf16[32,32], index: 3, kind: output, shape index: {}]
  %s4 = sld [smem:[#allocation0]]
  $region22: #{depth_star_forward.19} parent=0
    _
  %s6 = ssub.s32 1, %s4
  %s7 = scalar_select 0, %s6, %s4
  // Predicated region
  $region2: #{depth_star_forward.19} parent=0 // pred_check
    _
  $region3: #{depth_star_forward.19} parent=0 // pred_check_branch
    %9 = sbr.rel (0) target = $region5
  $region4: #{depth_star_forward.19} parent=0 // pred_region
    _
  $region5: #{depth_star_forward.19} parent=0 // pred_fallthru
    _
  // Predicated region
  $region6: #{depth_star_forward.19} parent=0 // pred_check
    _
  $region7: #{depth_star_forward.19} parent=0 // pred_check_branch
    %11 = sbr.rel (0) target = $region9
  $region8: #{depth_star_forward.19} parent=0 // pred_region
    _
  $region9: #{depth_star_forward.19} parent=0 // pred_fallthru
    _
  // Predicated region
  $region10: #{depth_star_forward.19} parent=0 // pred_check
    _
  $region11: #{depth_star_forward.19} parent=0 // pred_check_branch
    %13 = sbr.rel (0) target = $region13
  $region12: #{depth_star_forward.19} parent=0 // pred_region
    _
  $region13: #{depth_star_forward.19} parent=0 // pred_fallthru
    _
  %v15 = vld [vmem:[%s0] sm:$0xff]
  %v16 = vld [vmem:[%s0 + $0x8] sm:$0xf]
  %v17 = vld [vmem:[%s0 + $0xc] sm:$0xff]
  %v18 = vld [vmem:[%s0 + $0x14] sm:$0xf]
  %v19 = vld [vmem:[%s0 + $0x18] sm:$0xff]
  %v20 = vld [vmem:[%s0 + $0x20] sm:$0xf]
  %v21 = vld [vmem:[%s0 + $0x24] sm:$0xff]
  %v22 = vld [vmem:[%s0 + $0x2c] sm:$0xf]
  %v23 = vld [vmem:[%s1] sm:$0xf]
  %v24 = vld [vmem:[%s1 + $0x4] sm:$0xf]
  %v25 = vld [vmem:[%s1 + $0x8] sm:$0xf]
  %v26 = vld [vmem:[%s1 + $0xc] sm:$0xf]
  %v27 = vld [vmem:[%s1 + $0x10] sm:$0xf]
  %v28 = vld [vmem:[%s1 + $0x14] sm:$0xf]
  %v29 = vld [vmem:[%s1 + $0x18] sm:$0xf]
  %v30 = vld [vmem:[%s1 + $0x1c] sm:$0xf]
  %v31 = vld [vmem:[%s1 + $0x20] sm:$0xf]
  %v32 = vld [vmem:[%s1 + $0x24] sm:$0xf]
  %v33 = vld [vmem:[%s1 + $0x28] sm:$0xf]
  %v34 = vld [vmem:[%s1 + $0x2c] sm:$0xf]
  %v35 = vld [vmem:[%s1 + $0x30] sm:$0xf]
  %v36 = vld [vmem:[%s1 + $0x34] sm:$0xf]
  %v37 = vld [vmem:[%s1 + $0x38] sm:$0xf]
  %v38 = vld [vmem:[%s1 + $0x3c] sm:$0xf]
  %v39 = vld [vmem:[%s1 + $0x40] sm:$0xf]
  %v40 = vld [vmem:[%s1 + $0x44] sm:$0xf]
  %v41 = vld [vmem:[%s1 + $0x48] sm:$0xf]
  %v42 = vld [vmem:[%s1 + $0x4c] sm:$0xf]
  %v43 = vld [vmem:[%s1 + $0x50] sm:$0xf]
  %v44 = vld [vmem:[%s1 + $0x54] sm:$0xf]
  %v45 = vld [vmem:[%s1 + $0x58] sm:$0xf]
  %v46 = vld [vmem:[%s1 + $0x5c] sm:$0xf]
  %v47 = vld [vmem:[%s1 + $0x60] sm:$0xf]
  %v48 = vld [vmem:[%s1 + $0x64] sm:$0xf]
  %v49 = vld [vmem:[%s1 + $0x68] sm:$0xf]
  %v50 = vld [vmem:[%s1 + $0x6c] sm:$0xf]
  %v51 = vld [vmem:[%s1 + $0x70] sm:$0xf]
  %v52 = vld [vmem:[%s1 + $0x74] sm:$0xf]
  %v53 = vld [vmem:[%s1 + $0x78] sm:$0xf]
  %v54 = vld [vmem:[%s1 + $0x7c] sm:$0xf]
  %v55 = vld [vmem:[%s1 + $0x80] sm:$0xf]
  %v56 = vld [vmem:[%s1 + $0x84] sm:$0xf]
  %v57 = vld [vmem:[%s1 + $0x88] sm:$0xf]
  %v58 = vld [vmem:[%s1 + $0x8c] sm:$0xf]
  %v59 = vld [vmem:[%s2] sm:$0x1]
  %v61 = vperm.slane %v59, 0
  %v71 = vunpack.c.l.b16 %v15
  %v72 = vunpack.c.h.b16 %v15
  %v73 = vunpack.c.l.b16 %v16
  %v74 = vunpack.c.l.b16 %v17
  %v75 = vunpack.c.h.b16 %v17
  %v76 = vunpack.c.l.b16 %v18
  %v77 = vunpack.c.l.b16 %v19
  %v78 = vunpack.c.h.b16 %v19
  %v79 = vunpack.c.l.b16 %v20
  %v80 = vunpack.c.l.b16 %v21
  %v81 = vunpack.c.h.b16 %v21
  %v82 = vunpack.c.l.b16 %v22
  %v83 = vpack.c.b16 %v74, %v71
  %v84 = vpack.c.b16 %v75, %v72
  %v85 = vpack.c.b16 %v76, %v73
  %v86 = vpack.c.b16 %v80, %v77
  %v87 = vpack.c.b16 %v81, %v78
  %v88 = vpack.c.b16 %v82, %v79
  %v129 = vunpack.c.l.b16 %v23
  %v130 = vunpack.c.l.b16 %v24
  %v131 = vunpack.c.l.b16 %v25
  %v132 = vunpack.c.l.b16 %v26
  %v133 = vunpack.c.l.b16 %v27
  %v134 = vunpack.c.l.b16 %v28
  %v135 = vunpack.c.l.b16 %v29
  %v136 = vunpack.c.l.b16 %v30
  %v137 = vunpack.c.l.b16 %v31
  %v138 = vunpack.c.l.b16 %v32
  %v139 = vunpack.c.l.b16 %v33
  %v140 = vunpack.c.l.b16 %v34
  %v141 = vunpack.c.l.b16 %v35
  %v142 = vunpack.c.l.b16 %v36
  %v143 = vunpack.c.l.b16 %v37
  %v144 = vunpack.c.l.b16 %v38
  %v145 = vunpack.c.l.b16 %v39
  %v146 = vunpack.c.l.b16 %v40
  %v147 = vunpack.c.l.b16 %v41
  %v148 = vunpack.c.l.b16 %v42
  %v149 = vunpack.c.l.b16 %v43
  %v150 = vunpack.c.l.b16 %v44
  %v151 = vunpack.c.l.b16 %v45
  %v152 = vunpack.c.l.b16 %v46
  %v153 = vunpack.c.l.b16 %v47
  %v154 = vunpack.c.l.b16 %v48
  %v155 = vunpack.c.l.b16 %v49
  %v156 = vunpack.c.l.b16 %v50
  %v157 = vunpack.c.l.b16 %v51
  %v158 = vunpack.c.l.b16 %v52
  %v159 = vunpack.c.l.b16 %v53
  %v160 = vunpack.c.l.b16 %v54
  %v161 = vunpack.c.l.b16 %v55
  %v162 = vunpack.c.l.b16 %v56
  %v163 = vunpack.c.l.b16 %v57
  %v164 = vunpack.c.l.b16 %v58
  %v165 = vpack.c.b16 %v130, %v129
  %v166 = vpack.c.b16 %v132, %v131
  %v167 = vpack.c.b16 %v134, %v133
  %v168 = vpack.c.b16 %v136, %v135
  %v169 = vpack.c.b16 %v138, %v137
  %v170 = vpack.c.b16 %v140, %v139
  %v171 = vpack.c.b16 %v142, %v141
  %v172 = vpack.c.b16 %v144, %v143
  %v173 = vpack.c.b16 %v146, %v145
  %v174 = vpack.c.b16 %v148, %v147
  %v175 = vpack.c.b16 %v150, %v149
  %v176 = vpack.c.b16 %v152, %v151
  %v177 = vpack.c.b16 %v154, %v153
  %v178 = vpack.c.b16 %v156, %v155
  %v179 = vpack.c.b16 %v158, %v157
  %v180 = vpack.c.b16 %v160, %v159
  %v181 = vpack.c.b16 %v162, %v161
  %v182 = vpack.c.b16 %v164, %v163
  %vm201 = vcmask 261120
  %v203 = vsel %vm201, %v85, 0
  %v206 = vsel %vm201, %v88, 0
  %208 = vmatpush.bf16.msra.mxu0 %v172
  %209 = vmatpush.bf16.msra.mxu0 %v171
  %210 = vmatpush.bf16.msra.mxu0 %v170
  %211 = vmatpush.bf16.msra.mxu0 %v169
  %212 = vmatpush.bf16.msra.mxu0 %v168
  %213 = vmatpush.bf16.msra.mxu0 %v167
  %214 = vmatpush.bf16.msra.mxu0 %v166
  %215 = vmatpush.bf16.msra.mxu0 %v165
  %216 = vmatmul.bf16.gmra.mxu0 %v83
  %v217 = vpop.f32.mrf.mxu0
  %v218 = vadd.f32 %v61, %v217
  %v219 = vpop.f32.mrf.mxu0
  %v220 = vadd.f32 %v61, %v219
  %221 = vmatmul.bf16.gmra.mxu0 %v86
  %v222 = vpop.f32.mrf.mxu0
  %v223 = vadd.f32 %v61, %v222
  %v224 = vpop.f32.mrf.mxu0
  %v225 = vadd.f32 %v61, %v224
  %226 = vdwg.mxu0
  %227 = vmatpush.bf16.msra.mxu0 %v180
  %228 = vmatpush.bf16.msra.mxu0 %v179
  %229 = vmatpush.bf16.msra.mxu0 %v178
  %230 = vmatpush.bf16.msra.mxu0 %v177
  %231 = vmatpush.bf16.msra.mxu0 %v176
  %232 = vmatpush.bf16.msra.mxu0 %v175
  %233 = vmatpush.bf16.msra.mxu0 %v174
  %234 = vmatpush.bf16.msra.mxu0 %v173
  %235 = vmatmul.bf16.gmra.mxu0 %v84
  %v236 = vpop.f32.mrf.mxu0
  %v237 = vadd.f32 %v218, %v236
  %v238 = vpop.f32.mrf.mxu0
  %v239 = vadd.f32 %v220, %v238
  %240 = vmatmul.bf16.gmra.mxu0 %v87
  %v241 = vpop.f32.mrf.mxu0
  %v242 = vadd.f32 %v223, %v241
  %v243 = vpop.f32.mrf.mxu0
  %v244 = vadd.f32 %v225, %v243
  %245 = vdwg.mxu0
  %246 = vmatpush.bf16.msra.mxu0 0
  %247 = vmatpush.bf16.msra.mxu0 0
  %248 = vmatpush.bf16.msra.mxu0 0
  %249 = vmatpush.bf16.msra.mxu0 0
  %250 = vmatpush.bf16.msra.mxu0 0
  %251 = vmatpush.bf16.msra.mxu0 0
  %252 = vmatpush.bf16.msra.mxu0 %v182
  %253 = vmatpush.bf16.msra.mxu0 %v181
  %254 = vmatmul.bf16.gmra.mxu0 %v203
  %v255 = vpop.f32.mrf.mxu0
  %v256 = vadd.f32 %v237, %v255
  %v257 = vpop.f32.mrf.mxu0
  %v258 = vadd.f32 %v239, %v257
  %259 = vmatmul.bf16.gmra.mxu0 %v206
  %v260 = vpop.f32.mrf.mxu0
  %v261 = vadd.f32 %v242, %v260
  %v262 = vpop.f32.mrf.mxu0
  %v263 = vadd.f32 %v244, %v262
  %264 = vdwg.mxu0
  %v265 = vmax.f32 %v256, 0.0
  %v266 = vmax.f32 %v258, 0.0
  %v267 = vmax.f32 %v261, 0.0
  %v268 = vmax.f32 %v263, 0.0
  %v269 = vpack.c.bf16 %v265, %v265
  %v270 = vpack.c.bf16 %v266, %v266
  %v271 = vpack.c.bf16 %v267, %v267
  %v272 = vpack.c.bf16 %v268, %v268
  %vm273 = vcmask 257024
  %274 = vst.msk [vmem:[%s3] sm:$0xf] %vm273, %v269
  %275 = vst.msk [vmem:[%s3 + $0x4] sm:$0xf] %vm273, %v270
  %276 = vst.msk [vmem:[%s3 + $0x8] sm:$0xf] %vm273, %v271
  %277 = vst.msk [vmem:[%s3 + $0xc] sm:$0xf] %vm273, %v272
  // Predicated region
  $region14: #{depth_star_forward.19} parent=0 // pred_check
    _
  $region15: #{depth_star_forward.19} parent=0 // pred_check_branch
    %279 = sbr.rel (0) target = $region17
  $region16: #{depth_star_forward.19} parent=0 // pred_region
    _
  $region17: #{depth_star_forward.19} parent=0 // pred_fallthru
    _
  // Predicated region
  $region18: #{depth_star_forward.19} parent=0 // pred_check
    _
  $region19: #{depth_star_forward.19} parent=0 // pred_check_branch
    %281 = sbr.rel (0) target = $region21
  $region20: #{depth_star_forward.19} parent=0 // pred_region
    _
  $region21: #{depth_star_forward.19} parent=0 // pred_fallthru
    _

// kernel: depth_star_forward.20
$region0: #{depth_star_forward.20}
  #allocation0 [shape = 'u32[]', space=smem, size = 0x4, offset = 0x4, fixed_abs, tag = 'smem constant byte address 0x4 - core index']
  #allocation1 [shape = 'u32[72,128]{1,0:T(1,128)}', space=vmem, size = 0x9000, scoped, tag = 'internal scratch']
  %s0 = inlined_call_operand.vmem [shape: bf16[32,288], index: 0, kind: input, shape index: {}]
  %s1 = inlined_call_operand.vmem [shape: bf16[288,32], index: 1, kind: input, shape index: {}]
  %s2 = inlined_call_operand.vmem [shape: f32[1,32], index: 2, kind: input, shape index: {}]
  %s3 = inlined_call_operand.vmem [shape: bf16[32,32], index: 3, kind: input, shape index: {}]
  %s4 = inlined_call_operand.vmem [shape: bf16[32,32], index: 4, kind: output, shape index: {}]
  %s5 = sld [smem:[#allocation0]]
  $region26: #{depth_star_forward.20} parent=0
    _
  %s7 = ssub.s32 1, %s5
  %s8 = scalar_select 0, %s7, %s5
  // Predicated region
  $region2: #{depth_star_forward.20} parent=0 // pred_check
    _
  $region3: #{depth_star_forward.20} parent=0 // pred_check_branch
    %10 = sbr.rel (0) target = $region5
  $region4: #{depth_star_forward.20} parent=0 // pred_region
    _
  $region5: #{depth_star_forward.20} parent=0 // pred_fallthru
    _
  // Predicated region
  $region6: #{depth_star_forward.20} parent=0 // pred_check
    _
  $region7: #{depth_star_forward.20} parent=0 // pred_check_branch
    %12 = sbr.rel (0) target = $region9
  $region8: #{depth_star_forward.20} parent=0 // pred_region
    _
  $region9: #{depth_star_forward.20} parent=0 // pred_fallthru
    _
  // Predicated region
  $region10: #{depth_star_forward.20} parent=0 // pred_check
    _
  $region11: #{depth_star_forward.20} parent=0 // pred_check_branch
    %14 = sbr.rel (0) target = $region13
  $region12: #{depth_star_forward.20} parent=0 // pred_region
    _
  $region13: #{depth_star_forward.20} parent=0 // pred_fallthru
    _
  // Predicated region
  $region14: #{depth_star_forward.20} parent=0 // pred_check
    _
  $region15: #{depth_star_forward.20} parent=0 // pred_check_branch
    %16 = sbr.rel (0) target = $region17
  $region16: #{depth_star_forward.20} parent=0 // pred_region
    _
  $region17: #{depth_star_forward.20} parent=0 // pred_fallthru
    _
  %v18 = vld [vmem:[%s0] sm:$0xff]
  %v19 = vld [vmem:[%s0 + $0x8] sm:$0xf]
  %v20 = vld [vmem:[%s0 + $0xc] sm:$0xff]
  %v21 = vld [vmem:[%s0 + $0x14] sm:$0xf]
  %v22 = vld [vmem:[%s0 + $0x18] sm:$0xff]
  %v23 = vld [vmem:[%s0 + $0x20] sm:$0xf]
  %v24 = vld [vmem:[%s0 + $0x24] sm:$0xff]
  %v25 = vld [vmem:[%s0 + $0x2c] sm:$0xf]
  %v26 = vld [vmem:[%s1] sm:$0xf]
  %v27 = vld [vmem:[%s1 + $0x4] sm:$0xf]
  %v28 = vld [vmem:[%s1 + $0x8] sm:$0xf]
  %v29 = vld [vmem:[%s1 + $0xc] sm:$0xf]
  %v30 = vld [vmem:[%s1 + $0x10] sm:$0xf]
  %v31 = vld [vmem:[%s1 + $0x14] sm:$0xf]
  %v32 = vld [vmem:[%s1 + $0x18] sm:$0xf]
  %v33 = vld [vmem:[%s1 + $0x1c] sm:$0xf]
  %v34 = vld [vmem:[%s1 + $0x20] sm:$0xf]
  %v35 = vld [vmem:[%s1 + $0x24] sm:$0xf]
  %v36 = vld [vmem:[%s1 + $0x28] sm:$0xf]
  %v37 = vld [vmem:[%s1 + $0x2c] sm:$0xf]
  %v38 = vld [vmem:[%s1 + $0x30] sm:$0xf]
  %v39 = vld [vmem:[%s1 + $0x34] sm:$0xf]
  %v40 = vld [vmem:[%s1 + $0x38] sm:$0xf]
  %v41 = vld [vmem:[%s1 + $0x3c] sm:$0xf]
  %v42 = vld [vmem:[%s1 + $0x40] sm:$0xf]
  %v43 = vld [vmem:[%s1 + $0x44] sm:$0xf]
  %v44 = vld [vmem:[%s1 + $0x48] sm:$0xf]
  %v45 = vld [vmem:[%s1 + $0x4c] sm:$0xf]
  %v46 = vld [vmem:[%s1 + $0x50] sm:$0xf]
  %v47 = vld [vmem:[%s1 + $0x54] sm:$0xf]
  %v48 = vld [vmem:[%s1 + $0x58] sm:$0xf]
  %v49 = vld [vmem:[%s1 + $0x5c] sm:$0xf]
  %v50 = vld [vmem:[%s1 + $0x60] sm:$0xf]
  %v51 = vld [vmem:[%s1 + $0x64] sm:$0xf]
  %v52 = vld [vmem:[%s1 + $0x68] sm:$0xf]
  %v53 = vld [vmem:[%s1 + $0x6c] sm:$0xf]
  %v54 = vld [vmem:[%s1 + $0x70] sm:$0xf]
  %v55 = vld [vmem:[%s1 + $0x74] sm:$0xf]
  %v56 = vld [vmem:[%s1 + $0x78] sm:$0xf]
  %v57 = vld [vmem:[%s1 + $0x7c] sm:$0xf]
  %v58 = vld [vmem:[%s1 + $0x80] sm:$0xf]
  %v59 = vld [vmem:[%s1 + $0x84] sm:$0xf]
  %v60 = vld [vmem:[%s1 + $0x88] sm:$0xf]
  %v61 = vld [vmem:[%s1 + $0x8c] sm:$0xf]
  %v62 = vld [vmem:[%s2] sm:$0x1]
  %v64 = vperm.slane %v62, 0
  %v74 = vunpack.c.l.b16 %v18
  %v75 = vunpack.c.h.b16 %v18
  %v76 = vunpack.c.l.b16 %v19
  %v77 = vunpack.c.l.b16 %v20
  %v78 = vunpack.c.h.b16 %v20
  %v79 = vunpack.c.l.b16 %v21
  %v80 = vunpack.c.l.b16 %v22
  %v81 = vunpack.c.h.b16 %v22
  %v82 = vunpack.c.l.b16 %v23
  %v83 = vunpack.c.l.b16 %v24
  %v84 = vunpack.c.h.b16 %v24
  %v85 = vunpack.c.l.b16 %v25
  %v86 = vpack.c.b16 %v77, %v74
  %v87 = vpack.c.b16 %v78, %v75
  %v88 = vpack.c.b16 %v79, %v76
  %v89 = vpack.c.b16 %v83, %v80
  %v90 = vpack.c.b16 %v84, %v81
  %v91 = vpack.c.b16 %v85, %v82
  %v132 = vunpack.c.l.b16 %v26
  %v133 = vunpack.c.l.b16 %v27
  %v134 = vunpack.c.l.b16 %v28
  %v135 = vunpack.c.l.b16 %v29
  %v136 = vunpack.c.l.b16 %v30
  %v137 = vunpack.c.l.b16 %v31
  %v138 = vunpack.c.l.b16 %v32
  %v139 = vunpack.c.l.b16 %v33
  %v140 = vunpack.c.l.b16 %v34
  %v141 = vunpack.c.l.b16 %v35
  %v142 = vunpack.c.l.b16 %v36
  %v143 = vunpack.c.l.b16 %v37
  %v144 = vunpack.c.l.b16 %v38
  %v145 = vunpack.c.l.b16 %v39
  %v146 = vunpack.c.l.b16 %v40
  %v147 = vunpack.c.l.b16 %v41
  %v148 = vunpack.c.l.b16 %v42
  %v149 = vunpack.c.l.b16 %v43
  %v150 = vunpack.c.l.b16 %v44
  %v151 = vunpack.c.l.b16 %v45
  %v152 = vunpack.c.l.b16 %v46
  %v153 = vunpack.c.l.b16 %v47
  %v154 = vunpack.c.l.b16 %v48
  %v155 = vunpack.c.l.b16 %v49
  %v156 = vunpack.c.l.b16 %v50
  %v157 = vunpack.c.l.b16 %v51
  %v158 = vunpack.c.l.b16 %v52
  %v159 = vunpack.c.l.b16 %v53
  %v160 = vunpack.c.l.b16 %v54
  %v161 = vunpack.c.l.b16 %v55
  %v162 = vunpack.c.l.b16 %v56
  %v163 = vunpack.c.l.b16 %v57
  %v164 = vunpack.c.l.b16 %v58
  %v165 = vunpack.c.l.b16 %v59
  %v166 = vunpack.c.l.b16 %v60
  %v167 = vunpack.c.l.b16 %v61
  %v168 = vpack.c.b16 %v133, %v132
  %v169 = vpack.c.b16 %v135, %v134
  %v170 = vpack.c.b16 %v137, %v136
  %v171 = vpack.c.b16 %v139, %v138
  %v172 = vpack.c.b16 %v141, %v140
  %v173 = vpack.c.b16 %v143, %v142
  %v174 = vpack.c.b16 %v145, %v144
  %v175 = vpack.c.b16 %v147, %v146
  %v176 = vpack.c.b16 %v149, %v148
  %v177 = vpack.c.b16 %v151, %v150
  %v178 = vpack.c.b16 %v153, %v152
  %v179 = vpack.c.b16 %v155, %v154
  %v180 = vpack.c.b16 %v157, %v156
  %v181 = vpack.c.b16 %v159, %v158
  %v182 = vpack.c.b16 %v161, %v160
  %v183 = vpack.c.b16 %v163, %v162
  %v184 = vpack.c.b16 %v165, %v164
  %v185 = vpack.c.b16 %v167, %v166
  %vm204 = vcmask 261120
  %v206 = vsel %vm204, %v88, 0
  %v209 = vsel %vm204, %v91, 0
  %211 = vmatpush.bf16.msra.mxu0 %v175
  %212 = vmatpush.bf16.msra.mxu0 %v174
  %213 = vmatpush.bf16.msra.mxu0 %v173
  %214 = vmatpush.bf16.msra.mxu0 %v172
  %215 = vmatpush.bf16.msra.mxu0 %v171
  %216 = vmatpush.bf16.msra.mxu0 %v170
  %217 = vmatpush.bf16.msra.mxu0 %v169
  %218 = vmatpush.bf16.msra.mxu0 %v168
  %219 = vmatmul.bf16.gmra.mxu0 %v86
  %v220 = vpop.f32.mrf.mxu0
  %v221 = vadd.f32 %v64, %v220
  %v222 = vpop.f32.mrf.mxu0
  %v223 = vadd.f32 %v64, %v222
  %224 = vmatmul.bf16.gmra.mxu0 %v89
  %v225 = vpop.f32.mrf.mxu0
  %v226 = vadd.f32 %v64, %v225
  %v227 = vpop.f32.mrf.mxu0
  %v228 = vadd.f32 %v64, %v227
  %229 = vdwg.mxu0
  %230 = vmatpush.bf16.msra.mxu0 %v183
  %231 = vmatpush.bf16.msra.mxu0 %v182
  %232 = vmatpush.bf16.msra.mxu0 %v181
  %233 = vmatpush.bf16.msra.mxu0 %v180
  %234 = vmatpush.bf16.msra.mxu0 %v179
  %235 = vmatpush.bf16.msra.mxu0 %v178
  %236 = vmatpush.bf16.msra.mxu0 %v177
  %237 = vmatpush.bf16.msra.mxu0 %v176
  %238 = vmatmul.bf16.gmra.mxu0 %v87
  %v239 = vpop.f32.mrf.mxu0
  %v240 = vadd.f32 %v221, %v239
  %v241 = vpop.f32.mrf.mxu0
  %v242 = vadd.f32 %v223, %v241
  %243 = vmatmul.bf16.gmra.mxu0 %v90
  %v244 = vpop.f32.mrf.mxu0
  %v245 = vadd.f32 %v226, %v244
  %v246 = vpop.f32.mrf.mxu0
  %v247 = vadd.f32 %v228, %v246
  %248 = vdwg.mxu0
  %249 = vmatpush.bf16.msra.mxu0 0
  %250 = vmatpush.bf16.msra.mxu0 0
  %251 = vmatpush.bf16.msra.mxu0 0
  %252 = vmatpush.bf16.msra.mxu0 0
  %253 = vmatpush.bf16.msra.mxu0 0
  %254 = vmatpush.bf16.msra.mxu0 0
  %255 = vmatpush.bf16.msra.mxu0 %v185
  %256 = vmatpush.bf16.msra.mxu0 %v184
  %257 = vmatmul.bf16.gmra.mxu0 %v206
  %v258 = vpop.f32.mrf.mxu0
  %v259 = vadd.f32 %v240, %v258
  %v260 = vpop.f32.mrf.mxu0
  %v261 = vadd.f32 %v242, %v260
  %262 = vmatmul.bf16.gmra.mxu0 %v209
  %v263 = vpop.f32.mrf.mxu0
  %v264 = vadd.f32 %v245, %v263
  %v265 = vpop.f32.mrf.mxu0
  %v266 = vadd.f32 %v247, %v265
  %267 = vdwg.mxu0
  %v268 = vld [vmem:[%s3] sm:$0xf]
  %v269 = vld [vmem:[%s3 + $0x4] sm:$0xf]
  %v270 = vld [vmem:[%s3 + $0x8] sm:$0xf]
  %v271 = vld [vmem:[%s3 + $0xc] sm:$0xf]
  %v272 = vunpack.c.l.bf16 %v268
  %v273 = vunpack.c.l.bf16 %v269
  %v274 = vunpack.c.l.bf16 %v270
  %v275 = vunpack.c.l.bf16 %v271
  %v276 = vadd.f32 %v259, %v272
  %v277 = vadd.f32 %v261, %v273
  %v278 = vadd.f32 %v264, %v274
  %v279 = vadd.f32 %v266, %v275
  %v280 = vmax.f32 %v276, 0.0
  %v281 = vmax.f32 %v277, 0.0
  %v282 = vmax.f32 %v278, 0.0
  %v283 = vmax.f32 %v279, 0.0
  %v284 = vpack.c.bf16 %v280, %v280
  %v285 = vpack.c.bf16 %v281, %v281
  %v286 = vpack.c.bf16 %v282, %v282
  %v287 = vpack.c.bf16 %v283, %v283
  %vm288 = vcmask 257024
  %289 = vst.msk [vmem:[%s4] sm:$0xf] %vm288, %v284
  %290 = vst.msk [vmem:[%s4 + $0x4] sm:$0xf] %vm288, %v285
  %291 = vst.msk [vmem:[%s4 + $0x8] sm:$0xf] %vm288, %v286
  %292 = vst.msk [vmem:[%s4 + $0xc] sm:$0xf] %vm288, %v287
  // Predicated region
  $region18: #{depth_star_forward.20} parent=0 // pred_check
    _
  $region19: #{depth_star_forward.20} parent=0 // pred_check_branch
    %294 = sbr.rel (0) target = $region21
  $region20: #{depth_star_forward.20} parent=0 // pred_region
    _
  $region21: #{depth_star_forward.20} parent=0 // pred_fallthru
    _
  // Predicated region
  $region22: #{depth_star_forward.20} parent=0 // pred_check
    _
  $region23: #{depth_star_forward.20} parent=0 // pred_check_branch
    %296 = sbr.rel (0) target = $region25
  $region24: #{depth_star_forward.20} parent=0 // pred_region
    _
  $region25: #{depth_star_forward.20} parent=0 // pred_fallthru
    _

// kernel: depth_star_forward.23
$region0: #{depth_star_forward.23}
  #allocation0 [shape = 'u32[]', space=smem, size = 0x4, offset = 0x4, fixed_abs, tag = 'smem constant byte address 0x4 - core index']
  #allocation1 [shape = 'u32[72,128]{1,0:T(1,128)}', space=vmem, size = 0x9000, scoped, tag = 'internal scratch']
  %s0 = inlined_call_operand.vmem [shape: bf16[32,288], index: 0, kind: input, shape index: {}]
  %s1 = inlined_call_operand.vmem [shape: bf16[288,512], index: 1, kind: input, shape index: {}]
  %s2 = inlined_call_operand.vmem [shape: f32[1,512], index: 2, kind: input, shape index: {}]
  %s3 = inlined_call_operand.vmem [shape: bf16[32,512], index: 3, kind: output, shape index: {}]
  %s4 = sld [smem:[#allocation0]]
  $region22: #{depth_star_forward.23} parent=0
    _
  %s6 = ssub.s32 1, %s4
  %s7 = scalar_select 0, %s6, %s4
  // Predicated region
  $region2: #{depth_star_forward.23} parent=0 // pred_check
    _
  $region3: #{depth_star_forward.23} parent=0 // pred_check_branch
    %9 = sbr.rel (0) target = $region5
  $region4: #{depth_star_forward.23} parent=0 // pred_region
    _
  $region5: #{depth_star_forward.23} parent=0 // pred_fallthru
    _
  // Predicated region
  $region6: #{depth_star_forward.23} parent=0 // pred_check
    _
  $region7: #{depth_star_forward.23} parent=0 // pred_check_branch
    %11 = sbr.rel (0) target = $region9
  $region8: #{depth_star_forward.23} parent=0 // pred_region
    _
  $region9: #{depth_star_forward.23} parent=0 // pred_fallthru
    _
  // Predicated region
  $region10: #{depth_star_forward.23} parent=0 // pred_check
    _
  $region11: #{depth_star_forward.23} parent=0 // pred_check_branch
    %13 = sbr.rel (0) target = $region13
  $region12: #{depth_star_forward.23} parent=0 // pred_region
    _
  $region13: #{depth_star_forward.23} parent=0 // pred_fallthru
    _
  %v15 = vld [vmem:[%s0] sm:$0xff]
  %v16 = vld [vmem:[%s0 + $0x8] sm:$0xf]
  %v17 = vld [vmem:[%s0 + $0xc] sm:$0xff]
  %v18 = vld [vmem:[%s0 + $0x14] sm:$0xf]
  %v19 = vld [vmem:[%s0 + $0x18] sm:$0xff]
  %v20 = vld [vmem:[%s0 + $0x20] sm:$0xf]
  %v21 = vld [vmem:[%s0 + $0x24] sm:$0xff]
  %v22 = vld [vmem:[%s0 + $0x2c] sm:$0xf]
  %v23 = vld [vmem:[%s1] sm:$0xff]
  %v24 = vld [vmem:[%s1 + $0x8] sm:$0xff]
  %v25 = vld [vmem:[%s1 + $0x10] sm:$0xff]
  %v26 = vld [vmem:[%s1 + $0x18] sm:$0xff]
  %v27 = vld [vmem:[%s1 + $0x20] sm:$0xff]
  %v28 = vld [vmem:[%s1 + $0x28] sm:$0xff]
  %v29 = vld [vmem:[%s1 + $0x30] sm:$0xff]
  %v30 = vld [vmem:[%s1 + $0x38] sm:$0xff]
  %v31 = vld [vmem:[%s1 + $0x40] sm:$0xff]
  %v32 = vld [vmem:[%s1 + $0x48] sm:$0xff]
  %v33 = vld [vmem:[%s1 + $0x50] sm:$0xff]
  %v34 = vld [vmem:[%s1 + $0x58] sm:$0xff]
  %v35 = vld [vmem:[%s1 + $0x60] sm:$0xff]
  %v36 = vld [vmem:[%s1 + $0x68] sm:$0xff]
  %v37 = vld [vmem:[%s1 + $0x70] sm:$0xff]
  %v38 = vld [vmem:[%s1 + $0x78] sm:$0xff]
  %v39 = vld [vmem:[%s1 + $0x80] sm:$0xff]
  %v40 = vld [vmem:[%s1 + $0x88] sm:$0xff]
  %v41 = vld [vmem:[%s1 + $0x90] sm:$0xff]
  %v42 = vld [vmem:[%s1 + $0x98] sm:$0xff]
  %v43 = vld [vmem:[%s1 + $0xa0] sm:$0xff]
  %v44 = vld [vmem:[%s1 + $0xa8] sm:$0xff]
  %v45 = vld [vmem:[%s1 + $0xb0] sm:$0xff]
  %v46 = vld [vmem:[%s1 + $0xb8] sm:$0xff]
  %v47 = vld [vmem:[%s1 + $0xc0] sm:$0xff]
  %v48 = vld [vmem:[%s1 + $0xc8] sm:$0xff]
  %v49 = vld [vmem:[%s1 + $0xd0] sm:$0xff]
  %v50 = vld [vmem:[%s1 + $0xd8] sm:$0xff]
  %v51 = vld [vmem:[%s1 + $0xe0] sm:$0xff]
  %v52 = vld [vmem:[%s1 + $0xe8] sm:$0xff]
  %v53 = vld [vmem:[%s1 + $0xf0] sm:$0xff]
  %v54 = vld [vmem:[%s1 + $0xf8] sm:$0xff]
  %v55 = vld [vmem:[%s1 + $0x100] sm:$0xff]
  %v56 = vld [vmem:[%s1 + $0x108] sm:$0xff]
  %v57 = vld [vmem:[%s1 + $0x110] sm:$0xff]
  %v58 = vld [vmem:[%s1 + $0x118] sm:$0xff]
  %v59 = vld [vmem:[%s1 + $0x120] sm:$0xff]
  %v60 = vld [vmem:[%s1 + $0x128] sm:$0xff]
  %v61 = vld [vmem:[%s1 + $0x130] sm:$0xff]
  %v62 = vld [vmem:[%s1 + $0x138] sm:$0xff]
  %v63 = vld [vmem:[%s1 + $0x140] sm:$0xff]
  %v64 = vld [vmem:[%s1 + $0x148] sm:$0xff]
  %v65 = vld [vmem:[%s1 + $0x150] sm:$0xff]
  %v66 = vld [vmem:[%s1 + $0x158] sm:$0xff]
  %v67 = vld [vmem:[%s1 + $0x160] sm:$0xff]
  %v68 = vld [vmem:[%s1 + $0x168] sm:$0xff]
  %v69 = vld [vmem:[%s1 + $0x170] sm:$0xff]
  %v70 = vld [vmem:[%s1 + $0x178] sm:$0xff]
  %v71 = vld [vmem:[%s1 + $0x180] sm:$0xff]
  %v72 = vld [vmem:[%s1 + $0x188] sm:$0xff]
  %v73 = vld [vmem:[%s1 + $0x190] sm:$0xff]
  %v74 = vld [vmem:[%s1 + $0x198] sm:$0xff]
  %v75 = vld [vmem:[%s1 + $0x1a0] sm:$0xff]
  %v76 = vld [vmem:[%s1 + $0x1a8] sm:$0xff]
  %v77 = vld [vmem:[%s1 + $0x1b0] sm:$0xff]
  %v78 = vld [vmem:[%s1 + $0x1b8] sm:$0xff]
  %v79 = vld [vmem:[%s1 + $0x1c0] sm:$0xff]
  %v80 = vld [vmem:[%s1 + $0x1c8] sm:$0xff]
  %v81 = vld [vmem:[%s1 + $0x1d0] sm:$0xff]
  %v82 = vld [vmem:[%s1 + $0x1d8] sm:$0xff]
  %v83 = vld [vmem:[%s1 + $0x1e0] sm:$0xff]
  %v84 = vld [vmem:[%s1 + $0x1e8] sm:$0xff]
  %v85 = vld [vmem:[%s1 + $0x1f0] sm:$0xff]
  %v86 = vld [vmem:[%s1 + $0x1f8] sm:$0xff]
  %v87 = vld [vmem:[%s1 + $0x200] sm:$0xff]
  %v88 = vld [vmem:[%s1 + $0x208] sm:$0xff]
  %v89 = vld [vmem:[%s1 + $0x210] sm:$0xff]
  %v90 = vld [vmem:[%s1 + $0x218] sm:$0xff]
  %v91 = vld [vmem:[%s1 + $0x220] sm:$0xff]
  %v92 = vld [vmem:[%s1 + $0x228] sm:$0xff]
  %v93 = vld [vmem:[%s1 + $0x230] sm:$0xff]
  %v94 = vld [vmem:[%s1 + $0x238] sm:$0xff]
  %v95 = vld [vmem:[%s2] sm:$0xf]
  %v97 = vperm.slane %v95, 0
  %v98 = vperm.slane %v95, 1
  %v99 = vperm.slane %v95, 2
  %v100 = vperm.slane %v95, 3
  %v113 = vunpack.c.l.b16 %v15
  %v114 = vunpack.c.h.b16 %v15
  %v115 = vunpack.c.l.b16 %v16
  %v116 = vunpack.c.l.b16 %v17
  %v117 = vunpack.c.h.b16 %v17
  %v118 = vunpack.c.l.b16 %v18
  %v119 = vunpack.c.l.b16 %v19
  %v120 = vunpack.c.h.b16 %v19
  %v121 = vunpack.c.l.b16 %v20
  %v122 = vunpack.c.l.b16 %v21
  %v123 = vunpack.c.h.b16 %v21
  %v124 = vunpack.c.l.b16 %v22
  %v125 = vpack.c.b16 %v116, %v113
  %v126 = vpack.c.b16 %v117, %v114
  %v127 = vpack.c.b16 %v118, %v115
  %v128 = vpack.c.b16 %v122, %v119
  %v129 = vpack.c.b16 %v123, %v120
  %v130 = vpack.c.b16 %v124, %v121
  %v207 = vunpack.c.l.b16 %v23
  %v208 = vunpack.c.h.b16 %v23
  %v209 = vunpack.c.l.b16 %v24
  %v210 = vunpack.c.h.b16 %v24
  %v211 = vunpack.c.l.b16 %v25
  %v212 = vunpack.c.h.b16 %v25
  %v213 = vunpack.c.l.b16 %v26
  %v214 = vunpack.c.h.b16 %v26
  %v215 = vunpack.c.l.b16 %v27
  %v216 = vunpack.c.h.b16 %v27
  %v217 = vunpack.c.l.b16 %v28
  %v218 = vunpack.c.h.b16 %v28
  %v219 = vunpack.c.l.b16 %v29
  %v220 = vunpack.c.h.b16 %v29
  %v221 = vunpack.c.l.b16 %v30
  %v222 = vunpack.c.h.b16 %v30
  %v223 = vunpack.c.l.b16 %v31
  %v224 = vunpack.c.h.b16 %v31
  %v225 = vunpack.c.l.b16 %v32
  %v226 = vunpack.c.h.b16 %v32
  %v227 = vunpack.c.l.b16 %v33
  %v228 = vunpack.c.h.b16 %v33
  %v229 = vunpack.c.l.b16 %v34
  %v230 = vunpack.c.h.b16 %v34
  %v231 = vunpack.c.l.b16 %v35
  %v232 = vunpack.c.h.b16 %v35
  %v233 = vunpack.c.l.b16 %v36
  %v234 = vunpack.c.h.b16 %v36
  %v235 = vunpack.c.l.b16 %v37
  %v236 = vunpack.c.h.b16 %v37
  %v237 = vunpack.c.l.b16 %v38
  %v238 = vunpack.c.h.b16 %v38
  %v239 = vunpack.c.l.b16 %v39
  %v240 = vunpack.c.h.b16 %v39
  %v241 = vunpack.c.l.b16 %v40
  %v242 = vunpack.c.h.b16 %v40
  %v243 = vunpack.c.l.b16 %v41
  %v244 = vunpack.c.h.b16 %v41
  %v245 = vunpack.c.l.b16 %v42
  %v246 = vunpack.c.h.b16 %v42
  %v247 = vunpack.c.l.b16 %v43
  %v248 = vunpack.c.h.b16 %v43
  %v249 = vunpack.c.l.b16 %v44
  %v250 = vunpack.c.h.b16 %v44
  %v251 = vunpack.c.l.b16 %v45
  %v252 = vunpack.c.h.b16 %v45
  %v253 = vunpack.c.l.b16 %v46
  %v254 = vunpack.c.h.b16 %v46
  %v255 = vunpack.c.l.b16 %v47
  %v256 = vunpack.c.h.b16 %v47
  %v257 = vunpack.c.l.b16 %v48
  %v258 = vunpack.c.h.b16 %v48
  %v259 = vunpack.c.l.b16 %v49
  %v260 = vunpack.c.h.b16 %v49
  %v261 = vunpack.c.l.b16 %v50
  %v262 = vunpack.c.h.b16 %v50
  %v263 = vunpack.c.l.b16 %v51
  %v264 = vunpack.c.h.b16 %v51
  %v265 = vunpack.c.l.b16 %v52
  %v266 = vunpack.c.h.b16 %v52
  %v267 = vunpack.c.l.b16 %v53
  %v268 = vunpack.c.h.b16 %v53
  %v269 = vunpack.c.l.b16 %v54
  %v270 = vunpack.c.h.b16 %v54
  %v271 = vunpack.c.l.b16 %v55
  %v272 = vunpack.c.h.b16 %v55
  %v273 = vunpack.c.l.b16 %v56
  %v274 = vunpack.c.h.b16 %v56
  %v275 = vunpack.c.l.b16 %v57
  %v276 = vunpack.c.h.b16 %v57
  %v277 = vunpack.c.l.b16 %v58
  %v278 = vunpack.c.h.b16 %v58
  %v279 = vunpack.c.l.b16 %v59
  %v280 = vunpack.c.h.b16 %v59
  %v281 = vunpack.c.l.b16 %v60
  %v282 = vunpack.c.h.b16 %v60
  %v283 = vunpack.c.l.b16 %v61
  %v284 = vunpack.c.h.b16 %v61
  %v285 = vunpack.c.l.b16 %v62
  %v286 = vunpack.c.h.b16 %v62
  %v287 = vunpack.c.l.b16 %v63
  %v288 = vunpack.c.h.b16 %v63
  %v289 = vunpack.c.l.b16 %v64
  %v290 = vunpack.c.h.b16 %v64
  %v291 = vunpack.c.l.b16 %v65
  %v292 = vunpack.c.h.b16 %v65
  %v293 = vunpack.c.l.b16 %v66
  %v294 = vunpack.c.h.b16 %v66
  %v295 = vunpack.c.l.b16 %v67
  %v296 = vunpack.c.h.b16 %v67
  %v297 = vunpack.c.l.b16 %v68
  %v298 = vunpack.c.h.b16 %v68
  %v299 = vunpack.c.l.b16 %v69
  %v300 = vunpack.c.h.b16 %v69
  %v301 = vunpack.c.l.b16 %v70
  %v302 = vunpack.c.h.b16 %v70
  %v303 = vunpack.c.l.b16 %v71
  %v304 = vunpack.c.h.b16 %v71
  %v305 = vunpack.c.l.b16 %v72
  %v306 = vunpack.c.h.b16 %v72
  %v307 = vunpack.c.l.b16 %v73
  %v308 = vunpack.c.h.b16 %v73
  %v309 = vunpack.c.l.b16 %v74
  %v310 = vunpack.c.h.b16 %v74
  %v311 = vunpack.c.l.b16 %v75
  %v312 = vunpack.c.h.b16 %v75
  %v313 = vunpack.c.l.b16 %v76
  %v314 = vunpack.c.h.b16 %v76
  %v315 = vunpack.c.l.b16 %v77
  %v316 = vunpack.c.h.b16 %v77
  %v317 = vunpack.c.l.b16 %v78
  %v318 = vunpack.c.h.b16 %v78
  %v319 = vunpack.c.l.b16 %v79
  %v320 = vunpack.c.h.b16 %v79
  %v321 = vunpack.c.l.b16 %v80
  %v322 = vunpack.c.h.b16 %v80
  %v323 = vunpack.c.l.b16 %v81
  %v324 = vunpack.c.h.b16 %v81
  %v325 = vunpack.c.l.b16 %v82
  %v326 = vunpack.c.h.b16 %v82
  %v327 = vunpack.c.l.b16 %v83
  %v328 = vunpack.c.h.b16 %v83
  %v329 = vunpack.c.l.b16 %v84
  %v330 = vunpack.c.h.b16 %v84
  %v331 = vunpack.c.l.b16 %v85
  %v332 = vunpack.c.h.b16 %v85
  %v333 = vunpack.c.l.b16 %v86
  %v334 = vunpack.c.h.b16 %v86
  %v335 = vunpack.c.l.b16 %v87
  %v336 = vunpack.c.h.b16 %v87
  %v337 = vunpack.c.l.b16 %v88
  %v338 = vunpack.c.h.b16 %v88
  %v339 = vunpack.c.l.b16 %v89
  %v340 = vunpack.c.h.b16 %v89
  %v341 = vunpack.c.l.b16 %v90
  %v342 = vunpack.c.h.b16 %v90
  %v343 = vunpack.c.l.b16 %v91
  %v344 = vunpack.c.h.b16 %v91
  %v345 = vunpack.c.l.b16 %v92
  %v346 = vunpack.c.h.b16 %v92
  %v347 = vunpack.c.l.b16 %v93
  %v348 = vunpack.c.h.b16 %v93
  %v349 = vunpack.c.l.b16 %v94
  %v350 = vunpack.c.h.b16 %v94
  %v351 = vpack.c.b16 %v211, %v207
  %v352 = vpack.c.b16 %v212, %v208
  %v353 = vpack.c.b16 %v213, %v209
  %v354 = vpack.c.b16 %v214, %v210
  %v355 = vpack.c.b16 %v219, %v215
  %v356 = vpack.c.b16 %v220, %v216
  %v357 = vpack.c.b16 %v221, %v217
  %v358 = vpack.c.b16 %v222, %v218
  %v359 = vpack.c.b16 %v227, %v223
  %v360 = vpack.c.b16 %v228, %v224
  %v361 = vpack.c.b16 %v229, %v225
  %v362 = vpack.c.b16 %v230, %v226
  %v363 = vpack.c.b16 %v235, %v231
  %v364 = vpack.c.b16 %v236, %v232
  %v365 = vpack.c.b16 %v237, %v233
  %v366 = vpack.c.b16 %v238, %v234
  %v367 = vpack.c.b16 %v243, %v239
  %v368 = vpack.c.b16 %v244, %v240
  %v369 = vpack.c.b16 %v245, %v241
  %v370 = vpack.c.b16 %v246, %v242
  %v371 = vpack.c.b16 %v251, %v247
  %v372 = vpack.c.b16 %v252, %v248
  %v373 = vpack.c.b16 %v253, %v249
  %v374 = vpack.c.b16 %v254, %v250
  %v375 = vpack.c.b16 %v259, %v255
  %v376 = vpack.c.b16 %v260, %v256
  %v377 = vpack.c.b16 %v261, %v257
  %v378 = vpack.c.b16 %v262, %v258
  %v379 = vpack.c.b16 %v267, %v263
  %v380 = vpack.c.b16 %v268, %v264
  %v381 = vpack.c.b16 %v269, %v265
  %v382 = vpack.c.b16 %v270, %v266
  %v383 = vpack.c.b16 %v275, %v271
  %v384 = vpack.c.b16 %v276, %v272
  %v385 = vpack.c.b16 %v277, %v273
  %v386 = vpack.c.b16 %v278, %v274
  %v387 = vpack.c.b16 %v283, %v279
  %v388 = vpack.c.b16 %v284, %v280
  %v389 = vpack.c.b16 %v285, %v281
  %v390 = vpack.c.b16 %v286, %v282
  %v391 = vpack.c.b16 %v291, %v287
  %v392 = vpack.c.b16 %v292, %v288
  %v393 = vpack.c.b16 %v293, %v289
  %v394 = vpack.c.b16 %v294, %v290
  %v395 = vpack.c.b16 %v299, %v295
  %v396 = vpack.c.b16 %v300, %v296
  %v397 = vpack.c.b16 %v301, %v297
  %v398 = vpack.c.b16 %v302, %v298
  %v399 = vpack.c.b16 %v307, %v303
  %v400 = vpack.c.b16 %v308, %v304
  %v401 = vpack.c.b16 %v309, %v305
  %v402 = vpack.c.b16 %v310, %v306
  %v403 = vpack.c.b16 %v315, %v311
  %v404 = vpack.c.b16 %v316, %v312
  %v405 = vpack.c.b16 %v317, %v313
  %v406 = vpack.c.b16 %v318, %v314
  %v407 = vpack.c.b16 %v323, %v319
  %v408 = vpack.c.b16 %v324, %v320
  %v409 = vpack.c.b16 %v325, %v321
  %v410 = vpack.c.b16 %v326, %v322
  %v411 = vpack.c.b16 %v331, %v327
  %v412 = vpack.c.b16 %v332, %v328
  %v413 = vpack.c.b16 %v333, %v329
  %v414 = vpack.c.b16 %v334, %v330
  %v415 = vpack.c.b16 %v339, %v335
  %v416 = vpack.c.b16 %v340, %v336
  %v417 = vpack.c.b16 %v341, %v337
  %v418 = vpack.c.b16 %v342, %v338
  %v419 = vpack.c.b16 %v347, %v343
  %v420 = vpack.c.b16 %v348, %v344
  %v421 = vpack.c.b16 %v349, %v345
  %v422 = vpack.c.b16 %v350, %v346
  %vm495 = vcmask 261120
  %v497 = vsel %vm495, %v127, 0
  %v500 = vsel %vm495, %v130, 0
  %502 = vmatpush.bf16.msra.mxu0 %v379
  %503 = vmatpush.bf16.msra.mxu0 %v375
  %504 = vmatpush.bf16.msra.mxu0 %v371
  %505 = vmatpush.bf16.msra.mxu0 %v367
  %506 = vmatpush.bf16.msra.mxu0 %v363
  %507 = vmatpush.bf16.msra.mxu0 %v359
  %508 = vmatpush.bf16.msra.mxu0 %v355
  %509 = vmatpush.bf16.msra.mxu0 %v351
  %510 = vmatmul.bf16.gmra.mxu0 %v125
  %v511 = vpop.f32.mrf.mxu0
  %v512 = vadd.f32 %v97, %v511
  %v513 = vpop.f32.mrf.mxu0
  %v514 = vadd.f32 %v97, %v513
  %515 = vmatmul.bf16.gmra.mxu0 %v128
  %v516 = vpop.f32.mrf.mxu0
  %v517 = vadd.f32 %v97, %v516
  %v518 = vpop.f32.mrf.mxu0
  %v519 = vadd.f32 %v97, %v518
  %520 = vdwg.mxu0
  %521 = vmatpush.bf16.msra.mxu0 %v411
  %522 = vmatpush.bf16.msra.mxu0 %v407
  %523 = vmatpush.bf16.msra.mxu0 %v403
  %524 = vmatpush.bf16.msra.mxu0 %v399
  %525 = vmatpush.bf16.msra.mxu0 %v395
  %526 = vmatpush.bf16.msra.mxu0 %v391
  %527 = vmatpush.bf16.msra.mxu0 %v387
  %528 = vmatpush.bf16.msra.mxu0 %v383
  %529 = vmatmul.bf16.gmra.mxu0 %v126
  %v530 = vpop.f32.mrf.mxu0
  %v531 = vadd.f32 %v512, %v530
  %v532 = vpop.f32.mrf.mxu0
  %v533 = vadd.f32 %v514, %v532
  %534 = vmatmul.bf16.gmra.mxu0 %v129
  %v535 = vpop.f32.mrf.mxu0
  %v536 = vadd.f32 %v517, %v535
  %v537 = vpop.f32.mrf.mxu0
  %v538 = vadd.f32 %v519, %v537
  %539 = vdwg.mxu0
  %540 = vmatpush.bf16.msra.mxu0 0
  %541 = vmatpush.bf16.msra.mxu0 0
  %542 = vmatpush.bf16.msra.mxu0 0
  %543 = vmatpush.bf16.msra.mxu0 0
  %544 = vmatpush.bf16.msra.mxu0 0
  %545 = vmatpush.bf16.msra.mxu0 0
  %546 = vmatpush.bf16.msra.mxu0 %v419
  %547 = vmatpush.bf16.msra.mxu0 %v415
  %548 = vmatmul.bf16.gmra.mxu0 %v497
  %v549 = vpop.f32.mrf.mxu0
  %v550 = vadd.f32 %v531, %v549
  %v551 = vpop.f32.mrf.mxu0
  %v552 = vadd.f32 %v533, %v551
  %553 = vmatmul.bf16.gmra.mxu0 %v500
  %v554 = vpop.f32.mrf.mxu0
  %v555 = vadd.f32 %v536, %v554
  %v556 = vpop.f32.mrf.mxu0
  %v557 = vadd.f32 %v538, %v556
  %558 = vdwg.mxu0
  %559 = vmatpush.bf16.msra.mxu0 %v380
  %560 = vmatpush.bf16.msra.mxu0 %v376
  %561 = vmatpush.bf16.msra.mxu0 %v372
  %562 = vmatpush.bf16.msra.mxu0 %v368
  %563 = vmatpush.bf16.msra.mxu0 %v364
  %564 = vmatpush.bf16.msra.mxu0 %v360
  %565 = vmatpush.bf16.msra.mxu0 %v356
  %566 = vmatpush.bf16.msra.mxu0 %v352
  %567 = vmatmul.bf16.gmra.mxu0 %v125
  %v568 = vpop.f32.mrf.mxu0
  %v569 = vadd.f32 %v98, %v568
  %v570 = vpop.f32.mrf.mxu0
  %v571 = vadd.f32 %v98, %v570
  %572 = vmatmul.bf16.gmra.mxu0 %v128
  %v573 = vpop.f32.mrf.mxu0
  %v574 = vadd.f32 %v98, %v573
  %v575 = vpop.f32.mrf.mxu0
  %v576 = vadd.f32 %v98, %v575
  %577 = vdwg.mxu0
  %578 = vmatpush.bf16.msra.mxu0 %v412
  %579 = vmatpush.bf16.msra.mxu0 %v408
  %580 = vmatpush.bf16.msra.mxu0 %v404
  %581 = vmatpush.bf16.msra.mxu0 %v400
  %582 = vmatpush.bf16.msra.mxu0 %v396
  %583 = vmatpush.bf16.msra.mxu0 %v392
  %584 = vmatpush.bf16.msra.mxu0 %v388
  %585 = vmatpush.bf16.msra.mxu0 %v384
  %586 = vmatmul.bf16.gmra.mxu0 %v126
  %v587 = vpop.f32.mrf.mxu0
  %v588 = vadd.f32 %v569, %v587
  %v589 = vpop.f32.mrf.mxu0
  %v590 = vadd.f32 %v571, %v589
  %591 = vmatmul.bf16.gmra.mxu0 %v129
  %v592 = vpop.f32.mrf.mxu0
  %v593 = vadd.f32 %v574, %v592
  %v594 = vpop.f32.mrf.mxu0
  %v595 = vadd.f32 %v576, %v594
  %596 = vdwg.mxu0
  %597 = vmatpush.bf16.msra.mxu0 0
  %598 = vmatpush.bf16.msra.mxu0 0
  %599 = vmatpush.bf16.msra.mxu0 0
  %600 = vmatpush.bf16.msra.mxu0 0
  %601 = vmatpush.bf16.msra.mxu0 0
  %602 = vmatpush.bf16.msra.mxu0 0
  %603 = vmatpush.bf16.msra.mxu0 %v420
  %604 = vmatpush.bf16.msra.mxu0 %v416
  %605 = vmatmul.bf16.gmra.mxu0 %v497
  %v606 = vpop.f32.mrf.mxu0
  %v607 = vadd.f32 %v588, %v606
  %v608 = vpop.f32.mrf.mxu0
  %v609 = vadd.f32 %v590, %v608
  %610 = vmatmul.bf16.gmra.mxu0 %v500
  %v611 = vpop.f32.mrf.mxu0
  %v612 = vadd.f32 %v593, %v611
  %v613 = vpop.f32.mrf.mxu0
  %v614 = vadd.f32 %v595, %v613
  %615 = vdwg.mxu0
  %616 = vmatpush.bf16.msra.mxu0 %v381
  %617 = vmatpush.bf16.msra.mxu0 %v377
  %618 = vmatpush.bf16.msra.mxu0 %v373
  %619 = vmatpush.bf16.msra.mxu0 %v369
  %620 = vmatpush.bf16.msra.mxu0 %v365
  %621 = vmatpush.bf16.msra.mxu0 %v361
  %622 = vmatpush.bf16.msra.mxu0 %v357
  %623 = vmatpush.bf16.msra.mxu0 %v353
  %624 = vmatmul.bf16.gmra.mxu0 %v125
  %v625 = vpop.f32.mrf.mxu0
  %v626 = vadd.f32 %v99, %v625
  %v627 = vpop.f32.mrf.mxu0
  %v628 = vadd.f32 %v99, %v627
  %629 = vmatmul.bf16.gmra.mxu0 %v128
  %v630 = vpop.f32.mrf.mxu0
  %v631 = vadd.f32 %v99, %v630
  %v632 = vpop.f32.mrf.mxu0
  %v633 = vadd.f32 %v99, %v632
  %634 = vdwg.mxu0
  %635 = vmatpush.bf16.msra.mxu0 %v413
  %636 = vmatpush.bf16.msra.mxu0 %v409
  %637 = vmatpush.bf16.msra.mxu0 %v405
  %638 = vmatpush.bf16.msra.mxu0 %v401
  %639 = vmatpush.bf16.msra.mxu0 %v397
  %640 = vmatpush.bf16.msra.mxu0 %v393
  %641 = vmatpush.bf16.msra.mxu0 %v389
  %642 = vmatpush.bf16.msra.mxu0 %v385
  %643 = vmatmul.bf16.gmra.mxu0 %v126
  %v644 = vpop.f32.mrf.mxu0
  %v645 = vadd.f32 %v626, %v644
  %v646 = vpop.f32.mrf.mxu0
  %v647 = vadd.f32 %v628, %v646
  %648 = vmatmul.bf16.gmra.mxu0 %v129
  %v649 = vpop.f32.mrf.mxu0
  %v650 = vadd.f32 %v631, %v649
  %v651 = vpop.f32.mrf.mxu0
  %v652 = vadd.f32 %v633, %v651
  %653 = vdwg.mxu0
  %654 = vmatpush.bf16.msra.mxu0 0
  %655 = vmatpush.bf16.msra.mxu0 0
  %656 = vmatpush.bf16.msra.mxu0 0
  %657 = vmatpush.bf16.msra.mxu0 0
  %658 = vmatpush.bf16.msra.mxu0 0
  %659 = vmatpush.bf16.msra.mxu0 0
  %660 = vmatpush.bf16.msra.mxu0 %v421
  %661 = vmatpush.bf16.msra.mxu0 %v417
  %662 = vmatmul.bf16.gmra.mxu0 %v497
  %v663 = vpop.f32.mrf.mxu0
  %v664 = vadd.f32 %v645, %v663
  %v665 = vpop.f32.mrf.mxu0
  %v666 = vadd.f32 %v647, %v665
  %667 = vmatmul.bf16.gmra.mxu0 %v500
  %v668 = vpop.f32.mrf.mxu0
  %v669 = vadd.f32 %v650, %v668
  %v670 = vpop.f32.mrf.mxu0
  %v671 = vadd.f32 %v652, %v670
  %672 = vdwg.mxu0
  %673 = vmatpush.bf16.msra.mxu0 %v382
  %674 = vmatpush.bf16.msra.mxu0 %v378
  %675 = vmatpush.bf16.msra.mxu0 %v374
  %676 = vmatpush.bf16.msra.mxu0 %v370
  %677 = vmatpush.bf16.msra.mxu0 %v366
  %678 = vmatpush.bf16.msra.mxu0 %v362
  %679 = vmatpush.bf16.msra.mxu0 %v358
  %680 = vmatpush.bf16.msra.mxu0 %v354
  %681 = vmatmul.bf16.gmra.mxu0 %v125
  %v682 = vpop.f32.mrf.mxu0
  %v683 = vadd.f32 %v100, %v682
  %v684 = vpop.f32.mrf.mxu0
  %v685 = vadd.f32 %v100, %v684
  %686 = vmatmul.bf16.gmra.mxu0 %v128
  %v687 = vpop.f32.mrf.mxu0
  %v688 = vadd.f32 %v100, %v687
  %v689 = vpop.f32.mrf.mxu0
  %v690 = vadd.f32 %v100, %v689
  %691 = vdwg.mxu0
  %692 = vmatpush.bf16.msra.mxu0 %v414
  %693 = vmatpush.bf16.msra.mxu0 %v410
  %694 = vmatpush.bf16.msra.mxu0 %v406
  %695 = vmatpush.bf16.msra.mxu0 %v402
  %696 = vmatpush.bf16.msra.mxu0 %v398
  %697 = vmatpush.bf16.msra.mxu0 %v394
  %698 = vmatpush.bf16.msra.mxu0 %v390
  %699 = vmatpush.bf16.msra.mxu0 %v386
  %700 = vmatmul.bf16.gmra.mxu0 %v126
  %v701 = vpop.f32.mrf.mxu0
  %v702 = vadd.f32 %v683, %v701
  %v703 = vpop.f32.mrf.mxu0
  %v704 = vadd.f32 %v685, %v703
  %705 = vmatmul.bf16.gmra.mxu0 %v129
  %v706 = vpop.f32.mrf.mxu0
  %v707 = vadd.f32 %v688, %v706
  %v708 = vpop.f32.mrf.mxu0
  %v709 = vadd.f32 %v690, %v708
  %710 = vdwg.mxu0
  %711 = vmatpush.bf16.msra.mxu0 0
  %712 = vmatpush.bf16.msra.mxu0 0
  %713 = vmatpush.bf16.msra.mxu0 0
  %714 = vmatpush.bf16.msra.mxu0 0
  %715 = vmatpush.bf16.msra.mxu0 0
  %716 = vmatpush.bf16.msra.mxu0 0
  %717 = vmatpush.bf16.msra.mxu0 %v422
  %718 = vmatpush.bf16.msra.mxu0 %v418
  %719 = vmatmul.bf16.gmra.mxu0 %v497
  %v720 = vpop.f32.mrf.mxu0
  %v721 = vadd.f32 %v702, %v720
  %v722 = vpop.f32.mrf.mxu0
  %v723 = vadd.f32 %v704, %v722
  %724 = vmatmul.bf16.gmra.mxu0 %v500
  %v725 = vpop.f32.mrf.mxu0
  %v726 = vadd.f32 %v707, %v725
  %v727 = vpop.f32.mrf.mxu0
  %v728 = vadd.f32 %v709, %v727
  %729 = vdwg.mxu0
  %v730 = vmax.f32 %v550, 0.0
  %v731 = vmax.f32 %v607, 0.0
  %v732 = vmax.f32 %v664, 0.0
  %v733 = vmax.f32 %v721, 0.0
  %v734 = vmax.f32 %v552, 0.0
  %v735 = vmax.f32 %v609, 0.0
  %v736 = vmax.f32 %v666, 0.0
  %v737 = vmax.f32 %v723, 0.0
  %v738 = vmax.f32 %v555, 0.0
  %v739 = vmax.f32 %v612, 0.0
  %v740 = vmax.f32 %v669, 0.0
  %v741 = vmax.f32 %v726, 0.0
  %v742 = vmax.f32 %v557, 0.0
  %v743 = vmax.f32 %v614, 0.0
  %v744 = vmax.f32 %v671, 0.0
  %v745 = vmax.f32 %v728, 0.0
  %v746 = vpack.c.bf16 %v731, %v730
  %v747 = vpack.c.bf16 %v733, %v732
  %v748 = vpack.c.bf16 %v735, %v734
  %v749 = vpack.c.bf16 %v737, %v736
  %v750 = vpack.c.bf16 %v739, %v738
  %v751 = vpack.c.bf16 %v741, %v740
  %v752 = vpack.c.bf16 %v743, %v742
  %v753 = vpack.c.bf16 %v745, %v744
  %754 = vst [vmem:[%s3] sm:$0xff] %v746
  %755 = vst [vmem:[%s3 + $0x8] sm:$0xff] %v747
  %756 = vst [vmem:[%s3 + $0x10] sm:$0xff] %v748
  %757 = vst [vmem:[%s3 + $0x18] sm:$0xff] %v749
  %758 = vst [vmem:[%s3 + $0x20] sm:$0xff] %v750
  %759 = vst [vmem:[%s3 + $0x28] sm:$0xff] %v751
  %760 = vst [vmem:[%s3 + $0x30] sm:$0xff] %v752
  %761 = vst [vmem:[%s3 + $0x38] sm:$0xff] %v753
  // Predicated region
  $region14: #{depth_star_forward.23} parent=0 // pred_check
    _
  $region15: #{depth_star_forward.23} parent=0 // pred_check_branch
    %763 = sbr.rel (0) target = $region17
  $region16: #{depth_star_forward.23} parent=0 // pred_region
    _
  $region17: #{depth_star_forward.23} parent=0 // pred_fallthru
    _
  // Predicated region
  $region18: #{depth_star_forward.23} parent=0 // pred_check
    _
  $region19: #{depth_star_forward.23} parent=0 // pred_check_branch
    %765 = sbr.rel (0) target = $region21
  $region20: #{depth_star_forward.23} parent=0 // pred_region
    _
  $region21: #{depth_star_forward.23} parent=0 // pred_fallthru
    _

// kernel: depth_star_forward.21
$region0: #{depth_star_forward.21}
  #allocation0 [shape = 'u32[]', space=smem, size = 0x4, offset = 0x4, fixed_abs, tag = 'smem constant byte address 0x4 - core index']
  #allocation1 [shape = 'u32[72,128]{1,0:T(1,128)}', space=vmem, size = 0x9000, scoped, tag = 'internal scratch']
  %s0 = inlined_call_operand.vmem [shape: bf16[32,32], index: 0, kind: input, shape index: {}]
  %s1 = inlined_call_operand.vmem [shape: bf16[32,96], index: 1, kind: input, shape index: {}]
  %s2 = inlined_call_operand.vmem [shape: f32[1,96], index: 2, kind: input, shape index: {}]
  %s3 = inlined_call_operand.vmem [shape: bf16[32,32], index: 3, kind: input, shape index: {}]
  %s4 = inlined_call_operand.vmem [shape: f32[1,32], index: 4, kind: input, shape index: {}]
  %s5 = inlined_call_operand.vmem [shape: f32[1,32], index: 5, kind: input, shape index: {}]
  %s6 = inlined_call_operand.vmem [shape: f32[1,32], index: 6, kind: input, shape index: {}]
  %s7 = inlined_call_operand.vmem [shape: bf16[32,128], index: 7, kind: input, shape index: {}]
  %s8 = inlined_call_operand.vmem [shape: f32[1,128], index: 8, kind: input, shape index: {}]
  %s9 = inlined_call_operand.vmem [shape: bf16[128,32], index: 9, kind: input, shape index: {}]
  %s10 = inlined_call_operand.vmem [shape: f32[1,32], index: 10, kind: input, shape index: {}]
  %s11 = inlined_call_operand.vmem [shape: f32[1,32], index: 11, kind: input, shape index: {}]
  %s12 = inlined_call_operand.vmem [shape: f32[1,32], index: 12, kind: input, shape index: {}]
  %s13 = inlined_call_operand.vmem [shape: bf16[32,32], index: 13, kind: output, shape index: {}]
  %s14 = sld [smem:[#allocation0]]
  $region62: #{depth_star_forward.21} parent=0
    _
  %s16 = ssub.s32 1, %s14
  %s17 = scalar_select 0, %s16, %s14
  // Predicated region
  $region2: #{depth_star_forward.21} parent=0 // pred_check
    _
  $region3: #{depth_star_forward.21} parent=0 // pred_check_branch
    %19 = sbr.rel (0) target = $region5
  $region4: #{depth_star_forward.21} parent=0 // pred_region
    _
  $region5: #{depth_star_forward.21} parent=0 // pred_fallthru
    _
  // Predicated region
  $region6: #{depth_star_forward.21} parent=0 // pred_check
    _
  $region7: #{depth_star_forward.21} parent=0 // pred_check_branch
    %21 = sbr.rel (0) target = $region9
  $region8: #{depth_star_forward.21} parent=0 // pred_region
    _
  $region9: #{depth_star_forward.21} parent=0 // pred_fallthru
    _
  // Predicated region
  $region10: #{depth_star_forward.21} parent=0 // pred_check
    _
  $region11: #{depth_star_forward.21} parent=0 // pred_check_branch
    %23 = sbr.rel (0) target = $region13
  $region12: #{depth_star_forward.21} parent=0 // pred_region
    _
  $region13: #{depth_star_forward.21} parent=0 // pred_fallthru
    _
  // Predicated region
  $region14: #{depth_star_forward.21} parent=0 // pred_check
    _
  $region15: #{depth_star_forward.21} parent=0 // pred_check_branch
    %25 = sbr.rel (0) target = $region17
  $region16: #{depth_star_forward.21} parent=0 // pred_region
    _
  $region17: #{depth_star_forward.21} parent=0 // pred_fallthru
    _
  // Predicated region
  $region18: #{depth_star_forward.21} parent=0 // pred_check
    _
  $region19: #{depth_star_forward.21} parent=0 // pred_check_branch
    %27 = sbr.rel (0) target = $region21
  $region20: #{depth_star_forward.21} parent=0 // pred_region
    _
  $region21: #{depth_star_forward.21} parent=0 // pred_fallthru
    _
  // Predicated region
  $region22: #{depth_star_forward.21} parent=0 // pred_check
    _
  $region23: #{depth_star_forward.21} parent=0 // pred_check_branch
    %29 = sbr.rel (0) target = $region25
  $region24: #{depth_star_forward.21} parent=0 // pred_region
    _
  $region25: #{depth_star_forward.21} parent=0 // pred_fallthru
    _
  // Predicated region
  $region26: #{depth_star_forward.21} parent=0 // pred_check
    _
  $region27: #{depth_star_forward.21} parent=0 // pred_check_branch
    %31 = sbr.rel (0) target = $region29
  $region28: #{depth_star_forward.21} parent=0 // pred_region
    _
  $region29: #{depth_star_forward.21} parent=0 // pred_fallthru
    _
  // Predicated region
  $region30: #{depth_star_forward.21} parent=0 // pred_check
    _
  $region31: #{depth_star_forward.21} parent=0 // pred_check_branch
    %33 = sbr.rel (0) target = $region33
  $region32: #{depth_star_forward.21} parent=0 // pred_region
    _
  $region33: #{depth_star_forward.21} parent=0 // pred_fallthru
    _
  // Predicated region
  $region34: #{depth_star_forward.21} parent=0 // pred_check
    _
  $region35: #{depth_star_forward.21} parent=0 // pred_check_branch
    %35 = sbr.rel (0) target = $region37
  $region36: #{depth_star_forward.21} parent=0 // pred_region
    _
  $region37: #{depth_star_forward.21} parent=0 // pred_fallthru
    _
  // Predicated region
  $region38: #{depth_star_forward.21} parent=0 // pred_check
    _
  $region39: #{depth_star_forward.21} parent=0 // pred_check_branch
    %37 = sbr.rel (0) target = $region41
  $region40: #{depth_star_forward.21} parent=0 // pred_region
    _
  $region41: #{depth_star_forward.21} parent=0 // pred_fallthru
    _
  // Predicated region
  $region42: #{depth_star_forward.21} parent=0 // pred_check
    _
  $region43: #{depth_star_forward.21} parent=0 // pred_check_branch
    %39 = sbr.rel (0) target = $region45
  $region44: #{depth_star_forward.21} parent=0 // pred_region
    _
  $region45: #{depth_star_forward.21} parent=0 // pred_fallthru
    _
  // Predicated region
  $region46: #{depth_star_forward.21} parent=0 // pred_check
    _
  $region47: #{depth_star_forward.21} parent=0 // pred_check_branch
    %41 = sbr.rel (0) target = $region49
  $region48: #{depth_star_forward.21} parent=0 // pred_region
    _
  $region49: #{depth_star_forward.21} parent=0 // pred_fallthru
    _
  // Predicated region
  $region50: #{depth_star_forward.21} parent=0 // pred_check
    _
  $region51: #{depth_star_forward.21} parent=0 // pred_check_branch
    %43 = sbr.rel (0) target = $region53
  $region52: #{depth_star_forward.21} parent=0 // pred_region
    _
  $region53: #{depth_star_forward.21} parent=0 // pred_fallthru
    _
  %v44 = vld [vmem:[%s0] sm:$0xf]
  %v45 = vld [vmem:[%s0 + $0x4] sm:$0xf]
  %v46 = vld [vmem:[%s0 + $0x8] sm:$0xf]
  %v47 = vld [vmem:[%s0 + $0xc] sm:$0xf]
  %v48 = vunpack.c.l.bf16 %v44
  %v49 = vunpack.c.l.bf16 %v45
  %v50 = vunpack.c.l.bf16 %v46
  %v51 = vunpack.c.l.bf16 %v47
  %v52 = vld [vmem:[%s1] sm:$0xf]
  %v53 = vld [vmem:[%s1 + $0x4] sm:$0xf]
  %v54 = vld [vmem:[%s1 + $0x8] sm:$0xf]
  %v55 = vld [vmem:[%s1 + $0xc] sm:$0xf]
  %v56 = vunpack.c.l.bf16 %v52
  %v57 = vunpack.c.l.bf16 %v53
  %v58 = vunpack.c.l.bf16 %v54
  %v59 = vunpack.c.l.bf16 %v55
  %v60 = vld [vmem:[%s3] sm:$0xf]
  %v61 = vld [vmem:[%s3 + $0x4] sm:$0xf]
  %v62 = vld [vmem:[%s3 + $0x8] sm:$0xf]
  %v63 = vld [vmem:[%s3 + $0xc] sm:$0xf]
  %v64 = vunpack.c.l.bf16 %v60
  %v65 = vunpack.c.l.bf16 %v61
  %v66 = vunpack.c.l.bf16 %v62
  %v67 = vunpack.c.l.bf16 %v63
  %v68 = vld [vmem:[%s7] sm:$0xf]
  %v69 = vld [vmem:[%s7 + $0x4] sm:$0xf]
  %v70 = vld [vmem:[%s7 + $0x8] sm:$0xf]
  %v71 = vld [vmem:[%s7 + $0xc] sm:$0xf]
  %v72 = vunpack.c.l.bf16 %v68
  %v73 = vunpack.c.l.bf16 %v69
  %v74 = vunpack.c.l.bf16 %v70
  %v75 = vunpack.c.l.bf16 %v71
  %v76 = vld [vmem:[%s9] sm:$0xf]
  %v77 = vld [vmem:[%s9 + $0x4] sm:$0xf]
  %v78 = vld [vmem:[%s9 + $0x8] sm:$0xf]
  %v79 = vld [vmem:[%s9 + $0xc] sm:$0xf]
  %v80 = vld [vmem:[%s9 + $0x10] sm:$0xf]
  %v81 = vld [vmem:[%s9 + $0x14] sm:$0xf]
  %v82 = vld [vmem:[%s9 + $0x18] sm:$0xf]
  %v83 = vld [vmem:[%s9 + $0x1c] sm:$0xf]
  %v84 = vld [vmem:[%s9 + $0x20] sm:$0xf]
  %v85 = vld [vmem:[%s9 + $0x24] sm:$0xf]
  %v86 = vld [vmem:[%s9 + $0x28] sm:$0xf]
  %v87 = vld [vmem:[%s9 + $0x2c] sm:$0xf]
  %v88 = vld [vmem:[%s9 + $0x30] sm:$0xf]
  %v89 = vld [vmem:[%s9 + $0x34] sm:$0xf]
  %v90 = vld [vmem:[%s9 + $0x38] sm:$0xf]
  %v91 = vld [vmem:[%s9 + $0x3c] sm:$0xf]
  %v92 = vunpack.c.l.bf16 %v76
  %v93 = vunpack.c.l.bf16 %v77
  %v94 = vunpack.c.l.bf16 %v78
  %v95 = vunpack.c.l.bf16 %v79
  %v96 = vunpack.c.l.bf16 %v80
  %v97 = vunpack.c.l.bf16 %v81
  %v98 = vunpack.c.l.bf16 %v82
  %v99 = vunpack.c.l.bf16 %v83
  %v100 = vunpack.c.l.bf16 %v84
  %v101 = vunpack.c.l.bf16 %v85
  %v102 = vunpack.c.l.bf16 %v86
  %v103 = vunpack.c.l.bf16 %v87
  %v104 = vunpack.c.l.bf16 %v88
  %v105 = vunpack.c.l.bf16 %v89
  %v106 = vunpack.c.l.bf16 %v90
  %v107 = vunpack.c.l.bf16 %v91
  %v108 = vld [vmem:[%s2] sm:$0x1]
  %v110 = vperm.slane %v108, 0
  %vm112 = vcmask 261120
  %v114 = vsel %vm112, %v48, 0
  %v117 = vsel %vm112, %v49, 0
  %v120 = vsel %vm112, %v50, 0
  %v123 = vsel %vm112, %v51, 0
  %125 = vmatpush.msra.mxu0 0.0
  %126 = vmatpush.msra.mxu0 0.0
  %127 = vmatpush.msra.mxu0 0.0
  %128 = vmatpush.msra.mxu0 0.0
  %129 = vmatpush.msra.mxu0 0.0
  %130 = vmatpush.msra.mxu0 0.0
  %131 = vmatpush.msra.mxu0 0.0
  %132 = vmatpush.msra.mxu0 0.0
  %133 = vmatpush.msra.mxu0 0.0
  %134 = vmatpush.msra.mxu0 0.0
  %135 = vmatpush.msra.mxu0 0.0
  %136 = vmatpush.msra.mxu0 0.0
  %137 = vmatpush.msra.mxu0 %v59
  %138 = vmatpush.msra.mxu0 %v58
  %139 = vmatpush.msra.mxu0 %v57
  %140 = vmatpush.msra.mxu0 %v56
  %141 = vmatmul.f32.gmra.mxu0 %v114
  %v142 = vpop.f32.mrf.mxu0
  %v143 = vadd.f32 %v110, %v142
  %144 = vmatmul.f32.gmra.mxu0 %v117
  %v145 = vpop.f32.mrf.mxu0
  %v146 = vadd.f32 %v110, %v145
  %147 = vmatmul.f32.gmra.mxu0 %v120
  %v148 = vpop.f32.mrf.mxu0
  %v149 = vadd.f32 %v110, %v148
  %150 = vmatmul.f32.gmra.mxu0 %v123
  %v151 = vpop.f32.mrf.mxu0
  %v152 = vadd.f32 %v110, %v151
  %153 = vdwg.mxu0
  %156 = vrot.lane.b32.xlu0 %v143, 96
  %v157 = vpop.permute.xlu0 %156
  %158 = vrot.lane.b32.xlu0 %v146, 96
  %v159 = vpop.permute.xlu0 %158
  %vm160 = vcmask 64512
  %v161 = vsel %vm160, %v143, 0
  %v163 = vsel %vm160, %v146, 0
  %v165 = vsel %vm160, %v157, 0
  %v167 = vsel %vm160, %v159, 0
  %169 = vmatpush.xpose.msra.mxu0 0.0
  %170 = vmatpush.xpose.msra.mxu0 0.0
  %171 = vmatpush.xpose.msra.mxu0 0.0
  %172 = vmatpush.xpose.msra.mxu0 0.0
  %173 = vmatpush.xpose.msra.mxu0 0.0
  %174 = vmatpush.xpose.msra.mxu0 0.0
  %175 = vmatpush.xpose.msra.mxu0 0.0
  %176 = vmatpush.xpose.msra.mxu0 0.0
  %177 = vmatpush.xpose.msra.mxu0 0.0
  %178 = vmatpush.xpose.msra.mxu0 0.0
  %179 = vmatpush.xpose.msra.mxu0 0.0
  %180 = vmatpush.xpose.msra.mxu0 0.0
  %181 = vmatpush.xpose.msra.mxu0 0.0
  %182 = vmatpush.xpose.msra.mxu0 0.0
  %183 = vmatpush.xpose.msra.mxu0 %v167
  %184 = vmatpush.xpose.msra.mxu0 %v165
  %185 = vmatmul.f32.gmra.mxu0 %v161
  %v186 = vpop.f32.mrf.mxu0
  %v187 = vadd.f32 0.0, %v186
  %188 = vmatmul.f32.gmra.mxu0 %v163
  %v189 = vpop.f32.mrf.mxu0
  %v190 = vadd.f32 0.0, %v189
  %191 = vdwg.mxu0
  %v192 = vmul.f32 %v187, 0.35355338
  %v193 = vmul.f32 %v190, 0.35355338
  %vm194 = vcmask 130048
  %v195 = vsel %vm194, %v192, -inf
  %196 = vmax.xlane.f32.xlu0 %v195
  %v197 = vpop.xlane.xlu0 %196
  %v198 = vsel %vm194, %v193, -inf
  %199 = vmax.xlane.f32.xlu0 %v198
  %v200 = vpop.xlane.xlu0 %199
  %v201 = vsub.f32 %v192, %v197
  %v202 = vsub.f32 %v193, %v200
  %v203 = vmul.f32 %v201, 1.442695
  %v204 = vpow.pop %v203
  %v205 = vmul.f32 %v202, 1.442695
  %v206 = vpow.pop %v205
  %v207 = vsel %vm194, %v204, 0.0
  %208 = vadd.xlane.f32.xlu0 %v207
  %v209 = vpop.xlane.xlu0 %208
  %v210 = vsel %vm194, %v206, 0.0
  %211 = vadd.xlane.f32.xlu0 %v210
  %v212 = vpop.xlane.xlu0 %211
  %v213 = vrcp.pop %v209
  %v214 = vmul.f32 %v209, %v213
  %v215 = vsub.f32 1.0, %v214
  %v216 = vmul.f32 %v213, %v215
  %v217 = vadd.f32 %v213, %v216
  %vm218 = vweird.f32 %v209
  %vm219 = vweird.f32 %v213
  %vm220 = vmor %vm218, %vm219
  %v221 = vsel %vm220, %v213, %v217
  %v222 = vand.u32 2147483647, %v209
  %vm223 = vcmp.eq.f32.partialorder %v222, 8.507059e+37
  %v224 = vand.u32 %v209, 2147483648
  %v225 = vor.u32 1.1754944e-38, %v224
  %v226 = vsel %vm223, %v225, %v221
  %v227 = vmul.f32 %v204, %v226
  %v228 = vrcp.pop %v212
  %v229 = vmul.f32 %v212, %v228
  %v230 = vsub.f32 1.0, %v229
  %v231 = vmul.f32 %v228, %v230
  %v232 = vadd.f32 %v228, %v231
  %vm233 = vweird.f32 %v212
  %vm234 = vweird.f32 %v228
  %vm235 = vmor %vm233, %vm234
  %v236 = vsel %vm235, %v228, %v232
  %v237 = vand.u32 2147483647, %v212
  %vm238 = vcmp.eq.f32.partialorder %v237, 8.507059e+37
  %v239 = vand.u32 %v212, 2147483648
  %v240 = vor.u32 1.1754944e-38, %v239
  %v241 = vsel %vm238, %v240, %v236
  %v242 = vmul.f32 %v206, %v241
  %243 = vrot.lane.b32.xlu0 %v143, 64
  %v244 = vpop.permute.xlu0 %243
  %245 = vrot.lane.b32.xlu0 %v146, 64
  %v246 = vpop.permute.xlu0 %245
  %v250 = vsel %vm194, %v227, 0
  %v253 = vsel %vm194, %v242, 0
  %255 = vmatpush.msra.mxu0 0.0
  %256 = vmatpush.msra.mxu0 0.0
  %257 = vmatpush.msra.mxu0 0.0
  %258 = vmatpush.msra.mxu0 0.0
  %259 = vmatpush.msra.mxu0 0.0
  %260 = vmatpush.msra.mxu0 0.0
  %261 = vmatpush.msra.mxu0 0.0
  %262 = vmatpush.msra.mxu0 0.0
  %263 = vmatpush.msra.mxu0 0.0
  %264 = vmatpush.msra.mxu0 0.0
  %265 = vmatpush.msra.mxu0 0.0
  %266 = vmatpush.msra.mxu0 0.0
  %267 = vmatpush.msra.mxu0 0.0
  %268 = vmatpush.msra.mxu0 0.0
  %269 = vmatpush.msra.mxu0 %v246
  %270 = vmatpush.msra.mxu0 %v244
  %271 = vmatmul.f32.gmra.mxu0 %v250
  %v272 = vpop.f32.mrf.mxu0
  %v273 = vadd.f32 0.0, %v272
  %274 = vmatmul.f32.gmra.mxu0 %v253
  %v275 = vpop.f32.mrf.mxu0
  %v276 = vadd.f32 0.0, %v275
  %277 = vdwg.mxu0
  %280 = vrot.lane.b32.xlu0 %v149, 96
  %v281 = vpop.permute.xlu0 %280
  %282 = vrot.lane.b32.xlu0 %v152, 96
  %v283 = vpop.permute.xlu0 %282
  %v284 = vsel %vm160, %v149, 0
  %v286 = vsel %vm160, %v152, 0
  %v288 = vsel %vm160, %v281, 0
  %v290 = vsel %vm160, %v283, 0
  %292 = vmatpush.xpose.msra.mxu0 0.0
  %293 = vmatpush.xpose.msra.mxu0 0.0
  %294 = vmatpush.xpose.msra.mxu0 0.0
  %295 = vmatpush.xpose.msra.mxu0 0.0
  %296 = vmatpush.xpose.msra.mxu0 0.0
  %297 = vmatpush.xpose.msra.mxu0 0.0
  %298 = vmatpush.xpose.msra.mxu0 0.0
  %299 = vmatpush.xpose.msra.mxu0 0.0
  %300 = vmatpush.xpose.msra.mxu0 0.0
  %301 = vmatpush.xpose.msra.mxu0 0.0
  %302 = vmatpush.xpose.msra.mxu0 0.0
  %303 = vmatpush.xpose.msra.mxu0 0.0
  %304 = vmatpush.xpose.msra.mxu0 0.0
  %305 = vmatpush.xpose.msra.mxu0 0.0
  %306 = vmatpush.xpose.msra.mxu0 %v290
  %307 = vmatpush.xpose.msra.mxu0 %v288
  %308 = vmatmul.f32.gmra.mxu0 %v284
  %v309 = vpop.f32.mrf.mxu0
  %v310 = vadd.f32 0.0, %v309
  %311 = vmatmul.f32.gmra.mxu0 %v286
  %v312 = vpop.f32.mrf.mxu0
  %v313 = vadd.f32 0.0, %v312
  %314 = vdwg.mxu0
  %v315 = vmul.f32 %v310, 0.35355338
  %v316 = vmul.f32 %v313, 0.35355338
  %v317 = vsel %vm194, %v315, -inf
  %318 = vmax.xlane.f32.xlu0 %v317
  %v319 = vpop.xlane.xlu0 %318
  %v320 = vsel %vm194, %v316, -inf
  %321 = vmax.xlane.f32.xlu0 %v320
  %v322 = vpop.xlane.xlu0 %321
  %v323 = vsub.f32 %v315, %v319
  %v324 = vsub.f32 %v316, %v322
  %v325 = vmul.f32 %v323, 1.442695
  %v326 = vpow.pop %v325
  %v327 = vmul.f32 %v324, 1.442695
  %v328 = vpow.pop %v327
  %v329 = vsel %vm194, %v326, 0.0
  %330 = vadd.xlane.f32.xlu0 %v329
  %v331 = vpop.xlane.xlu0 %330
  %v332 = vsel %vm194, %v328, 0.0
  %333 = vadd.xlane.f32.xlu0 %v332
  %v334 = vpop.xlane.xlu0 %333
  %v335 = vrcp.pop %v331
  %v336 = vmul.f32 %v331, %v335
  %v337 = vsub.f32 1.0, %v336
  %v338 = vmul.f32 %v335, %v337
  %v339 = vadd.f32 %v335, %v338
  %vm340 = vweird.f32 %v331
  %vm341 = vweird.f32 %v335
  %vm342 = vmor %vm340, %vm341
  %v343 = vsel %vm342, %v335, %v339
  %v344 = vand.u32 2147483647, %v331
  %vm345 = vcmp.eq.f32.partialorder %v344, 8.507059e+37
  %v346 = vand.u32 %v331, 2147483648
  %v347 = vor.u32 1.1754944e-38, %v346
  %v348 = vsel %vm345, %v347, %v343
  %v349 = vmul.f32 %v326, %v348
  %v350 = vrcp.pop %v334
  %v351 = vmul.f32 %v334, %v350
  %v352 = vsub.f32 1.0, %v351
  %v353 = vmul.f32 %v350, %v352
  %v354 = vadd.f32 %v350, %v353
  %vm355 = vweird.f32 %v334
  %vm356 = vweird.f32 %v350
  %vm357 = vmor %vm355, %vm356
  %v358 = vsel %vm357, %v350, %v354
  %v359 = vand.u32 2147483647, %v334
  %vm360 = vcmp.eq.f32.partialorder %v359, 8.507059e+37
  %v361 = vand.u32 %v334, 2147483648
  %v362 = vor.u32 1.1754944e-38, %v361
  %v363 = vsel %vm360, %v362, %v358
  %v364 = vmul.f32 %v328, %v363
  %365 = vrot.lane.b32.xlu0 %v149, 64
  %v366 = vpop.permute.xlu0 %365
  %367 = vrot.lane.b32.xlu0 %v152, 64
  %v368 = vpop.permute.xlu0 %367
  %v372 = vsel %vm194, %v349, 0
  %v375 = vsel %vm194, %v364, 0
  %377 = vmatpush.msra.mxu0 0.0
  %378 = vmatpush.msra.mxu0 0.0
  %379 = vmatpush.msra.mxu0 0.0
  %380 = vmatpush.msra.mxu0 0.0
  %381 = vmatpush.msra.mxu0 0.0
  %382 = vmatpush.msra.mxu0 0.0
  %383 = vmatpush.msra.mxu0 0.0
  %384 = vmatpush.msra.mxu0 0.0
  %385 = vmatpush.msra.mxu0 0.0
  %386 = vmatpush.msra.mxu0 0.0
  %387 = vmatpush.msra.mxu0 0.0
  %388 = vmatpush.msra.mxu0 0.0
  %389 = vmatpush.msra.mxu0 0.0
  %390 = vmatpush.msra.mxu0 0.0
  %391 = vmatpush.msra.mxu0 %v368
  %392 = vmatpush.msra.mxu0 %v366
  %393 = vmatmul.f32.gmra.mxu0 %v372
  %v394 = vpop.f32.mrf.mxu0
  %v395 = vadd.f32 0.0, %v394
  %396 = vmatmul.f32.gmra.mxu0 %v375
  %v397 = vpop.f32.mrf.mxu0
  %v398 = vadd.f32 0.0, %v397
  %399 = vdwg.mxu0
  %400 = vrot.lane.b32.xlu0 %v143, 120
  %v401 = vpop.permute.xlu0 %400
  %402 = vrot.lane.b32.xlu0 %v146, 120
  %v403 = vpop.permute.xlu0 %402
  %404 = vrot.lane.b32.xlu0 %v143, 88
  %v405 = vpop.permute.xlu0 %404
  %406 = vrot.lane.b32.xlu0 %v146, 88
  %v407 = vpop.permute.xlu0 %406
  %v408 = vsel %vm160, %v401, 0
  %v410 = vsel %vm160, %v403, 0
  %v412 = vsel %vm160, %v405, 0
  %v414 = vsel %vm160, %v407, 0
  %416 = vmatpush.xpose.msra.mxu0 0.0
  %417 = vmatpush.xpose.msra.mxu0 0.0
  %418 = vmatpush.xpose.msra.mxu0 0.0
  %419 = vmatpush.xpose.msra.mxu0 0.0
  %420 = vmatpush.xpose.msra.mxu0 0.0
  %421 = vmatpush.xpose.msra.mxu0 0.0
  %422 = vmatpush.xpose.msra.mxu0 0.0
  %423 = vmatpush.xpose.msra.mxu0 0.0
  %424 = vmatpush.xpose.msra.mxu0 0.0
  %425 = vmatpush.xpose.msra.mxu0 0.0
  %426 = vmatpush.xpose.msra.mxu0 0.0
  %427 = vmatpush.xpose.msra.mxu0 0.0
  %428 = vmatpush.xpose.msra.mxu0 0.0
  %429 = vmatpush.xpose.msra.mxu0 0.0
  %430 = vmatpush.xpose.msra.mxu0 %v414
  %431 = vmatpush.xpose.msra.mxu0 %v412
  %432 = vmatmul.f32.gmra.mxu0 %v408
  %v433 = vpop.f32.mrf.mxu0
  %v434 = vadd.f32 0.0, %v433
  %435 = vmatmul.f32.gmra.mxu0 %v410
  %v436 = vpop.f32.mrf.mxu0
  %v437 = vadd.f32 0.0, %v436
  %438 = vdwg.mxu0
  %v439 = vmul.f32 %v434, 0.35355338
  %v440 = vmul.f32 %v437, 0.35355338
  %v441 = vsel %vm194, %v439, -inf
  %442 = vmax.xlane.f32.xlu0 %v441
  %v443 = vpop.xlane.xlu0 %442
  %v444 = vsel %vm194, %v440, -inf
  %445 = vmax.xlane.f32.xlu0 %v444
  %v446 = vpop.xlane.xlu0 %445
  %v447 = vsub.f32 %v439, %v443
  %v448 = vsub.f32 %v440, %v446
  %v449 = vmul.f32 %v447, 1.442695
  %v450 = vpow.pop %v449
  %v451 = vmul.f32 %v448, 1.442695
  %v452 = vpow.pop %v451
  %v453 = vsel %vm194, %v450, 0.0
  %454 = vadd.xlane.f32.xlu0 %v453
  %v455 = vpop.xlane.xlu0 %454
  %v456 = vsel %vm194, %v452, 0.0
  %457 = vadd.xlane.f32.xlu0 %v456
  %v458 = vpop.xlane.xlu0 %457
  %v459 = vrcp.pop %v455
  %v460 = vmul.f32 %v455, %v459
  %v461 = vsub.f32 1.0, %v460
  %v462 = vmul.f32 %v459, %v461
  %v463 = vadd.f32 %v459, %v462
  %vm464 = vweird.f32 %v455
  %vm465 = vweird.f32 %v459
  %vm466 = vmor %vm464, %vm465
  %v467 = vsel %vm466, %v459, %v463
  %v468 = vand.u32 2147483647, %v455
  %vm469 = vcmp.eq.f32.partialorder %v468, 8.507059e+37
  %v470 = vand.u32 %v455, 2147483648
  %v471 = vor.u32 1.1754944e-38, %v470
  %v472 = vsel %vm469, %v471, %v467
  %v473 = vmul.f32 %v450, %v472
  %v474 = vrcp.pop %v458
  %v475 = vmul.f32 %v458, %v474
  %v476 = vsub.f32 1.0, %v475
  %v477 = vmul.f32 %v474, %v476
  %v478 = vadd.f32 %v474, %v477
  %vm479 = vweird.f32 %v458
  %vm480 = vweird.f32 %v474
  %vm481 = vmor %vm479, %vm480
  %v482 = vsel %vm481, %v474, %v478
  %v483 = vand.u32 2147483647, %v458
  %vm484 = vcmp.eq.f32.partialorder %v483, 8.507059e+37
  %v485 = vand.u32 %v458, 2147483648
  %v486 = vor.u32 1.1754944e-38, %v485
  %v487 = vsel %vm484, %v486, %v482
  %v488 = vmul.f32 %v452, %v487
  %489 = vrot.lane.b32.xlu0 %v143, 56
  %v490 = vpop.permute.xlu0 %489
  %491 = vrot.lane.b32.xlu0 %v146, 56
  %v492 = vpop.permute.xlu0 %491
  %v496 = vsel %vm194, %v473, 0
  %v499 = vsel %vm194, %v488, 0
  %501 = vmatpush.msra.mxu0 0.0
  %502 = vmatpush.msra.mxu0 0.0
  %503 = vmatpush.msra.mxu0 0.0
  %504 = vmatpush.msra.mxu0 0.0
  %505 = vmatpush.msra.mxu0 0.0
  %506 = vmatpush.msra.mxu0 0.0
  %507 = vmatpush.msra.mxu0 0.0
  %508 = vmatpush.msra.mxu0 0.0
  %509 = vmatpush.msra.mxu0 0.0
  %510 = vmatpush.msra.mxu0 0.0
  %511 = vmatpush.msra.mxu0 0.0
  %512 = vmatpush.msra.mxu0 0.0
  %513 = vmatpush.msra.mxu0 0.0
  %514 = vmatpush.msra.mxu0 0.0
  %515 = vmatpush.msra.mxu0 %v492
  %516 = vmatpush.msra.mxu0 %v490
  %517 = vmatmul.f32.gmra.mxu0 %v496
  %v518 = vpop.f32.mrf.mxu0
  %v519 = vadd.f32 0.0, %v518
  %520 = vmatmul.f32.gmra.mxu0 %v499
  %v521 = vpop.f32.mrf.mxu0
  %v522 = vadd.f32 0.0, %v521
  %523 = vdwg.mxu0
  %524 = vrot.lane.b32.xlu0 %v149, 120
  %v525 = vpop.permute.xlu0 %524
  %526 = vrot.lane.b32.xlu0 %v152, 120
  %v527 = vpop.permute.xlu0 %526
  %528 = vrot.lane.b32.xlu0 %v149, 88
  %v529 = vpop.permute.xlu0 %528
  %530 = vrot.lane.b32.xlu0 %v152, 88
  %v531 = vpop.permute.xlu0 %530
  %v532 = vsel %vm160, %v525, 0
  %v534 = vsel %vm160, %v527, 0
  %v536 = vsel %vm160, %v529, 0
  %v538 = vsel %vm160, %v531, 0
  %540 = vmatpush.xpose.msra.mxu0 0.0
  %541 = vmatpush.xpose.msra.mxu0 0.0
  %542 = vmatpush.xpose.msra.mxu0 0.0
  %543 = vmatpush.xpose.msra.mxu0 0.0
  %544 = vmatpush.xpose.msra.mxu0 0.0
  %545 = vmatpush.xpose.msra.mxu0 0.0
  %546 = vmatpush.xpose.msra.mxu0 0.0
  %547 = vmatpush.xpose.msra.mxu0 0.0
  %548 = vmatpush.xpose.msra.mxu0 0.0
  %549 = vmatpush.xpose.msra.mxu0 0.0
  %550 = vmatpush.xpose.msra.mxu0 0.0
  %551 = vmatpush.xpose.msra.mxu0 0.0
  %552 = vmatpush.xpose.msra.mxu0 0.0
  %553 = vmatpush.xpose.msra.mxu0 0.0
  %554 = vmatpush.xpose.msra.mxu0 %v538
  %555 = vmatpush.xpose.msra.mxu0 %v536
  %556 = vmatmul.f32.gmra.mxu0 %v532
  %v557 = vpop.f32.mrf.mxu0
  %v558 = vadd.f32 0.0, %v557
  %559 = vmatmul.f32.gmra.mxu0 %v534
  %v560 = vpop.f32.mrf.mxu0
  %v561 = vadd.f32 0.0, %v560
  %562 = vdwg.mxu0
  %v563 = vmul.f32 %v558, 0.35355338
  %v564 = vmul.f32 %v561, 0.35355338
  %v565 = vsel %vm194, %v563, -inf
  %566 = vmax.xlane.f32.xlu0 %v565
  %v567 = vpop.xlane.xlu0 %566
  %v568 = vsel %vm194, %v564, -inf
  %569 = vmax.xlane.f32.xlu0 %v568
  %v570 = vpop.xlane.xlu0 %569
  %v571 = vsub.f32 %v563, %v567
  %v572 = vsub.f32 %v564, %v570
  %v573 = vmul.f32 %v571, 1.442695
  %v574 = vpow.pop %v573
  %v575 = vmul.f32 %v572, 1.442695
  %v576 = vpow.pop %v575
  %v577 = vsel %vm194, %v574, 0.0
  %578 = vadd.xlane.f32.xlu0 %v577
  %v579 = vpop.xlane.xlu0 %578
  %v580 = vsel %vm194, %v576, 0.0
  %581 = vadd.xlane.f32.xlu0 %v580
  %v582 = vpop.xlane.xlu0 %581
  %v583 = vrcp.pop %v579
  %v584 = vmul.f32 %v579, %v583
  %v585 = vsub.f32 1.0, %v584
  %v586 = vmul.f32 %v583, %v585
  %v587 = vadd.f32 %v583, %v586
  %vm588 = vweird.f32 %v579
  %vm589 = vweird.f32 %v583
  %vm590 = vmor %vm588, %vm589
  %v591 = vsel %vm590, %v583, %v587
  %v592 = vand.u32 2147483647, %v579
  %vm593 = vcmp.eq.f32.partialorder %v592, 8.507059e+37
  %v594 = vand.u32 %v579, 2147483648
  %v595 = vor.u32 1.1754944e-38, %v594
  %v596 = vsel %vm593, %v595, %v591
  %v597 = vmul.f32 %v574, %v596
  %v598 = vrcp.pop %v582
  %v599 = vmul.f32 %v582, %v598
  %v600 = vsub.f32 1.0, %v599
  %v601 = vmul.f32 %v598, %v600
  %v602 = vadd.f32 %v598, %v601
  %vm603 = vweird.f32 %v582
  %vm604 = vweird.f32 %v598
  %vm605 = vmor %vm603, %vm604
  %v606 = vsel %vm605, %v598, %v602
  %v607 = vand.u32 2147483647, %v582
  %vm608 = vcmp.eq.f32.partialorder %v607, 8.507059e+37
  %v609 = vand.u32 %v582, 2147483648
  %v610 = vor.u32 1.1754944e-38, %v609
  %v611 = vsel %vm608, %v610, %v606
  %v612 = vmul.f32 %v576, %v611
  %613 = vrot.lane.b32.xlu0 %v149, 56
  %v614 = vpop.permute.xlu0 %613
  %615 = vrot.lane.b32.xlu0 %v152, 56
  %v616 = vpop.permute.xlu0 %615
  %v620 = vsel %vm194, %v597, 0
  %v623 = vsel %vm194, %v612, 0
  %625 = vmatpush.msra.mxu0 0.0
  %626 = vmatpush.msra.mxu0 0.0
  %627 = vmatpush.msra.mxu0 0.0
  %628 = vmatpush.msra.mxu0 0.0
  %629 = vmatpush.msra.mxu0 0.0
  %630 = vmatpush.msra.mxu0 0.0
  %631 = vmatpush.msra.mxu0 0.0
  %632 = vmatpush.msra.mxu0 0.0
  %633 = vmatpush.msra.mxu0 0.0
  %634 = vmatpush.msra.mxu0 0.0
  %635 = vmatpush.msra.mxu0 0.0
  %636 = vmatpush.msra.mxu0 0.0
  %637 = vmatpush.msra.mxu0 0.0
  %638 = vmatpush.msra.mxu0 0.0
  %639 = vmatpush.msra.mxu0 %v616
  %640 = vmatpush.msra.mxu0 %v614
  %641 = vmatmul.f32.gmra.mxu0 %v620
  %v642 = vpop.f32.mrf.mxu0
  %v643 = vadd.f32 0.0, %v642
  %644 = vmatmul.f32.gmra.mxu0 %v623
  %v645 = vpop.f32.mrf.mxu0
  %v646 = vadd.f32 0.0, %v645
  %647 = vdwg.mxu0
  %v649 = vsel %vm160, %v519, 0
  %v652 = vsel %vm160, %v522, 0
  %v655 = vsel %vm160, %v643, 0
  %v658 = vsel %vm160, %v646, 0
  %660 = vmatpush.msra.mxu0 0.0
  %661 = vmatpush.msra.mxu0 0.0
  %662 = vmatpush.msra.mxu0 0.0
  %663 = vmatpush.msra.mxu0 0.0
  %664 = vmatpush.msra.mxu0 0.0
  %665 = vmatpush.msra.mxu0 0.0
  %666 = vmatpush.msra.mxu0 0.0
  %667 = vmatpush.msra.mxu0 0.0
  %668 = vmatpush.msra.mxu0 0.0
  %669 = vmatpush.msra.mxu0 0.0
  %670 = vmatpush.msra.mxu0 0.0
  %671 = vmatpush.msra.mxu0 0.0
  %672 = vmatpush.msra.mxu0 0.0
  %673 = vmatpush.msra.mxu0 0.0
  %674 = vmatpush.msra.mxu0 0.0
  %675 = vmatpush.msra.mxu0 %v65
  %676 = vmatmul.f32.gmra.mxu0 %v649
  %v677 = vpop.f32.mrf.mxu0
  %v678 = vadd.f32 0.0, %v677
  %679 = vmatmul.f32.gmra.mxu0 %v652
  %v680 = vpop.f32.mrf.mxu0
  %v681 = vadd.f32 0.0, %v680
  %682 = vmatmul.f32.gmra.mxu0 %v655
  %v683 = vpop.f32.mrf.mxu0
  %v684 = vadd.f32 0.0, %v683
  %685 = vmatmul.f32.gmra.mxu0 %v658
  %v686 = vpop.f32.mrf.mxu0
  %v687 = vadd.f32 0.0, %v686
  %688 = vdwg.mxu0
  %v690 = vsel %vm160, %v273, 0
  %v693 = vsel %vm160, %v276, 0
  %v696 = vsel %vm160, %v395, 0
  %v699 = vsel %vm160, %v398, 0
  %701 = vmatpush.msra.mxu0 0.0
  %702 = vmatpush.msra.mxu0 0.0
  %703 = vmatpush.msra.mxu0 0.0
  %704 = vmatpush.msra.mxu0 0.0
  %705 = vmatpush.msra.mxu0 0.0
  %706 = vmatpush.msra.mxu0 0.0
  %707 = vmatpush.msra.mxu0 0.0
  %708 = vmatpush.msra.mxu0 0.0
  %709 = vmatpush.msra.mxu0 0.0
  %710 = vmatpush.msra.mxu0 0.0
  %711 = vmatpush.msra.mxu0 0.0
  %712 = vmatpush.msra.mxu0 0.0
  %713 = vmatpush.msra.mxu0 0.0
  %714 = vmatpush.msra.mxu0 0.0
  %715 = vmatpush.msra.mxu0 0.0
  %716 = vmatpush.msra.mxu0 %v64
  %717 = vmatmul.f32.gmra.mxu0 %v690
  %v718 = vpop.f32.mrf.mxu0
  %v719 = vadd.f32 %v678, %v718
  %720 = vmatmul.f32.gmra.mxu0 %v693
  %v721 = vpop.f32.mrf.mxu0
  %v722 = vadd.f32 %v681, %v721
  %723 = vmatmul.f32.gmra.mxu0 %v696
  %v724 = vpop.f32.mrf.mxu0
  %v725 = vadd.f32 %v684, %v724
  %726 = vmatmul.f32.gmra.mxu0 %v699
  %v727 = vpop.f32.mrf.mxu0
  %v728 = vadd.f32 %v687, %v727
  %729 = vdwg.mxu0
  %730 = vrot.lane.b32.xlu0 %v143, 112
  %v731 = vpop.permute.xlu0 %730
  %732 = vrot.lane.b32.xlu0 %v146, 112
  %v733 = vpop.permute.xlu0 %732
  %734 = vrot.lane.b32.xlu0 %v143, 80
  %v735 = vpop.permute.xlu0 %734
  %736 = vrot.lane.b32.xlu0 %v146, 80
  %v737 = vpop.permute.xlu0 %736
  %v738 = vsel %vm160, %v731, 0
  %v740 = vsel %vm160, %v733, 0
  %v742 = vsel %vm160, %v735, 0
  %v744 = vsel %vm160, %v737, 0
  %746 = vmatpush.xpose.msra.mxu0 0.0
  %747 = vmatpush.xpose.msra.mxu0 0.0
  %748 = vmatpush.xpose.msra.mxu0 0.0
  %749 = vmatpush.xpose.msra.mxu0 0.0
  %750 = vmatpush.xpose.msra.mxu0 0.0
  %751 = vmatpush.xpose.msra.mxu0 0.0
  %752 = vmatpush.xpose.msra.mxu0 0.0
  %753 = vmatpush.xpose.msra.mxu0 0.0
  %754 = vmatpush.xpose.msra.mxu0 0.0
  %755 = vmatpush.xpose.msra.mxu0 0.0
  %756 = vmatpush.xpose.msra.mxu0 0.0
  %757 = vmatpush.xpose.msra.mxu0 0.0
  %758 = vmatpush.xpose.msra.mxu0 0.0
  %759 = vmatpush.xpose.msra.mxu0 0.0
  %760 = vmatpush.xpose.msra.mxu0 %v744
  %761 = vmatpush.xpose.msra.mxu0 %v742
  %762 = vmatmul.f32.gmra.mxu0 %v738
  %v763 = vpop.f32.mrf.mxu0
  %v764 = vadd.f32 0.0, %v763
  %765 = vmatmul.f32.gmra.mxu0 %v740
  %v766 = vpop.f32.mrf.mxu0
  %v767 = vadd.f32 0.0, %v766
  %768 = vdwg.mxu0
  %v769 = vmul.f32 %v764, 0.35355338
  %v770 = vmul.f32 %v767, 0.35355338
  %v771 = vsel %vm194, %v769, -inf
  %772 = vmax.xlane.f32.xlu0 %v771
  %v773 = vpop.xlane.xlu0 %772
  %v774 = vsel %vm194, %v770, -inf
  %775 = vmax.xlane.f32.xlu0 %v774
  %v776 = vpop.xlane.xlu0 %775
  %v777 = vsub.f32 %v769, %v773
  %v778 = vsub.f32 %v770, %v776
  %v779 = vmul.f32 %v777, 1.442695
  %v780 = vpow.pop %v779
  %v781 = vmul.f32 %v778, 1.442695
  %v782 = vpow.pop %v781
  %v783 = vsel %vm194, %v780, 0.0
  %784 = vadd.xlane.f32.xlu0 %v783
  %v785 = vpop.xlane.xlu0 %784
  %v786 = vsel %vm194, %v782, 0.0
  %787 = vadd.xlane.f32.xlu0 %v786
  %v788 = vpop.xlane.xlu0 %787
  %v789 = vrcp.pop %v785
  %v790 = vmul.f32 %v785, %v789
  %v791 = vsub.f32 1.0, %v790
  %v792 = vmul.f32 %v789, %v791
  %v793 = vadd.f32 %v789, %v792
  %vm794 = vweird.f32 %v785
  %vm795 = vweird.f32 %v789
  %vm796 = vmor %vm794, %vm795
  %v797 = vsel %vm796, %v789, %v793
  %v798 = vand.u32 2147483647, %v785
  %vm799 = vcmp.eq.f32.partialorder %v798, 8.507059e+37
  %v800 = vand.u32 %v785, 2147483648
  %v801 = vor.u32 1.1754944e-38, %v800
  %v802 = vsel %vm799, %v801, %v797
  %v803 = vmul.f32 %v780, %v802
  %v804 = vrcp.pop %v788
  %v805 = vmul.f32 %v788, %v804
  %v806 = vsub.f32 1.0, %v805
  %v807 = vmul.f32 %v804, %v806
  %v808 = vadd.f32 %v804, %v807
  %vm809 = vweird.f32 %v788
  %vm810 = vweird.f32 %v804
  %vm811 = vmor %vm809, %vm810
  %v812 = vsel %vm811, %v804, %v808
  %v813 = vand.u32 2147483647, %v788
  %vm814 = vcmp.eq.f32.partialorder %v813, 8.507059e+37
  %v815 = vand.u32 %v788, 2147483648
  %v816 = vor.u32 1.1754944e-38, %v815
  %v817 = vsel %vm814, %v816, %v812
  %v818 = vmul.f32 %v782, %v817
  %819 = vrot.lane.b32.xlu0 %v143, 48
  %v820 = vpop.permute.xlu0 %819
  %821 = vrot.lane.b32.xlu0 %v146, 48
  %v822 = vpop.permute.xlu0 %821
  %v826 = vsel %vm194, %v803, 0
  %v829 = vsel %vm194, %v818, 0
  %831 = vmatpush.msra.mxu0 0.0
  %832 = vmatpush.msra.mxu0 0.0
  %833 = vmatpush.msra.mxu0 0.0
  %834 = vmatpush.msra.mxu0 0.0
  %835 = vmatpush.msra.mxu0 0.0
  %836 = vmatpush.msra.mxu0 0.0
  %837 = vmatpush.msra.mxu0 0.0
  %838 = vmatpush.msra.mxu0 0.0
  %839 = vmatpush.msra.mxu0 0.0
  %840 = vmatpush.msra.mxu0 0.0
  %841 = vmatpush.msra.mxu0 0.0
  %842 = vmatpush.msra.mxu0 0.0
  %843 = vmatpush.msra.mxu0 0.0
  %844 = vmatpush.msra.mxu0 0.0
  %845 = vmatpush.msra.mxu0 %v822
  %846 = vmatpush.msra.mxu0 %v820
  %847 = vmatmul.f32.gmra.mxu0 %v826
  %v848 = vpop.f32.mrf.mxu0
  %v849 = vadd.f32 0.0, %v848
  %850 = vmatmul.f32.gmra.mxu0 %v829
  %v851 = vpop.f32.mrf.mxu0
  %v852 = vadd.f32 0.0, %v851
  %853 = vdwg.mxu0
  %854 = vrot.lane.b32.xlu0 %v149, 112
  %v855 = vpop.permute.xlu0 %854
  %856 = vrot.lane.b32.xlu0 %v152, 112
  %v857 = vpop.permute.xlu0 %856
  %858 = vrot.lane.b32.xlu0 %v149, 80
  %v859 = vpop.permute.xlu0 %858
  %860 = vrot.lane.b32.xlu0 %v152, 80
  %v861 = vpop.permute.xlu0 %860
  %v862 = vsel %vm160, %v855, 0
  %v864 = vsel %vm160, %v857, 0
  %v866 = vsel %vm160, %v859, 0
  %v868 = vsel %vm160, %v861, 0
  %870 = vmatpush.xpose.msra.mxu0 0.0
  %871 = vmatpush.xpose.msra.mxu0 0.0
  %872 = vmatpush.xpose.msra.mxu0 0.0
  %873 = vmatpush.xpose.msra.mxu0 0.0
  %874 = vmatpush.xpose.msra.mxu0 0.0
  %875 = vmatpush.xpose.msra.mxu0 0.0
  %876 = vmatpush.xpose.msra.mxu0 0.0
  %877 = vmatpush.xpose.msra.mxu0 0.0
  %878 = vmatpush.xpose.msra.mxu0 0.0
  %879 = vmatpush.xpose.msra.mxu0 0.0
  %880 = vmatpush.xpose.msra.mxu0 0.0
  %881 = vmatpush.xpose.msra.mxu0 0.0
  %882 = vmatpush.xpose.msra.mxu0 0.0
  %883 = vmatpush.xpose.msra.mxu0 0.0
  %884 = vmatpush.xpose.msra.mxu0 %v868
  %885 = vmatpush.xpose.msra.mxu0 %v866
  %886 = vmatmul.f32.gmra.mxu0 %v862
  %v887 = vpop.f32.mrf.mxu0
  %v888 = vadd.f32 0.0, %v887
  %889 = vmatmul.f32.gmra.mxu0 %v864
  %v890 = vpop.f32.mrf.mxu0
  %v891 = vadd.f32 0.0, %v890
  %892 = vdwg.mxu0
  %v893 = vmul.f32 %v888, 0.35355338
  %v894 = vmul.f32 %v891, 0.35355338
  %v895 = vsel %vm194, %v893, -inf
  %896 = vmax.xlane.f32.xlu0 %v895
  %v897 = vpop.xlane.xlu0 %896
  %v898 = vsel %vm194, %v894, -inf
  %899 = vmax.xlane.f32.xlu0 %v898
  %v900 = vpop.xlane.xlu0 %899
  %v901 = vsub.f32 %v893, %v897
  %v902 = vsub.f32 %v894, %v900
  %v903 = vmul.f32 %v901, 1.442695
  %v904 = vpow.pop %v903
  %v905 = vmul.f32 %v902, 1.442695
  %v906 = vpow.pop %v905
  %v907 = vsel %vm194, %v904, 0.0
  %908 = vadd.xlane.f32.xlu0 %v907
  %v909 = vpop.xlane.xlu0 %908
  %v910 = vsel %vm194, %v906, 0.0
  %911 = vadd.xlane.f32.xlu0 %v910
  %v912 = vpop.xlane.xlu0 %911
  %v913 = vrcp.pop %v909
  %v914 = vmul.f32 %v909, %v913
  %v915 = vsub.f32 1.0, %v914
  %v916 = vmul.f32 %v913, %v915
  %v917 = vadd.f32 %v913, %v916
  %vm918 = vweird.f32 %v909
  %vm919 = vweird.f32 %v913
  %vm920 = vmor %vm918, %vm919
  %v921 = vsel %vm920, %v913, %v917
  %v922 = vand.u32 2147483647, %v909
  %vm923 = vcmp.eq.f32.partialorder %v922, 8.507059e+37
  %v924 = vand.u32 %v909, 2147483648
  %v925 = vor.u32 1.1754944e-38, %v924
  %v926 = vsel %vm923, %v925, %v921
  %v927 = vmul.f32 %v904, %v926
  %v928 = vrcp.pop %v912
  %v929 = vmul.f32 %v912, %v928
  %v930 = vsub.f32 1.0, %v929
  %v931 = vmul.f32 %v928, %v930
  %v932 = vadd.f32 %v928, %v931
  %vm933 = vweird.f32 %v912
  %vm934 = vweird.f32 %v928
  %vm935 = vmor %vm933, %vm934
  %v936 = vsel %vm935, %v928, %v932
  %v937 = vand.u32 2147483647, %v912
  %vm938 = vcmp.eq.f32.partialorder %v937, 8.507059e+37
  %v939 = vand.u32 %v912, 2147483648
  %v940 = vor.u32 1.1754944e-38, %v939
  %v941 = vsel %vm938, %v940, %v936
  %v942 = vmul.f32 %v906, %v941
  %943 = vrot.lane.b32.xlu0 %v149, 48
  %v944 = vpop.permute.xlu0 %943
  %945 = vrot.lane.b32.xlu0 %v152, 48
  %v946 = vpop.permute.xlu0 %945
  %v950 = vsel %vm194, %v927, 0
  %v953 = vsel %vm194, %v942, 0
  %955 = vmatpush.msra.mxu0 0.0
  %956 = vmatpush.msra.mxu0 0.0
  %957 = vmatpush.msra.mxu0 0.0
  %958 = vmatpush.msra.mxu0 0.0
  %959 = vmatpush.msra.mxu0 0.0
  %960 = vmatpush.msra.mxu0 0.0
  %961 = vmatpush.msra.mxu0 0.0
  %962 = vmatpush.msra.mxu0 0.0
  %963 = vmatpush.msra.mxu0 0.0
  %964 = vmatpush.msra.mxu0 0.0
  %965 = vmatpush.msra.mxu0 0.0
  %966 = vmatpush.msra.mxu0 0.0
  %967 = vmatpush.msra.mxu0 0.0
  %968 = vmatpush.msra.mxu0 0.0
  %969 = vmatpush.msra.mxu0 %v946
  %970 = vmatpush.msra.mxu0 %v944
  %971 = vmatmul.f32.gmra.mxu0 %v950
  %v972 = vpop.f32.mrf.mxu0
  %v973 = vadd.f32 0.0, %v972
  %974 = vmatmul.f32.gmra.mxu0 %v953
  %v975 = vpop.f32.mrf.mxu0
  %v976 = vadd.f32 0.0, %v975
  %977 = vdwg.mxu0
  %v979 = vsel %vm160, %v849, 0
  %v982 = vsel %vm160, %v852, 0
  %v985 = vsel %vm160, %v973, 0
  %v988 = vsel %vm160, %v976, 0
  %990 = vmatpush.msra.mxu0 0.0
  %991 = vmatpush.msra.mxu0 0.0
  %992 = vmatpush.msra.mxu0 0.0
  %993 = vmatpush.msra.mxu0 0.0
  %994 = vmatpush.msra.mxu0 0.0
  %995 = vmatpush.msra.mxu0 0.0
  %996 = vmatpush.msra.mxu0 0.0
  %997 = vmatpush.msra.mxu0 0.0
  %998 = vmatpush.msra.mxu0 0.0
  %999 = vmatpush.msra.mxu0 0.0
  %1000 = vmatpush.msra.mxu0 0.0
  %1001 = vmatpush.msra.mxu0 0.0
  %1002 = vmatpush.msra.mxu0 0.0
  %1003 = vmatpush.msra.mxu0 0.0
  %1004 = vmatpush.msra.mxu0 0.0
  %1005 = vmatpush.msra.mxu0 %v66
  %1006 = vmatmul.f32.gmra.mxu0 %v979
  %v1007 = vpop.f32.mrf.mxu0
  %v1008 = vadd.f32 0.0, %v1007
  %1009 = vmatmul.f32.gmra.mxu0 %v982
  %v1010 = vpop.f32.mrf.mxu0
  %v1011 = vadd.f32 0.0, %v1010
  %1012 = vmatmul.f32.gmra.mxu0 %v985
  %v1013 = vpop.f32.mrf.mxu0
  %v1014 = vadd.f32 0.0, %v1013
  %1015 = vmatmul.f32.gmra.mxu0 %v988
  %v1016 = vpop.f32.mrf.mxu0
  %v1017 = vadd.f32 0.0, %v1016
  %1018 = vdwg.mxu0
  %v1019 = vadd.f32 %v719, %v1008
  %v1020 = vadd.f32 %v722, %v1011
  %v1021 = vadd.f32 %v725, %v1014
  %v1022 = vadd.f32 %v728, %v1017
  %1023 = vrot.lane.b32.xlu0 %v143, 104
  %v1024 = vpop.permute.xlu0 %1023
  %1025 = vrot.lane.b32.xlu0 %v146, 104
  %v1026 = vpop.permute.xlu0 %1025
  %1027 = vrot.lane.b32.xlu0 %v143, 72
  %v1028 = vpop.permute.xlu0 %1027
  %1029 = vrot.lane.b32.xlu0 %v146, 72
  %v1030 = vpop.permute.xlu0 %1029
  %v1031 = vsel %vm160, %v1024, 0
  %v1033 = vsel %vm160, %v1026, 0
  %v1035 = vsel %vm160, %v1028, 0
  %v1037 = vsel %vm160, %v1030, 0
  %1039 = vmatpush.xpose.msra.mxu0 0.0
  %1040 = vmatpush.xpose.msra.mxu0 0.0
  %1041 = vmatpush.xpose.msra.mxu0 0.0
  %1042 = vmatpush.xpose.msra.mxu0 0.0
  %1043 = vmatpush.xpose.msra.mxu0 0.0
  %1044 = vmatpush.xpose.msra.mxu0 0.0
  %1045 = vmatpush.xpose.msra.mxu0 0.0
  %1046 = vmatpush.xpose.msra.mxu0 0.0
  %1047 = vmatpush.xpose.msra.mxu0 0.0
  %1048 = vmatpush.xpose.msra.mxu0 0.0
  %1049 = vmatpush.xpose.msra.mxu0 0.0
  %1050 = vmatpush.xpose.msra.mxu0 0.0
  %1051 = vmatpush.xpose.msra.mxu0 0.0
  %1052 = vmatpush.xpose.msra.mxu0 0.0
  %1053 = vmatpush.xpose.msra.mxu0 %v1037
  %1054 = vmatpush.xpose.msra.mxu0 %v1035
  %1055 = vmatmul.f32.gmra.mxu0 %v1031
  %v1056 = vpop.f32.mrf.mxu0
  %v1057 = vadd.f32 0.0, %v1056
  %1058 = vmatmul.f32.gmra.mxu0 %v1033
  %v1059 = vpop.f32.mrf.mxu0
  %v1060 = vadd.f32 0.0, %v1059
  %1061 = vdwg.mxu0
  %v1062 = vmul.f32 %v1057, 0.35355338
  %v1063 = vmul.f32 %v1060, 0.35355338
  %v1064 = vsel %vm194, %v1062, -inf
  %1065 = vmax.xlane.f32.xlu0 %v1064
  %v1066 = vpop.xlane.xlu0 %1065
  %v1067 = vsel %vm194, %v1063, -inf
  %1068 = vmax.xlane.f32.xlu0 %v1067
  %v1069 = vpop.xlane.xlu0 %1068
  %v1070 = vsub.f32 %v1062, %v1066
  %v1071 = vsub.f32 %v1063, %v1069
  %v1072 = vmul.f32 %v1070, 1.442695
  %v1073 = vpow.pop %v1072
  %v1074 = vmul.f32 %v1071, 1.442695
  %v1075 = vpow.pop %v1074
  %v1076 = vsel %vm194, %v1073, 0.0
  %1077 = vadd.xlane.f32.xlu0 %v1076
  %v1078 = vpop.xlane.xlu0 %1077
  %v1079 = vsel %vm194, %v1075, 0.0
  %1080 = vadd.xlane.f32.xlu0 %v1079
  %v1081 = vpop.xlane.xlu0 %1080
  %v1082 = vrcp.pop %v1078
  %v1083 = vmul.f32 %v1078, %v1082
  %v1084 = vsub.f32 1.0, %v1083
  %v1085 = vmul.f32 %v1082, %v1084
  %v1086 = vadd.f32 %v1082, %v1085
  %vm1087 = vweird.f32 %v1078
  %vm1088 = vweird.f32 %v1082
  %vm1089 = vmor %vm1087, %vm1088
  %v1090 = vsel %vm1089, %v1082, %v1086
  %v1091 = vand.u32 2147483647, %v1078
  %vm1092 = vcmp.eq.f32.partialorder %v1091, 8.507059e+37
  %v1093 = vand.u32 %v1078, 2147483648
  %v1094 = vor.u32 1.1754944e-38, %v1093
  %v1095 = vsel %vm1092, %v1094, %v1090
  %v1096 = vmul.f32 %v1073, %v1095
  %v1097 = vrcp.pop %v1081
  %v1098 = vmul.f32 %v1081, %v1097
  %v1099 = vsub.f32 1.0, %v1098
  %v1100 = vmul.f32 %v1097, %v1099
  %v1101 = vadd.f32 %v1097, %v1100
  %vm1102 = vweird.f32 %v1081
  %vm1103 = vweird.f32 %v1097
  %vm1104 = vmor %vm1102, %vm1103
  %v1105 = vsel %vm1104, %v1097, %v1101
  %v1106 = vand.u32 2147483647, %v1081
  %vm1107 = vcmp.eq.f32.partialorder %v1106, 8.507059e+37
  %v1108 = vand.u32 %v1081, 2147483648
  %v1109 = vor.u32 1.1754944e-38, %v1108
  %v1110 = vsel %vm1107, %v1109, %v1105
  %v1111 = vmul.f32 %v1075, %v1110
  %1112 = vrot.lane.b32.xlu0 %v143, 40
  %v1113 = vpop.permute.xlu0 %1112
  %1114 = vrot.lane.b32.xlu0 %v146, 40
  %v1115 = vpop.permute.xlu0 %1114
  %v1119 = vsel %vm194, %v1096, 0
  %v1122 = vsel %vm194, %v1111, 0
  %1124 = vmatpush.msra.mxu0 0.0
  %1125 = vmatpush.msra.mxu0 0.0
  %1126 = vmatpush.msra.mxu0 0.0
  %1127 = vmatpush.msra.mxu0 0.0
  %1128 = vmatpush.msra.mxu0 0.0
  %1129 = vmatpush.msra.mxu0 0.0
  %1130 = vmatpush.msra.mxu0 0.0
  %1131 = vmatpush.msra.mxu0 0.0
  %1132 = vmatpush.msra.mxu0 0.0
  %1133 = vmatpush.msra.mxu0 0.0
  %1134 = vmatpush.msra.mxu0 0.0
  %1135 = vmatpush.msra.mxu0 0.0
  %1136 = vmatpush.msra.mxu0 0.0
  %1137 = vmatpush.msra.mxu0 0.0
  %1138 = vmatpush.msra.mxu0 %v1115
  %1139 = vmatpush.msra.mxu0 %v1113
  %1140 = vmatmul.f32.gmra.mxu0 %v1119
  %v1141 = vpop.f32.mrf.mxu0
  %v1142 = vadd.f32 0.0, %v1141
  %1143 = vmatmul.f32.gmra.mxu0 %v1122
  %v1144 = vpop.f32.mrf.mxu0
  %v1145 = vadd.f32 0.0, %v1144
  %1146 = vdwg.mxu0
  %1147 = vrot.lane.b32.xlu0 %v149, 104
  %v1148 = vpop.permute.xlu0 %1147
  %1149 = vrot.lane.b32.xlu0 %v152, 104
  %v1150 = vpop.permute.xlu0 %1149
  %1151 = vrot.lane.b32.xlu0 %v149, 72
  %v1152 = vpop.permute.xlu0 %1151
  %1153 = vrot.lane.b32.xlu0 %v152, 72
  %v1154 = vpop.permute.xlu0 %1153
  %v1155 = vsel %vm160, %v1148, 0
  %v1157 = vsel %vm160, %v1150, 0
  %v1159 = vsel %vm160, %v1152, 0
  %v1161 = vsel %vm160, %v1154, 0
  %1163 = vmatpush.xpose.msra.mxu0 0.0
  %1164 = vmatpush.xpose.msra.mxu0 0.0
  %1165 = vmatpush.xpose.msra.mxu0 0.0
  %1166 = vmatpush.xpose.msra.mxu0 0.0
  %1167 = vmatpush.xpose.msra.mxu0 0.0
  %1168 = vmatpush.xpose.msra.mxu0 0.0
  %1169 = vmatpush.xpose.msra.mxu0 0.0
  %1170 = vmatpush.xpose.msra.mxu0 0.0
  %1171 = vmatpush.xpose.msra.mxu0 0.0
  %1172 = vmatpush.xpose.msra.mxu0 0.0
  %1173 = vmatpush.xpose.msra.mxu0 0.0
  %1174 = vmatpush.xpose.msra.mxu0 0.0
  %1175 = vmatpush.xpose.msra.mxu0 0.0
  %1176 = vmatpush.xpose.msra.mxu0 0.0
  %1177 = vmatpush.xpose.msra.mxu0 %v1161
  %1178 = vmatpush.xpose.msra.mxu0 %v1159
  %1179 = vmatmul.f32.gmra.mxu0 %v1155
  %v1180 = vpop.f32.mrf.mxu0
  %v1181 = vadd.f32 0.0, %v1180
  %1182 = vmatmul.f32.gmra.mxu0 %v1157
  %v1183 = vpop.f32.mrf.mxu0
  %v1184 = vadd.f32 0.0, %v1183
  %1185 = vdwg.mxu0
  %v1186 = vmul.f32 %v1181, 0.35355338
  %v1187 = vmul.f32 %v1184, 0.35355338
  %v1188 = vsel %vm194, %v1186, -inf
  %1189 = vmax.xlane.f32.xlu0 %v1188
  %v1190 = vpop.xlane.xlu0 %1189
  %v1191 = vsel %vm194, %v1187, -inf
  %1192 = vmax.xlane.f32.xlu0 %v1191
  %v1193 = vpop.xlane.xlu0 %1192
  %v1194 = vsub.f32 %v1186, %v1190
  %v1195 = vsub.f32 %v1187, %v1193
  %v1196 = vmul.f32 %v1194, 1.442695
  %v1197 = vpow.pop %v1196
  %v1198 = vmul.f32 %v1195, 1.442695
  %v1199 = vpow.pop %v1198
  %v1200 = vsel %vm194, %v1197, 0.0
  %1201 = vadd.xlane.f32.xlu0 %v1200
  %v1202 = vpop.xlane.xlu0 %1201
  %v1203 = vsel %vm194, %v1199, 0.0
  %1204 = vadd.xlane.f32.xlu0 %v1203
  %v1205 = vpop.xlane.xlu0 %1204
  %v1206 = vrcp.pop %v1202
  %v1207 = vmul.f32 %v1202, %v1206
  %v1208 = vsub.f32 1.0, %v1207
  %v1209 = vmul.f32 %v1206, %v1208
  %v1210 = vadd.f32 %v1206, %v1209
  %vm1211 = vweird.f32 %v1202
  %vm1212 = vweird.f32 %v1206
  %vm1213 = vmor %vm1211, %vm1212
  %v1214 = vsel %vm1213, %v1206, %v1210
  %v1215 = vand.u32 2147483647, %v1202
  %vm1216 = vcmp.eq.f32.partialorder %v1215, 8.507059e+37
  %v1217 = vand.u32 %v1202, 2147483648
  %v1218 = vor.u32 1.1754944e-38, %v1217
  %v1219 = vsel %vm1216, %v1218, %v1214
  %v1220 = vmul.f32 %v1197, %v1219
  %v1221 = vrcp.pop %v1205
  %v1222 = vmul.f32 %v1205, %v1221
  %v1223 = vsub.f32 1.0, %v1222
  %v1224 = vmul.f32 %v1221, %v1223
  %v1225 = vadd.f32 %v1221, %v1224
  %vm1226 = vweird.f32 %v1205
  %vm1227 = vweird.f32 %v1221
  %vm1228 = vmor %vm1226, %vm1227
  %v1229 = vsel %vm1228, %v1221, %v1225
  %v1230 = vand.u32 2147483647, %v1205
  %vm1231 = vcmp.eq.f32.partialorder %v1230, 8.507059e+37
  %v1232 = vand.u32 %v1205, 2147483648
  %v1233 = vor.u32 1.1754944e-38, %v1232
  %v1234 = vsel %vm1231, %v1233, %v1229
  %v1235 = vmul.f32 %v1199, %v1234
  %1236 = vrot.lane.b32.xlu0 %v149, 40
  %v1237 = vpop.permute.xlu0 %1236
  %1238 = vrot.lane.b32.xlu0 %v152, 40
  %v1239 = vpop.permute.xlu0 %1238
  %v1243 = vsel %vm194, %v1220, 0
  %v1246 = vsel %vm194, %v1235, 0
  %1248 = vmatpush.msra.mxu0 0.0
  %1249 = vmatpush.msra.mxu0 0.0
  %1250 = vmatpush.msra.mxu0 0.0
  %1251 = vmatpush.msra.mxu0 0.0
  %1252 = vmatpush.msra.mxu0 0.0
  %1253 = vmatpush.msra.mxu0 0.0
  %1254 = vmatpush.msra.mxu0 0.0
  %1255 = vmatpush.msra.mxu0 0.0
  %1256 = vmatpush.msra.mxu0 0.0
  %1257 = vmatpush.msra.mxu0 0.0
  %1258 = vmatpush.msra.mxu0 0.0
  %1259 = vmatpush.msra.mxu0 0.0
  %1260 = vmatpush.msra.mxu0 0.0
  %1261 = vmatpush.msra.mxu0 0.0
  %1262 = vmatpush.msra.mxu0 %v1239
  %1263 = vmatpush.msra.mxu0 %v1237
  %1264 = vmatmul.f32.gmra.mxu0 %v1243
  %v1265 = vpop.f32.mrf.mxu0
  %v1266 = vadd.f32 0.0, %v1265
  %1267 = vmatmul.f32.gmra.mxu0 %v1246
  %v1268 = vpop.f32.mrf.mxu0
  %v1269 = vadd.f32 0.0, %v1268
  %1270 = vdwg.mxu0
  %v1272 = vsel %vm160, %v1142, 0
  %v1275 = vsel %vm160, %v1145, 0
  %v1278 = vsel %vm160, %v1266, 0
  %v1281 = vsel %vm160, %v1269, 0
  %1283 = vmatpush.msra.mxu0 0.0
  %1284 = vmatpush.msra.mxu0 0.0
  %1285 = vmatpush.msra.mxu0 0.0
  %1286 = vmatpush.msra.mxu0 0.0
  %1287 = vmatpush.msra.mxu0 0.0
  %1288 = vmatpush.msra.mxu0 0.0
  %1289 = vmatpush.msra.mxu0 0.0
  %1290 = vmatpush.msra.mxu0 0.0
  %1291 = vmatpush.msra.mxu0 0.0
  %1292 = vmatpush.msra.mxu0 0.0
  %1293 = vmatpush.msra.mxu0 0.0
  %1294 = vmatpush.msra.mxu0 0.0
  %1295 = vmatpush.msra.mxu0 0.0
  %1296 = vmatpush.msra.mxu0 0.0
  %1297 = vmatpush.msra.mxu0 0.0
  %1298 = vmatpush.msra.mxu0 %v67
  %1299 = vmatmul.f32.gmra.mxu0 %v1272
  %v1300 = vpop.f32.mrf.mxu0
  %v1301 = vadd.f32 0.0, %v1300
  %1302 = vmatmul.f32.gmra.mxu0 %v1275
  %v1303 = vpop.f32.mrf.mxu0
  %v1304 = vadd.f32 0.0, %v1303
  %1305 = vmatmul.f32.gmra.mxu0 %v1278
  %v1306 = vpop.f32.mrf.mxu0
  %v1307 = vadd.f32 0.0, %v1306
  %1308 = vmatmul.f32.gmra.mxu0 %v1281
  %v1309 = vpop.f32.mrf.mxu0
  %v1310 = vadd.f32 0.0, %v1309
  %1311 = vdwg.mxu0
  %v1312 = vadd.f32 %v1019, %v1301
  %v1313 = vadd.f32 %v1020, %v1304
  %v1314 = vadd.f32 %v1021, %v1307
  %v1315 = vadd.f32 %v1022, %v1310
  %v1316 = vadd.f32 %v48, %v1312
  %v1317 = vadd.f32 %v49, %v1313
  %v1318 = vadd.f32 %v50, %v1314
  %v1319 = vadd.f32 %v51, %v1315
  %v1320 = vld [vmem:[%s4] sm:$0x1]
  %v1322 = vperm.slane %v1320, 0
  %v1324 = vadd.f32 %v1316, %v1322
  %v1325 = vadd.f32 %v1317, %v1322
  %v1326 = vadd.f32 %v1318, %v1322
  %v1327 = vadd.f32 %v1319, %v1322
  %v1328 = vld [vmem:[%s5] sm:$0x1]
  %v1329 = vld [vmem:[%s6] sm:$0x1]
  %v1330 = vsel %vm112, %v1324, 0.0
  %1331 = vadd.xlane.f32.xlu0 %v1330
  %v1332 = vpop.xlane.xlu0 %1331
  %v1333 = vsel %vm112, %v1325, 0.0
  %1334 = vadd.xlane.f32.xlu0 %v1333
  %v1335 = vpop.xlane.xlu0 %1334
  %v1336 = vsel %vm112, %v1326, 0.0
  %1337 = vadd.xlane.f32.xlu0 %v1336
  %v1338 = vpop.xlane.xlu0 %1337
  %v1339 = vsel %vm112, %v1327, 0.0
  %1340 = vadd.xlane.f32.xlu0 %v1339
  %v1341 = vpop.xlane.xlu0 %1340
  %v1342 = vrcp.pop 32.0
  %v1343 = vmul.f32 32.0, %v1342
  %v1344 = vsub.f32 1.0, %v1343
  %v1345 = vmul.f32 %v1342, %v1344
  %v1346 = vadd.f32 %v1342, %v1345
  %vm1347 = vweird.f32 %v1342
  %v1348 = vsel %vm1347, %v1342, %v1346
  %v1349 = vmul.f32 %v1332, %v1348
  %v1350 = vmul.f32 %v1335, %v1348
  %v1351 = vmul.f32 %v1338, %v1348
  %v1352 = vmul.f32 %v1341, %v1348
  %v1353 = vsub.f32 %v1324, %v1349
  %v1354 = vsub.f32 %v1325, %v1350
  %v1355 = vsub.f32 %v1326, %v1351
  %v1356 = vsub.f32 %v1327, %v1352
  %v1357 = vmul.f32 %v1353, %v1353
  %v1358 = vmul.f32 %v1354, %v1354
  %v1359 = vmul.f32 %v1355, %v1355
  %v1360 = vmul.f32 %v1356, %v1356
  %v1361 = vsel %vm112, %v1357, 0.0
  %1362 = vadd.xlane.f32.xlu0 %v1361
  %v1363 = vpop.xlane.xlu0 %1362
  %v1364 = vsel %vm112, %v1358, 0.0
  %1365 = vadd.xlane.f32.xlu0 %v1364
  %v1366 = vpop.xlane.xlu0 %1365
  %v1367 = vsel %vm112, %v1359, 0.0
  %1368 = vadd.xlane.f32.xlu0 %v1367
  %v1369 = vpop.xlane.xlu0 %1368
  %v1370 = vsel %vm112, %v1360, 0.0
  %1371 = vadd.xlane.f32.xlu0 %v1370
  %v1372 = vpop.xlane.xlu0 %1371
  %v1373 = vmul.f32 %v1363, %v1348
  %v1374 = vmul.f32 %v1366, %v1348
  %v1375 = vmul.f32 %v1369, %v1348
  %v1376 = vmul.f32 %v1372, %v1348
  %v1377 = vadd.f32 %v1373, 1e-05
  %v1378 = vadd.f32 %v1374, 1e-05
  %v1379 = vadd.f32 %v1375, 1e-05
  %v1380 = vadd.f32 %v1376, 1e-05
  %v1381 = vrsqrt.pop %v1377
  %v1382 = vmul.f32 %v1381, %v1377
  %v1383 = vmul.f32 %v1382, %v1381
  %v1384 = vmul.f32 0.5, %v1383
  %v1385 = vsub.f32 1.5, %v1384
  %v1386 = vmul.f32 %v1381, %v1385
  %vm1387 = vweird.f32 %v1377
  %vm1388 = vweird.f32 %v1381
  %vm1389 = vmor %vm1387, %vm1388
  %v1390 = vsel %vm1389, %v1381, %v1386
  %v1391 = vrsqrt.pop %v1378
  %v1392 = vmul.f32 %v1391, %v1378
  %v1393 = vmul.f32 %v1392, %v1391
  %v1394 = vmul.f32 0.5, %v1393
  %v1395 = vsub.f32 1.5, %v1394
  %v1396 = vmul.f32 %v1391, %v1395
  %vm1397 = vweird.f32 %v1378
  %vm1398 = vweird.f32 %v1391
  %vm1399 = vmor %vm1397, %vm1398
  %v1400 = vsel %vm1399, %v1391, %v1396
  %v1401 = vrsqrt.pop %v1379
  %v1402 = vmul.f32 %v1401, %v1379
  %v1403 = vmul.f32 %v1402, %v1401
  %v1404 = vmul.f32 0.5, %v1403
  %v1405 = vsub.f32 1.5, %v1404
  %v1406 = vmul.f32 %v1401, %v1405
  %vm1407 = vweird.f32 %v1379
  %vm1408 = vweird.f32 %v1401
  %vm1409 = vmor %vm1407, %vm1408
  %v1410 = vsel %vm1409, %v1401, %v1406
  %v1411 = vrsqrt.pop %v1380
  %v1412 = vmul.f32 %v1411, %v1380
  %v1413 = vmul.f32 %v1412, %v1411
  %v1414 = vmul.f32 0.5, %v1413
  %v1415 = vsub.f32 1.5, %v1414
  %v1416 = vmul.f32 %v1411, %v1415
  %vm1417 = vweird.f32 %v1380
  %vm1418 = vweird.f32 %v1411
  %vm1419 = vmor %vm1417, %vm1418
  %v1420 = vsel %vm1419, %v1411, %v1416
  %v1421 = vmul.f32 %v1353, %v1390
  %v1422 = vmul.f32 %v1354, %v1400
  %v1423 = vmul.f32 %v1355, %v1410
  %v1424 = vmul.f32 %v1356, %v1420
  %v1426 = vperm.slane %v1328, 0
  %v1428 = vmul.f32 %v1421, %v1426
  %v1429 = vmul.f32 %v1422, %v1426
  %v1430 = vmul.f32 %v1423, %v1426
  %v1431 = vmul.f32 %v1424, %v1426
  %v1433 = vperm.slane %v1329, 0
  %v1435 = vadd.f32 %v1428, %v1433
  %v1436 = vadd.f32 %v1429, %v1433
  %v1437 = vadd.f32 %v1430, %v1433
  %v1438 = vadd.f32 %v1431, %v1433
  %v1439 = vld [vmem:[%s8] sm:$0x1]
  %v1441 = vperm.slane %v1439, 0
  %v1444 = vsel %vm112, %v1435, 0
  %v1447 = vsel %vm112, %v1436, 0
  %v1450 = vsel %vm112, %v1437, 0
  %v1453 = vsel %vm112, %v1438, 0
  %1455 = vmatpush.msra.mxu0 0.0
  %1456 = vmatpush.msra.mxu0 0.0
  %1457 = vmatpush.msra.mxu0 0.0
  %1458 = vmatpush.msra.mxu0 0.0
  %1459 = vmatpush.msra.mxu0 0.0
  %1460 = vmatpush.msra.mxu0 0.0
  %1461 = vmatpush.msra.mxu0 0.0
  %1462 = vmatpush.msra.mxu0 0.0
  %1463 = vmatpush.msra.mxu0 0.0
  %1464 = vmatpush.msra.mxu0 0.0
  %1465 = vmatpush.msra.mxu0 0.0
  %1466 = vmatpush.msra.mxu0 0.0
  %1467 = vmatpush.msra.mxu0 %v75
  %1468 = vmatpush.msra.mxu0 %v74
  %1469 = vmatpush.msra.mxu0 %v73
  %1470 = vmatpush.msra.mxu0 %v72
  %1471 = vmatmul.f32.gmra.mxu0 %v1444
  %v1472 = vpop.f32.mrf.mxu0
  %v1473 = vadd.f32 %v1441, %v1472
  %1474 = vmatmul.f32.gmra.mxu0 %v1447
  %v1475 = vpop.f32.mrf.mxu0
  %v1476 = vadd.f32 %v1441, %v1475
  %1477 = vmatmul.f32.gmra.mxu0 %v1450
  %v1478 = vpop.f32.mrf.mxu0
  %v1479 = vadd.f32 %v1441, %v1478
  %1480 = vmatmul.f32.gmra.mxu0 %v1453
  %v1481 = vpop.f32.mrf.mxu0
  %v1482 = vadd.f32 %v1441, %v1481
  %1483 = vdwg.mxu0
  %v1484 = vmax.f32 %v1473, 0.0
  %v1485 = vmax.f32 %v1476, 0.0
  %v1486 = vmax.f32 %v1479, 0.0
  %v1487 = vmax.f32 %v1482, 0.0
  %1488 = vmatpush.msra.mxu0 %v107
  %1489 = vmatpush.msra.mxu0 %v106
  %1490 = vmatpush.msra.mxu0 %v105
  %1491 = vmatpush.msra.mxu0 %v104
  %1492 = vmatpush.msra.mxu0 %v103
  %1493 = vmatpush.msra.mxu0 %v102
  %1494 = vmatpush.msra.mxu0 %v101
  %1495 = vmatpush.msra.mxu0 %v100
  %1496 = vmatpush.msra.mxu0 %v99
  %1497 = vmatpush.msra.mxu0 %v98
  %1498 = vmatpush.msra.mxu0 %v97
  %1499 = vmatpush.msra.mxu0 %v96
  %1500 = vmatpush.msra.mxu0 %v95
  %1501 = vmatpush.msra.mxu0 %v94
  %1502 = vmatpush.msra.mxu0 %v93
  %1503 = vmatpush.msra.mxu0 %v92
  %1504 = vmatmul.f32.gmra.mxu0 %v1484
  %v1505 = vpop.f32.mrf.mxu0
  %v1506 = vadd.f32 0.0, %v1505
  %1507 = vmatmul.f32.gmra.mxu0 %v1485
  %v1508 = vpop.f32.mrf.mxu0
  %v1509 = vadd.f32 0.0, %v1508
  %1510 = vmatmul.f32.gmra.mxu0 %v1486
  %v1511 = vpop.f32.mrf.mxu0
  %v1512 = vadd.f32 0.0, %v1511
  %1513 = vmatmul.f32.gmra.mxu0 %v1487
  %v1514 = vpop.f32.mrf.mxu0
  %v1515 = vadd.f32 0.0, %v1514
  %1516 = vdwg.mxu0
  %v1517 = vadd.f32 %v1435, %v1506
  %v1518 = vadd.f32 %v1436, %v1509
  %v1519 = vadd.f32 %v1437, %v1512
  %v1520 = vadd.f32 %v1438, %v1515
  %v1521 = vld [vmem:[%s10] sm:$0x1]
  %v1523 = vperm.slane %v1521, 0
  %v1525 = vadd.f32 %v1517, %v1523
  %v1526 = vadd.f32 %v1518, %v1523
  %v1527 = vadd.f32 %v1519, %v1523
  %v1528 = vadd.f32 %v1520, %v1523
  %v1529 = vld [vmem:[%s11] sm:$0x1]
  %v1530 = vld [vmem:[%s12] sm:$0x1]
  %v1531 = vsel %vm112, %v1525, 0.0
  %1532 = vadd.xlane.f32.xlu0 %v1531
  %v1533 = vpop.xlane.xlu0 %1532
  %v1534 = vsel %vm112, %v1526, 0.0
  %1535 = vadd.xlane.f32.xlu0 %v1534
  %v1536 = vpop.xlane.xlu0 %1535
  %v1537 = vsel %vm112, %v1527, 0.0
  %1538 = vadd.xlane.f32.xlu0 %v1537
  %v1539 = vpop.xlane.xlu0 %1538
  %v1540 = vsel %vm112, %v1528, 0.0
  %1541 = vadd.xlane.f32.xlu0 %v1540
  %v1542 = vpop.xlane.xlu0 %1541
  %v1543 = vmul.f32 %v1533, %v1348
  %v1544 = vmul.f32 %v1536, %v1348
  %v1545 = vmul.f32 %v1539, %v1348
  %v1546 = vmul.f32 %v1542, %v1348
  %v1547 = vsub.f32 %v1525, %v1543
  %v1548 = vsub.f32 %v1526, %v1544
  %v1549 = vsub.f32 %v1527, %v1545
  %v1550 = vsub.f32 %v1528, %v1546
  %v1551 = vmul.f32 %v1547, %v1547
  %v1552 = vmul.f32 %v1548, %v1548
  %v1553 = vmul.f32 %v1549, %v1549
  %v1554 = vmul.f32 %v1550, %v1550
  %v1555 = vsel %vm112, %v1551, 0.0
  %1556 = vadd.xlane.f32.xlu0 %v1555
  %v1557 = vpop.xlane.xlu0 %1556
  %v1558 = vsel %vm112, %v1552, 0.0
  %1559 = vadd.xlane.f32.xlu0 %v1558
  %v1560 = vpop.xlane.xlu0 %1559
  %v1561 = vsel %vm112, %v1553, 0.0
  %1562 = vadd.xlane.f32.xlu0 %v1561
  %v1563 = vpop.xlane.xlu0 %1562
  %v1564 = vsel %vm112, %v1554, 0.0
  %1565 = vadd.xlane.f32.xlu0 %v1564
  %v1566 = vpop.xlane.xlu0 %1565
  %v1567 = vmul.f32 %v1557, %v1348
  %v1568 = vmul.f32 %v1560, %v1348
  %v1569 = vmul.f32 %v1563, %v1348
  %v1570 = vmul.f32 %v1566, %v1348
  %v1571 = vadd.f32 %v1567, 1e-05
  %v1572 = vadd.f32 %v1568, 1e-05
  %v1573 = vadd.f32 %v1569, 1e-05
  %v1574 = vadd.f32 %v1570, 1e-05
  %v1575 = vrsqrt.pop %v1571
  %v1576 = vmul.f32 %v1575, %v1571
  %v1577 = vmul.f32 %v1576, %v1575
  %v1578 = vmul.f32 0.5, %v1577
  %v1579 = vsub.f32 1.5, %v1578
  %v1580 = vmul.f32 %v1575, %v1579
  %vm1581 = vweird.f32 %v1571
  %vm1582 = vweird.f32 %v1575
  %vm1583 = vmor %vm1581, %vm1582
  %v1584 = vsel %vm1583, %v1575, %v1580
  %v1585 = vrsqrt.pop %v1572
  %v1586 = vmul.f32 %v1585, %v1572
  %v1587 = vmul.f32 %v1586, %v1585
  %v1588 = vmul.f32 0.5, %v1587
  %v1589 = vsub.f32 1.5, %v1588
  %v1590 = vmul.f32 %v1585, %v1589
  %vm1591 = vweird.f32 %v1572
  %vm1592 = vweird.f32 %v1585
  %vm1593 = vmor %vm1591, %vm1592
  %v1594 = vsel %vm1593, %v1585, %v1590
  %v1595 = vrsqrt.pop %v1573
  %v1596 = vmul.f32 %v1595, %v1573
  %v1597 = vmul.f32 %v1596, %v1595
  %v1598 = vmul.f32 0.5, %v1597
  %v1599 = vsub.f32 1.5, %v1598
  %v1600 = vmul.f32 %v1595, %v1599
  %vm1601 = vweird.f32 %v1573
  %vm1602 = vweird.f32 %v1595
  %vm1603 = vmor %vm1601, %vm1602
  %v1604 = vsel %vm1603, %v1595, %v1600
  %v1605 = vrsqrt.pop %v1574
  %v1606 = vmul.f32 %v1605, %v1574
  %v1607 = vmul.f32 %v1606, %v1605
  %v1608 = vmul.f32 0.5, %v1607
  %v1609 = vsub.f32 1.5, %v1608
  %v1610 = vmul.f32 %v1605, %v1609
  %vm1611 = vweird.f32 %v1574
  %vm1612 = vweird.f32 %v1605
  %vm1613 = vmor %vm1611, %vm1612
  %v1614 = vsel %vm1613, %v1605, %v1610
  %v1615 = vmul.f32 %v1547, %v1584
  %v1616 = vmul.f32 %v1548, %v1594
  %v1617 = vmul.f32 %v1549, %v1604
  %v1618 = vmul.f32 %v1550, %v1614
  %v1620 = vperm.slane %v1529, 0
  %v1622 = vmul.f32 %v1615, %v1620
  %v1623 = vmul.f32 %v1616, %v1620
  %v1624 = vmul.f32 %v1617, %v1620
  %v1625 = vmul.f32 %v1618, %v1620
  %v1627 = vperm.slane %v1530, 0
  %v1629 = vadd.f32 %v1622, %v1627
  %v1630 = vadd.f32 %v1623, %v1627
  %v1631 = vadd.f32 %v1624, %v1627
  %v1632 = vadd.f32 %v1625, %v1627
  %v1633 = vpack.c.bf16 %v1629, %v1629
  %v1634 = vpack.c.bf16 %v1630, %v1630
  %v1635 = vpack.c.bf16 %v1631, %v1631
  %v1636 = vpack.c.bf16 %v1632, %v1632
  %vm1637 = vcmask 257024
  %1638 = vst.msk [vmem:[%s13] sm:$0xf] %vm1637, %v1633
  %1639 = vst.msk [vmem:[%s13 + $0x4] sm:$0xf] %vm1637, %v1634
  %1640 = vst.msk [vmem:[%s13 + $0x8] sm:$0xf] %vm1637, %v1635
  %1641 = vst.msk [vmem:[%s13 + $0xc] sm:$0xf] %vm1637, %v1636
  // Predicated region
  $region54: #{depth_star_forward.21} parent=0 // pred_check
    _
  $region55: #{depth_star_forward.21} parent=0 // pred_check_branch
    %1643 = sbr.rel (0) target = $region57
  $region56: #{depth_star_forward.21} parent=0 // pred_region
    _
  $region57: #{depth_star_forward.21} parent=0 // pred_fallthru
    _
  // Predicated region
  $region58: #{depth_star_forward.21} parent=0 // pred_check
    _
  $region59: #{depth_star_forward.21} parent=0 // pred_check_branch
    %1645 = sbr.rel (0) target = $region61
  $region60: #{depth_star_forward.21} parent=0 // pred_region
    _
  $region61: #{depth_star_forward.21} parent=0 // pred_fallthru
    _

// kernel: depth_star_forward.26
$region0: #{depth_star_forward.26}
  #allocation0 [shape = 'u32[]', space=smem, size = 0x4, offset = 0x4, fixed_abs, tag = 'smem constant byte address 0x4 - core index']
  #allocation1 [shape = 'u32[72,128]{1,0:T(1,128)}', space=vmem, size = 0x9000, scoped, tag = 'internal scratch']
  %s0 = inlined_call_operand.vmem [shape: bf16[128,1152], index: 0, kind: input, shape index: {}]
  %s1 = inlined_call_operand.vmem [shape: bf16[1152,256], index: 1, kind: input, shape index: {}]
  %s2 = inlined_call_operand.vmem [shape: f32[1,256], index: 2, kind: input, shape index: {}]
  %s3 = inlined_call_operand.vmem [shape: bf16[128,256], index: 3, kind: output, shape index: {}]
  %s4 = sld [smem:[#allocation0]]
  $region22: #{depth_star_forward.26} parent=0
    _
  %s6 = ssub.s32 1, %s4
  %s7 = scalar_select 0, %s6, %s4
  // Predicated region
  $region2: #{depth_star_forward.26} parent=0 // pred_check
    _
  $region3: #{depth_star_forward.26} parent=0 // pred_check_branch
    %9 = sbr.rel (0) target = $region5
  $region4: #{depth_star_forward.26} parent=0 // pred_region
    _
  $region5: #{depth_star_forward.26} parent=0 // pred_fallthru
    _
  // Predicated region
  $region6: #{depth_star_forward.26} parent=0 // pred_check
    _
  $region7: #{depth_star_forward.26} parent=0 // pred_check_branch
    %11 = sbr.rel (0) target = $region9
  $region8: #{depth_star_forward.26} parent=0 // pred_region
    _
  $region9: #{depth_star_forward.26} parent=0 // pred_fallthru
    _
  // Predicated region
  $region10: #{depth_star_forward.26} parent=0 // pred_check
    _
  $region11: #{depth_star_forward.26} parent=0 // pred_check_branch
    %13 = sbr.rel (0) target = $region13
  $region12: #{depth_star_forward.26} parent=0 // pred_region
    _
  $region13: #{depth_star_forward.26} parent=0 // pred_fallthru
    _
  %v14 = vld [vmem:[%s0] sm:$0xff]
  %v15 = vld [vmem:[%s0 + $0x8] sm:$0xff]
  %v16 = vld [vmem:[%s0 + $0x10] sm:$0xff]
  %v17 = vld [vmem:[%s0 + $0x18] sm:$0xff]
  %v18 = vld [vmem:[%s0 + $0x20] sm:$0xf]
  %v19 = vld [vmem:[%s0 + $0x24] sm:$0xff]
  %v20 = vld [vmem:[%s0 + $0x2c] sm:$0xff]
  %v21 = vld [vmem:[%s0 + $0x34] sm:$0xff]
  %v22 = vld [vmem:[%s0 + $0x3c] sm:$0xff]
  %v23 = vld [vmem:[%s0 + $0x44] sm:$0xf]
  %v24 = vld [vmem:[%s0 + $0x48] sm:$0xff]
  %v25 = vld [vmem:[%s0 + $0x50] sm:$0xff]
  %v26 = vld [vmem:[%s0 + $0x58] sm:$0xff]
  %v27 = vld [vmem:[%s0 + $0x60] sm:$0xff]
  %v28 = vld [vmem:[%s0 + $0x68] sm:$0xf]
  %v29 = vld [vmem:[%s0 + $0x6c] sm:$0xff]
  %v30 = vld [vmem:[%s0 + $0x74] sm:$0xff]
  %v31 = vld [vmem:[%s0 + $0x7c] sm:$0xff]
  %v32 = vld [vmem:[%s0 + $0x84] sm:$0xff]
  %v33 = vld [vmem:[%s0 + $0x8c] sm:$0xf]
  %v34 = vld [vmem:[%s0 + $0x90] sm:$0xff]
  %v35 = vld [vmem:[%s0 + $0x98] sm:$0xff]
  %v36 = vld [vmem:[%s0 + $0xa0] sm:$0xff]
  %v37 = vld [vmem:[%s0 + $0xa8] sm:$0xff]
  %v38 = vld [vmem:[%s0 + $0xb0] sm:$0xf]
  %v39 = vld [vmem:[%s0 + $0xb4] sm:$0xff]
  %v40 = vld [vmem:[%s0 + $0xbc] sm:$0xff]
  %v41 = vld [vmem:[%s0 + $0xc4] sm:$0xff]
  %v42 = vld [vmem:[%s0 + $0xcc] sm:$0xff]
  %v43 = vld [vmem:[%s0 + $0xd4] sm:$0xf]
  %v44 = vld [vmem:[%s0 + $0xd8] sm:$0xff]
  %v45 = vld [vmem:[%s0 + $0xe0] sm:$0xff]
  %v46 = vld [vmem:[%s0 + $0xe8] sm:$0xff]
  %v47 = vld [vmem:[%s0 + $0xf0] sm:$0xff]
  %v48 = vld [vmem:[%s0 + $0xf8] sm:$0xf]
  %v49 = vld [vmem:[%s0 + $0xfc] sm:$0xff]
  %v50 = vld [vmem:[%s0 + $0x104] sm:$0xff]
  %v51 = vld [vmem:[%s0 + $0x10c] sm:$0xff]
  %v52 = vld [vmem:[%s0 + $0x114] sm:$0xff]
  %v53 = vld [vmem:[%s0 + $0x11c] sm:$0xf]
  %v54 = vld [vmem:[%s0 + $0x120] sm:$0xff]
  %v55 = vld [vmem:[%s0 + $0x128] sm:$0xff]
  %v56 = vld [vmem:[%s0 + $0x130] sm:$0xff]
  %v57 = vld [vmem:[%s0 + $0x138] sm:$0xff]
  %v58 = vld [vmem:[%s0 + $0x140] sm:$0xf]
  %v59 = vld [vmem:[%s0 + $0x144] sm:$0xff]
  %v60 = vld [vmem:[%s0 + $0x14c] sm:$0xff]
  %v61 = vld [vmem:[%s0 + $0x154] sm:$0xff]
  %v62 = vld [vmem:[%s0 + $0x15c] sm:$0xff]
  %v63 = vld [vmem:[%s0 + $0x164] sm:$0xf]
  %v64 = vld [vmem:[%s0 + $0x168] sm:$0xff]
  %v65 = vld [vmem:[%s0 + $0x170] sm:$0xff]
  %v66 = vld [vmem:[%s0 + $0x178] sm:$0xff]
  %v67 = vld [vmem:[%s0 + $0x180] sm:$0xff]
  %v68 = vld [vmem:[%s0 + $0x188] sm:$0xf]
  %v69 = vld [vmem:[%s0 + $0x18c] sm:$0xff]
  %v70 = vld [vmem:[%s0 + $0x194] sm:$0xff]
  %v71 = vld [vmem:[%s0 + $0x19c] sm:$0xff]
  %v72 = vld [vmem:[%s0 + $0x1a4] sm:$0xff]
  %v73 = vld [vmem:[%s0 + $0x1ac] sm:$0xf]
  %v74 = vld [vmem:[%s0 + $0x1b0] sm:$0xff]
  %v75 = vld [vmem:[%s0 + $0x1b8] sm:$0xff]
  %v76 = vld [vmem:[%s0 + $0x1c0] sm:$0xff]
  %v77 = vld [vmem:[%s0 + $0x1c8] sm:$0xff]
  %v78 = vld [vmem:[%s0 + $0x1d0] sm:$0xf]
  %v79 = vld [vmem:[%s0 + $0x1d4] sm:$0xff]
  %v80 = vld [vmem:[%s0 + $0x1dc] sm:$0xff]
  %v81 = vld [vmem:[%s0 + $0x1e4] sm:$0xff]
  %v82 = vld [vmem:[%s0 + $0x1ec] sm:$0xff]
  %v83 = vld [vmem:[%s0 + $0x1f4] sm:$0xf]
  %v84 = vld [vmem:[%s0 + $0x1f8] sm:$0xff]
  %v85 = vld [vmem:[%s0 + $0x200] sm:$0xff]
  %v86 = vld [vmem:[%s0 + $0x208] sm:$0xff]
  %v87 = vld [vmem:[%s0 + $0x210] sm:$0xff]
  %v88 = vld [vmem:[%s0 + $0x218] sm:$0xf]
  %v89 = vld [vmem:[%s0 + $0x21c] sm:$0xff]
  %v90 = vld [vmem:[%s0 + $0x224] sm:$0xff]
  %v91 = vld [vmem:[%s0 + $0x22c] sm:$0xff]
  %v92 = vld [vmem:[%s0 + $0x234] sm:$0xff]
  %v93 = vld [vmem:[%s0 + $0x23c] sm:$0xf]
  %v94 = vld [vmem:[%s1] sm:$0xff]
  %v95 = vld [vmem:[%s1 + $0x8] sm:$0xff]
  %v96 = vld [vmem:[%s1 + $0x10] sm:$0xff]
  %v97 = vld [vmem:[%s1 + $0x18] sm:$0xff]
  %v98 = vld [vmem:[%s1 + $0x20] sm:$0xff]
  %v99 = vld [vmem:[%s1 + $0x28] sm:$0xff]
  %v100 = vld [vmem:[%s1 + $0x30] sm:$0xff]
  %v101 = vld [vmem:[%s1 + $0x38] sm:$0xff]
  %v102 = vld [vmem:[%s1 + $0x40] sm:$0xff]
  %v103 = vld [vmem:[%s1 + $0x48] sm:$0xff]
  %v104 = vld [vmem:[%s1 + $0x50] sm:$0xff]
  %v105 = vld [vmem:[%s1 + $0x58] sm:$0xff]
  %v106 = vld [vmem:[%s1 + $0x60] sm:$0xff]
  %v107 = vld [vmem:[%s1 + $0x68] sm:$0xff]
  %v108 = vld [vmem:[%s1 + $0x70] sm:$0xff]
  %v109 = vld [vmem:[%s1 + $0x78] sm:$0xff]
  %v110 = vld [vmem:[%s1 + $0x80] sm:$0xff]
  %v111 = vld [vmem:[%s1 + $0x88] sm:$0xff]
  %v112 = vld [vmem:[%s1 + $0x90] sm:$0xff]
  %v113 = vld [vmem:[%s1 + $0x98] sm:$0xff]
  %v114 = vld [vmem:[%s1 + $0xa0] sm:$0xff]
  %v115 = vld [vmem:[%s1 + $0xa8] sm:$0xff]
  %v116 = vld [vmem:[%s1 + $0xb0] sm:$0xff]
  %v117 = vld [vmem:[%s1 + $0xb8] sm:$0xff]
  %v118 = vld [vmem:[%s1 + $0xc0] sm:$0xff]
  %v119 = vld [vmem:[%s1 + $0xc8] sm:$0xff]
  %v120 = vld [vmem:[%s1 + $0xd0] sm:$0xff]
  %v121 = vld [vmem:[%s1 + $0xd8] sm:$0xff]
  %v122 = vld [vmem:[%s1 + $0xe0] sm:$0xff]
  %v123 = vld [vmem:[%s1 + $0xe8] sm:$0xff]
  %v124 = vld [vmem:[%s1 + $0xf0] sm:$0xff]
  %v125 = vld [vmem:[%s1 + $0xf8] sm:$0xff]
  %v126 = vld [vmem:[%s1 + $0x100] sm:$0xff]
  %v127 = vld [vmem:[%s1 + $0x108] sm:$0xff]
  %v128 = vld [vmem:[%s1 + $0x110] sm:$0xff]
  %v129 = vld [vmem:[%s1 + $0x118] sm:$0xff]
  %v130 = vld [vmem:[%s1 + $0x120] sm:$0xff]
  %v131 = vld [vmem:[%s1 + $0x128] sm:$0xff]
  %v132 = vld [vmem:[%s1 + $0x130] sm:$0xff]
  %v133 = vld [vmem:[%s1 + $0x138] sm:$0xff]
  %v134 = vld [vmem:[%s1 + $0x140] sm:$0xff]
  %v135 = vld [vmem:[%s1 + $0x148] sm:$0xff]
  %v136 = vld [vmem:[%s1 + $0x150] sm:$0xff]
  %v137 = vld [vmem:[%s1 + $0x158] sm:$0xff]
  %v138 = vld [vmem:[%s1 + $0x160] sm:$0xff]
  %v139 = vld [vmem:[%s1 + $0x168] sm:$0xff]
  %v140 = vld [vmem:[%s1 + $0x170] sm:$0xff]
  %v141 = vld [vmem:[%s1 + $0x178] sm:$0xff]
  %v142 = vld [vmem:[%s1 + $0x180] sm:$0xff]
  %v143 = vld [vmem:[%s1 + $0x188] sm:$0xff]
  %v144 = vld [vmem:[%s1 + $0x190] sm:$0xff]
  %v145 = vld [vmem:[%s1 + $0x198] sm:$0xff]
  %v146 = vld [vmem:[%s1 + $0x1a0] sm:$0xff]
  %v147 = vld [vmem:[%s1 + $0x1a8] sm:$0xff]
  %v148 = vld [vmem:[%s1 + $0x1b0] sm:$0xff]
  %v149 = vld [vmem:[%s1 + $0x1b8] sm:$0xff]
  %v150 = vld [vmem:[%s1 + $0x1c0] sm:$0xff]
  %v151 = vld [vmem:[%s1 + $0x1c8] sm:$0xff]
  %v152 = vld [vmem:[%s1 + $0x1d0] sm:$0xff]
  %v153 = vld [vmem:[%s1 + $0x1d8] sm:$0xff]
  %v154 = vld [vmem:[%s1 + $0x1e0] sm:$0xff]
  %v155 = vld [vmem:[%s1 + $0x1e8] sm:$0xff]
  %v156 = vld [vmem:[%s1 + $0x1f0] sm:$0xff]
  %v157 = vld [vmem:[%s1 + $0x1f8] sm:$0xff]
  %v158 = vld [vmem:[%s1 + $0x200] sm:$0xff]
  %v159 = vld [vmem:[%s1 + $0x208] sm:$0xff]
  %v160 = vld [vmem:[%s1 + $0x210] sm:$0xff]
  %v161 = vld [vmem:[%s1 + $0x218] sm:$0xff]
  %v162 = vld [vmem:[%s1 + $0x220] sm:$0xff]
  %v163 = vld [vmem:[%s1 + $0x228] sm:$0xff]
  %v164 = vld [vmem:[%s1 + $0x230] sm:$0xff]
  %v165 = vld [vmem:[%s1 + $0x238] sm:$0xff]
  %v166 = vld [vmem:[%s1 + $0x240] sm:$0xff]
  %v167 = vld [vmem:[%s1 + $0x248] sm:$0xff]
  %v168 = vld [vmem:[%s1 + $0x250] sm:$0xff]
  %v169 = vld [vmem:[%s1 + $0x258] sm:$0xff]
  %v170 = vld [vmem:[%s1 + $0x260] sm:$0xff]
  %v171 = vld [vmem:[%s1 + $0x268] sm:$0xff]
  %v172 = vld [vmem:[%s1 + $0x270] sm:$0xff]
  %v173 = vld [vmem:[%s1 + $0x278] sm:$0xff]
  %v174 = vld [vmem:[%s1 + $0x280] sm:$0xff]
  %v175 = vld [vmem:[%s1 + $0x288] sm:$0xff]
  %v176 = vld [vmem:[%s1 + $0x290] sm:$0xff]
  %v177 = vld [vmem:[%s1 + $0x298] sm:$0xff]
  %v178 = vld [vmem:[%s1 + $0x2a0] sm:$0xff]
  %v179 = vld [vmem:[%s1 + $0x2a8] sm:$0xff]
  %v180 = vld [vmem:[%s1 + $0x2b0] sm:$0xff]
  %v181 = vld [vmem:[%s1 + $0x2b8] sm:$0xff]
  %v182 = vld [vmem:[%s1 + $0x2c0] sm:$0xff]
  %v183 = vld [vmem:[%s1 + $0x2c8] sm:$0xff]
  %v184 = vld [vmem:[%s1 + $0x2d0] sm:$0xff]
  %v185 = vld [vmem:[%s1 + $0x2d8] sm:$0xff]
  %v186 = vld [vmem:[%s1 + $0x2e0] sm:$0xff]
  %v187 = vld [vmem:[%s1 + $0x2e8] sm:$0xff]
  %v188 = vld [vmem:[%s1 + $0x2f0] sm:$0xff]
  %v189 = vld [vmem:[%s1 + $0x2f8] sm:$0xff]
  %v190 = vld [vmem:[%s1 + $0x300] sm:$0xff]
  %v191 = vld [vmem:[%s1 + $0x308] sm:$0xff]
  %v192 = vld [vmem:[%s1 + $0x310] sm:$0xff]
  %v193 = vld [vmem:[%s1 + $0x318] sm:$0xff]
  %v194 = vld [vmem:[%s1 + $0x320] sm:$0xff]
  %v195 = vld [vmem:[%s1 + $0x328] sm:$0xff]
  %v196 = vld [vmem:[%s1 + $0x330] sm:$0xff]
  %v197 = vld [vmem:[%s1 + $0x338] sm:$0xff]
  %v198 = vld [vmem:[%s1 + $0x340] sm:$0xff]
  %v199 = vld [vmem:[%s1 + $0x348] sm:$0xff]
  %v200 = vld [vmem:[%s1 + $0x350] sm:$0xff]
  %v201 = vld [vmem:[%s1 + $0x358] sm:$0xff]
  %v202 = vld [vmem:[%s1 + $0x360] sm:$0xff]
  %v203 = vld [vmem:[%s1 + $0x368] sm:$0xff]
  %v204 = vld [vmem:[%s1 + $0x370] sm:$0xff]
  %v205 = vld [vmem:[%s1 + $0x378] sm:$0xff]
  %v206 = vld [vmem:[%s1 + $0x380] sm:$0xff]
  %v207 = vld [vmem:[%s1 + $0x388] sm:$0xff]
  %v208 = vld [vmem:[%s1 + $0x390] sm:$0xff]
  %v209 = vld [vmem:[%s1 + $0x398] sm:$0xff]
  %v210 = vld [vmem:[%s1 + $0x3a0] sm:$0xff]
  %v211 = vld [vmem:[%s1 + $0x3a8] sm:$0xff]
  %v212 = vld [vmem:[%s1 + $0x3b0] sm:$0xff]
  %v213 = vld [vmem:[%s1 + $0x3b8] sm:$0xff]
  %v214 = vld [vmem:[%s1 + $0x3c0] sm:$0xff]
  %v215 = vld [vmem:[%s1 + $0x3c8] sm:$0xff]
  %v216 = vld [vmem:[%s1 + $0x3d0] sm:$0xff]
  %v217 = vld [vmem:[%s1 + $0x3d8] sm:$0xff]
  %v218 = vld [vmem:[%s1 + $0x3e0] sm:$0xff]
  %v219 = vld [vmem:[%s1 + $0x3e8] sm:$0xff]
  %v220 = vld [vmem:[%s1 + $0x3f0] sm:$0xff]
  %v221 = vld [vmem:[%s1 + $0x3f8] sm:$0xff]
  %v222 = vld [vmem:[%s1 + $0x400] sm:$0xff]
  %v223 = vld [vmem:[%s1 + $0x408] sm:$0xff]
  %v224 = vld [vmem:[%s1 + $0x410] sm:$0xff]
  %v225 = vld [vmem:[%s1 + $0x418] sm:$0xff]
  %v226 = vld [vmem:[%s1 + $0x420] sm:$0xff]
  %v227 = vld [vmem:[%s1 + $0x428] sm:$0xff]
  %v228 = vld [vmem:[%s1 + $0x430] sm:$0xff]
  %v229 = vld [vmem:[%s1 + $0x438] sm:$0xff]
  %v230 = vld [vmem:[%s1 + $0x440] sm:$0xff]
  %v231 = vld [vmem:[%s1 + $0x448] sm:$0xff]
  %v232 = vld [vmem:[%s1 + $0x450] sm:$0xff]
  %v233 = vld [vmem:[%s1 + $0x458] sm:$0xff]
  %v234 = vld [vmem:[%s1 + $0x460] sm:$0xff]
  %v235 = vld [vmem:[%s1 + $0x468] sm:$0xff]
  %v236 = vld [vmem:[%s1 + $0x470] sm:$0xff]
  %v237 = vld [vmem:[%s1 + $0x478] sm:$0xff]
  %v238 = vld [vmem:[%s2] sm:$0x3]
  %v240 = vperm.slane %v238, 0
  %v241 = vperm.slane %v238, 1
  %v324 = vunpack.c.l.b16 %v14
  %v325 = vunpack.c.h.b16 %v14
  %v326 = vunpack.c.l.b16 %v15
  %v327 = vunpack.c.h.b16 %v15
  %v328 = vunpack.c.l.b16 %v16
  %v329 = vunpack.c.h.b16 %v16
  %v330 = vunpack.c.l.b16 %v17
  %v331 = vunpack.c.h.b16 %v17
  %v332 = vunpack.c.l.b16 %v18
  %v333 = vunpack.c.l.b16 %v19
  %v334 = vunpack.c.h.b16 %v19
  %v335 = vunpack.c.l.b16 %v20
  %v336 = vunpack.c.h.b16 %v20
  %v337 = vunpack.c.l.b16 %v21
  %v338 = vunpack.c.h.b16 %v21
  %v339 = vunpack.c.l.b16 %v22
  %v340 = vunpack.c.h.b16 %v22
  %v341 = vunpack.c.l.b16 %v23
  %v342 = vunpack.c.l.b16 %v24
  %v343 = vunpack.c.h.b16 %v24
  %v344 = vunpack.c.l.b16 %v25
  %v345 = vunpack.c.h.b16 %v25
  %v346 = vunpack.c.l.b16 %v26
  %v347 = vunpack.c.h.b16 %v26
  %v348 = vunpack.c.l.b16 %v27
  %v349 = vunpack.c.h.b16 %v27
  %v350 = vunpack.c.l.b16 %v28
  %v351 = vunpack.c.l.b16 %v29
  %v352 = vunpack.c.h.b16 %v29
  %v353 = vunpack.c.l.b16 %v30
  %v354 = vunpack.c.h.b16 %v30
  %v355 = vunpack.c.l.b16 %v31
  %v356 = vunpack.c.h.b16 %v31
  %v357 = vunpack.c.l.b16 %v32
  %v358 = vunpack.c.h.b16 %v32
  %v359 = vunpack.c.l.b16 %v33
  %v360 = vunpack.c.l.b16 %v34
  %v361 = vunpack.c.h.b16 %v34
  %v362 = vunpack.c.l.b16 %v35
  %v363 = vunpack.c.h.b16 %v35
  %v364 = vunpack.c.l.b16 %v36
  %v365 = vunpack.c.h.b16 %v36
  %v366 = vunpack.c.l.b16 %v37
  %v367 = vunpack.c.h.b16 %v37
  %v368 = vunpack.c.l.b16 %v38
  %v369 = vunpack.c.l.b16 %v39
  %v370 = vunpack.c.h.b16 %v39
  %v371 = vunpack.c.l.b16 %v40
  %v372 = vunpack.c.h.b16 %v40
  %v373 = vunpack.c.l.b16 %v41
  %v374 = vunpack.c.h.b16 %v41
  %v375 = vunpack.c.l.b16 %v42
  %v376 = vunpack.c.h.b16 %v42
  %v377 = vunpack.c.l.b16 %v43
  %v378 = vunpack.c.l.b16 %v44
  %v379 = vunpack.c.h.b16 %v44
  %v380 = vunpack.c.l.b16 %v45
  %v381 = vunpack.c.h.b16 %v45
  %v382 = vunpack.c.l.b16 %v46
  %v383 = vunpack.c.h.b16 %v46
  %v384 = vunpack.c.l.b16 %v47
  %v385 = vunpack.c.h.b16 %v47
  %v386 = vunpack.c.l.b16 %v48
  %v387 = vunpack.c.l.b16 %v49
  %v388 = vunpack.c.h.b16 %v49
  %v389 = vunpack.c.l.b16 %v50
  %v390 = vunpack.c.h.b16 %v50
  %v391 = vunpack.c.l.b16 %v51
  %v392 = vunpack.c.h.b16 %v51
  %v393 = vunpack.c.l.b16 %v52
  %v394 = vunpack.c.h.b16 %v52
  %v395 = vunpack.c.l.b16 %v53
  %v396 = vunpack.c.l.b16 %v54
  %v397 = vunpack.c.h.b16 %v54
  %v398 = vunpack.c.l.b16 %v55
  %v399 = vunpack.c.h.b16 %v55
  %v400 = vunpack.c.l.b16 %v56
  %v401 = vunpack.c.h.b16 %v56
  %v402 = vunpack.c.l.b16 %v57
  %v403 = vunpack.c.h.b16 %v57
  %v404 = vunpack.c.l.b16 %v58
  %v405 = vunpack.c.l.b16 %v59
  %v406 = vunpack.c.h.b16 %v59
  %v407 = vunpack.c.l.b16 %v60
  %v408 = vunpack.c.h.b16 %v60
  %v409 = vunpack.c.l.b16 %v61
  %v410 = vunpack.c.h.b16 %v61
  %v411 = vunpack.c.l.b16 %v62
  %v412 = vunpack.c.h.b16 %v62
  %v413 = vunpack.c.l.b16 %v63
  %v414 = vunpack.c.l.b16 %v64
  %v415 = vunpack.c.h.b16 %v64
  %v416 = vunpack.c.l.b16 %v65
  %v417 = vunpack.c.h.b16 %v65
  %v418 = vunpack.c.l.b16 %v66
  %v419 = vunpack.c.h.b16 %v66
  %v420 = vunpack.c.l.b16 %v67
  %v421 = vunpack.c.h.b16 %v67
  %v422 = vunpack.c.l.b16 %v68
  %v423 = vunpack.c.l.b16 %v69
  %v424 = vunpack.c.h.b16 %v69
  %v425 = vunpack.c.l.b16 %v70
  %v426 = vunpack.c.h.b16 %v70
  %v427 = vunpack.c.l.b16 %v71
  %v428 = vunpack.c.h.b16 %v71
  %v429 = vunpack.c.l.b16 %v72
  %v430 = vunpack.c.h.b16 %v72
  %v431 = vunpack.c.l.b16 %v73
  %v432 = vunpack.c.l.b16 %v74
  %v433 = vunpack.c.h.b16 %v74
  %v434 = vunpack.c.l.b16 %v75
  %v435 = vunpack.c.h.b16 %v75
  %v436 = vunpack.c.l.b16 %v76
  %v437 = vunpack.c.h.b16 %v76
  %v438 = vunpack.c.l.b16 %v77
  %v439 = vunpack.c.h.b16 %v77
  %v440 = vunpack.c.l.b16 %v78
  %v441 = vunpack.c.l.b16 %v79
  %v442 = vunpack.c.h.b16 %v79
  %v443 = vunpack.c.l.b16 %v80
  %v444 = vunpack.c.h.b16 %v80
  %v445 = vunpack.c.l.b16 %v81
  %v446 = vunpack.c.h.b16 %v81
  %v447 = vunpack.c.l.b16 %v82
  %v448 = vunpack.c.h.b16 %v82
  %v449 = vunpack.c.l.b16 %v83
  %v450 = vunpack.c.l.b16 %v84
  %v451 = vunpack.c.h.b16 %v84
  %v452 = vunpack.c.l.b16 %v85
  %v453 = vunpack.c.h.b16 %v85
  %v454 = vunpack.c.l.b16 %v86
  %v455 = vunpack.c.h.b16 %v86
  %v456 = vunpack.c.l.b16 %v87
  %v457 = vunpack.c.h.b16 %v87
  %v458 = vunpack.c.l.b16 %v88
  %v459 = vunpack.c.l.b16 %v89
  %v460 = vunpack.c.h.b16 %v89
  %v461 = vunpack.c.l.b16 %v90
  %v462 = vunpack.c.h.b16 %v90
  %v463 = vunpack.c.l.b16 %v91
  %v464 = vunpack.c.h.b16 %v91
  %v465 = vunpack.c.l.b16 %v92
  %v466 = vunpack.c.h.b16 %v92
  %v467 = vunpack.c.l.b16 %v93
  %v468 = vpack.c.b16 %v333, %v324
  %v469 = vpack.c.b16 %v334, %v325
  %v470 = vpack.c.b16 %v335, %v326
  %v471 = vpack.c.b16 %v336, %v327
  %v472 = vpack.c.b16 %v337, %v328
  %v473 = vpack.c.b16 %v338, %v329
  %v474 = vpack.c.b16 %v339, %v330
  %v475 = vpack.c.b16 %v340, %v331
  %v476 = vpack.c.b16 %v341, %v332
  %v477 = vpack.c.b16 %v351, %v342
  %v478 = vpack.c.b16 %v352, %v343
  %v479 = vpack.c.b16 %v353, %v344
  %v480 = vpack.c.b16 %v354, %v345
  %v481 = vpack.c.b16 %v355, %v346
  %v482 = vpack.c.b16 %v356, %v347
  %v483 = vpack.c.b16 %v357, %v348
  %v484 = vpack.c.b16 %v358, %v349
  %v485 = vpack.c.b16 %v359, %v350
  %v486 = vpack.c.b16 %v369, %v360
  %v487 = vpack.c.b16 %v370, %v361
  %v488 = vpack.c.b16 %v371, %v362
  %v489 = vpack.c.b16 %v372, %v363
  %v490 = vpack.c.b16 %v373, %v364
  %v491 = vpack.c.b16 %v374, %v365
  %v492 = vpack.c.b16 %v375, %v366
  %v493 = vpack.c.b16 %v376, %v367
  %v494 = vpack.c.b16 %v377, %v368
  %v495 = vpack.c.b16 %v387, %v378
  %v496 = vpack.c.b16 %v388, %v379
  %v497 = vpack.c.b16 %v389, %v380
  %v498 = vpack.c.b16 %v390, %v381
  %v499 = vpack.c.b16 %v391, %v382
  %v500 = vpack.c.b16 %v392, %v383
  %v501 = vpack.c.b16 %v393, %v384
  %v502 = vpack.c.b16 %v394, %v385
  %v503 = vpack.c.b16 %v395, %v386
  %v504 = vpack.c.b16 %v405, %v396
  %v505 = vpack.c.b16 %v406, %v397
  %v506 = vpack.c.b16 %v407, %v398
  %v507 = vpack.c.b16 %v408, %v399
  %v508 = vpack.c.b16 %v409, %v400
  %v509 = vpack.c.b16 %v410, %v401
  %v510 = vpack.c.b16 %v411, %v402
  %v511 = vpack.c.b16 %v412, %v403
  %v512 = vpack.c.b16 %v413, %v404
  %v513 = vpack.c.b16 %v423, %v414
  %v514 = vpack.c.b16 %v424, %v415
  %v515 = vpack.c.b16 %v425, %v416
  %v516 = vpack.c.b16 %v426, %v417
  %v517 = vpack.c.b16 %v427, %v418
  %v518 = vpack.c.b16 %v428, %v419
  %v519 = vpack.c.b16 %v429, %v420
  %v520 = vpack.c.b16 %v430, %v421
  %v521 = vpack.c.b16 %v431, %v422
  %v522 = vpack.c.b16 %v441, %v432
  %v523 = vpack.c.b16 %v442, %v433
  %v524 = vpack.c.b16 %v443, %v434
  %v525 = vpack.c.b16 %v444, %v435
  %v526 = vpack.c.b16 %v445, %v436
  %v527 = vpack.c.b16 %v446, %v437
  %v528 = vpack.c.b16 %v447, %v438
  %v529 = vpack.c.b16 %v448, %v439
  %v530 = vpack.c.b16 %v449, %v440
  %v531 = vpack.c.b16 %v459, %v450
  %v532 = vpack.c.b16 %v460, %v451
  %v533 = vpack.c.b16 %v461, %v452
  %v534 = vpack.c.b16 %v462, %v453
  %v535 = vpack.c.b16 %v463, %v454
  %v536 = vpack.c.b16 %v464, %v455
  %v537 = vpack.c.b16 %v465, %v456
  %v538 = vpack.c.b16 %v466, %v457
  %v539 = vpack.c.b16 %v467, %v458
  %v756 = vunpack.c.l.b16 %v94
  %v757 = vunpack.c.h.b16 %v94
  %v758 = vunpack.c.l.b16 %v95
  %v759 = vunpack.c.h.b16 %v95
  %v760 = vunpack.c.l.b16 %v96
  %v761 = vunpack.c.h.b16 %v96
  %v762 = vunpack.c.l.b16 %v97
  %v763 = vunpack.c.h.b16 %v97
  %v764 = vunpack.c.l.b16 %v98
  %v765 = vunpack.c.h.b16 %v98
  %v766 = vunpack.c.l.b16 %v99
  %v767 = vunpack.c.h.b16 %v99
  %v768 = vunpack.c.l.b16 %v100
  %v769 = vunpack.c.h.b16 %v100
  %v770 = vunpack.c.l.b16 %v101
  %v771 = vunpack.c.h.b16 %v101
  %v772 = vunpack.c.l.b16 %v102
  %v773 = vunpack.c.h.b16 %v102
  %v774 = vunpack.c.l.b16 %v103
  %v775 = vunpack.c.h.b16 %v103
  %v776 = vunpack.c.l.b16 %v104
  %v777 = vunpack.c.h.b16 %v104
  %v778 = vunpack.c.l.b16 %v105
  %v779 = vunpack.c.h.b16 %v105
  %v780 = vunpack.c.l.b16 %v106
  %v781 = vunpack.c.h.b16 %v106
  %v782 = vunpack.c.l.b16 %v107
  %v783 = vunpack.c.h.b16 %v107
  %v784 = vunpack.c.l.b16 %v108
  %v785 = vunpack.c.h.b16 %v108
  %v786 = vunpack.c.l.b16 %v109
  %v787 = vunpack.c.h.b16 %v109
  %v788 = vunpack.c.l.b16 %v110
  %v789 = vunpack.c.h.b16 %v110
  %v790 = vunpack.c.l.b16 %v111
  %v791 = vunpack.c.h.b16 %v111
  %v792 = vunpack.c.l.b16 %v112
  %v793 = vunpack.c.h.b16 %v112
  %v794 = vunpack.c.l.b16 %v113
  %v795 = vunpack.c.h.b16 %v113
  %v796 = vunpack.c.l.b16 %v114
  %v797 = vunpack.c.h.b16 %v114
  %v798 = vunpack.c.l.b16 %v115
  %v799 = vunpack.c.h.b16 %v115
  %v800 = vunpack.c.l.b16 %v116
  %v801 = vunpack.c.h.b16 %v116
  %v802 = vunpack.c.l.b16 %v117
  %v803 = vunpack.c.h.b16 %v117
  %v804 = vunpack.c.l.b16 %v118
  %v805 = vunpack.c.h.b16 %v118
  %v806 = vunpack.c.l.b16 %v119
  %v807 = vunpack.c.h.b16 %v119
  %v808 = vunpack.c.l.b16 %v120
  %v809 = vunpack.c.h.b16 %v120
  %v810 = vunpack.c.l.b16 %v121
  %v811 = vunpack.c.h.b16 %v121
  %v812 = vunpack.c.l.b16 %v122
  %v813 = vunpack.c.h.b16 %v122
  %v814 = vunpack.c.l.b16 %v123
  %v815 = vunpack.c.h.b16 %v123
  %v816 = vunpack.c.l.b16 %v124
  %v817 = vunpack.c.h.b16 %v124
  %v818 = vunpack.c.l.b16 %v125
  %v819 = vunpack.c.h.b16 %v125
  %v820 = vunpack.c.l.b16 %v126
  %v821 = vunpack.c.h.b16 %v126
  %v822 = vunpack.c.l.b16 %v127
  %v823 = vunpack.c.h.b16 %v127
  %v824 = vunpack.c.l.b16 %v128
  %v825 = vunpack.c.h.b16 %v128
  %v826 = vunpack.c.l.b16 %v129
  %v827 = vunpack.c.h.b16 %v129
  %v828 = vunpack.c.l.b16 %v130
  %v829 = vunpack.c.h.b16 %v130
  %v830 = vunpack.c.l.b16 %v131
  %v831 = vunpack.c.h.b16 %v131
  %v832 = vunpack.c.l.b16 %v132
  %v833 = vunpack.c.h.b16 %v132
  %v834 = vunpack.c.l.b16 %v133
  %v835 = vunpack.c.h.b16 %v133
  %v836 = vunpack.c.l.b16 %v134
  %v837 = vunpack.c.h.b16 %v134
  %v838 = vunpack.c.l.b16 %v135
  %v839 = vunpack.c.h.b16 %v135
  %v840 = vunpack.c.l.b16 %v136
  %v841 = vunpack.c.h.b16 %v136
  %v842 = vunpack.c.l.b16 %v137
  %v843 = vunpack.c.h.b16 %v137
  %v844 = vunpack.c.l.b16 %v138
  %v845 = vunpack.c.h.b16 %v138
  %v846 = vunpack.c.l.b16 %v139
  %v847 = vunpack.c.h.b16 %v139
  %v848 = vunpack.c.l.b16 %v140
  %v849 = vunpack.c.h.b16 %v140
  %v850 = vunpack.c.l.b16 %v141
  %v851 = vunpack.c.h.b16 %v141
  %v852 = vunpack.c.l.b16 %v142
  %v853 = vunpack.c.h.b16 %v142
  %v854 = vunpack.c.l.b16 %v143
  %v855 = vunpack.c.h.b16 %v143
  %v856 = vunpack.c.l.b16 %v144
  %v857 = vunpack.c.h.b16 %v144
  %v858 = vunpack.c.l.b16 %v145
  %v859 = vunpack.c.h.b16 %v145
  %v860 = vunpack.c.l.b16 %v146
  %v861 = vunpack.c.h.b16 %v146
  %v862 = vunpack.c.l.b16 %v147
  %v863 = vunpack.c.h.b16 %v147
  %v864 = vunpack.c.l.b16 %v148
  %v865 = vunpack.c.h.b16 %v148
  %v866 = vunpack.c.l.b16 %v149
  %v867 = vunpack.c.h.b16 %v149
  %v868 = vunpack.c.l.b16 %v150
  %v869 = vunpack.c.h.b16 %v150
  %v870 = vunpack.c.l.b16 %v151
  %v871 = vunpack.c.h.b16 %v151
  %v872 = vunpack.c.l.b16 %v152
  %v873 = vunpack.c.h.b16 %v152
  %v874 = vunpack.c.l.b16 %v153
  %v875 = vunpack.c.h.b16 %v153
  %v876 = vunpack.c.l.b16 %v154
  %v877 = vunpack.c.h.b16 %v154
  %v878 = vunpack.c.l.b16 %v155
  %v879 = vunpack.c.h.b16 %v155
  %v880 = vunpack.c.l.b16 %v156
  %v881 = vunpack.c.h.b16 %v156
  %v882 = vunpack.c.l.b16 %v157
  %v883 = vunpack.c.h.b16 %v157
  %v884 = vunpack.c.l.b16 %v158
  %v885 = vunpack.c.h.b16 %v158
  %v886 = vunpack.c.l.b16 %v159
  %v887 = vunpack.c.h.b16 %v159
  %v888 = vunpack.c.l.b16 %v160
  %v889 = vunpack.c.h.b16 %v160
  %v890 = vunpack.c.l.b16 %v161
  %v891 = vunpack.c.h.b16 %v161
  %v892 = vunpack.c.l.b16 %v162
  %v893 = vunpack.c.h.b16 %v162
  %v894 = vunpack.c.l.b16 %v163
  %v895 = vunpack.c.h.b16 %v163
  %v896 = vunpack.c.l.b16 %v164
  %v897 = vunpack.c.h.b16 %v164
  %v898 = vunpack.c.l.b16 %v165
  %v899 = vunpack.c.h.b16 %v165
  %v900 = vunpack.c.l.b16 %v166
  %v901 = vunpack.c.h.b16 %v166
  %v902 = vunpack.c.l.b16 %v167
  %v903 = vunpack.c.h.b16 %v167
  %v904 = vunpack.c.l.b16 %v168
  %v905 = vunpack.c.h.b16 %v168
  %v906 = vunpack.c.l.b16 %v169
  %v907 = vunpack.c.h.b16 %v169
  %v908 = vunpack.c.l.b16 %v170
  %v909 = vunpack.c.h.b16 %v170
  %v910 = vunpack.c.l.b16 %v171
  %v911 = vunpack.c.h.b16 %v171
  %v912 = vunpack.c.l.b16 %v172
  %v913 = vunpack.c.h.b16 %v172
  %v914 = vunpack.c.l.b16 %v173
  %v915 = vunpack.c.h.b16 %v173
  %v916 = vunpack.c.l.b16 %v174
  %v917 = vunpack.c.h.b16 %v174
  %v918 = vunpack.c.l.b16 %v175
  %v919 = vunpack.c.h.b16 %v175
  %v920 = vunpack.c.l.b16 %v176
  %v921 = vunpack.c.h.b16 %v176
  %v922 = vunpack.c.l.b16 %v177
  %v923 = vunpack.c.h.b16 %v177
  %v924 = vunpack.c.l.b16 %v178
  %v925 = vunpack.c.h.b16 %v178
  %v926 = vunpack.c.l.b16 %v179
  %v927 = vunpack.c.h.b16 %v179
  %v928 = vunpack.c.l.b16 %v180
  %v929 = vunpack.c.h.b16 %v180
  %v930 = vunpack.c.l.b16 %v181
  %v931 = vunpack.c.h.b16 %v181
  %v932 = vunpack.c.l.b16 %v182
  %v933 = vunpack.c.h.b16 %v182
  %v934 = vunpack.c.l.b16 %v183
  %v935 = vunpack.c.h.b16 %v183
  %v936 = vunpack.c.l.b16 %v184
  %v937 = vunpack.c.h.b16 %v184
  %v938 = vunpack.c.l.b16 %v185
  %v939 = vunpack.c.h.b16 %v185
  %v940 = vunpack.c.l.b16 %v186
  %v941 = vunpack.c.h.b16 %v186
  %v942 = vunpack.c.l.b16 %v187
  %v943 = vunpack.c.h.b16 %v187
  %v944 = vunpack.c.l.b16 %v188
  %v945 = vunpack.c.h.b16 %v188
  %v946 = vunpack.c.l.b16 %v189
  %v947 = vunpack.c.h.b16 %v189
  %v948 = vunpack.c.l.b16 %v190
  %v949 = vunpack.c.h.b16 %v190
  %v950 = vunpack.c.l.b16 %v191
  %v951 = vunpack.c.h.b16 %v191
  %v952 = vunpack.c.l.b16 %v192
  %v953 = vunpack.c.h.b16 %v192
  %v954 = vunpack.c.l.b16 %v193
  %v955 = vunpack.c.h.b16 %v193
  %v956 = vunpack.c.l.b16 %v194
  %v957 = vunpack.c.h.b16 %v194
  %v958 = vunpack.c.l.b16 %v195
  %v959 = vunpack.c.h.b16 %v195
  %v960 = vunpack.c.l.b16 %v196
  %v961 = vunpack.c.h.b16 %v196
  %v962 = vunpack.c.l.b16 %v197
  %v963 = vunpack.c.h.b16 %v197
  %v964 = vunpack.c.l.b16 %v198
  %v965 = vunpack.c.h.b16 %v198
  %v966 = vunpack.c.l.b16 %v199
  %v967 = vunpack.c.h.b16 %v199
  %v968 = vunpack.c.l.b16 %v200
  %v969 = vunpack.c.h.b16 %v200
  %v970 = vunpack.c.l.b16 %v201
  %v971 = vunpack.c.h.b16 %v201
  %v972 = vunpack.c.l.b16 %v202
  %v973 = vunpack.c.h.b16 %v202
  %v974 = vunpack.c.l.b16 %v203
  %v975 = vunpack.c.h.b16 %v203
  %v976 = vunpack.c.l.b16 %v204
  %v977 = vunpack.c.h.b16 %v204
  %v978 = vunpack.c.l.b16 %v205
  %v979 = vunpack.c.h.b16 %v205
  %v980 = vunpack.c.l.b16 %v206
  %v981 = vunpack.c.h.b16 %v206
  %v982 = vunpack.c.l.b16 %v207
  %v983 = vunpack.c.h.b16 %v207
  %v984 = vunpack.c.l.b16 %v208
  %v985 = vunpack.c.h.b16 %v208
  %v986 = vunpack.c.l.b16 %v209
  %v987 = vunpack.c.h.b16 %v209
  %v988 = vunpack.c.l.b16 %v210
  %v989 = vunpack.c.h.b16 %v210
  %v990 = vunpack.c.l.b16 %v211
  %v991 = vunpack.c.h.b16 %v211
  %v992 = vunpack.c.l.b16 %v212
  %v993 = vunpack.c.h.b16 %v212
  %v994 = vunpack.c.l.b16 %v213
  %v995 = vunpack.c.h.b16 %v213
  %v996 = vunpack.c.l.b16 %v214
  %v997 = vunpack.c.h.b16 %v214
  %v998 = vunpack.c.l.b16 %v215
  %v999 = vunpack.c.h.b16 %v215
  %v1000 = vunpack.c.l.b16 %v216
  %v1001 = vunpack.c.h.b16 %v216
  %v1002 = vunpack.c.l.b16 %v217
  %v1003 = vunpack.c.h.b16 %v217
  %v1004 = vunpack.c.l.b16 %v218
  %v1005 = vunpack.c.h.b16 %v218
  %v1006 = vunpack.c.l.b16 %v219
  %v1007 = vunpack.c.h.b16 %v219
  %v1008 = vunpack.c.l.b16 %v220
  %v1009 = vunpack.c.h.b16 %v220
  %v1010 = vunpack.c.l.b16 %v221
  %v1011 = vunpack.c.h.b16 %v221
  %v1012 = vunpack.c.l.b16 %v222
  %v1013 = vunpack.c.h.b16 %v222
  %v1014 = vunpack.c.l.b16 %v223
  %v1015 = vunpack.c.h.b16 %v223
  %v1016 = vunpack.c.l.b16 %v224
  %v1017 = vunpack.c.h.b16 %v224
  %v1018 = vunpack.c.l.b16 %v225
  %v1019 = vunpack.c.h.b16 %v225
  %v1020 = vunpack.c.l.b16 %v226
  %v1021 = vunpack.c.h.b16 %v226
  %v1022 = vunpack.c.l.b16 %v227
  %v1023 = vunpack.c.h.b16 %v227
  %v1024 = vunpack.c.l.b16 %v228
  %v1025 = vunpack.c.h.b16 %v228
  %v1026 = vunpack.c.l.b16 %v229
  %v1027 = vunpack.c.h.b16 %v229
  %v1028 = vunpack.c.l.b16 %v230
  %v1029 = vunpack.c.h.b16 %v230
  %v1030 = vunpack.c.l.b16 %v231
  %v1031 = vunpack.c.h.b16 %v231
  %v1032 = vunpack.c.l.b16 %v232
  %v1033 = vunpack.c.h.b16 %v232
  %v1034 = vunpack.c.l.b16 %v233
  %v1035 = vunpack.c.h.b16 %v233
  %v1036 = vunpack.c.l.b16 %v234
  %v1037 = vunpack.c.h.b16 %v234
  %v1038 = vunpack.c.l.b16 %v235
  %v1039 = vunpack.c.h.b16 %v235
  %v1040 = vunpack.c.l.b16 %v236
  %v1041 = vunpack.c.h.b16 %v236
  %v1042 = vunpack.c.l.b16 %v237
  %v1043 = vunpack.c.h.b16 %v237
  %v1044 = vpack.c.b16 %v758, %v756
  %v1045 = vpack.c.b16 %v759, %v757
  %v1046 = vpack.c.b16 %v762, %v760
  %v1047 = vpack.c.b16 %v763, %v761
  %v1048 = vpack.c.b16 %v766, %v764
  %v1049 = vpack.c.b16 %v767, %v765
  %v1050 = vpack.c.b16 %v770, %v768
  %v1051 = vpack.c.b16 %v771, %v769
  %v1052 = vpack.c.b16 %v774, %v772
  %v1053 = vpack.c.b16 %v775, %v773
  %v1054 = vpack.c.b16 %v778, %v776
  %v1055 = vpack.c.b16 %v779, %v777
  %v1056 = vpack.c.b16 %v782, %v780
  %v1057 = vpack.c.b16 %v783, %v781
  %v1058 = vpack.c.b16 %v786, %v784
  %v1059 = vpack.c.b16 %v787, %v785
  %v1060 = vpack.c.b16 %v790, %v788
  %v1061 = vpack.c.b16 %v791, %v789
  %v1062 = vpack.c.b16 %v794, %v792
  %v1063 = vpack.c.b16 %v795, %v793
  %v1064 = vpack.c.b16 %v798, %v796
  %v1065 = vpack.c.b16 %v799, %v797
  %v1066 = vpack.c.b16 %v802, %v800
  %v1067 = vpack.c.b16 %v803, %v801
  %v1068 = vpack.c.b16 %v806, %v804
  %v1069 = vpack.c.b16 %v807, %v805
  %v1070 = vpack.c.b16 %v810, %v808
  %v1071 = vpack.c.b16 %v811, %v809
  %v1072 = vpack.c.b16 %v814, %v812
  %v1073 = vpack.c.b16 %v815, %v813
  %v1074 = vpack.c.b16 %v818, %v816
  %v1075 = vpack.c.b16 %v819, %v817
  %v1076 = vpack.c.b16 %v822, %v820
  %v1077 = vpack.c.b16 %v823, %v821
  %v1078 = vpack.c.b16 %v826, %v824
  %v1079 = vpack.c.b16 %v827, %v825
  %v1080 = vpack.c.b16 %v830, %v828
  %v1081 = vpack.c.b16 %v831, %v829
  %v1082 = vpack.c.b16 %v834, %v832
  %v1083 = vpack.c.b16 %v835, %v833
  %v1084 = vpack.c.b16 %v838, %v836
  %v1085 = vpack.c.b16 %v839, %v837
  %v1086 = vpack.c.b16 %v842, %v840
  %v1087 = vpack.c.b16 %v843, %v841
  %v1088 = vpack.c.b16 %v846, %v844
  %v1089 = vpack.c.b16 %v847, %v845
  %v1090 = vpack.c.b16 %v850, %v848
  %v1091 = vpack.c.b16 %v851, %v849
  %v1092 = vpack.c.b16 %v854, %v852
  %v1093 = vpack.c.b16 %v855, %v853
  %v1094 = vpack.c.b16 %v858, %v856
  %v1095 = vpack.c.b16 %v859, %v857
  %v1096 = vpack.c.b16 %v862, %v860
  %v1097 = vpack.c.b16 %v863, %v861
  %v1098 = vpack.c.b16 %v866, %v864
  %v1099 = vpack.c.b16 %v867, %v865
  %v1100 = vpack.c.b16 %v870, %v868
  %v1101 = vpack.c.b16 %v871, %v869
  %v1102 = vpack.c.b16 %v874, %v872
  %v1103 = vpack.c.b16 %v875, %v873
  %v1104 = vpack.c.b16 %v878, %v876
  %v1105 = vpack.c.b16 %v879, %v877
  %v1106 = vpack.c.b16 %v882, %v880
  %v1107 = vpack.c.b16 %v883, %v881
  %v1108 = vpack.c.b16 %v886, %v884
  %v1109 = vpack.c.b16 %v887, %v885
  %v1110 = vpack.c.b16 %v890, %v888
  %v1111 = vpack.c.b16 %v891, %v889
  %v1112 = vpack.c.b16 %v894, %v892
  %v1113 = vpack.c.b16 %v895, %v893
  %v1114 = vpack.c.b16 %v898, %v896
  %v1115 = vpack.c.b16 %v899, %v897
  %v1116 = vpack.c.b16 %v902, %v900
  %v1117 = vpack.c.b16 %v903, %v901
  %v1118 = vpack.c.b16 %v906, %v904
  %v1119 = vpack.c.b16 %v907, %v905
  %v1120 = vpack.c.b16 %v910, %v908
  %v1121 = vpack.c.b16 %v911, %v909
  %v1122 = vpack.c.b16 %v914, %v912
  %v1123 = vpack.c.b16 %v915, %v913
  %v1124 = vpack.c.b16 %v918, %v916
  %v1125 = vpack.c.b16 %v919, %v917
  %v1126 = vpack.c.b16 %v922, %v920
  %v1127 = vpack.c.b16 %v923, %v921
  %v1128 = vpack.c.b16 %v926, %v924
  %v1129 = vpack.c.b16 %v927, %v925
  %v1130 = vpack.c.b16 %v930, %v928
  %v1131 = vpack.c.b16 %v931, %v929
  %v1132 = vpack.c.b16 %v934, %v932
  %v1133 = vpack.c.b16 %v935, %v933
  %v1134 = vpack.c.b16 %v938, %v936
  %v1135 = vpack.c.b16 %v939, %v937
  %v1136 = vpack.c.b16 %v942, %v940
  %v1137 = vpack.c.b16 %v943, %v941
  %v1138 = vpack.c.b16 %v946, %v944
  %v1139 = vpack.c.b16 %v947, %v945
  %v1140 = vpack.c.b16 %v950, %v948
  %v1141 = vpack.c.b16 %v951, %v949
  %v1142 = vpack.c.b16 %v954, %v952
  %v1143 = vpack.c.b16 %v955, %v953
  %v1144 = vpack.c.b16 %v958, %v956
  %v1145 = vpack.c.b16 %v959, %v957
  %v1146 = vpack.c.b16 %v962, %v960
  %v1147 = vpack.c.b16 %v963, %v961
  %v1148 = vpack.c.b16 %v966, %v964
  %v1149 = vpack.c.b16 %v967, %v965
  %v1150 = vpack.c.b16 %v970, %v968
  %v1151 = vpack.c.b16 %v971, %v969
  %v1152 = vpack.c.b16 %v974, %v972
  %v1153 = vpack.c.b16 %v975, %v973
  %v1154 = vpack.c.b16 %v978, %v976
  %v1155 = vpack.c.b16 %v979, %v977
  %v1156 = vpack.c.b16 %v982, %v980
  %v1157 = vpack.c.b16 %v983, %v981
  %v1158 = vpack.c.b16 %v986, %v984
  %v1159 = vpack.c.b16 %v987, %v985
  %v1160 = vpack.c.b16 %v990, %v988
  %v1161 = vpack.c.b16 %v991, %v989
  %v1162 = vpack.c.b16 %v994, %v992
  %v1163 = vpack.c.b16 %v995, %v993
  %v1164 = vpack.c.b16 %v998, %v996
  %v1165 = vpack.c.b16 %v999, %v997
  %v1166 = vpack.c.b16 %v1002, %v1000
  %v1167 = vpack.c.b16 %v1003, %v1001
  %v1168 = vpack.c.b16 %v1006, %v1004
  %v1169 = vpack.c.b16 %v1007, %v1005
  %v1170 = vpack.c.b16 %v1010, %v1008
  %v1171 = vpack.c.b16 %v1011, %v1009
  %v1172 = vpack.c.b16 %v1014, %v1012
  %v1173 = vpack.c.b16 %v1015, %v1013
  %v1174 = vpack.c.b16 %v1018, %v1016
  %v1175 = vpack.c.b16 %v1019, %v1017
  %v1176 = vpack.c.b16 %v1022, %v1020
  %v1177 = vpack.c.b16 %v1023, %v1021
  %v1178 = vpack.c.b16 %v1026, %v1024
  %v1179 = vpack.c.b16 %v1027, %v1025
  %v1180 = vpack.c.b16 %v1030, %v1028
  %v1181 = vpack.c.b16 %v1031, %v1029
  %v1182 = vpack.c.b16 %v1034, %v1032
  %v1183 = vpack.c.b16 %v1035, %v1033
  %v1184 = vpack.c.b16 %v1038, %v1036
  %v1185 = vpack.c.b16 %v1039, %v1037
  %v1186 = vpack.c.b16 %v1042, %v1040
  %v1187 = vpack.c.b16 %v1043, %v1041
  %1332 = vmatpush.bf16.msra.mxu0 %v1058
  %1333 = vmatpush.bf16.msra.mxu0 %v1056
  %1334 = vmatpush.bf16.msra.mxu0 %v1054
  %1335 = vmatpush.bf16.msra.mxu0 %v1052
  %1336 = vmatpush.bf16.msra.mxu0 %v1050
  %1337 = vmatpush.bf16.msra.mxu0 %v1048
  %1338 = vmatpush.bf16.msra.mxu0 %v1046
  %1339 = vmatpush.bf16.msra.mxu0 %v1044
  %1340 = vmatmul.bf16.gmra.mxu0 %v468
  %v1341 = vpop.f32.mrf.mxu0
  %v1342 = vadd.f32 %v240, %v1341
  %v1343 = vpop.f32.mrf.mxu0
  %v1344 = vadd.f32 %v240, %v1343
  %1345 = vmatmul.bf16.gmra.mxu0 %v477
  %v1346 = vpop.f32.mrf.mxu0
  %v1347 = vadd.f32 %v240, %v1346
  %v1348 = vpop.f32.mrf.mxu0
  %v1349 = vadd.f32 %v240, %v1348
  %1350 = vmatmul.bf16.gmra.mxu0 %v486
  %v1351 = vpop.f32.mrf.mxu0
  %v1352 = vadd.f32 %v240, %v1351
  %v1353 = vpop.f32.mrf.mxu0
  %v1354 = vadd.f32 %v240, %v1353
  %1355 = vmatmul.bf16.gmra.mxu0 %v495
  %v1356 = vpop.f32.mrf.mxu0
  %v1357 = vadd.f32 %v240, %v1356
  %v1358 = vpop.f32.mrf.mxu0
  %v1359 = vadd.f32 %v240, %v1358
  %1360 = vmatmul.bf16.gmra.mxu0 %v504
  %v1361 = vpop.f32.mrf.mxu0
  %v1362 = vadd.f32 %v240, %v1361
  %v1363 = vpop.f32.mrf.mxu0
  %v1364 = vadd.f32 %v240, %v1363
  %1365 = vmatmul.bf16.gmra.mxu0 %v513
  %v1366 = vpop.f32.mrf.mxu0
  %v1367 = vadd.f32 %v240, %v1366
  %v1368 = vpop.f32.mrf.mxu0
  %v1369 = vadd.f32 %v240, %v1368
  %1370 = vmatmul.bf16.gmra.mxu0 %v522
  %v1371 = vpop.f32.mrf.mxu0
  %v1372 = vadd.f32 %v240, %v1371
  %v1373 = vpop.f32.mrf.mxu0
  %v1374 = vadd.f32 %v240, %v1373
  %1375 = vmatmul.bf16.gmra.mxu0 %v531
  %v1376 = vpop.f32.mrf.mxu0
  %v1377 = vadd.f32 %v240, %v1376
  %v1378 = vpop.f32.mrf.mxu0
  %v1379 = vadd.f32 %v240, %v1378
  %1380 = vdwg.mxu0
  %1381 = vmatpush.bf16.msra.mxu0 %v1074
  %1382 = vmatpush.bf16.msra.mxu0 %v1072
  %1383 = vmatpush.bf16.msra.mxu0 %v1070
  %1384 = vmatpush.bf16.msra.mxu0 %v1068
  %1385 = vmatpush.bf16.msra.mxu0 %v1066
  %1386 = vmatpush.bf16.msra.mxu0 %v1064
  %1387 = vmatpush.bf16.msra.mxu0 %v1062
  %1388 = vmatpush.bf16.msra.mxu0 %v1060
  %1389 = vmatmul.bf16.gmra.mxu0 %v469
  %v1390 = vpop.f32.mrf.mxu0
  %v1391 = vadd.f32 %v1342, %v1390
  %v1392 = vpop.f32.mrf.mxu0
  %v1393 = vadd.f32 %v1344, %v1392
  %1394 = vmatmul.bf16.gmra.mxu0 %v478
  %v1395 = vpop.f32.mrf.mxu0
  %v1396 = vadd.f32 %v1347, %v1395
  %v1397 = vpop.f32.mrf.mxu0
  %v1398 = vadd.f32 %v1349, %v1397
  %1399 = vmatmul.bf16.gmra.mxu0 %v487
  %v1400 = vpop.f32.mrf.mxu0
  %v1401 = vadd.f32 %v1352, %v1400
  %v1402 = vpop.f32.mrf.mxu0
  %v1403 = vadd.f32 %v1354, %v1402
  %1404 = vmatmul.bf16.gmra.mxu0 %v496
  %v1405 = vpop.f32.mrf.mxu0
  %v1406 = vadd.f32 %v1357, %v1405
  %v1407 = vpop.f32.mrf.mxu0
  %v1408 = vadd.f32 %v1359, %v1407
  %1409 = vmatmul.bf16.gmra.mxu0 %v505
  %v1410 = vpop.f32.mrf.mxu0
  %v1411 = vadd.f32 %v1362, %v1410
  %v1412 = vpop.f32.mrf.mxu0
  %v1413 = vadd.f32 %v1364, %v1412
  %1414 = vmatmul.bf16.gmra.mxu0 %v514
  %v1415 = vpop.f32.mrf.mxu0
  %v1416 = vadd.f32 %v1367, %v1415
  %v1417 = vpop.f32.mrf.mxu0
  %v1418 = vadd.f32 %v1369, %v1417
  %1419 = vmatmul.bf16.gmra.mxu0 %v523
  %v1420 = vpop.f32.mrf.mxu0
  %v1421 = vadd.f32 %v1372, %v1420
  %v1422 = vpop.f32.mrf.mxu0
  %v1423 = vadd.f32 %v1374, %v1422
  %1424 = vmatmul.bf16.gmra.mxu0 %v532
  %v1425 = vpop.f32.mrf.mxu0
  %v1426 = vadd.f32 %v1377, %v1425
  %v1427 = vpop.f32.mrf.mxu0
  %v1428 = vadd.f32 %v1379, %v1427
  %1429 = vdwg.mxu0
  %1430 = vmatpush.bf16.msra.mxu0 %v1090
  %1431 = vmatpush.bf16.msra.mxu0 %v1088
  %1432 = vmatpush.bf16.msra.mxu0 %v1086
  %1433 = vmatpush.bf16.msra.mxu0 %v1084
  %1434 = vmatpush.bf16.msra.mxu0 %v1082
  %1435 = vmatpush.bf16.msra.mxu0 %v1080
  %1436 = vmatpush.bf16.msra.mxu0 %v1078
  %1437 = vmatpush.bf16.msra.mxu0 %v1076
  %1438 = vmatmul.bf16.gmra.mxu0 %v470
  %v1439 = vpop.f32.mrf.mxu0
  %v1440 = vadd.f32 %v1391, %v1439
  %v1441 = vpop.f32.mrf.mxu0
  %v1442 = vadd.f32 %v1393, %v1441
  %1443 = vmatmul.bf16.gmra.mxu0 %v479
  %v1444 = vpop.f32.mrf.mxu0
  %v1445 = vadd.f32 %v1396, %v1444
  %v1446 = vpop.f32.mrf.mxu0
  %v1447 = vadd.f32 %v1398, %v1446
  %1448 = vmatmul.bf16.gmra.mxu0 %v488
  %v1449 = vpop.f32.mrf.mxu0
  %v1450 = vadd.f32 %v1401, %v1449
  %v1451 = vpop.f32.mrf.mxu0
  %v1452 = vadd.f32 %v1403, %v1451
  %1453 = vmatmul.bf16.gmra.mxu0 %v497
  %v1454 = vpop.f32.mrf.mxu0
  %v1455 = vadd.f32 %v1406, %v1454
  %v1456 = vpop.f32.mrf.mxu0
  %v1457 = vadd.f32 %v1408, %v1456
  %1458 = vmatmul.bf16.gmra.mxu0 %v506
  %v1459 = vpop.f32.mrf.mxu0
  %v1460 = vadd.f32 %v1411, %v1459
  %v1461 = vpop.f32.mrf.mxu0
  %v1462 = vadd.f32 %v1413, %v1461
  %1463 = vmatmul.bf16.gmra.mxu0 %v515
  %v1464 = vpop.f32.mrf.mxu0
  %v1465 = vadd.f32 %v1416, %v1464
  %v1466 = vpop.f32.mrf.mxu0
  %v1467 = vadd.f32 %v1418, %v1466
  %1468 = vmatmul.bf16.gmra.mxu0 %v524
  %v1469 = vpop.f32.mrf.mxu0
  %v1470 = vadd.f32 %v1421, %v1469
  %v1471 = vpop.f32.mrf.mxu0
  %v1472 = vadd.f32 %v1423, %v1471
  %1473 = vmatmul.bf16.gmra.mxu0 %v533
  %v1474 = vpop.f32.mrf.mxu0
  %v1475 = vadd.f32 %v1426, %v1474
  %v1476 = vpop.f32.mrf.mxu0
  %v1477 = vadd.f32 %v1428, %v1476
  %1478 = vdwg.mxu0
  %1479 = vmatpush.bf16.msra.mxu0 %v1106
  %1480 = vmatpush.bf16.msra.mxu0 %v1104
  %1481 = vmatpush.bf16.msra.mxu0 %v1102
  %1482 = vmatpush.bf16.msra.mxu0 %v1100
  %1483 = vmatpush.bf16.msra.mxu0 %v1098
  %1484 = vmatpush.bf16.msra.mxu0 %v1096
  %1485 = vmatpush.bf16.msra.mxu0 %v1094
  %1486 = vmatpush.bf16.msra.mxu0 %v1092
  %1487 = vmatmul.bf16.gmra.mxu0 %v471
  %v1488 = vpop.f32.mrf.mxu0
  %v1489 = vadd.f32 %v1440, %v1488
  %v1490 = vpop.f32.mrf.mxu0
  %v1491 = vadd.f32 %v1442, %v1490
  %1492 = vmatmul.bf16.gmra.mxu0 %v480
  %v1493 = vpop.f32.mrf.mxu0
  %v1494 = vadd.f32 %v1445, %v1493
  %v1495 = vpop.f32.mrf.mxu0
  %v1496 = vadd.f32 %v1447, %v1495
  %1497 = vmatmul.bf16.gmra.mxu0 %v489
  %v1498 = vpop.f32.mrf.mxu0
  %v1499 = vadd.f32 %v1450, %v1498
  %v1500 = vpop.f32.mrf.mxu0
  %v1501 = vadd.f32 %v1452, %v1500
  %1502 = vmatmul.bf16.gmra.mxu0 %v498
  %v1503 = vpop.f32.mrf.mxu0
  %v1504 = vadd.f32 %v1455, %v1503
  %v1505 = vpop.f32.mrf.mxu0
  %v1506 = vadd.f32 %v1457, %v1505
  %1507 = vmatmul.bf16.gmra.mxu0 %v507
  %v1508 = vpop.f32.mrf.mxu0
  %v1509 = vadd.f32 %v1460, %v1508
  %v1510 = vpop.f32.mrf.mxu0
  %v1511 = vadd.f32 %v1462, %v1510
  %1512 = vmatmul.bf16.gmra.mxu0 %v516
  %v1513 = vpop.f32.mrf.mxu0
  %v1514 = vadd.f32 %v1465, %v1513
  %v1515 = vpop.f32.mrf.mxu0
  %v1516 = vadd.f32 %v1467, %v1515
  %1517 = vmatmul.bf16.gmra.mxu0 %v525
  %v1518 = vpop.f32.mrf.mxu0
  %v1519 = vadd.f32 %v1470, %v1518
  %v1520 = vpop.f32.mrf.mxu0
  %v1521 = vadd.f32 %v1472, %v1520
  %1522 = vmatmul.bf16.gmra.mxu0 %v534
  %v1523 = vpop.f32.mrf.mxu0
  %v1524 = vadd.f32 %v1475, %v1523
  %v1525 = vpop.f32.mrf.mxu0
  %v1526 = vadd.f32 %v1477, %v1525
  %1527 = vdwg.mxu0
  %1528 = vmatpush.bf16.msra.mxu0 %v1122
  %1529 = vmatpush.bf16.msra.mxu0 %v1120
  %1530 = vmatpush.bf16.msra.mxu0 %v1118
  %1531 = vmatpush.bf16.msra.mxu0 %v1116
  %1532 = vmatpush.bf16.msra.mxu0 %v1114
  %1533 = vmatpush.bf16.msra.mxu0 %v1112
  %1534 = vmatpush.bf16.msra.mxu0 %v1110
  %1535 = vmatpush.bf16.msra.mxu0 %v1108
  %1536 = vmatmul.bf16.gmra.mxu0 %v472
  %v1537 = vpop.f32.mrf.mxu0
  %v1538 = vadd.f32 %v1489, %v1537
  %v1539 = vpop.f32.mrf.mxu0
  %v1540 = vadd.f32 %v1491, %v1539
  %1541 = vmatmul.bf16.gmra.mxu0 %v481
  %v1542 = vpop.f32.mrf.mxu0
  %v1543 = vadd.f32 %v1494, %v1542
  %v1544 = vpop.f32.mrf.mxu0
  %v1545 = vadd.f32 %v1496, %v1544
  %1546 = vmatmul.bf16.gmra.mxu0 %v490
  %v1547 = vpop.f32.mrf.mxu0
  %v1548 = vadd.f32 %v1499, %v1547
  %v1549 = vpop.f32.mrf.mxu0
  %v1550 = vadd.f32 %v1501, %v1549
  %1551 = vmatmul.bf16.gmra.mxu0 %v499
  %v1552 = vpop.f32.mrf.mxu0
  %v1553 = vadd.f32 %v1504, %v1552
  %v1554 = vpop.f32.mrf.mxu0
  %v1555 = vadd.f32 %v1506, %v1554
  %1556 = vmatmul.bf16.gmra.mxu0 %v508
  %v1557 = vpop.f32.mrf.mxu0
  %v1558 = vadd.f32 %v1509, %v1557
  %v1559 = vpop.f32.mrf.mxu0
  %v1560 = vadd.f32 %v1511, %v1559
  %1561 = vmatmul.bf16.gmra.mxu0 %v517
  %v1562 = vpop.f32.mrf.mxu0
  %v1563 = vadd.f32 %v1514, %v1562
  %v1564 = vpop.f32.mrf.mxu0
  %v1565 = vadd.f32 %v1516, %v1564
  %1566 = vmatmul.bf16.gmra.mxu0 %v526
  %v1567 = vpop.f32.mrf.mxu0
  %v1568 = vadd.f32 %v1519, %v1567
  %v1569 = vpop.f32.mrf.mxu0
  %v1570 = vadd.f32 %v1521, %v1569
  %1571 = vmatmul.bf16.gmra.mxu0 %v535
  %v1572 = vpop.f32.mrf.mxu0
  %v1573 = vadd.f32 %v1524, %v1572
  %v1574 = vpop.f32.mrf.mxu0
  %v1575 = vadd.f32 %v1526, %v1574
  %1576 = vdwg.mxu0
  %1577 = vmatpush.bf16.msra.mxu0 %v1138
  %1578 = vmatpush.bf16.msra.mxu0 %v1136
  %1579 = vmatpush.bf16.msra.mxu0 %v1134
  %1580 = vmatpush.bf16.msra.mxu0 %v1132
  %1581 = vmatpush.bf16.msra.mxu0 %v1130
  %1582 = vmatpush.bf16.msra.mxu0 %v1128
  %1583 = vmatpush.bf16.msra.mxu0 %v1126
  %1584 = vmatpush.bf16.msra.mxu0 %v1124
  %1585 = vmatmul.bf16.gmra.mxu0 %v473
  %v1586 = vpop.f32.mrf.mxu0
  %v1587 = vadd.f32 %v1538, %v1586
  %v1588 = vpop.f32.mrf.mxu0
  %v1589 = vadd.f32 %v1540, %v1588
  %1590 = vmatmul.bf16.gmra.mxu0 %v482
  %v1591 = vpop.f32.mrf.mxu0
  %v1592 = vadd.f32 %v1543, %v1591
  %v1593 = vpop.f32.mrf.mxu0
  %v1594 = vadd.f32 %v1545, %v1593
  %1595 = vmatmul.bf16.gmra.mxu0 %v491
  %v1596 = vpop.f32.mrf.mxu0
  %v1597 = vadd.f32 %v1548, %v1596
  %v1598 = vpop.f32.mrf.mxu0
  %v1599 = vadd.f32 %v1550, %v1598
  %1600 = vmatmul.bf16.gmra.mxu0 %v500
  %v1601 = vpop.f32.mrf.mxu0
  %v1602 = vadd.f32 %v1553, %v1601
  %v1603 = vpop.f32.mrf.mxu0
  %v1604 = vadd.f32 %v1555, %v1603
  %1605 = vmatmul.bf16.gmra.mxu0 %v509
  %v1606 = vpop.f32.mrf.mxu0
  %v1607 = vadd.f32 %v1558, %v1606
  %v1608 = vpop.f32.mrf.mxu0
  %v1609 = vadd.f32 %v1560, %v1608
  %1610 = vmatmul.bf16.gmra.mxu0 %v518
  %v1611 = vpop.f32.mrf.mxu0
  %v1612 = vadd.f32 %v1563, %v1611
  %v1613 = vpop.f32.mrf.mxu0
  %v1614 = vadd.f32 %v1565, %v1613
  %1615 = vmatmul.bf16.gmra.mxu0 %v527
  %v1616 = vpop.f32.mrf.mxu0
  %v1617 = vadd.f32 %v1568, %v1616
  %v1618 = vpop.f32.mrf.mxu0
  %v1619 = vadd.f32 %v1570, %v1618
  %1620 = vmatmul.bf16.gmra.mxu0 %v536
  %v1621 = vpop.f32.mrf.mxu0
  %v1622 = vadd.f32 %v1573, %v1621
  %v1623 = vpop.f32.mrf.mxu0
  %v1624 = vadd.f32 %v1575, %v1623
  %1625 = vdwg.mxu0
  %1626 = vmatpush.bf16.msra.mxu0 %v1154
  %1627 = vmatpush.bf16.msra.mxu0 %v1152
  %1628 = vmatpush.bf16.msra.mxu0 %v1150
  %1629 = vmatpush.bf16.msra.mxu0 %v1148
  %1630 = vmatpush.bf16.msra.mxu0 %v1146
  %1631 = vmatpush.bf16.msra.mxu0 %v1144
  %1632 = vmatpush.bf16.msra.mxu0 %v1142
  %1633 = vmatpush.bf16.msra.mxu0 %v1140
  %1634 = vmatmul.bf16.gmra.mxu0 %v474
  %v1635 = vpop.f32.mrf.mxu0
  %v1636 = vadd.f32 %v1587, %v1635
  %v1637 = vpop.f32.mrf.mxu0
  %v1638 = vadd.f32 %v1589, %v1637
  %1639 = vmatmul.bf16.gmra.mxu0 %v483
  %v1640 = vpop.f32.mrf.mxu0
  %v1641 = vadd.f32 %v1592, %v1640
  %v1642 = vpop.f32.mrf.mxu0
  %v1643 = vadd.f32 %v1594, %v1642
  %1644 = vmatmul.bf16.gmra.mxu0 %v492
  %v1645 = vpop.f32.mrf.mxu0
  %v1646 = vadd.f32 %v1597, %v1645
  %v1647 = vpop.f32.mrf.mxu0
  %v1648 = vadd.f32 %v1599, %v1647
  %1649 = vmatmul.bf16.gmra.mxu0 %v501
  %v1650 = vpop.f32.mrf.mxu0
  %v1651 = vadd.f32 %v1602, %v1650
  %v1652 = vpop.f32.mrf.mxu0
  %v1653 = vadd.f32 %v1604, %v1652
  %1654 = vmatmul.bf16.gmra.mxu0 %v510
  %v1655 = vpop.f32.mrf.mxu0
  %v1656 = vadd.f32 %v1607, %v1655
  %v1657 = vpop.f32.mrf.mxu0
  %v1658 = vadd.f32 %v1609, %v1657
  %1659 = vmatmul.bf16.gmra.mxu0 %v519
  %v1660 = vpop.f32.mrf.mxu0
  %v1661 = vadd.f32 %v1612, %v1660
  %v1662 = vpop.f32.mrf.mxu0
  %v1663 = vadd.f32 %v1614, %v1662
  %1664 = vmatmul.bf16.gmra.mxu0 %v528
  %v1665 = vpop.f32.mrf.mxu0
  %v1666 = vadd.f32 %v1617, %v1665
  %v1667 = vpop.f32.mrf.mxu0
  %v1668 = vadd.f32 %v1619, %v1667
  %1669 = vmatmul.bf16.gmra.mxu0 %v537
  %v1670 = vpop.f32.mrf.mxu0
  %v1671 = vadd.f32 %v1622, %v1670
  %v1672 = vpop.f32.mrf.mxu0
  %v1673 = vadd.f32 %v1624, %v1672
  %1674 = vdwg.mxu0
  %1675 = vmatpush.bf16.msra.mxu0 %v1170
  %1676 = vmatpush.bf16.msra.mxu0 %v1168
  %1677 = vmatpush.bf16.msra.mxu0 %v1166
  %1678 = vmatpush.bf16.msra.mxu0 %v1164
  %1679 = vmatpush.bf16.msra.mxu0 %v1162
  %1680 = vmatpush.bf16.msra.mxu0 %v1160
  %1681 = vmatpush.bf16.msra.mxu0 %v1158
  %1682 = vmatpush.bf16.msra.mxu0 %v1156
  %1683 = vmatmul.bf16.gmra.mxu0 %v475
  %v1684 = vpop.f32.mrf.mxu0
  %v1685 = vadd.f32 %v1636, %v1684
  %v1686 = vpop.f32.mrf.mxu0
  %v1687 = vadd.f32 %v1638, %v1686
  %1688 = vmatmul.bf16.gmra.mxu0 %v484
  %v1689 = vpop.f32.mrf.mxu0
  %v1690 = vadd.f32 %v1641, %v1689
  %v1691 = vpop.f32.mrf.mxu0
  %v1692 = vadd.f32 %v1643, %v1691
  %1693 = vmatmul.bf16.gmra.mxu0 %v493
  %v1694 = vpop.f32.mrf.mxu0
  %v1695 = vadd.f32 %v1646, %v1694
  %v1696 = vpop.f32.mrf.mxu0
  %v1697 = vadd.f32 %v1648, %v1696
  %1698 = vmatmul.bf16.gmra.mxu0 %v502
  %v1699 = vpop.f32.mrf.mxu0
  %v1700 = vadd.f32 %v1651, %v1699
  %v1701 = vpop.f32.mrf.mxu0
  %v1702 = vadd.f32 %v1653, %v1701
  %1703 = vmatmul.bf16.gmra.mxu0 %v511
  %v1704 = vpop.f32.mrf.mxu0
  %v1705 = vadd.f32 %v1656, %v1704
  %v1706 = vpop.f32.mrf.mxu0
  %v1707 = vadd.f32 %v1658, %v1706
  %1708 = vmatmul.bf16.gmra.mxu0 %v520
  %v1709 = vpop.f32.mrf.mxu0
  %v1710 = vadd.f32 %v1661, %v1709
  %v1711 = vpop.f32.mrf.mxu0
  %v1712 = vadd.f32 %v1663, %v1711
  %1713 = vmatmul.bf16.gmra.mxu0 %v529
  %v1714 = vpop.f32.mrf.mxu0
  %v1715 = vadd.f32 %v1666, %v1714
  %v1716 = vpop.f32.mrf.mxu0
  %v1717 = vadd.f32 %v1668, %v1716
  %1718 = vmatmul.bf16.gmra.mxu0 %v538
  %v1719 = vpop.f32.mrf.mxu0
  %v1720 = vadd.f32 %v1671, %v1719
  %v1721 = vpop.f32.mrf.mxu0
  %v1722 = vadd.f32 %v1673, %v1721
  %1723 = vdwg.mxu0
  %1724 = vmatpush.bf16.msra.mxu0 %v1186
  %1725 = vmatpush.bf16.msra.mxu0 %v1184
  %1726 = vmatpush.bf16.msra.mxu0 %v1182
  %1727 = vmatpush.bf16.msra.mxu0 %v1180
  %1728 = vmatpush.bf16.msra.mxu0 %v1178
  %1729 = vmatpush.bf16.msra.mxu0 %v1176
  %1730 = vmatpush.bf16.msra.mxu0 %v1174
  %1731 = vmatpush.bf16.msra.mxu0 %v1172
  %1732 = vmatmul.bf16.gmra.mxu0 %v476
  %v1733 = vpop.f32.mrf.mxu0
  %v1734 = vadd.f32 %v1685, %v1733
  %v1735 = vpop.f32.mrf.mxu0
  %v1736 = vadd.f32 %v1687, %v1735
  %1737 = vmatmul.bf16.gmra.mxu0 %v485
  %v1738 = vpop.f32.mrf.mxu0
  %v1739 = vadd.f32 %v1690, %v1738
  %v1740 = vpop.f32.mrf.mxu0
  %v1741 = vadd.f32 %v1692, %v1740
  %1742 = vmatmul.bf16.gmra.mxu0 %v494
  %v1743 = vpop.f32.mrf.mxu0
  %v1744 = vadd.f32 %v1695, %v1743
  %v1745 = vpop.f32.mrf.mxu0
  %v1746 = vadd.f32 %v1697, %v1745
  %1747 = vmatmul.bf16.gmra.mxu0 %v503
  %v1748 = vpop.f32.mrf.mxu0
  %v1749 = vadd.f32 %v1700, %v1748
  %v1750 = vpop.f32.mrf.mxu0
  %v1751 = vadd.f32 %v1702, %v1750
  %1752 = vmatmul.bf16.gmra.mxu0 %v512
  %v1753 = vpop.f32.mrf.mxu0
  %v1754 = vadd.f32 %v1705, %v1753
  %v1755 = vpop.f32.mrf.mxu0
  %v1756 = vadd.f32 %v1707, %v1755
  %1757 = vmatmul.bf16.gmra.mxu0 %v521
  %v1758 = vpop.f32.mrf.mxu0
  %v1759 = vadd.f32 %v1710, %v1758
  %v1760 = vpop.f32.mrf.mxu0
  %v1761 = vadd.f32 %v1712, %v1760
  %1762 = vmatmul.bf16.gmra.mxu0 %v530
  %v1763 = vpop.f32.mrf.mxu0
  %v1764 = vadd.f32 %v1715, %v1763
  %v1765 = vpop.f32.mrf.mxu0
  %v1766 = vadd.f32 %v1717, %v1765
  %1767 = vmatmul.bf16.gmra.mxu0 %v539
  %v1768 = vpop.f32.mrf.mxu0
  %v1769 = vadd.f32 %v1720, %v1768
  %v1770 = vpop.f32.mrf.mxu0
  %v1771 = vadd.f32 %v1722, %v1770
  %1772 = vdwg.mxu0
  %1773 = vmatpush.bf16.msra.mxu0 %v1059
  %1774 = vmatpush.bf16.msra.mxu0 %v1057
  %1775 = vmatpush.bf16.msra.mxu0 %v1055
  %1776 = vmatpush.bf16.msra.mxu0 %v1053
  %1777 = vmatpush.bf16.msra.mxu0 %v1051
  %1778 = vmatpush.bf16.msra.mxu0 %v1049
  %1779 = vmatpush.bf16.msra.mxu0 %v1047
  %1780 = vmatpush.bf16.msra.mxu0 %v1045
  %1781 = vmatmul.bf16.gmra.mxu0 %v468
  %v1782 = vpop.f32.mrf.mxu0
  %v1783 = vadd.f32 %v241, %v1782
  %v1784 = vpop.f32.mrf.mxu0
  %v1785 = vadd.f32 %v241, %v1784
  %1786 = vmatmul.bf16.gmra.mxu0 %v477
  %v1787 = vpop.f32.mrf.mxu0
  %v1788 = vadd.f32 %v241, %v1787
  %v1789 = vpop.f32.mrf.mxu0
  %v1790 = vadd.f32 %v241, %v1789
  %1791 = vmatmul.bf16.gmra.mxu0 %v486
  %v1792 = vpop.f32.mrf.mxu0
  %v1793 = vadd.f32 %v241, %v1792
  %v1794 = vpop.f32.mrf.mxu0
  %v1795 = vadd.f32 %v241, %v1794
  %1796 = vmatmul.bf16.gmra.mxu0 %v495
  %v1797 = vpop.f32.mrf.mxu0
  %v1798 = vadd.f32 %v241, %v1797
  %v1799 = vpop.f32.mrf.mxu0
  %v1800 = vadd.f32 %v241, %v1799
  %1801 = vmatmul.bf16.gmra.mxu0 %v504
  %v1802 = vpop.f32.mrf.mxu0
  %v1803 = vadd.f32 %v241, %v1802
  %v1804 = vpop.f32.mrf.mxu0
  %v1805 = vadd.f32 %v241, %v1804
  %1806 = vmatmul.bf16.gmra.mxu0 %v513
  %v1807 = vpop.f32.mrf.mxu0
  %v1808 = vadd.f32 %v241, %v1807
  %v1809 = vpop.f32.mrf.mxu0
  %v1810 = vadd.f32 %v241, %v1809
  %1811 = vmatmul.bf16.gmra.mxu0 %v522
  %v1812 = vpop.f32.mrf.mxu0
  %v1813 = vadd.f32 %v241, %v1812
  %v1814 = vpop.f32.mrf.mxu0
  %v1815 = vadd.f32 %v241, %v1814
  %1816 = vmatmul.bf16.gmra.mxu0 %v531
  %v1817 = vpop.f32.mrf.mxu0
  %v1818 = vadd.f32 %v241, %v1817
  %v1819 = vpop.f32.mrf.mxu0
  %v1820 = vadd.f32 %v241, %v1819
  %1821 = vdwg.mxu0
  %1822 = vmatpush.bf16.msra.mxu0 %v1075
  %1823 = vmatpush.bf16.msra.mxu0 %v1073
  %1824 = vmatpush.bf16.msra.mxu0 %v1071
  %1825 = vmatpush.bf16.msra.mxu0 %v1069
  %1826 = vmatpush.bf16.msra.mxu0 %v1067
  %1827 = vmatpush.bf16.msra.mxu0 %v1065
  %1828 = vmatpush.bf16.msra.mxu0 %v1063
  %1829 = vmatpush.bf16.msra.mxu0 %v1061
  %1830 = vmatmul.bf16.gmra.mxu0 %v469
  %v1831 = vpop.f32.mrf.mxu0
  %v1832 = vadd.f32 %v1783, %v1831
  %v1833 = vpop.f32.mrf.mxu0
  %v1834 = vadd.f32 %v1785, %v1833
  %1835 = vmatmul.bf16.gmra.mxu0 %v478
  %v1836 = vpop.f32.mrf.mxu0
  %v1837 = vadd.f32 %v1788, %v1836
  %v1838 = vpop.f32.mrf.mxu0
  %v1839 = vadd.f32 %v1790, %v1838
  %1840 = vmatmul.bf16.gmra.mxu0 %v487
  %v1841 = vpop.f32.mrf.mxu0
  %v1842 = vadd.f32 %v1793, %v1841
  %v1843 = vpop.f32.mrf.mxu0
  %v1844 = vadd.f32 %v1795, %v1843
  %1845 = vmatmul.bf16.gmra.mxu0 %v496
  %v1846 = vpop.f32.mrf.mxu0
  %v1847 = vadd.f32 %v1798, %v1846
  %v1848 = vpop.f32.mrf.mxu0
  %v1849 = vadd.f32 %v1800, %v1848
  %1850 = vmatmul.bf16.gmra.mxu0 %v505
  %v1851 = vpop.f32.mrf.mxu0
  %v1852 = vadd.f32 %v1803, %v1851
  %v1853 = vpop.f32.mrf.mxu0
  %v1854 = vadd.f32 %v1805, %v1853
  %1855 = vmatmul.bf16.gmra.mxu0 %v514
  %v1856 = vpop.f32.mrf.mxu0
  %v1857 = vadd.f32 %v1808, %v1856
  %v1858 = vpop.f32.mrf.mxu0
  %v1859 = vadd.f32 %v1810, %v1858
  %1860 = vmatmul.bf16.gmra.mxu0 %v523
  %v1861 = vpop.f32.mrf.mxu0
  %v1862 = vadd.f32 %v1813, %v1861
  %v1863 = vpop.f32.mrf.mxu0
  %v1864 = vadd.f32 %v1815, %v1863
  %1865 = vmatmul.bf16.gmra.mxu0 %v532
  %v1866 = vpop.f32.mrf.mxu0
  %v1867 = vadd.f32 %v1818, %v1866
  %v1868 = vpop.f32.mrf.mxu0
  %v1869 = vadd.f32 %v1820, %v1868
  %1870 = vdwg.mxu0
  %1871 = vmatpush.bf16.msra.mxu0 %v1091
  %1872 = vmatpush.bf16.msra.mxu0 %v1089
  %1873 = vmatpush.bf16.msra.mxu0 %v1087
  %1874 = vmatpush.bf16.msra.mxu0 %v1085
  %1875 = vmatpush.bf16.msra.mxu0 %v1083
  %1876 = vmatpush.bf16.msra.mxu0 %v1081
  %1877 = vmatpush.bf16.msra.mxu0 %v1079
  %1878 = vmatpush.bf16.msra.mxu0 %v1077
  %1879 = vmatmul.bf16.gmra.mxu0 %v470
  %v1880 = vpop.f32.mrf.mxu0
  %v1881 = vadd.f32 %v1832, %v1880
  %v1882 = vpop.f32.mrf.mxu0
  %v1883 = vadd.f32 %v1834, %v1882
  %1884 = vmatmul.bf16.gmra.mxu0 %v479
  %v1885 = vpop.f32.mrf.mxu0
  %v1886 = vadd.f32 %v1837, %v1885
  %v1887 = vpop.f32.mrf.mxu0
  %v1888 = vadd.f32 %v1839, %v1887
  %1889 = vmatmul.bf16.gmra.mxu0 %v488
  %v1890 = vpop.f32.mrf.mxu0
  %v1891 = vadd.f32 %v1842, %v1890
  %v1892 = vpop.f32.mrf.mxu0
  %v1893 = vadd.f32 %v1844, %v1892
  %1894 = vmatmul.bf16.gmra.mxu0 %v497
  %v1895 = vpop.f32.mrf.mxu0
  %v1896 = vadd.f32 %v1847, %v1895
  %v1897 = vpop.f32.mrf.mxu0
  %v1898 = vadd.f32 %v1849, %v1897
  %1899 = vmatmul.bf16.gmra.mxu0 %v506
  %v1900 = vpop.f32.mrf.mxu0
  %v1901 = vadd.f32 %v1852, %v1900
  %v1902 = vpop.f32.mrf.mxu0
  %v1903 = vadd.f32 %v1854, %v1902
  %1904 = vmatmul.bf16.gmra.mxu0 %v515
  %v1905 = vpop.f32.mrf.mxu0
  %v1906 = vadd.f32 %v1857, %v1905
  %v1907 = vpop.f32.mrf.mxu0
  %v1908 = vadd.f32 %v1859, %v1907
  %1909 = vmatmul.bf16.gmra.mxu0 %v524
  %v1910 = vpop.f32.mrf.mxu0
  %v1911 = vadd.f32 %v1862, %v1910
  %v1912 = vpop.f32.mrf.mxu0
  %v1913 = vadd.f32 %v1864, %v1912
  %1914 = vmatmul.bf16.gmra.mxu0 %v533
  %v1915 = vpop.f32.mrf.mxu0
  %v1916 = vadd.f32 %v1867, %v1915
  %v1917 = vpop.f32.mrf.mxu0
  %v1918 = vadd.f32 %v1869, %v1917
  %1919 = vdwg.mxu0
  %1920 = vmatpush.bf16.msra.mxu0 %v1107
  %1921 = vmatpush.bf16.msra.mxu0 %v1105
  %1922 = vmatpush.bf16.msra.mxu0 %v1103
  %1923 = vmatpush.bf16.msra.mxu0 %v1101
  %1924 = vmatpush.bf16.msra.mxu0 %v1099
  %1925 = vmatpush.bf16.msra.mxu0 %v1097
  %1926 = vmatpush.bf16.msra.mxu0 %v1095
  %1927 = vmatpush.bf16.msra.mxu0 %v1093
  %1928 = vmatmul.bf16.gmra.mxu0 %v471
  %v1929 = vpop.f32.mrf.mxu0
  %v1930 = vadd.f32 %v1881, %v1929
  %v1931 = vpop.f32.mrf.mxu0
  %v1932 = vadd.f32 %v1883, %v1931
  %1933 = vmatmul.bf16.gmra.mxu0 %v480
  %v1934 = vpop.f32.mrf.mxu0
  %v1935 = vadd.f32 %v1886, %v1934
  %v1936 = vpop.f32.mrf.mxu0
  %v1937 = vadd.f32 %v1888, %v1936
  %1938 = vmatmul.bf16.gmra.mxu0 %v489
  %v1939 = vpop.f32.mrf.mxu0
  %v1940 = vadd.f32 %v1891, %v1939
  %v1941 = vpop.f32.mrf.mxu0
  %v1942 = vadd.f32 %v1893, %v1941
  %1943 = vmatmul.bf16.gmra.mxu0 %v498
  %v1944 = vpop.f32.mrf.mxu0
  %v1945 = vadd.f32 %v1896, %v1944
  %v1946 = vpop.f32.mrf.mxu0
  %v1947 = vadd.f32 %v1898, %v1946
  %1948 = vmatmul.bf16.gmra.mxu0 %v507
  %v1949 = vpop.f32.mrf.mxu0
  %v1950 = vadd.f32 %v1901, %v1949
  %v1951 = vpop.f32.mrf.mxu0
  %v1952 = vadd.f32 %v1903, %v1951
  %1953 = vmatmul.bf16.gmra.mxu0 %v516
  %v1954 = vpop.f32.mrf.mxu0
  %v1955 = vadd.f32 %v1906, %v1954
  %v1956 = vpop.f32.mrf.mxu0
  %v1957 = vadd.f32 %v1908, %v1956
  %1958 = vmatmul.bf16.gmra.mxu0 %v525
  %v1959 = vpop.f32.mrf.mxu0
  %v1960 = vadd.f32 %v1911, %v1959
  %v1961 = vpop.f32.mrf.mxu0
  %v1962 = vadd.f32 %v1913, %v1961
  %1963 = vmatmul.bf16.gmra.mxu0 %v534
  %v1964 = vpop.f32.mrf.mxu0
  %v1965 = vadd.f32 %v1916, %v1964
  %v1966 = vpop.f32.mrf.mxu0
  %v1967 = vadd.f32 %v1918, %v1966
  %1968 = vdwg.mxu0
  %1969 = vmatpush.bf16.msra.mxu0 %v1123
  %1970 = vmatpush.bf16.msra.mxu0 %v1121
  %1971 = vmatpush.bf16.msra.mxu0 %v1119
  %1972 = vmatpush.bf16.msra.mxu0 %v1117
  %1973 = vmatpush.bf16.msra.mxu0 %v1115
  %1974 = vmatpush.bf16.msra.mxu0 %v1113
  %1975 = vmatpush.bf16.msra.mxu0 %v1111
  %1976 = vmatpush.bf16.msra.mxu0 %v1109
  %1977 = vmatmul.bf16.gmra.mxu0 %v472
  %v1978 = vpop.f32.mrf.mxu0
  %v1979 = vadd.f32 %v1930, %v1978
  %v1980 = vpop.f32.mrf.mxu0
  %v1981 = vadd.f32 %v1932, %v1980
  %1982 = vmatmul.bf16.gmra.mxu0 %v481
  %v1983 = vpop.f32.mrf.mxu0
  %v1984 = vadd.f32 %v1935, %v1983
  %v1985 = vpop.f32.mrf.mxu0
  %v1986 = vadd.f32 %v1937, %v1985
  %1987 = vmatmul.bf16.gmra.mxu0 %v490
  %v1988 = vpop.f32.mrf.mxu0
  %v1989 = vadd.f32 %v1940, %v1988
  %v1990 = vpop.f32.mrf.mxu0
  %v1991 = vadd.f32 %v1942, %v1990
  %1992 = vmatmul.bf16.gmra.mxu0 %v499
  %v1993 = vpop.f32.mrf.mxu0
  %v1994 = vadd.f32 %v1945, %v1993
  %v1995 = vpop.f32.mrf.mxu0
  %v1996 = vadd.f32 %v1947, %v1995
  %1997 = vmatmul.bf16.gmra.mxu0 %v508
  %v1998 = vpop.f32.mrf.mxu0
  %v1999 = vadd.f32 %v1950, %v1998
  %v2000 = vpop.f32.mrf.mxu0
  %v2001 = vadd.f32 %v1952, %v2000
  %2002 = vmatmul.bf16.gmra.mxu0 %v517
  %v2003 = vpop.f32.mrf.mxu0
  %v2004 = vadd.f32 %v1955, %v2003
  %v2005 = vpop.f32.mrf.mxu0
  %v2006 = vadd.f32 %v1957, %v2005
  %2007 = vmatmul.bf16.gmra.mxu0 %v526
  %v2008 = vpop.f32.mrf.mxu0
  %v2009 = vadd.f32 %v1960, %v2008
  %v2010 = vpop.f32.mrf.mxu0
  %v2011 = vadd.f32 %v1962, %v2010
  %2012 = vmatmul.bf16.gmra.mxu0 %v535
  %v2013 = vpop.f32.mrf.mxu0
  %v2014 = vadd.f32 %v1965, %v2013
  %v2015 = vpop.f32.mrf.mxu0
  %v2016 = vadd.f32 %v1967, %v2015
  %2017 = vdwg.mxu0
  %2018 = vmatpush.bf16.msra.mxu0 %v1139
  %2019 = vmatpush.bf16.msra.mxu0 %v1137
  %2020 = vmatpush.bf16.msra.mxu0 %v1135
  %2021 = vmatpush.bf16.msra.mxu0 %v1133
  %2022 = vmatpush.bf16.msra.mxu0 %v1131
  %2023 = vmatpush.bf16.msra.mxu0 %v1129
  %2024 = vmatpush.bf16.msra.mxu0 %v1127
  %2025 = vmatpush.bf16.msra.mxu0 %v1125
  %2026 = vmatmul.bf16.gmra.mxu0 %v473
  %v2027 = vpop.f32.mrf.mxu0
  %v2028 = vadd.f32 %v1979, %v2027
  %v2029 = vpop.f32.mrf.mxu0
  %v2030 = vadd.f32 %v1981, %v2029
  %2031 = vmatmul.bf16.gmra.mxu0 %v482
  %v2032 = vpop.f32.mrf.mxu0
  %v2033 = vadd.f32 %v1984, %v2032
  %v2034 = vpop.f32.mrf.mxu0
  %v2035 = vadd.f32 %v1986, %v2034
  %2036 = vmatmul.bf16.gmra.mxu0 %v491
  %v2037 = vpop.f32.mrf.mxu0
  %v2038 = vadd.f32 %v1989, %v2037
  %v2039 = vpop.f32.mrf.mxu0
  %v2040 = vadd.f32 %v1991, %v2039
  %2041 = vmatmul.bf16.gmra.mxu0 %v500
  %v2042 = vpop.f32.mrf.mxu0
  %v2043 = vadd.f32 %v1994, %v2042
  %v2044 = vpop.f32.mrf.mxu0
  %v2045 = vadd.f32 %v1996, %v2044
  %2046 = vmatmul.bf16.gmra.mxu0 %v509
  %v2047 = vpop.f32.mrf.mxu0
  %v2048 = vadd.f32 %v1999, %v2047
  %v2049 = vpop.f32.mrf.mxu0
  %v2050 = vadd.f32 %v2001, %v2049
  %2051 = vmatmul.bf16.gmra.mxu0 %v518
  %v2052 = vpop.f32.mrf.mxu0
  %v2053 = vadd.f32 %v2004, %v2052
  %v2054 = vpop.f32.mrf.mxu0
  %v2055 = vadd.f32 %v2006, %v2054
  %2056 = vmatmul.bf16.gmra.mxu0 %v527
  %v2057 = vpop.f32.mrf.mxu0
  %v2058 = vadd.f32 %v2009, %v2057
  %v2059 = vpop.f32.mrf.mxu0
  %v2060 = vadd.f32 %v2011, %v2059
  %2061 = vmatmul.bf16.gmra.mxu0 %v536
  %v2062 = vpop.f32.mrf.mxu0
  %v2063 = vadd.f32 %v2014, %v2062
  %v2064 = vpop.f32.mrf.mxu0
  %v2065 = vadd.f32 %v2016, %v2064
  %2066 = vdwg.mxu0
  %2067 = vmatpush.bf16.msra.mxu0 %v1155
  %2068 = vmatpush.bf16.msra.mxu0 %v1153
  %2069 = vmatpush.bf16.msra.mxu0 %v1151
  %2070 = vmatpush.bf16.msra.mxu0 %v1149
  %2071 = vmatpush.bf16.msra.mxu0 %v1147
  %2072 = vmatpush.bf16.msra.mxu0 %v1145
  %2073 = vmatpush.bf16.msra.mxu0 %v1143
  %2074 = vmatpush.bf16.msra.mxu0 %v1141
  %2075 = vmatmul.bf16.gmra.mxu0 %v474
  %v2076 = vpop.f32.mrf.mxu0
  %v2077 = vadd.f32 %v2028, %v2076
  %v2078 = vpop.f32.mrf.mxu0
  %v2079 = vadd.f32 %v2030, %v2078
  %2080 = vmatmul.bf16.gmra.mxu0 %v483
  %v2081 = vpop.f32.mrf.mxu0
  %v2082 = vadd.f32 %v2033, %v2081
  %v2083 = vpop.f32.mrf.mxu0
  %v2084 = vadd.f32 %v2035, %v2083
  %2085 = vmatmul.bf16.gmra.mxu0 %v492
  %v2086 = vpop.f32.mrf.mxu0
  %v2087 = vadd.f32 %v2038, %v2086
  %v2088 = vpop.f32.mrf.mxu0
  %v2089 = vadd.f32 %v2040, %v2088
  %2090 = vmatmul.bf16.gmra.mxu0 %v501
  %v2091 = vpop.f32.mrf.mxu0
  %v2092 = vadd.f32 %v2043, %v2091
  %v2093 = vpop.f32.mrf.mxu0
  %v2094 = vadd.f32 %v2045, %v2093
  %2095 = vmatmul.bf16.gmra.mxu0 %v510
  %v2096 = vpop.f32.mrf.mxu0
  %v2097 = vadd.f32 %v2048, %v2096
  %v2098 = vpop.f32.mrf.mxu0
  %v2099 = vadd.f32 %v2050, %v2098
  %2100 = vmatmul.bf16.gmra.mxu0 %v519
  %v2101 = vpop.f32.mrf.mxu0
  %v2102 = vadd.f32 %v2053, %v2101
  %v2103 = vpop.f32.mrf.mxu0
  %v2104 = vadd.f32 %v2055, %v2103
  %2105 = vmatmul.bf16.gmra.mxu0 %v528
  %v2106 = vpop.f32.mrf.mxu0
  %v2107 = vadd.f32 %v2058, %v2106
  %v2108 = vpop.f32.mrf.mxu0
  %v2109 = vadd.f32 %v2060, %v2108
  %2110 = vmatmul.bf16.gmra.mxu0 %v537
  %v2111 = vpop.f32.mrf.mxu0
  %v2112 = vadd.f32 %v2063, %v2111
  %v2113 = vpop.f32.mrf.mxu0
  %v2114 = vadd.f32 %v2065, %v2113
  %2115 = vdwg.mxu0
  %2116 = vmatpush.bf16.msra.mxu0 %v1171
  %2117 = vmatpush.bf16.msra.mxu0 %v1169
  %2118 = vmatpush.bf16.msra.mxu0 %v1167
  %2119 = vmatpush.bf16.msra.mxu0 %v1165
  %2120 = vmatpush.bf16.msra.mxu0 %v1163
  %2121 = vmatpush.bf16.msra.mxu0 %v1161
  %2122 = vmatpush.bf16.msra.mxu0 %v1159
  %2123 = vmatpush.bf16.msra.mxu0 %v1157
  %2124 = vmatmul.bf16.gmra.mxu0 %v475
  %v2125 = vpop.f32.mrf.mxu0
  %v2126 = vadd.f32 %v2077, %v2125
  %v2127 = vpop.f32.mrf.mxu0
  %v2128 = vadd.f32 %v2079, %v2127
  %2129 = vmatmul.bf16.gmra.mxu0 %v484
  %v2130 = vpop.f32.mrf.mxu0
  %v2131 = vadd.f32 %v2082, %v2130
  %v2132 = vpop.f32.mrf.mxu0
  %v2133 = vadd.f32 %v2084, %v2132
  %2134 = vmatmul.bf16.gmra.mxu0 %v493
  %v2135 = vpop.f32.mrf.mxu0
  %v2136 = vadd.f32 %v2087, %v2135
  %v2137 = vpop.f32.mrf.mxu0
  %v2138 = vadd.f32 %v2089, %v2137
  %2139 = vmatmul.bf16.gmra.mxu0 %v502
  %v2140 = vpop.f32.mrf.mxu0
  %v2141 = vadd.f32 %v2092, %v2140
  %v2142 = vpop.f32.mrf.mxu0
  %v2143 = vadd.f32 %v2094, %v2142
  %2144 = vmatmul.bf16.gmra.mxu0 %v511
  %v2145 = vpop.f32.mrf.mxu0
  %v2146 = vadd.f32 %v2097, %v2145
  %v2147 = vpop.f32.mrf.mxu0
  %v2148 = vadd.f32 %v2099, %v2147
  %2149 = vmatmul.bf16.gmra.mxu0 %v520
  %v2150 = vpop.f32.mrf.mxu0
  %v2151 = vadd.f32 %v2102, %v2150
  %v2152 = vpop.f32.mrf.mxu0
  %v2153 = vadd.f32 %v2104, %v2152
  %2154 = vmatmul.bf16.gmra.mxu0 %v529
  %v2155 = vpop.f32.mrf.mxu0
  %v2156 = vadd.f32 %v2107, %v2155
  %v2157 = vpop.f32.mrf.mxu0
  %v2158 = vadd.f32 %v2109, %v2157
  %2159 = vmatmul.bf16.gmra.mxu0 %v538
  %v2160 = vpop.f32.mrf.mxu0
  %v2161 = vadd.f32 %v2112, %v2160
  %v2162 = vpop.f32.mrf.mxu0
  %v2163 = vadd.f32 %v2114, %v2162
  %2164 = vdwg.mxu0
  %2165 = vmatpush.bf16.msra.mxu0 %v1187
  %2166 = vmatpush.bf16.msra.mxu0 %v1185
  %2167 = vmatpush.bf16.msra.mxu0 %v1183
  %2168 = vmatpush.bf16.msra.mxu0 %v1181
  %2169 = vmatpush.bf16.msra.mxu0 %v1179
  %2170 = vmatpush.bf16.msra.mxu0 %v1177
  %2171 = vmatpush.bf16.msra.mxu0 %v1175
  %2172 = vmatpush.bf16.msra.mxu0 %v1173
  %2173 = vmatmul.bf16.gmra.mxu0 %v476
  %v2174 = vpop.f32.mrf.mxu0
  %v2175 = vadd.f32 %v2126, %v2174
  %v2176 = vpop.f32.mrf.mxu0
  %v2177 = vadd.f32 %v2128, %v2176
  %2178 = vmatmul.bf16.gmra.mxu0 %v485
  %v2179 = vpop.f32.mrf.mxu0
  %v2180 = vadd.f32 %v2131, %v2179
  %v2181 = vpop.f32.mrf.mxu0
  %v2182 = vadd.f32 %v2133, %v2181
  %2183 = vmatmul.bf16.gmra.mxu0 %v494
  %v2184 = vpop.f32.mrf.mxu0
  %v2185 = vadd.f32 %v2136, %v2184
  %v2186 = vpop.f32.mrf.mxu0
  %v2187 = vadd.f32 %v2138, %v2186
  %2188 = vmatmul.bf16.gmra.mxu0 %v503
  %v2189 = vpop.f32.mrf.mxu0
  %v2190 = vadd.f32 %v2141, %v2189
  %v2191 = vpop.f32.mrf.mxu0
  %v2192 = vadd.f32 %v2143, %v2191
  %2193 = vmatmul.bf16.gmra.mxu0 %v512
  %v2194 = vpop.f32.mrf.mxu0
  %v2195 = vadd.f32 %v2146, %v2194
  %v2196 = vpop.f32.mrf.mxu0
  %v2197 = vadd.f32 %v2148, %v2196
  %2198 = vmatmul.bf16.gmra.mxu0 %v521
  %v2199 = vpop.f32.mrf.mxu0
  %v2200 = vadd.f32 %v2151, %v2199
  %v2201 = vpop.f32.mrf.mxu0
  %v2202 = vadd.f32 %v2153, %v2201
  %2203 = vmatmul.bf16.gmra.mxu0 %v530
  %v2204 = vpop.f32.mrf.mxu0
  %v2205 = vadd.f32 %v2156, %v2204
  %v2206 = vpop.f32.mrf.mxu0
  %v2207 = vadd.f32 %v2158, %v2206
  %2208 = vmatmul.bf16.gmra.mxu0 %v539
  %v2209 = vpop.f32.mrf.mxu0
  %v2210 = vadd.f32 %v2161, %v2209
  %v2211 = vpop.f32.mrf.mxu0
  %v2212 = vadd.f32 %v2163, %v2211
  %2213 = vdwg.mxu0
  %v2214 = vmax.f32 %v1734, 0.0
  %v2215 = vmax.f32 %v2175, 0.0
  %v2216 = vmax.f32 %v1736, 0.0
  %v2217 = vmax.f32 %v2177, 0.0
  %v2218 = vmax.f32 %v1739, 0.0
  %v2219 = vmax.f32 %v2180, 0.0
  %v2220 = vmax.f32 %v1741, 0.0
  %v2221 = vmax.f32 %v2182, 0.0
  %v2222 = vmax.f32 %v1744, 0.0
  %v2223 = vmax.f32 %v2185, 0.0
  %v2224 = vmax.f32 %v1746, 0.0
  %v2225 = vmax.f32 %v2187, 0.0
  %v2226 = vmax.f32 %v1749, 0.0
  %v2227 = vmax.f32 %v2190, 0.0
  %v2228 = vmax.f32 %v1751, 0.0
  %v2229 = vmax.f32 %v2192, 0.0
  %v2230 = vmax.f32 %v1754, 0.0
  %v2231 = vmax.f32 %v2195, 0.0
  %v2232 = vmax.f32 %v1756, 0.0
  %v2233 = vmax.f32 %v2197, 0.0
  %v2234 = vmax.f32 %v1759, 0.0
  %v2235 = vmax.f32 %v2200, 0.0
  %v2236 = vmax.f32 %v1761, 0.0
  %v2237 = vmax.f32 %v2202, 0.0
  %v2238 = vmax.f32 %v1764, 0.0
  %v2239 = vmax.f32 %v2205, 0.0
  %v2240 = vmax.f32 %v1766, 0.0
  %v2241 = vmax.f32 %v2207, 0.0
  %v2242 = vmax.f32 %v1769, 0.0
  %v2243 = vmax.f32 %v2210, 0.0
  %v2244 = vmax.f32 %v1771, 0.0
  %v2245 = vmax.f32 %v2212, 0.0
  %v2246 = vpack.c.bf16 %v2215, %v2214
  %v2247 = vpack.c.bf16 %v2217, %v2216
  %v2248 = vpack.c.bf16 %v2219, %v2218
  %v2249 = vpack.c.bf16 %v2221, %v2220
  %v2250 = vpack.c.bf16 %v2223, %v2222
  %v2251 = vpack.c.bf16 %v2225, %v2224
  %v2252 = vpack.c.bf16 %v2227, %v2226
  %v2253 = vpack.c.bf16 %v2229, %v2228
  %v2254 = vpack.c.bf16 %v2231, %v2230
  %v2255 = vpack.c.bf16 %v2233, %v2232
  %v2256 = vpack.c.bf16 %v2235, %v2234
  %v2257 = vpack.c.bf16 %v2237, %v2236
  %v2258 = vpack.c.bf16 %v2239, %v2238
  %v2259 = vpack.c.bf16 %v2241, %v2240
  %v2260 = vpack.c.bf16 %v2243, %v2242
  %v2261 = vpack.c.bf16 %v2245, %v2244
  %2262 = vst [vmem:[%s3] sm:$0xff] %v2246
  %2263 = vst [vmem:[%s3 + $0x8] sm:$0xff] %v2247
  %2264 = vst [vmem:[%s3 + $0x10] sm:$0xff] %v2248
  %2265 = vst [vmem:[%s3 + $0x18] sm:$0xff] %v2249
  %2266 = vst [vmem:[%s3 + $0x20] sm:$0xff] %v2250
  %2267 = vst [vmem:[%s3 + $0x28] sm:$0xff] %v2251
  %2268 = vst [vmem:[%s3 + $0x30] sm:$0xff] %v2252
  %2269 = vst [vmem:[%s3 + $0x38] sm:$0xff] %v2253
  %2270 = vst [vmem:[%s3 + $0x40] sm:$0xff] %v2254
  %2271 = vst [vmem:[%s3 + $0x48] sm:$0xff] %v2255
  %2272 = vst [vmem:[%s3 + $0x50] sm:$0xff] %v2256
  %2273 = vst [vmem:[%s3 + $0x58] sm:$0xff] %v2257
  %2274 = vst [vmem:[%s3 + $0x60] sm:$0xff] %v2258
  %2275 = vst [vmem:[%s3 + $0x68] sm:$0xff] %v2259
  %2276 = vst [vmem:[%s3 + $0x70] sm:$0xff] %v2260
  %2277 = vst [vmem:[%s3 + $0x78] sm:$0xff] %v2261
  // Predicated region
  $region14: #{depth_star_forward.26} parent=0 // pred_check
    _
  $region15: #{depth_star_forward.26} parent=0 // pred_check_branch
    %2279 = sbr.rel (0) target = $region17
  $region16: #{depth_star_forward.26} parent=0 // pred_region
    _
  $region17: #{depth_star_forward.26} parent=0 // pred_fallthru
    _
  // Predicated region
  $region18: #{depth_star_forward.26} parent=0 // pred_check
    _
  $region19: #{depth_star_forward.26} parent=0 // pred_check_branch
    %2281 = sbr.rel (0) target = $region21
  $region20: #{depth_star_forward.26} parent=0 // pred_region
    _
  $region21: #{depth_star_forward.26} parent=0 // pred_fallthru
    _

// kernel: depth_star_forward.27
$region0: #{depth_star_forward.27}
  #allocation0 [shape = 'u32[]', space=smem, size = 0x4, offset = 0x4, fixed_abs, tag = 'smem constant byte address 0x4 - core index']
  #allocation1 [shape = 'u32[72,128]{1,0:T(1,128)}', space=vmem, size = 0x9000, scoped, tag = 'internal scratch']
  #allocation2 [shape = 'f32[1,1]{1,0:T(1,128)S(1)}', space=vmem, size = 0x200, scoped, tag = 'scoped memory for depth_star_forward.27']
  %s0 = inlined_call_operand.vmem [shape: bf16[512,576], index: 0, kind: input, shape index: {}]
  %s1 = inlined_call_operand.vmem [shape: bf16[576,1], index: 1, kind: input, shape index: {}]
  %s2 = inlined_call_operand.<no memory space> [shape: f32[1,1], index: 2, kind: input, shape index: {}]
  %s3 = inlined_call_operand.vmem [shape: f32[512,1], index: 3, kind: output, shape index: {}]
  %s4 = sld [smem:[#allocation0]]
  $region45: #{depth_star_forward.27} parent=0
    _
  %s6 = ssub.s32 1, %s4
  %s7 = scalar_select 0, %s6, %s4
  %v8 = vstv %s2
  %9 = vst [vmem:[#allocation2] sm:$0x1] %v8
  loop: start=0, step=1, limit=4
  $region2: #{depth_star_forward.27} parent=0 // loop_pre_header
    _
  $region3: #{depth_star_forward.27} parent=0 // loop_header
    %s11 = sphi 0, %s15
    %p12 = scmp.ge.s32.totalorder %s11, 4
    %s21 = sphi 0, %s23
    %s24 = sphi 0, %s21
    %s25 = sphi 0, %s24
    %s41 = sphi 0, %s25
    %s45 = sphi 0, %s45
    %s47 = sphi 0, %s45
    %s48 = sphi 0, %s47
    %s62 = sphi 0, %s48
    %s66 = sphi 0, %s66
    %s68 = sphi 0, %s66
    %s69 = sphi 0, %s68
    %s83 = sphi 0, %s69
    %s89 = sphi 0, %s91
    %s92 = sphi 0, %s89
    %s93 = sphi 0, %s92
    %s109 = sphi 0, %s93
  $region4: #{depth_star_forward.27} parent=0 // loop_header_branch
    %14 = sbr.rel (%p12) target = $region8
  $region5: #{depth_star_forward.27} parent=0 // loop_body
    %s16 = ssub.s32 %s11, 1
    %s17 = ssub.s32 %s11, 2
    %s18 = sadd.s32 %s11, 1
    %s19 = ssub.s32 %s11, %s18
    %p20 = scmp.eq.s32.totalorder %s19, 0
    %s22 = sadd.s32 %s21, 1
    %s23 = scalar_select %p20, %s21, %s22
    %p26 = pneg %p20
    %p27 = scmp.eq.s32.totalorder %s11, 1
    %p28 = por %p26, %p27
    %p29 = scmp.ne.s32.totalorder %s21, %s24
    %p30 = scmp.eq.s32.totalorder %s11, 0
    %p31 = por %p29, %p30
    %p32 = scmp.ne.s32.totalorder %s21, %s24
    %p33 = scmp.eq.s32.totalorder %s16, 1
    %p34 = por %p32, %p33
    %p35 = scmp.ne.s32.totalorder %s24, %s25
    %p36 = scmp.eq.s32.totalorder %s16, 0
    %p37 = por %p35, %p36
    %p38 = scmp.ne.s32.totalorder %s24, %s25
    %p39 = scmp.eq.s32.totalorder %s17, 1
    %p40 = por %p38, %p39
    %p42 = scmp.ne.s32.totalorder %s25, %s41
    %p43 = scmp.eq.s32.totalorder %s17, 0
    %p44 = por %p42, %p43
    %s46 = sadd.s32 %s45, 1
    %p49 = scmp.eq.s32.totalorder %s11, 1
    %p50 = scmp.ne.s32.totalorder %s45, %s47
    %p51 = scmp.eq.s32.totalorder %s11, 0
    %p52 = por %p50, %p51
    %p53 = scmp.ne.s32.totalorder %s45, %s47
    %p54 = scmp.eq.s32.totalorder %s16, 1
    %p55 = por %p53, %p54
    %p56 = scmp.ne.s32.totalorder %s47, %s48
    %p57 = scmp.eq.s32.totalorder %s16, 0
    %p58 = por %p56, %p57
    %p59 = scmp.ne.s32.totalorder %s47, %s48
    %p60 = scmp.eq.s32.totalorder %s17, 1
    %p61 = por %p59, %p60
    %p63 = scmp.ne.s32.totalorder %s48, %s62
    %p64 = scmp.eq.s32.totalorder %s17, 0
    %p65 = por %p63, %p64
    %s67 = sadd.s32 %s66, 1
    %p70 = scmp.eq.s32.totalorder %s11, 1
    %p71 = scmp.ne.s32.totalorder %s66, %s68
    %p72 = scmp.eq.s32.totalorder %s11, 0
    %p73 = por %p71, %p72
    %p74 = scmp.ne.s32.totalorder %s66, %s68
    %p75 = scmp.eq.s32.totalorder %s16, 1
    %p76 = por %p74, %p75
    %p77 = scmp.ne.s32.totalorder %s68, %s69
    %p78 = scmp.eq.s32.totalorder %s16, 0
    %p79 = por %p77, %p78
    %p80 = scmp.ne.s32.totalorder %s68, %s69
    %p81 = scmp.eq.s32.totalorder %s17, 1
    %p82 = por %p80, %p81
    %p84 = scmp.ne.s32.totalorder %s69, %s83
    %p85 = scmp.eq.s32.totalorder %s17, 0
    %p86 = por %p84, %p85
    %s87 = ssub.s32 %s11, %s18
    %p88 = scmp.eq.s32.totalorder %s87, 0
    %s90 = sadd.s32 %s89, 1
    %s91 = scalar_select %p88, %s89, %s90
    %p94 = pneg %p88
    %p95 = scmp.eq.s32.totalorder %s11, 1
    %p96 = por %p94, %p95
    %p97 = scmp.ne.s32.totalorder %s89, %s92
    %p98 = scmp.eq.s32.totalorder %s11, 0
    %p99 = por %p97, %p98
    %p100 = scmp.ne.s32.totalorder %s89, %s92
    %p101 = scmp.eq.s32.totalorder %s16, 1
    %p102 = por %p100, %p101
    %p103 = scmp.ne.s32.totalorder %s92, %s93
    %p104 = scmp.eq.s32.totalorder %s16, 0
    %p105 = por %p103, %p104
    %p106 = scmp.ne.s32.totalorder %s92, %s93
    %p107 = scmp.eq.s32.totalorder %s17, 1
    %p108 = por %p106, %p107
    %p110 = scmp.ne.s32.totalorder %s93, %s109
    %p111 = scmp.eq.s32.totalorder %s17, 0
    %p112 = por %p110, %p111
    %p113 = scmp.le.s32.totalorder 1, %s11
    %p114 = scmp.lt.s32.totalorder %s11, 3
    %p115 = pnand %p113, %p114
    %p116 = pneg %p115
    // Predicated region
    $region9: #{depth_star_forward.27} parent=5 // pred_check
      _
    $region10: #{depth_star_forward.27} parent=5 // pred_check_branch
      %118 = sbr.rel (%p115) target = $region12
    $region11: #{depth_star_forward.27} parent=5 // pred_region
      %s119 = ssub.s32 %s11, 1
      // Predicated region
      $region13: #{depth_star_forward.27} parent=11 // pred_check
        %p120 = pneg %p58
      $region14: #{depth_star_forward.27} parent=11 // pred_check_branch
        %122 = sbr.rel (%p120) target = $region16
      $region15: #{depth_star_forward.27} parent=11 // pred_region
        _
      $region16: #{depth_star_forward.27} parent=11 // pred_fallthru
        _
      // Predicated region
      $region17: #{depth_star_forward.27} parent=11 // pred_check
        %p123 = pneg %p79
      $region18: #{depth_star_forward.27} parent=11 // pred_check_branch
        %125 = sbr.rel (%p123) target = $region20
      $region19: #{depth_star_forward.27} parent=11 // pred_region
        _
      $region20: #{depth_star_forward.27} parent=11 // pred_fallthru
        _
    $region12: #{depth_star_forward.27} parent=5 // pred_fallthru
      _
    %p126 = scmp.lt.s32.totalorder %s11, 2
    // Predicated region
    $region21: #{depth_star_forward.27} parent=5 // pred_check
      %p127 = pneg %p126
    $region22: #{depth_star_forward.27} parent=5 // pred_check_branch
      %129 = sbr.rel (%p127) target = $region24
    $region23: #{depth_star_forward.27} parent=5 // pred_region
      // Predicated region
      $region25: #{depth_star_forward.27} parent=23 // pred_check
        %p130 = pneg %p31
      $region26: #{depth_star_forward.27} parent=23 // pred_check_branch
        %132 = sbr.rel (%p130) target = $region28
      $region27: #{depth_star_forward.27} parent=23 // pred_region
        %s133 = smul.u32 32, %s11
        %p134 = scmp.lt.s32.totalorder %s133, 63
        %s135 = scalar_select %p134, %s133, 63
        %s136 = smul.addr %s135, 5
        %s137 = smul.addr %s136, 4
        %s138 = scalar_lea.vmem %s0, %s137
        %s139 = smul.u32 32, %s11
      $region28: #{depth_star_forward.27} parent=23 // pred_fallthru
        _
    $region24: #{depth_star_forward.27} parent=5 // pred_fallthru
      _
    %p140 = scmp.le.s32.totalorder 1, %s11
    %p141 = scmp.lt.s32.totalorder %s11, 3
    %p142 = pnand %p140, %p141
    %p143 = pneg %p142
    // Predicated region
    $region29: #{depth_star_forward.27} parent=5 // pred_check
      _
    $region30: #{depth_star_forward.27} parent=5 // pred_check_branch
      %145 = sbr.rel (%p142) target = $region32
    $region31: #{depth_star_forward.27} parent=5 // pred_region
      %s146 = ssub.s32 %s11, 1
      %s147 = smul.u32 32, %s16
      %p148 = scmp.lt.s32.totalorder %s147, 63
      %s149 = scalar_select %p148, %s147, 63
      %s150 = smul.addr %s149, 5
      %s151 = smul.addr %s150, 4
      %s152 = scalar_lea.vmem %s0, %s151
      %p153 = pneg %p37
      %p154 = pneg %p34
      %p155 = pneg %p58
      %p156 = pneg %p55
      %p157 = pneg %p79
      %p158 = pneg %p76
      %p159 = pneg %p105
      %p160 = pneg %p102
      %s161 = smul.u32 32, %s16
      %p162 = scmp.lt.s32.totalorder %s161, 63
      %s163 = scalar_select %p162, %s161, 63
      %s164 = smul.addr %s163, 8
      %s165 = scalar_lea.vmem %s3, %s164
      %s166 = smul.u32 32, %s16
      %p167 = scmp.lt.s32.totalorder %s166, 63
      %s168 = scalar_select %p167, %s166, 63
      %s169 = smul.addr %s168, 5
      %s170 = smul.addr %s169, 4
      %s171 = scalar_lea.vmem %s0, %s170
      %s172 = smul.u32 32, %s16
      %s173 = smul.u32 32, %s16
      %p174 = scmp.lt.s32.totalorder %s173, 63
      %s175 = scalar_select %p174, %s173, 63
      %s176 = smul.addr %s175, 8
      %s177 = scalar_lea.vmem %s3, %s176
      %s178 = smul.u32 32, %s16
      %v180 = vld [vmem:[%s171] sm:$0xff]
      %v181 = vld [vmem:[%s171 + $0x8] sm:$0xff]
      %v182 = vld [vmem:[%s171 + $0x10] sm:$0xf]
      %v183 = vld [vmem:[%s171 + $0x14] sm:$0xff]
      %v184 = vld [vmem:[%s171 + $0x1c] sm:$0xff]
      %v185 = vld [vmem:[%s171 + $0x24] sm:$0xf]
      %v186 = vld [vmem:[%s171 + $0x28] sm:$0xff]
      %v187 = vld [vmem:[%s171 + $0x30] sm:$0xff]
      %v188 = vld [vmem:[%s171 + $0x38] sm:$0xf]
      %v189 = vld [vmem:[%s171 + $0x3c] sm:$0xff]
      %v190 = vld [vmem:[%s171 + $0x44] sm:$0xff]
      %v191 = vld [vmem:[%s171 + $0x4c] sm:$0xf]
      %v192 = vld [vmem:[%s171 + $0x50] sm:$0xff]
      %v193 = vld [vmem:[%s171 + $0x58] sm:$0xff]
      %v194 = vld [vmem:[%s171 + $0x60] sm:$0xf]
      %v195 = vld [vmem:[%s171 + $0x64] sm:$0xff]
      %v196 = vld [vmem:[%s171 + $0x6c] sm:$0xff]
      %v197 = vld [vmem:[%s171 + $0x74] sm:$0xf]
      %v198 = vld [vmem:[%s171 + $0x78] sm:$0xff]
      %v199 = vld [vmem:[%s171 + $0x80] sm:$0xff]
      %v200 = vld [vmem:[%s171 + $0x88] sm:$0xf]
      %v201 = vld [vmem:[%s171 + $0x8c] sm:$0xff]
      %v202 = vld [vmem:[%s171 + $0x94] sm:$0xff]
      %v203 = vld [vmem:[%s171 + $0x9c] sm:$0xf]
      %v204 = vld [vmem:[%s171 + $0xa0] sm:$0xff]
      %v205 = vld [vmem:[%s171 + $0xa8] sm:$0xff]
      %v206 = vld [vmem:[%s171 + $0xb0] sm:$0xf]
      %v207 = vld [vmem:[%s171 + $0xb4] sm:$0xff]
      %v208 = vld [vmem:[%s171 + $0xbc] sm:$0xff]
      %v209 = vld [vmem:[%s171 + $0xc4] sm:$0xf]
      %v210 = vld [vmem:[%s171 + $0xc8] sm:$0xff]
      %v211 = vld [vmem:[%s171 + $0xd0] sm:$0xff]
      %v212 = vld [vmem:[%s171 + $0xd8] sm:$0xf]
      %v213 = vld [vmem:[%s171 + $0xdc] sm:$0xff]
      %v214 = vld [vmem:[%s171 + $0xe4] sm:$0xff]
      %v215 = vld [vmem:[%s171 + $0xec] sm:$0xf]
      %v216 = vld [vmem:[%s171 + $0xf0] sm:$0xff]
      %v217 = vld [vmem:[%s171 + $0xf8] sm:$0xff]
      %v218 = vld [vmem:[%s171 + $0x100] sm:$0xf]
      %v219 = vld [vmem:[%s171 + $0x104] sm:$0xff]
      %v220 = vld [vmem:[%s171 + $0x10c] sm:$0xff]
      %v221 = vld [vmem:[%s171 + $0x114] sm:$0xf]
      %v222 = vld [vmem:[%s171 + $0x118] sm:$0xff]
      %v223 = vld [vmem:[%s171 + $0x120] sm:$0xff]
      %v224 = vld [vmem:[%s171 + $0x128] sm:$0xf]
      %v225 = vld [vmem:[%s171 + $0x12c] sm:$0xff]
      %v226 = vld [vmem:[%s171 + $0x134] sm:$0xff]
      %v227 = vld [vmem:[%s171 + $0x13c] sm:$0xf]
      %v228 = vld [vmem:[%s171 + $0x140] sm:$0xff]
      %v229 = vld [vmem:[%s171 + $0x148] sm:$0xff]
      %v230 = vld [vmem:[%s171 + $0x150] sm:$0xf]
      %v231 = vld [vmem:[%s171 + $0x154] sm:$0xff]
      %v232 = vld [vmem:[%s171 + $0x15c] sm:$0xff]
      %v233 = vld [vmem:[%s171 + $0x164] sm:$0xf]
      %v234 = vld [vmem:[%s171 + $0x168] sm:$0xff]
      %v235 = vld [vmem:[%s171 + $0x170] sm:$0xff]
      %v236 = vld [vmem:[%s171 + $0x178] sm:$0xf]
      %v237 = vld [vmem:[%s171 + $0x17c] sm:$0xff]
      %v238 = vld [vmem:[%s171 + $0x184] sm:$0xff]
      %v239 = vld [vmem:[%s171 + $0x18c] sm:$0xf]
      %v240 = vld [vmem:[%s171 + $0x190] sm:$0xff]
      %v241 = vld [vmem:[%s171 + $0x198] sm:$0xff]
      %v242 = vld [vmem:[%s171 + $0x1a0] sm:$0xf]
      %v243 = vld [vmem:[%s171 + $0x1a4] sm:$0xff]
      %v244 = vld [vmem:[%s171 + $0x1ac] sm:$0xff]
      %v245 = vld [vmem:[%s171 + $0x1b4] sm:$0xf]
      %v246 = vld [vmem:[%s171 + $0x1b8] sm:$0xff]
      %v247 = vld [vmem:[%s171 + $0x1c0] sm:$0xff]
      %v248 = vld [vmem:[%s171 + $0x1c8] sm:$0xf]
      %v249 = vld [vmem:[%s171 + $0x1cc] sm:$0xff]
      %v250 = vld [vmem:[%s171 + $0x1d4] sm:$0xff]
      %v251 = vld [vmem:[%s171 + $0x1dc] sm:$0xf]
      %v252 = vld [vmem:[%s171 + $0x1e0] sm:$0xff]
      %v253 = vld [vmem:[%s171 + $0x1e8] sm:$0xff]
      %v254 = vld [vmem:[%s171 + $0x1f0] sm:$0xf]
      %v255 = vld [vmem:[%s171 + $0x1f4] sm:$0xff]
      %v256 = vld [vmem:[%s171 + $0x1fc] sm:$0xff]
      %v257 = vld [vmem:[%s171 + $0x204] sm:$0xf]
      %v258 = vld [vmem:[%s171 + $0x208] sm:$0xff]
      %v259 = vld [vmem:[%s171 + $0x210] sm:$0xff]
      %v260 = vld [vmem:[%s171 + $0x218] sm:$0xf]
      %v261 = vld [vmem:[%s171 + $0x21c] sm:$0xff]
      %v262 = vld [vmem:[%s171 + $0x224] sm:$0xff]
      %v263 = vld [vmem:[%s171 + $0x22c] sm:$0xf]
      %v264 = vld [vmem:[%s171 + $0x230] sm:$0xff]
      %v265 = vld [vmem:[%s171 + $0x238] sm:$0xff]
      %v266 = vld [vmem:[%s171 + $0x240] sm:$0xf]
      %v267 = vld [vmem:[%s171 + $0x244] sm:$0xff]
      %v268 = vld [vmem:[%s171 + $0x24c] sm:$0xff]
      %v269 = vld [vmem:[%s171 + $0x254] sm:$0xf]
      %v270 = vld [vmem:[%s171 + $0x258] sm:$0xff]
      %v271 = vld [vmem:[%s171 + $0x260] sm:$0xff]
      %v272 = vld [vmem:[%s171 + $0x268] sm:$0xf]
      %v273 = vld [vmem:[%s171 + $0x26c] sm:$0xff]
      %v274 = vld [vmem:[%s171 + $0x274] sm:$0xff]
      %v275 = vld [vmem:[%s171 + $0x27c] sm:$0xf]
      %v276 = vld [vmem:[%s1] sm:$0xf]
      %v277 = vld [vmem:[%s1 + $0x4] sm:$0xf]
      %v278 = vld [vmem:[%s1 + $0x8] sm:$0xf]
      %v279 = vld [vmem:[%s1 + $0xc] sm:$0xf]
      %v280 = vld [vmem:[%s1 + $0x10] sm:$0xf]
      %v281 = vld [vmem:[%s1 + $0x14] sm:$0xf]
      %v282 = vld [vmem:[%s1 + $0x18] sm:$0xf]
      %v283 = vld [vmem:[%s1 + $0x1c] sm:$0xf]
      %v284 = vld [vmem:[%s1 + $0x20] sm:$0xf]
      %v285 = vld [vmem:[%s1 + $0x24] sm:$0xf]
      %v286 = vld [vmem:[%s1 + $0x28] sm:$0xf]
      %v287 = vld [vmem:[%s1 + $0x2c] sm:$0xf]
      %v288 = vld [vmem:[%s1 + $0x30] sm:$0xf]
      %v289 = vld [vmem:[%s1 + $0x34] sm:$0xf]
      %v290 = vld [vmem:[%s1 + $0x38] sm:$0xf]
      %v291 = vld [vmem:[%s1 + $0x3c] sm:$0xf]
      %v292 = vld [vmem:[%s1 + $0x40] sm:$0xf]
      %v293 = vld [vmem:[%s1 + $0x44] sm:$0xf]
      %v294 = vld [vmem:[%s1 + $0x48] sm:$0xf]
      %v295 = vld [vmem:[%s1 + $0x4c] sm:$0xf]
      %v296 = vld [vmem:[%s1 + $0x50] sm:$0xf]
      %v297 = vld [vmem:[%s1 + $0x54] sm:$0xf]
      %v298 = vld [vmem:[%s1 + $0x58] sm:$0xf]
      %v299 = vld [vmem:[%s1 + $0x5c] sm:$0xf]
      %v300 = vld [vmem:[%s1 + $0x60] sm:$0xf]
      %v301 = vld [vmem:[%s1 + $0x64] sm:$0xf]
      %v302 = vld [vmem:[%s1 + $0x68] sm:$0xf]
      %v303 = vld [vmem:[%s1 + $0x6c] sm:$0xf]
      %v304 = vld [vmem:[%s1 + $0x70] sm:$0xf]
      %v305 = vld [vmem:[%s1 + $0x74] sm:$0xf]
      %v306 = vld [vmem:[%s1 + $0x78] sm:$0xf]
      %v307 = vld [vmem:[%s1 + $0x7c] sm:$0xf]
      %v308 = vld [vmem:[%s1 + $0x80] sm:$0xf]
      %v309 = vld [vmem:[%s1 + $0x84] sm:$0xf]
      %v310 = vld [vmem:[%s1 + $0x88] sm:$0xf]
      %v311 = vld [vmem:[%s1 + $0x8c] sm:$0xf]
      %v312 = vld [vmem:[%s1 + $0x90] sm:$0xf]
      %v313 = vld [vmem:[%s1 + $0x94] sm:$0xf]
      %v314 = vld [vmem:[%s1 + $0x98] sm:$0xf]
      %v315 = vld [vmem:[%s1 + $0x9c] sm:$0xf]
      %v316 = vld [vmem:[%s1 + $0xa0] sm:$0xf]
      %v317 = vld [vmem:[%s1 + $0xa4] sm:$0xf]
      %v318 = vld [vmem:[%s1 + $0xa8] sm:$0xf]
      %v319 = vld [vmem:[%s1 + $0xac] sm:$0xf]
      %v320 = vld [vmem:[%s1 + $0xb0] sm:$0xf]
      %v321 = vld [vmem:[%s1 + $0xb4] sm:$0xf]
      %v322 = vld [vmem:[%s1 + $0xb8] sm:$0xf]
      %v323 = vld [vmem:[%s1 + $0xbc] sm:$0xf]
      %v324 = vld [vmem:[%s1 + $0xc0] sm:$0xf]
      %v325 = vld [vmem:[%s1 + $0xc4] sm:$0xf]
      %v326 = vld [vmem:[%s1 + $0xc8] sm:$0xf]
      %v327 = vld [vmem:[%s1 + $0xcc] sm:$0xf]
      %v328 = vld [vmem:[%s1 + $0xd0] sm:$0xf]
      %v329 = vld [vmem:[%s1 + $0xd4] sm:$0xf]
      %v330 = vld [vmem:[%s1 + $0xd8] sm:$0xf]
      %v331 = vld [vmem:[%s1 + $0xdc] sm:$0xf]
      %v332 = vld [vmem:[%s1 + $0xe0] sm:$0xf]
      %v333 = vld [vmem:[%s1 + $0xe4] sm:$0xf]
      %v334 = vld [vmem:[%s1 + $0xe8] sm:$0xf]
      %v335 = vld [vmem:[%s1 + $0xec] sm:$0xf]
      %v336 = vld [vmem:[%s1 + $0xf0] sm:$0xf]
      %v337 = vld [vmem:[%s1 + $0xf4] sm:$0xf]
      %v338 = vld [vmem:[%s1 + $0xf8] sm:$0xf]
      %v339 = vld [vmem:[%s1 + $0xfc] sm:$0xf]
      %v340 = vld [vmem:[%s1 + $0x100] sm:$0xf]
      %v341 = vld [vmem:[%s1 + $0x104] sm:$0xf]
      %v342 = vld [vmem:[%s1 + $0x108] sm:$0xf]
      %v343 = vld [vmem:[%s1 + $0x10c] sm:$0xf]
      %v344 = vld [vmem:[%s1 + $0x110] sm:$0xf]
      %v345 = vld [vmem:[%s1 + $0x114] sm:$0xf]
      %v346 = vld [vmem:[%s1 + $0x118] sm:$0xf]
      %v347 = vld [vmem:[%s1 + $0x11c] sm:$0xf]
      %v348 = vld [vmem:[#allocation2] sm:$0x1]
      %v350 = vperm.slane %v348, 0
      %v448 = vunpack.c.l.b16 %v180
      %v449 = vunpack.c.h.b16 %v180
      %v450 = vunpack.c.l.b16 %v181
      %v451 = vunpack.c.h.b16 %v181
      %v452 = vunpack.c.l.b16 %v182
      %v453 = vunpack.c.l.b16 %v183
      %v454 = vunpack.c.h.b16 %v183
      %v455 = vunpack.c.l.b16 %v184
      %v456 = vunpack.c.h.b16 %v184
      %v457 = vunpack.c.l.b16 %v185
      %v458 = vunpack.c.l.b16 %v186
      %v459 = vunpack.c.h.b16 %v186
      %v460 = vunpack.c.l.b16 %v187
      %v461 = vunpack.c.h.b16 %v187
      %v462 = vunpack.c.l.b16 %v188
      %v463 = vunpack.c.l.b16 %v189
      %v464 = vunpack.c.h.b16 %v189
      %v465 = vunpack.c.l.b16 %v190
      %v466 = vunpack.c.h.b16 %v190
      %v467 = vunpack.c.l.b16 %v191
      %v468 = vunpack.c.l.b16 %v192
      %v469 = vunpack.c.h.b16 %v192
      %v470 = vunpack.c.l.b16 %v193
      %v471 = vunpack.c.h.b16 %v193
      %v472 = vunpack.c.l.b16 %v194
      %v473 = vunpack.c.l.b16 %v195
      %v474 = vunpack.c.h.b16 %v195
      %v475 = vunpack.c.l.b16 %v196
      %v476 = vunpack.c.h.b16 %v196
      %v477 = vunpack.c.l.b16 %v197
      %v478 = vunpack.c.l.b16 %v198
      %v479 = vunpack.c.h.b16 %v198
      %v480 = vunpack.c.l.b16 %v199
      %v481 = vunpack.c.h.b16 %v199
      %v482 = vunpack.c.l.b16 %v200
      %v483 = vunpack.c.l.b16 %v201
      %v484 = vunpack.c.h.b16 %v201
      %v485 = vunpack.c.l.b16 %v202
      %v486 = vunpack.c.h.b16 %v202
      %v487 = vunpack.c.l.b16 %v203
      %v488 = vunpack.c.l.b16 %v204
      %v489 = vunpack.c.h.b16 %v204
      %v490 = vunpack.c.l.b16 %v205
      %v491 = vunpack.c.h.b16 %v205
      %v492 = vunpack.c.l.b16 %v206
      %v493 = vunpack.c.l.b16 %v207
      %v494 = vunpack.c.h.b16 %v207
      %v495 = vunpack.c.l.b16 %v208
      %v496 = vunpack.c.h.b16 %v208
      %v497 = vunpack.c.l.b16 %v209
      %v498 = vunpack.c.l.b16 %v210
      %v499 = vunpack.c.h.b16 %v210
      %v500 = vunpack.c.l.b16 %v211
      %v501 = vunpack.c.h.b16 %v211
      %v502 = vunpack.c.l.b16 %v212
      %v503 = vunpack.c.l.b16 %v213
      %v504 = vunpack.c.h.b16 %v213
      %v505 = vunpack.c.l.b16 %v214
      %v506 = vunpack.c.h.b16 %v214
      %v507 = vunpack.c.l.b16 %v215
      %v508 = vunpack.c.l.b16 %v216
      %v509 = vunpack.c.h.b16 %v216
      %v510 = vunpack.c.l.b16 %v217
      %v511 = vunpack.c.h.b16 %v217
      %v512 = vunpack.c.l.b16 %v218
      %v513 = vunpack.c.l.b16 %v219
      %v514 = vunpack.c.h.b16 %v219
      %v515 = vunpack.c.l.b16 %v220
      %v516 = vunpack.c.h.b16 %v220
      %v517 = vunpack.c.l.b16 %v221
      %v518 = vunpack.c.l.b16 %v222
      %v519 = vunpack.c.h.b16 %v222
      %v520 = vunpack.c.l.b16 %v223
      %v521 = vunpack.c.h.b16 %v223
      %v522 = vunpack.c.l.b16 %v224
      %v523 = vunpack.c.l.b16 %v225
      %v524 = vunpack.c.h.b16 %v225
      %v525 = vunpack.c.l.b16 %v226
      %v526 = vunpack.c.h.b16 %v226
      %v527 = vunpack.c.l.b16 %v227
      %v528 = vunpack.c.l.b16 %v228
      %v529 = vunpack.c.h.b16 %v228
      %v530 = vunpack.c.l.b16 %v229
      %v531 = vunpack.c.h.b16 %v229
      %v532 = vunpack.c.l.b16 %v230
      %v533 = vunpack.c.l.b16 %v231
      %v534 = vunpack.c.h.b16 %v231
      %v535 = vunpack.c.l.b16 %v232
      %v536 = vunpack.c.h.b16 %v232
      %v537 = vunpack.c.l.b16 %v233
      %v538 = vunpack.c.l.b16 %v234
      %v539 = vunpack.c.h.b16 %v234
      %v540 = vunpack.c.l.b16 %v235
      %v541 = vunpack.c.h.b16 %v235
      %v542 = vunpack.c.l.b16 %v236
      %v543 = vunpack.c.l.b16 %v237
      %v544 = vunpack.c.h.b16 %v237
      %v545 = vunpack.c.l.b16 %v238
      %v546 = vunpack.c.h.b16 %v238
      %v547 = vunpack.c.l.b16 %v239
      %v548 = vunpack.c.l.b16 %v240
      %v549 = vunpack.c.h.b16 %v240
      %v550 = vunpack.c.l.b16 %v241
      %v551 = vunpack.c.h.b16 %v241
      %v552 = vunpack.c.l.b16 %v242
      %v553 = vunpack.c.l.b16 %v243
      %v554 = vunpack.c.h.b16 %v243
      %v555 = vunpack.c.l.b16 %v244
      %v556 = vunpack.c.h.b16 %v244
      %v557 = vunpack.c.l.b16 %v245
      %v558 = vunpack.c.l.b16 %v246
      %v559 = vunpack.c.h.b16 %v246
      %v560 = vunpack.c.l.b16 %v247
      %v561 = vunpack.c.h.b16 %v247
      %v562 = vunpack.c.l.b16 %v248
      %v563 = vunpack.c.l.b16 %v249
      %v564 = vunpack.c.h.b16 %v249
      %v565 = vunpack.c.l.b16 %v250
      %v566 = vunpack.c.h.b16 %v250
      %v567 = vunpack.c.l.b16 %v251
      %v568 = vunpack.c.l.b16 %v252
      %v569 = vunpack.c.h.b16 %v252
      %v570 = vunpack.c.l.b16 %v253
      %v571 = vunpack.c.h.b16 %v253
      %v572 = vunpack.c.l.b16 %v254
      %v573 = vunpack.c.l.b16 %v255
      %v574 = vunpack.c.h.b16 %v255
      %v575 = vunpack.c.l.b16 %v256
      %v576 = vunpack.c.h.b16 %v256
      %v577 = vunpack.c.l.b16 %v257
      %v578 = vunpack.c.l.b16 %v258
      %v579 = vunpack.c.h.b16 %v258
      %v580 = vunpack.c.l.b16 %v259
      %v581 = vunpack.c.h.b16 %v259
      %v582 = vunpack.c.l.b16 %v260
      %v583 = vunpack.c.l.b16 %v261
      %v584 = vunpack.c.h.b16 %v261
      %v585 = vunpack.c.l.b16 %v262
      %v586 = vunpack.c.h.b16 %v262
      %v587 = vunpack.c.l.b16 %v263
      %v588 = vunpack.c.l.b16 %v264
      %v589 = vunpack.c.h.b16 %v264
      %v590 = vunpack.c.l.b16 %v265
      %v591 = vunpack.c.h.b16 %v265
      %v592 = vunpack.c.l.b16 %v266
      %v593 = vunpack.c.l.b16 %v267
      %v594 = vunpack.c.h.b16 %v267
      %v595 = vunpack.c.l.b16 %v268
      %v596 = vunpack.c.h.b16 %v268
      %v597 = vunpack.c.l.b16 %v269
      %v598 = vunpack.c.l.b16 %v270
      %v599 = vunpack.c.h.b16 %v270
      %v600 = vunpack.c.l.b16 %v271
      %v601 = vunpack.c.h.b16 %v271
      %v602 = vunpack.c.l.b16 %v272
      %v603 = vunpack.c.l.b16 %v273
      %v604 = vunpack.c.h.b16 %v273
      %v605 = vunpack.c.l.b16 %v274
      %v606 = vunpack.c.h.b16 %v274
      %v607 = vunpack.c.l.b16 %v275
      %v608 = vpack.c.b16 %v453, %v448
      %v609 = vpack.c.b16 %v454, %v449
      %v610 = vpack.c.b16 %v455, %v450
      %v611 = vpack.c.b16 %v456, %v451
      %v612 = vpack.c.b16 %v457, %v452
      %v613 = vpack.c.b16 %v463, %v458
      %v614 = vpack.c.b16 %v464, %v459
      %v615 = vpack.c.b16 %v465, %v460
      %v616 = vpack.c.b16 %v466, %v461
      %v617 = vpack.c.b16 %v467, %v462
      %v618 = vpack.c.b16 %v473, %v468
      %v619 = vpack.c.b16 %v474, %v469
      %v620 = vpack.c.b16 %v475, %v470
      %v621 = vpack.c.b16 %v476, %v471
      %v622 = vpack.c.b16 %v477, %v472
      %v623 = vpack.c.b16 %v483, %v478
      %v624 = vpack.c.b16 %v484, %v479
      %v625 = vpack.c.b16 %v485, %v480
      %v626 = vpack.c.b16 %v486, %v481
      %v627 = vpack.c.b16 %v487, %v482
      %v628 = vpack.c.b16 %v493, %v488
      %v629 = vpack.c.b16 %v494, %v489
      %v630 = vpack.c.b16 %v495, %v490
      %v631 = vpack.c.b16 %v496, %v491
      %v632 = vpack.c.b16 %v497, %v492
      %v633 = vpack.c.b16 %v503, %v498
      %v634 = vpack.c.b16 %v504, %v499
      %v635 = vpack.c.b16 %v505, %v500
      %v636 = vpack.c.b16 %v506, %v501
      %v637 = vpack.c.b16 %v507, %v502
      %v638 = vpack.c.b16 %v513, %v508
      %v639 = vpack.c.b16 %v514, %v509
      %v640 = vpack.c.b16 %v515, %v510
      %v641 = vpack.c.b16 %v516, %v511
      %v642 = vpack.c.b16 %v517, %v512
      %v643 = vpack.c.b16 %v523, %v518
      %v644 = vpack.c.b16 %v524, %v519
      %v645 = vpack.c.b16 %v525, %v520
      %v646 = vpack.c.b16 %v526, %v521
      %v647 = vpack.c.b16 %v527, %v522
      %v648 = vpack.c.b16 %v533, %v528
      %v649 = vpack.c.b16 %v534, %v529
      %v650 = vpack.c.b16 %v535, %v530
      %v651 = vpack.c.b16 %v536, %v531
      %v652 = vpack.c.b16 %v537, %v532
      %v653 = vpack.c.b16 %v543, %v538
      %v654 = vpack.c.b16 %v544, %v539
      %v655 = vpack.c.b16 %v545, %v540
      %v656 = vpack.c.b16 %v546, %v541
      %v657 = vpack.c.b16 %v547, %v542
      %v658 = vpack.c.b16 %v553, %v548
      %v659 = vpack.c.b16 %v554, %v549
      %v660 = vpack.c.b16 %v555, %v550
      %v661 = vpack.c.b16 %v556, %v551
      %v662 = vpack.c.b16 %v557, %v552
      %v663 = vpack.c.b16 %v563, %v558
      %v664 = vpack.c.b16 %v564, %v559
      %v665 = vpack.c.b16 %v565, %v560
      %v666 = vpack.c.b16 %v566, %v561
      %v667 = vpack.c.b16 %v567, %v562
      %v668 = vpack.c.b16 %v573, %v568
      %v669 = vpack.c.b16 %v574, %v569
      %v670 = vpack.c.b16 %v575, %v570
      %v671 = vpack.c.b16 %v576, %v571
      %v672 = vpack.c.b16 %v577, %v572
      %v673 = vpack.c.b16 %v583, %v578
      %v674 = vpack.c.b16 %v584, %v579
      %v675 = vpack.c.b16 %v585, %v580
      %v676 = vpack.c.b16 %v586, %v581
      %v677 = vpack.c.b16 %v587, %v582
      %v678 = vpack.c.b16 %v593, %v588
      %v679 = vpack.c.b16 %v594, %v589
      %v680 = vpack.c.b16 %v595, %v590
      %v681 = vpack.c.b16 %v596, %v591
      %v682 = vpack.c.b16 %v597, %v592
      %v683 = vpack.c.b16 %v603, %v598
      %v684 = vpack.c.b16 %v604, %v599
      %v685 = vpack.c.b16 %v605, %v600
      %v686 = vpack.c.b16 %v606, %v601
      %v687 = vpack.c.b16 %v607, %v602
      %v824 = vunpack.c.l.b16 %v276
      %v825 = vunpack.c.l.b16 %v277
      %v826 = vunpack.c.l.b16 %v278
      %v827 = vunpack.c.l.b16 %v279
      %v828 = vunpack.c.l.b16 %v280
      %v829 = vunpack.c.l.b16 %v281
      %v830 = vunpack.c.l.b16 %v282
      %v831 = vunpack.c.l.b16 %v283
      %v832 = vunpack.c.l.b16 %v284
      %v833 = vunpack.c.l.b16 %v285
      %v834 = vunpack.c.l.b16 %v286
      %v835 = vunpack.c.l.b16 %v287
      %v836 = vunpack.c.l.b16 %v288
      %v837 = vunpack.c.l.b16 %v289
      %v838 = vunpack.c.l.b16 %v290
      %v839 = vunpack.c.l.b16 %v291
      %v840 = vunpack.c.l.b16 %v292
      %v841 = vunpack.c.l.b16 %v293
      %v842 = vunpack.c.l.b16 %v294
      %v843 = vunpack.c.l.b16 %v295
      %v844 = vunpack.c.l.b16 %v296
      %v845 = vunpack.c.l.b16 %v297
      %v846 = vunpack.c.l.b16 %v298
      %v847 = vunpack.c.l.b16 %v299
      %v848 = vunpack.c.l.b16 %v300
      %v849 = vunpack.c.l.b16 %v301
      %v850 = vunpack.c.l.b16 %v302
      %v851 = vunpack.c.l.b16 %v303
      %v852 = vunpack.c.l.b16 %v304
      %v853 = vunpack.c.l.b16 %v305
      %v854 = vunpack.c.l.b16 %v306
      %v855 = vunpack.c.l.b16 %v307
      %v856 = vunpack.c.l.b16 %v308
      %v857 = vunpack.c.l.b16 %v309
      %v858 = vunpack.c.l.b16 %v310
      %v859 = vunpack.c.l.b16 %v311
      %v860 = vunpack.c.l.b16 %v312
      %v861 = vunpack.c.l.b16 %v313
      %v862 = vunpack.c.l.b16 %v314
      %v863 = vunpack.c.l.b16 %v315
      %v864 = vunpack.c.l.b16 %v316
      %v865 = vunpack.c.l.b16 %v317
      %v866 = vunpack.c.l.b16 %v318
      %v867 = vunpack.c.l.b16 %v319
      %v868 = vunpack.c.l.b16 %v320
      %v869 = vunpack.c.l.b16 %v321
      %v870 = vunpack.c.l.b16 %v322
      %v871 = vunpack.c.l.b16 %v323
      %v872 = vunpack.c.l.b16 %v324
      %v873 = vunpack.c.l.b16 %v325
      %v874 = vunpack.c.l.b16 %v326
      %v875 = vunpack.c.l.b16 %v327
      %v876 = vunpack.c.l.b16 %v328
      %v877 = vunpack.c.l.b16 %v329
      %v878 = vunpack.c.l.b16 %v330
      %v879 = vunpack.c.l.b16 %v331
      %v880 = vunpack.c.l.b16 %v332
      %v881 = vunpack.c.l.b16 %v333
      %v882 = vunpack.c.l.b16 %v334
      %v883 = vunpack.c.l.b16 %v335
      %v884 = vunpack.c.l.b16 %v336
      %v885 = vunpack.c.l.b16 %v337
      %v886 = vunpack.c.l.b16 %v338
      %v887 = vunpack.c.l.b16 %v339
      %v888 = vunpack.c.l.b16 %v340
      %v889 = vunpack.c.l.b16 %v341
      %v890 = vunpack.c.l.b16 %v342
      %v891 = vunpack.c.l.b16 %v343
      %v892 = vunpack.c.l.b16 %v344
      %v893 = vunpack.c.l.b16 %v345
      %v894 = vunpack.c.l.b16 %v346
      %v895 = vunpack.c.l.b16 %v347
      %v896 = vpack.c.b16 %v825, %v824
      %v897 = vpack.c.b16 %v827, %v826
      %v898 = vpack.c.b16 %v829, %v828
      %v899 = vpack.c.b16 %v831, %v830
      %v900 = vpack.c.b16 %v833, %v832
      %v901 = vpack.c.b16 %v835, %v834
      %v902 = vpack.c.b16 %v837, %v836
      %v903 = vpack.c.b16 %v839, %v838
      %v904 = vpack.c.b16 %v841, %v840
      %v905 = vpack.c.b16 %v843, %v842
      %v906 = vpack.c.b16 %v845, %v844
      %v907 = vpack.c.b16 %v847, %v846
      %v908 = vpack.c.b16 %v849, %v848
      %v909 = vpack.c.b16 %v851, %v850
      %v910 = vpack.c.b16 %v853, %v852
      %v911 = vpack.c.b16 %v855, %v854
      %v912 = vpack.c.b16 %v857, %v856
      %v913 = vpack.c.b16 %v859, %v858
      %v914 = vpack.c.b16 %v861, %v860
      %v915 = vpack.c.b16 %v863, %v862
      %v916 = vpack.c.b16 %v865, %v864
      %v917 = vpack.c.b16 %v867, %v866
      %v918 = vpack.c.b16 %v869, %v868
      %v919 = vpack.c.b16 %v871, %v870
      %v920 = vpack.c.b16 %v873, %v872
      %v921 = vpack.c.b16 %v875, %v874
      %v922 = vpack.c.b16 %v877, %v876
      %v923 = vpack.c.b16 %v879, %v878
      %v924 = vpack.c.b16 %v881, %v880
      %v925 = vpack.c.b16 %v883, %v882
      %v926 = vpack.c.b16 %v885, %v884
      %v927 = vpack.c.b16 %v887, %v886
      %v928 = vpack.c.b16 %v889, %v888
      %v929 = vpack.c.b16 %v891, %v890
      %v930 = vpack.c.b16 %v893, %v892
      %v931 = vpack.c.b16 %v895, %v894
      %vm968 = vcmask 523264
      %v970 = vsel %vm968, %v612, 0
      %v973 = vsel %vm968, %v617, 0
      %v976 = vsel %vm968, %v622, 0
      %v979 = vsel %vm968, %v627, 0
      %v982 = vsel %vm968, %v632, 0
      %v985 = vsel %vm968, %v637, 0
      %v988 = vsel %vm968, %v642, 0
      %v991 = vsel %vm968, %v647, 0
      %v994 = vsel %vm968, %v652, 0
      %v997 = vsel %vm968, %v657, 0
      %v1000 = vsel %vm968, %v662, 0
      %v1003 = vsel %vm968, %v667, 0
      %v1006 = vsel %vm968, %v672, 0
      %v1009 = vsel %vm968, %v677, 0
      %v1012 = vsel %vm968, %v682, 0
      %v1015 = vsel %vm968, %v687, 0
      %1017 = vmatpush.bf16.msra.mxu0 %v903
      %1018 = vmatpush.bf16.msra.mxu0 %v902
      %1019 = vmatpush.bf16.msra.mxu0 %v901
      %1020 = vmatpush.bf16.msra.mxu0 %v900
      %1021 = vmatpush.bf16.msra.mxu0 %v899
      %1022 = vmatpush.bf16.msra.mxu0 %v898
      %1023 = vmatpush.bf16.msra.mxu0 %v897
      %1024 = vmatpush.bf16.msra.mxu0 %v896
      %1025 = vmatmul.bf16.gmra.mxu0 %v608
      %v1026 = vpop.f32.mrf.mxu0
      %v1027 = vadd.f32 %v350, %v1026
      %v1028 = vpop.f32.mrf.mxu0
      %v1029 = vadd.f32 %v350, %v1028
      %1030 = vmatmul.bf16.gmra.mxu0 %v613
      %v1031 = vpop.f32.mrf.mxu0
      %v1032 = vadd.f32 %v350, %v1031
      %v1033 = vpop.f32.mrf.mxu0
      %v1034 = vadd.f32 %v350, %v1033
      %1035 = vmatmul.bf16.gmra.mxu0 %v618
      %v1036 = vpop.f32.mrf.mxu0
      %v1037 = vadd.f32 %v350, %v1036
      %v1038 = vpop.f32.mrf.mxu0
      %v1039 = vadd.f32 %v350, %v1038
      %1040 = vmatmul.bf16.gmra.mxu0 %v623
      %v1041 = vpop.f32.mrf.mxu0
      %v1042 = vadd.f32 %v350, %v1041
      %v1043 = vpop.f32.mrf.mxu0
      %v1044 = vadd.f32 %v350, %v1043
      %1045 = vmatmul.bf16.gmra.mxu0 %v628
      %v1046 = vpop.f32.mrf.mxu0
      %v1047 = vadd.f32 %v350, %v1046
      %v1048 = vpop.f32.mrf.mxu0
      %v1049 = vadd.f32 %v350, %v1048
      %1050 = vmatmul.bf16.gmra.mxu0 %v633
      %v1051 = vpop.f32.mrf.mxu0
      %v1052 = vadd.f32 %v350, %v1051
      %v1053 = vpop.f32.mrf.mxu0
      %v1054 = vadd.f32 %v350, %v1053
      %1055 = vmatmul.bf16.gmra.mxu0 %v638
      %v1056 = vpop.f32.mrf.mxu0
      %v1057 = vadd.f32 %v350, %v1056
      %v1058 = vpop.f32.mrf.mxu0
      %v1059 = vadd.f32 %v350, %v1058
      %1060 = vmatmul.bf16.gmra.mxu0 %v643
      %v1061 = vpop.f32.mrf.mxu0
      %v1062 = vadd.f32 %v350, %v1061
      %v1063 = vpop.f32.mrf.mxu0
      %v1064 = vadd.f32 %v350, %v1063
      %1065 = vmatmul.bf16.gmra.mxu0 %v648
      %v1066 = vpop.f32.mrf.mxu0
      %v1067 = vadd.f32 %v350, %v1066
      %v1068 = vpop.f32.mrf.mxu0
      %v1069 = vadd.f32 %v350, %v1068
      %1070 = vmatmul.bf16.gmra.mxu0 %v653
      %v1071 = vpop.f32.mrf.mxu0
      %v1072 = vadd.f32 %v350, %v1071
      %v1073 = vpop.f32.mrf.mxu0
      %v1074 = vadd.f32 %v350, %v1073
      %1075 = vmatmul.bf16.gmra.mxu0 %v658
      %v1076 = vpop.f32.mrf.mxu0
      %v1077 = vadd.f32 %v350, %v1076
      %v1078 = vpop.f32.mrf.mxu0
      %v1079 = vadd.f32 %v350, %v1078
      %1080 = vmatmul.bf16.gmra.mxu0 %v663
      %v1081 = vpop.f32.mrf.mxu0
      %v1082 = vadd.f32 %v350, %v1081
      %v1083 = vpop.f32.mrf.mxu0
      %v1084 = vadd.f32 %v350, %v1083
      %1085 = vmatmul.bf16.gmra.mxu0 %v668
      %v1086 = vpop.f32.mrf.mxu0
      %v1087 = vadd.f32 %v350, %v1086
      %v1088 = vpop.f32.mrf.mxu0
      %v1089 = vadd.f32 %v350, %v1088
      %1090 = vmatmul.bf16.gmra.mxu0 %v673
      %v1091 = vpop.f32.mrf.mxu0
      %v1092 = vadd.f32 %v350, %v1091
      %v1093 = vpop.f32.mrf.mxu0
      %v1094 = vadd.f32 %v350, %v1093
      %1095 = vmatmul.bf16.gmra.mxu0 %v678
      %v1096 = vpop.f32.mrf.mxu0
      %v1097 = vadd.f32 %v350, %v1096
      %v1098 = vpop.f32.mrf.mxu0
      %v1099 = vadd.f32 %v350, %v1098
      %1100 = vmatmul.bf16.gmra.mxu0 %v683
      %v1101 = vpop.f32.mrf.mxu0
      %v1102 = vadd.f32 %v350, %v1101
      %v1103 = vpop.f32.mrf.mxu0
      %v1104 = vadd.f32 %v350, %v1103
      %1105 = vdwg.mxu0
      %1106 = vmatpush.bf16.msra.mxu0 %v911
      %1107 = vmatpush.bf16.msra.mxu0 %v910
      %1108 = vmatpush.bf16.msra.mxu0 %v909
      %1109 = vmatpush.bf16.msra.mxu0 %v908
      %1110 = vmatpush.bf16.msra.mxu0 %v907
      %1111 = vmatpush.bf16.msra.mxu0 %v906
      %1112 = vmatpush.bf16.msra.mxu0 %v905
      %1113 = vmatpush.bf16.msra.mxu0 %v904
      %1114 = vmatmul.bf16.gmra.mxu0 %v609
      %v1115 = vpop.f32.mrf.mxu0
      %v1116 = vadd.f32 %v1027, %v1115
      %v1117 = vpop.f32.mrf.mxu0
      %v1118 = vadd.f32 %v1029, %v1117
      %1119 = vmatmul.bf16.gmra.mxu0 %v614
      %v1120 = vpop.f32.mrf.mxu0
      %v1121 = vadd.f32 %v1032, %v1120
      %v1122 = vpop.f32.mrf.mxu0
      %v1123 = vadd.f32 %v1034, %v1122
      %1124 = vmatmul.bf16.gmra.mxu0 %v619
      %v1125 = vpop.f32.mrf.mxu0
      %v1126 = vadd.f32 %v1037, %v1125
      %v1127 = vpop.f32.mrf.mxu0
      %v1128 = vadd.f32 %v1039, %v1127
      %1129 = vmatmul.bf16.gmra.mxu0 %v624
      %v1130 = vpop.f32.mrf.mxu0
      %v1131 = vadd.f32 %v1042, %v1130
      %v1132 = vpop.f32.mrf.mxu0
      %v1133 = vadd.f32 %v1044, %v1132
      %1134 = vmatmul.bf16.gmra.mxu0 %v629
      %v1135 = vpop.f32.mrf.mxu0
      %v1136 = vadd.f32 %v1047, %v1135
      %v1137 = vpop.f32.mrf.mxu0
      %v1138 = vadd.f32 %v1049, %v1137
      %1139 = vmatmul.bf16.gmra.mxu0 %v634
      %v1140 = vpop.f32.mrf.mxu0
      %v1141 = vadd.f32 %v1052, %v1140
      %v1142 = vpop.f32.mrf.mxu0
      %v1143 = vadd.f32 %v1054, %v1142
      %1144 = vmatmul.bf16.gmra.mxu0 %v639
      %v1145 = vpop.f32.mrf.mxu0
      %v1146 = vadd.f32 %v1057, %v1145
      %v1147 = vpop.f32.mrf.mxu0
      %v1148 = vadd.f32 %v1059, %v1147
      %1149 = vmatmul.bf16.gmra.mxu0 %v644
      %v1150 = vpop.f32.mrf.mxu0
      %v1151 = vadd.f32 %v1062, %v1150
      %v1152 = vpop.f32.mrf.mxu0
      %v1153 = vadd.f32 %v1064, %v1152
      %1154 = vmatmul.bf16.gmra.mxu0 %v649
      %v1155 = vpop.f32.mrf.mxu0
      %v1156 = vadd.f32 %v1067, %v1155
      %v1157 = vpop.f32.mrf.mxu0
      %v1158 = vadd.f32 %v1069, %v1157
      %1159 = vmatmul.bf16.gmra.mxu0 %v654
      %v1160 = vpop.f32.mrf.mxu0
      %v1161 = vadd.f32 %v1072, %v1160
      %v1162 = vpop.f32.mrf.mxu0
      %v1163 = vadd.f32 %v1074, %v1162
      %1164 = vmatmul.bf16.gmra.mxu0 %v659
      %v1165 = vpop.f32.mrf.mxu0
      %v1166 = vadd.f32 %v1077, %v1165
      %v1167 = vpop.f32.mrf.mxu0
      %v1168 = vadd.f32 %v1079, %v1167
      %1169 = vmatmul.bf16.gmra.mxu0 %v664
      %v1170 = vpop.f32.mrf.mxu0
      %v1171 = vadd.f32 %v1082, %v1170
      %v1172 = vpop.f32.mrf.mxu0
      %v1173 = vadd.f32 %v1084, %v1172
      %1174 = vmatmul.bf16.gmra.mxu0 %v669
      %v1175 = vpop.f32.mrf.mxu0
      %v1176 = vadd.f32 %v1087, %v1175
      %v1177 = vpop.f32.mrf.mxu0
      %v1178 = vadd.f32 %v1089, %v1177
      %1179 = vmatmul.bf16.gmra.mxu0 %v674
      %v1180 = vpop.f32.mrf.mxu0
      %v1181 = vadd.f32 %v1092, %v1180
      %v1182 = vpop.f32.mrf.mxu0
      %v1183 = vadd.f32 %v1094, %v1182
      %1184 = vmatmul.bf16.gmra.mxu0 %v679
      %v1185 = vpop.f32.mrf.mxu0
      %v1186 = vadd.f32 %v1097, %v1185
      %v1187 = vpop.f32.mrf.mxu0
      %v1188 = vadd.f32 %v1099, %v1187
      %1189 = vmatmul.bf16.gmra.mxu0 %v684
      %v1190 = vpop.f32.mrf.mxu0
      %v1191 = vadd.f32 %v1102, %v1190
      %v1192 = vpop.f32.mrf.mxu0
      %v1193 = vadd.f32 %v1104, %v1192
      %1194 = vdwg.mxu0
      %1195 = vmatpush.bf16.msra.mxu0 %v919
      %1196 = vmatpush.bf16.msra.mxu0 %v918
      %1197 = vmatpush.bf16.msra.mxu0 %v917
      %1198 = vmatpush.bf16.msra.mxu0 %v916
      %1199 = vmatpush.bf16.msra.mxu0 %v915
      %1200 = vmatpush.bf16.msra.mxu0 %v914
      %1201 = vmatpush.bf16.msra.mxu0 %v913
      %1202 = vmatpush.bf16.msra.mxu0 %v912
      %1203 = vmatmul.bf16.gmra.mxu0 %v610
      %v1204 = vpop.f32.mrf.mxu0
      %v1205 = vadd.f32 %v1116, %v1204
      %v1206 = vpop.f32.mrf.mxu0
      %v1207 = vadd.f32 %v1118, %v1206
      %1208 = vmatmul.bf16.gmra.mxu0 %v615
      %v1209 = vpop.f32.mrf.mxu0
      %v1210 = vadd.f32 %v1121, %v1209
      %v1211 = vpop.f32.mrf.mxu0
      %v1212 = vadd.f32 %v1123, %v1211
      %1213 = vmatmul.bf16.gmra.mxu0 %v620
      %v1214 = vpop.f32.mrf.mxu0
      %v1215 = vadd.f32 %v1126, %v1214
      %v1216 = vpop.f32.mrf.mxu0
      %v1217 = vadd.f32 %v1128, %v1216
      %1218 = vmatmul.bf16.gmra.mxu0 %v625
      %v1219 = vpop.f32.mrf.mxu0
      %v1220 = vadd.f32 %v1131, %v1219
      %v1221 = vpop.f32.mrf.mxu0
      %v1222 = vadd.f32 %v1133, %v1221
      %1223 = vmatmul.bf16.gmra.mxu0 %v630
      %v1224 = vpop.f32.mrf.mxu0
      %v1225 = vadd.f32 %v1136, %v1224
      %v1226 = vpop.f32.mrf.mxu0
      %v1227 = vadd.f32 %v1138, %v1226
      %1228 = vmatmul.bf16.gmra.mxu0 %v635
      %v1229 = vpop.f32.mrf.mxu0
      %v1230 = vadd.f32 %v1141, %v1229
      %v1231 = vpop.f32.mrf.mxu0
      %v1232 = vadd.f32 %v1143, %v1231
      %1233 = vmatmul.bf16.gmra.mxu0 %v640
      %v1234 = vpop.f32.mrf.mxu0
      %v1235 = vadd.f32 %v1146, %v1234
      %v1236 = vpop.f32.mrf.mxu0
      %v1237 = vadd.f32 %v1148, %v1236
      %1238 = vmatmul.bf16.gmra.mxu0 %v645
      %v1239 = vpop.f32.mrf.mxu0
      %v1240 = vadd.f32 %v1151, %v1239
      %v1241 = vpop.f32.mrf.mxu0
      %v1242 = vadd.f32 %v1153, %v1241
      %1243 = vmatmul.bf16.gmra.mxu0 %v650
      %v1244 = vpop.f32.mrf.mxu0
      %v1245 = vadd.f32 %v1156, %v1244
      %v1246 = vpop.f32.mrf.mxu0
      %v1247 = vadd.f32 %v1158, %v1246
      %1248 = vmatmul.bf16.gmra.mxu0 %v655
      %v1249 = vpop.f32.mrf.mxu0
      %v1250 = vadd.f32 %v1161, %v1249
      %v1251 = vpop.f32.mrf.mxu0
      %v1252 = vadd.f32 %v1163, %v1251
      %1253 = vmatmul.bf16.gmra.mxu0 %v660
      %v1254 = vpop.f32.mrf.mxu0
      %v1255 = vadd.f32 %v1166, %v1254
      %v1256 = vpop.f32.mrf.mxu0
      %v1257 = vadd.f32 %v1168, %v1256
      %1258 = vmatmul.bf16.gmra.mxu0 %v665
      %v1259 = vpop.f32.mrf.mxu0
      %v1260 = vadd.f32 %v1171, %v1259
      %v1261 = vpop.f32.mrf.mxu0
      %v1262 = vadd.f32 %v1173, %v1261
      %1263 = vmatmul.bf16.gmra.mxu0 %v670
      %v1264 = vpop.f32.mrf.mxu0
      %v1265 = vadd.f32 %v1176, %v1264
      %v1266 = vpop.f32.mrf.mxu0
      %v1267 = vadd.f32 %v1178, %v1266
      %1268 = vmatmul.bf16.gmra.mxu0 %v675
      %v1269 = vpop.f32.mrf.mxu0
      %v1270 = vadd.f32 %v1181, %v1269
      %v1271 = vpop.f32.mrf.mxu0
      %v1272 = vadd.f32 %v1183, %v1271
      %1273 = vmatmul.bf16.gmra.mxu0 %v680
      %v1274 = vpop.f32.mrf.mxu0
      %v1275 = vadd.f32 %v1186, %v1274
      %v1276 = vpop.f32.mrf.mxu0
      %v1277 = vadd.f32 %v1188, %v1276
      %1278 = vmatmul.bf16.gmra.mxu0 %v685
      %v1279 = vpop.f32.mrf.mxu0
      %v1280 = vadd.f32 %v1191, %v1279
      %v1281 = vpop.f32.mrf.mxu0
      %v1282 = vadd.f32 %v1193, %v1281
      %1283 = vdwg.mxu0
      %1284 = vmatpush.bf16.msra.mxu0 %v927
      %1285 = vmatpush.bf16.msra.mxu0 %v926
      %1286 = vmatpush.bf16.msra.mxu0 %v925
      %1287 = vmatpush.bf16.msra.mxu0 %v924
      %1288 = vmatpush.bf16.msra.mxu0 %v923
      %1289 = vmatpush.bf16.msra.mxu0 %v922
      %1290 = vmatpush.bf16.msra.mxu0 %v921
      %1291 = vmatpush.bf16.msra.mxu0 %v920
      %1292 = vmatmul.bf16.gmra.mxu0 %v611
      %v1293 = vpop.f32.mrf.mxu0
      %v1294 = vadd.f32 %v1205, %v1293
      %v1295 = vpop.f32.mrf.mxu0
      %v1296 = vadd.f32 %v1207, %v1295
      %1297 = vmatmul.bf16.gmra.mxu0 %v616
      %v1298 = vpop.f32.mrf.mxu0
      %v1299 = vadd.f32 %v1210, %v1298
      %v1300 = vpop.f32.mrf.mxu0
      %v1301 = vadd.f32 %v1212, %v1300
      %1302 = vmatmul.bf16.gmra.mxu0 %v621
      %v1303 = vpop.f32.mrf.mxu0
      %v1304 = vadd.f32 %v1215, %v1303
      %v1305 = vpop.f32.mrf.mxu0
      %v1306 = vadd.f32 %v1217, %v1305
      %1307 = vmatmul.bf16.gmra.mxu0 %v626
      %v1308 = vpop.f32.mrf.mxu0
      %v1309 = vadd.f32 %v1220, %v1308
      %v1310 = vpop.f32.mrf.mxu0
      %v1311 = vadd.f32 %v1222, %v1310
      %1312 = vmatmul.bf16.gmra.mxu0 %v631
      %v1313 = vpop.f32.mrf.mxu0
      %v1314 = vadd.f32 %v1225, %v1313
      %v1315 = vpop.f32.mrf.mxu0
      %v1316 = vadd.f32 %v1227, %v1315
      %1317 = vmatmul.bf16.gmra.mxu0 %v636
      %v1318 = vpop.f32.mrf.mxu0
      %v1319 = vadd.f32 %v1230, %v1318
      %v1320 = vpop.f32.mrf.mxu0
      %v1321 = vadd.f32 %v1232, %v1320
      %1322 = vmatmul.bf16.gmra.mxu0 %v641
      %v1323 = vpop.f32.mrf.mxu0
      %v1324 = vadd.f32 %v1235, %v1323
      %v1325 = vpop.f32.mrf.mxu0
      %v1326 = vadd.f32 %v1237, %v1325
      %1327 = vmatmul.bf16.gmra.mxu0 %v646
      %v1328 = vpop.f32.mrf.mxu0
      %v1329 = vadd.f32 %v1240, %v1328
      %v1330 = vpop.f32.mrf.mxu0
      %v1331 = vadd.f32 %v1242, %v1330
      %1332 = vmatmul.bf16.gmra.mxu0 %v651
      %v1333 = vpop.f32.mrf.mxu0
      %v1334 = vadd.f32 %v1245, %v1333
      %v1335 = vpop.f32.mrf.mxu0
      %v1336 = vadd.f32 %v1247, %v1335
      %1337 = vmatmul.bf16.gmra.mxu0 %v656
      %v1338 = vpop.f32.mrf.mxu0
      %v1339 = vadd.f32 %v1250, %v1338
      %v1340 = vpop.f32.mrf.mxu0
      %v1341 = vadd.f32 %v1252, %v1340
      %1342 = vmatmul.bf16.gmra.mxu0 %v661
      %v1343 = vpop.f32.mrf.mxu0
      %v1344 = vadd.f32 %v1255, %v1343
      %v1345 = vpop.f32.mrf.mxu0
      %v1346 = vadd.f32 %v1257, %v1345
      %1347 = vmatmul.bf16.gmra.mxu0 %v666
      %v1348 = vpop.f32.mrf.mxu0
      %v1349 = vadd.f32 %v1260, %v1348
      %v1350 = vpop.f32.mrf.mxu0
      %v1351 = vadd.f32 %v1262, %v1350
      %1352 = vmatmul.bf16.gmra.mxu0 %v671
      %v1353 = vpop.f32.mrf.mxu0
      %v1354 = vadd.f32 %v1265, %v1353
      %v1355 = vpop.f32.mrf.mxu0
      %v1356 = vadd.f32 %v1267, %v1355
      %1357 = vmatmul.bf16.gmra.mxu0 %v676
      %v1358 = vpop.f32.mrf.mxu0
      %v1359 = vadd.f32 %v1270, %v1358
      %v1360 = vpop.f32.mrf.mxu0
      %v1361 = vadd.f32 %v1272, %v1360
      %1362 = vmatmul.bf16.gmra.mxu0 %v681
      %v1363 = vpop.f32.mrf.mxu0
      %v1364 = vadd.f32 %v1275, %v1363
      %v1365 = vpop.f32.mrf.mxu0
      %v1366 = vadd.f32 %v1277, %v1365
      %1367 = vmatmul.bf16.gmra.mxu0 %v686
      %v1368 = vpop.f32.mrf.mxu0
      %v1369 = vadd.f32 %v1280, %v1368
      %v1370 = vpop.f32.mrf.mxu0
      %v1371 = vadd.f32 %v1282, %v1370
      %1372 = vdwg.mxu0
      %1373 = vmatpush.bf16.msra.mxu0 0
      %1374 = vmatpush.bf16.msra.mxu0 0
      %1375 = vmatpush.bf16.msra.mxu0 0
      %1376 = vmatpush.bf16.msra.mxu0 0
      %1377 = vmatpush.bf16.msra.mxu0 %v931
      %1378 = vmatpush.bf16.msra.mxu0 %v930
      %1379 = vmatpush.bf16.msra.mxu0 %v929
      %1380 = vmatpush.bf16.msra.mxu0 %v928
      %1381 = vmatmul.bf16.gmra.mxu0 %v970
      %v1382 = vpop.f32.mrf.mxu0
      %v1383 = vadd.f32 %v1294, %v1382
      %v1384 = vpop.f32.mrf.mxu0
      %v1385 = vadd.f32 %v1296, %v1384
      %1386 = vmatmul.bf16.gmra.mxu0 %v973
      %v1387 = vpop.f32.mrf.mxu0
      %v1388 = vadd.f32 %v1299, %v1387
      %v1389 = vpop.f32.mrf.mxu0
      %v1390 = vadd.f32 %v1301, %v1389
      %1391 = vmatmul.bf16.gmra.mxu0 %v976
      %v1392 = vpop.f32.mrf.mxu0
      %v1393 = vadd.f32 %v1304, %v1392
      %v1394 = vpop.f32.mrf.mxu0
      %v1395 = vadd.f32 %v1306, %v1394
      %1396 = vmatmul.bf16.gmra.mxu0 %v979
      %v1397 = vpop.f32.mrf.mxu0
      %v1398 = vadd.f32 %v1309, %v1397
      %v1399 = vpop.f32.mrf.mxu0
      %v1400 = vadd.f32 %v1311, %v1399
      %1401 = vmatmul.bf16.gmra.mxu0 %v982
      %v1402 = vpop.f32.mrf.mxu0
      %v1403 = vadd.f32 %v1314, %v1402
      %v1404 = vpop.f32.mrf.mxu0
      %v1405 = vadd.f32 %v1316, %v1404
      %1406 = vmatmul.bf16.gmra.mxu0 %v985
      %v1407 = vpop.f32.mrf.mxu0
      %v1408 = vadd.f32 %v1319, %v1407
      %v1409 = vpop.f32.mrf.mxu0
      %v1410 = vadd.f32 %v1321, %v1409
      %1411 = vmatmul.bf16.gmra.mxu0 %v988
      %v1412 = vpop.f32.mrf.mxu0
      %v1413 = vadd.f32 %v1324, %v1412
      %v1414 = vpop.f32.mrf.mxu0
      %v1415 = vadd.f32 %v1326, %v1414
      %1416 = vmatmul.bf16.gmra.mxu0 %v991
      %v1417 = vpop.f32.mrf.mxu0
      %v1418 = vadd.f32 %v1329, %v1417
      %v1419 = vpop.f32.mrf.mxu0
      %v1420 = vadd.f32 %v1331, %v1419
      %1421 = vmatmul.bf16.gmra.mxu0 %v994
      %v1422 = vpop.f32.mrf.mxu0
      %v1423 = vadd.f32 %v1334, %v1422
      %v1424 = vpop.f32.mrf.mxu0
      %v1425 = vadd.f32 %v1336, %v1424
      %1426 = vmatmul.bf16.gmra.mxu0 %v997
      %v1427 = vpop.f32.mrf.mxu0
      %v1428 = vadd.f32 %v1339, %v1427
      %v1429 = vpop.f32.mrf.mxu0
      %v1430 = vadd.f32 %v1341, %v1429
      %1431 = vmatmul.bf16.gmra.mxu0 %v1000
      %v1432 = vpop.f32.mrf.mxu0
      %v1433 = vadd.f32 %v1344, %v1432
      %v1434 = vpop.f32.mrf.mxu0
      %v1435 = vadd.f32 %v1346, %v1434
      %1436 = vmatmul.bf16.gmra.mxu0 %v1003
      %v1437 = vpop.f32.mrf.mxu0
      %v1438 = vadd.f32 %v1349, %v1437
      %v1439 = vpop.f32.mrf.mxu0
      %v1440 = vadd.f32 %v1351, %v1439
      %1441 = vmatmul.bf16.gmra.mxu0 %v1006
      %v1442 = vpop.f32.mrf.mxu0
      %v1443 = vadd.f32 %v1354, %v1442
      %v1444 = vpop.f32.mrf.mxu0
      %v1445 = vadd.f32 %v1356, %v1444
      %1446 = vmatmul.bf16.gmra.mxu0 %v1009
      %v1447 = vpop.f32.mrf.mxu0
      %v1448 = vadd.f32 %v1359, %v1447
      %v1449 = vpop.f32.mrf.mxu0
      %v1450 = vadd.f32 %v1361, %v1449
      %1451 = vmatmul.bf16.gmra.mxu0 %v1012
      %v1452 = vpop.f32.mrf.mxu0
      %v1453 = vadd.f32 %v1364, %v1452
      %v1454 = vpop.f32.mrf.mxu0
      %v1455 = vadd.f32 %v1366, %v1454
      %1456 = vmatmul.bf16.gmra.mxu0 %v1015
      %v1457 = vpop.f32.mrf.mxu0
      %v1458 = vadd.f32 %v1369, %v1457
      %v1459 = vpop.f32.mrf.mxu0
      %v1460 = vadd.f32 %v1371, %v1459
      %1461 = vdwg.mxu0
      %v1462 = vxor.u32 %v1383, 2147483648
      %v1463 = vxor.u32 %v1385, 2147483648
      %v1464 = vxor.u32 %v1388, 2147483648
      %v1465 = vxor.u32 %v1390, 2147483648
      %v1466 = vxor.u32 %v1393, 2147483648
      %v1467 = vxor.u32 %v1395, 2147483648
      %v1468 = vxor.u32 %v1398, 2147483648
      %v1469 = vxor.u32 %v1400, 2147483648
      %v1470 = vxor.u32 %v1403, 2147483648
      %v1471 = vxor.u32 %v1405, 2147483648
      %v1472 = vxor.u32 %v1408, 2147483648
      %v1473 = vxor.u32 %v1410, 2147483648
      %v1474 = vxor.u32 %v1413, 2147483648
      %v1475 = vxor.u32 %v1415, 2147483648
      %v1476 = vxor.u32 %v1418, 2147483648
      %v1477 = vxor.u32 %v1420, 2147483648
      %v1478 = vxor.u32 %v1423, 2147483648
      %v1479 = vxor.u32 %v1425, 2147483648
      %v1480 = vxor.u32 %v1428, 2147483648
      %v1481 = vxor.u32 %v1430, 2147483648
      %v1482 = vxor.u32 %v1433, 2147483648
      %v1483 = vxor.u32 %v1435, 2147483648
      %v1484 = vxor.u32 %v1438, 2147483648
      %v1485 = vxor.u32 %v1440, 2147483648
      %v1486 = vxor.u32 %v1443, 2147483648
      %v1487 = vxor.u32 %v1445, 2147483648
      %v1488 = vxor.u32 %v1448, 2147483648
      %v1489 = vxor.u32 %v1450, 2147483648
      %v1490 = vxor.u32 %v1453, 2147483648
      %v1491 = vxor.u32 %v1455, 2147483648
      %v1492 = vxor.u32 %v1458, 2147483648
      %v1493 = vxor.u32 %v1460, 2147483648
      %v1494 = vmul.f32 %v1462, 1.442695
      %v1495 = vpow.pop %v1494
      %v1496 = vmul.f32 %v1463, 1.442695
      %v1497 = vpow.pop %v1496
      %v1498 = vmul.f32 %v1464, 1.442695
      %v1499 = vpow.pop %v1498
      %v1500 = vmul.f32 %v1465, 1.442695
      %v1501 = vpow.pop %v1500
      %v1502 = vmul.f32 %v1466, 1.442695
      %v1503 = vpow.pop %v1502
      %v1504 = vmul.f32 %v1467, 1.442695
      %v1505 = vpow.pop %v1504
      %v1506 = vmul.f32 %v1468, 1.442695
      %v1507 = vpow.pop %v1506
      %v1508 = vmul.f32 %v1469, 1.442695
      %v1509 = vpow.pop %v1508
      %v1510 = vmul.f32 %v1470, 1.442695
      %v1511 = vpow.pop %v1510
      %v1512 = vmul.f32 %v1471, 1.442695
      %v1513 = vpow.pop %v1512
      %v1514 = vmul.f32 %v1472, 1.442695
      %v1515 = vpow.pop %v1514
      %v1516 = vmul.f32 %v1473, 1.442695
      %v1517 = vpow.pop %v1516
      %v1518 = vmul.f32 %v1474, 1.442695
      %v1519 = vpow.pop %v1518
      %v1520 = vmul.f32 %v1475, 1.442695
      %v1521 = vpow.pop %v1520
      %v1522 = vmul.f32 %v1476, 1.442695
      %v1523 = vpow.pop %v1522
      %v1524 = vmul.f32 %v1477, 1.442695
      %v1525 = vpow.pop %v1524
      %v1526 = vmul.f32 %v1478, 1.442695
      %v1527 = vpow.pop %v1526
      %v1528 = vmul.f32 %v1479, 1.442695
      %v1529 = vpow.pop %v1528
      %v1530 = vmul.f32 %v1480, 1.442695
      %v1531 = vpow.pop %v1530
      %v1532 = vmul.f32 %v1481, 1.442695
      %v1533 = vpow.pop %v1532
      %v1534 = vmul.f32 %v1482, 1.442695
      %v1535 = vpow.pop %v1534
      %v1536 = vmul.f32 %v1483, 1.442695
      %v1537 = vpow.pop %v1536
      %v1538 = vmul.f32 %v1484, 1.442695
      %v1539 = vpow.pop %v1538
      %v1540 = vmul.f32 %v1485, 1.442695
      %v1541 = vpow.pop %v1540
      %v1542 = vmul.f32 %v1486, 1.442695
      %v1543 = vpow.pop %v1542
      %v1544 = vmul.f32 %v1487, 1.442695
      %v1545 = vpow.pop %v1544
      %v1546 = vmul.f32 %v1488, 1.442695
      %v1547 = vpow.pop %v1546
      %v1548 = vmul.f32 %v1489, 1.442695
      %v1549 = vpow.pop %v1548
      %v1550 = vmul.f32 %v1490, 1.442695
      %v1551 = vpow.pop %v1550
      %v1552 = vmul.f32 %v1491, 1.442695
      %v1553 = vpow.pop %v1552
      %v1554 = vmul.f32 %v1492, 1.442695
      %v1555 = vpow.pop %v1554
      %v1556 = vmul.f32 %v1493, 1.442695
      %v1557 = vpow.pop %v1556
      %v1558 = vadd.f32 %v1495, 1.0
      %v1559 = vadd.f32 %v1497, 1.0
      %v1560 = vadd.f32 %v1499, 1.0
      %v1561 = vadd.f32 %v1501, 1.0
      %v1562 = vadd.f32 %v1503, 1.0
      %v1563 = vadd.f32 %v1505, 1.0
      %v1564 = vadd.f32 %v1507, 1.0
      %v1565 = vadd.f32 %v1509, 1.0
      %v1566 = vadd.f32 %v1511, 1.0
      %v1567 = vadd.f32 %v1513, 1.0
      %v1568 = vadd.f32 %v1515, 1.0
      %v1569 = vadd.f32 %v1517, 1.0
      %v1570 = vadd.f32 %v1519, 1.0
      %v1571 = vadd.f32 %v1521, 1.0
      %v1572 = vadd.f32 %v1523, 1.0
      %v1573 = vadd.f32 %v1525, 1.0
      %v1574 = vadd.f32 %v1527, 1.0
      %v1575 = vadd.f32 %v1529, 1.0
      %v1576 = vadd.f32 %v1531, 1.0
      %v1577 = vadd.f32 %v1533, 1.0
      %v1578 = vadd.f32 %v1535, 1.0
      %v1579 = vadd.f32 %v1537, 1.0
      %v1580 = vadd.f32 %v1539, 1.0
      %v1581 = vadd.f32 %v1541, 1.0
      %v1582 = vadd.f32 %v1543, 1.0
      %v1583 = vadd.f32 %v1545, 1.0
      %v1584 = vadd.f32 %v1547, 1.0
      %v1585 = vadd.f32 %v1549, 1.0
      %v1586 = vadd.f32 %v1551, 1.0
      %v1587 = vadd.f32 %v1553, 1.0
      %v1588 = vadd.f32 %v1555, 1.0
      %v1589 = vadd.f32 %v1557, 1.0
      %v1590 = vrcp.pop %v1558
      %v1591 = vmul.f32 %v1558, %v1590
      %v1592 = vsub.f32 1.0, %v1591
      %v1593 = vmul.f32 %v1590, %v1592
      %v1594 = vadd.f32 %v1590, %v1593
      %vm1595 = vweird.f32 %v1558
      %vm1596 = vweird.f32 %v1590
      %vm1597 = vmor %vm1595, %vm1596
      %v1598 = vsel %vm1597, %v1590, %v1594
      %v1599 = vand.u32 2147483647, %v1558
      %vm1600 = vcmp.eq.f32.partialorder %v1599, 8.507059e+37
      %v1601 = vand.u32 %v1558, 2147483648
      %v1602 = vor.u32 1.1754944e-38, %v1601
      %v1603 = vsel %vm1600, %v1602, %v1598
      %v1604 = vmul.f32 1.0, %v1603
      %v1605 = vrcp.pop %v1559
      %v1606 = vmul.f32 %v1559, %v1605
      %v1607 = vsub.f32 1.0, %v1606
      %v1608 = vmul.f32 %v1605, %v1607
      %v1609 = vadd.f32 %v1605, %v1608
      %vm1610 = vweird.f32 %v1559
      %vm1611 = vweird.f32 %v1605
      %vm1612 = vmor %vm1610, %vm1611
      %v1613 = vsel %vm1612, %v1605, %v1609
      %v1614 = vand.u32 2147483647, %v1559
      %vm1615 = vcmp.eq.f32.partialorder %v1614, 8.507059e+37
      %v1616 = vand.u32 %v1559, 2147483648
      %v1617 = vor.u32 1.1754944e-38, %v1616
      %v1618 = vsel %vm1615, %v1617, %v1613
      %v1619 = vmul.f32 1.0, %v1618
      %v1620 = vrcp.pop %v1560
      %v1621 = vmul.f32 %v1560, %v1620
      %v1622 = vsub.f32 1.0, %v1621
      %v1623 = vmul.f32 %v1620, %v1622
      %v1624 = vadd.f32 %v1620, %v1623
      %vm1625 = vweird.f32 %v1560
      %vm1626 = vweird.f32 %v1620
      %vm1627 = vmor %vm1625, %vm1626
      %v1628 = vsel %vm1627, %v1620, %v1624
      %v1629 = vand.u32 2147483647, %v1560
      %vm1630 = vcmp.eq.f32.partialorder %v1629, 8.507059e+37
      %v1631 = vand.u32 %v1560, 2147483648
      %v1632 = vor.u32 1.1754944e-38, %v1631
      %v1633 = vsel %vm1630, %v1632, %v1628
      %v1634 = vmul.f32 1.0, %v1633
      %v1635 = vrcp.pop %v1561
      %v1636 = vmul.f32 %v1561, %v1635
      %v1637 = vsub.f32 1.0, %v1636
      %v1638 = vmul.f32 %v1635, %v1637
      %v1639 = vadd.f32 %v1635, %v1638
      %vm1640 = vweird.f32 %v1561
      %vm1641 = vweird.f32 %v1635
      %vm1642 = vmor %vm1640, %vm1641
      %v1643 = vsel %vm1642, %v1635, %v1639
      %v1644 = vand.u32 2147483647, %v1561
      %vm1645 = vcmp.eq.f32.partialorder %v1644, 8.507059e+37
      %v1646 = vand.u32 %v1561, 2147483648
      %v1647 = vor.u32 1.1754944e-38, %v1646
      %v1648 = vsel %vm1645, %v1647, %v1643
      %v1649 = vmul.f32 1.0, %v1648
      %v1650 = vrcp.pop %v1562
      %v1651 = vmul.f32 %v1562, %v1650
      %v1652 = vsub.f32 1.0, %v1651
      %v1653 = vmul.f32 %v1650, %v1652
      %v1654 = vadd.f32 %v1650, %v1653
      %vm1655 = vweird.f32 %v1562
      %vm1656 = vweird.f32 %v1650
      %vm1657 = vmor %vm1655, %vm1656
      %v1658 = vsel %vm1657, %v1650, %v1654
      %v1659 = vand.u32 2147483647, %v1562
      %vm1660 = vcmp.eq.f32.partialorder %v1659, 8.507059e+37
      %v1661 = vand.u32 %v1562, 2147483648
      %v1662 = vor.u32 1.1754944e-38, %v1661
      %v1663 = vsel %vm1660, %v1662, %v1658
      %v1664 = vmul.f32 1.0, %v1663
      %v1665 = vrcp.pop %v1563
      %v1666 = vmul.f32 %v1563, %v1665
      %v1667 = vsub.f32 1.0, %v1666
      %v1668 = vmul.f32 %v1665, %v1667
      %v1669 = vadd.f32 %v1665, %v1668
      %vm1670 = vweird.f32 %v1563
      %vm1671 = vweird.f32 %v1665
      %vm1672 = vmor %vm1670, %vm1671
      %v1673 = vsel %vm1672, %v1665, %v1669
      %v1674 = vand.u32 2147483647, %v1563
      %vm1675 = vcmp.eq.f32.partialorder %v1674, 8.507059e+37
      %v1676 = vand.u32 %v1563, 2147483648
      %v1677 = vor.u32 1.1754944e-38, %v1676
      %v1678 = vsel %vm1675, %v1677, %v1673
      %v1679 = vmul.f32 1.0, %v1678
      %v1680 = vrcp.pop %v1564
      %v1681 = vmul.f32 %v1564, %v1680
      %v1682 = vsub.f32 1.0, %v1681
      %v1683 = vmul.f32 %v1680, %v1682
      %v1684 = vadd.f32 %v1680, %v1683
      %vm1685 = vweird.f32 %v1564
      %vm1686 = vweird.f32 %v1680
      %vm1687 = vmor %vm1685, %vm1686
      %v1688 = vsel %vm1687, %v1680, %v1684
      %v1689 = vand.u32 2147483647, %v1564
      %vm1690 = vcmp.eq.f32.partialorder %v1689, 8.507059e+37
      %v1691 = vand.u32 %v1564, 2147483648
      %v1692 = vor.u32 1.1754944e-38, %v1691
      %v1693 = vsel %vm1690, %v1692, %v1688
      %v1694 = vmul.f32 1.0, %v1693
      %v1695 = vrcp.pop %v1565
      %v1696 = vmul.f32 %v1565, %v1695
      %v1697 = vsub.f32 1.0, %v1696
      %v1698 = vmul.f32 %v1695, %v1697
      %v1699 = vadd.f32 %v1695, %v1698
      %vm1700 = vweird.f32 %v1565
      %vm1701 = vweird.f32 %v1695
      %vm1702 = vmor %vm1700, %vm1701
      %v1703 = vsel %vm1702, %v1695, %v1699
      %v1704 = vand.u32 2147483647, %v1565
      %vm1705 = vcmp.eq.f32.partialorder %v1704, 8.507059e+37
      %v1706 = vand.u32 %v1565, 2147483648
      %v1707 = vor.u32 1.1754944e-38, %v1706
      %v1708 = vsel %vm1705, %v1707, %v1703
      %v1709 = vmul.f32 1.0, %v1708
      %v1710 = vrcp.pop %v1566
      %v1711 = vmul.f32 %v1566, %v1710
      %v1712 = vsub.f32 1.0, %v1711
      %v1713 = vmul.f32 %v1710, %v1712
      %v1714 = vadd.f32 %v1710, %v1713
      %vm1715 = vweird.f32 %v1566
      %vm1716 = vweird.f32 %v1710
      %vm1717 = vmor %vm1715, %vm1716
      %v1718 = vsel %vm1717, %v1710, %v1714
      %v1719 = vand.u32 2147483647, %v1566
      %vm1720 = vcmp.eq.f32.partialorder %v1719, 8.507059e+37
      %v1721 = vand.u32 %v1566, 2147483648
      %v1722 = vor.u32 1.1754944e-38, %v1721
      %v1723 = vsel %vm1720, %v1722, %v1718
      %v1724 = vmul.f32 1.0, %v1723
      %v1725 = vrcp.pop %v1567
      %v1726 = vmul.f32 %v1567, %v1725
      %v1727 = vsub.f32 1.0, %v1726
      %v1728 = vmul.f32 %v1725, %v1727
      %v1729 = vadd.f32 %v1725, %v1728
      %vm1730 = vweird.f32 %v1567
      %vm1731 = vweird.f32 %v1725
      %vm1732 = vmor %vm1730, %vm1731
      %v1733 = vsel %vm1732, %v1725, %v1729
      %v1734 = vand.u32 2147483647, %v1567
      %vm1735 = vcmp.eq.f32.partialorder %v1734, 8.507059e+37
      %v1736 = vand.u32 %v1567, 2147483648
      %v1737 = vor.u32 1.1754944e-38, %v1736
      %v1738 = vsel %vm1735, %v1737, %v1733
      %v1739 = vmul.f32 1.0, %v1738
      %v1740 = vrcp.pop %v1568
      %v1741 = vmul.f32 %v1568, %v1740
      %v1742 = vsub.f32 1.0, %v1741
      %v1743 = vmul.f32 %v1740, %v1742
      %v1744 = vadd.f32 %v1740, %v1743
      %vm1745 = vweird.f32 %v1568
      %vm1746 = vweird.f32 %v1740
      %vm1747 = vmor %vm1745, %vm1746
      %v1748 = vsel %vm1747, %v1740, %v1744
      %v1749 = vand.u32 2147483647, %v1568
      %vm1750 = vcmp.eq.f32.partialorder %v1749, 8.507059e+37
      %v1751 = vand.u32 %v1568, 2147483648
      %v1752 = vor.u32 1.1754944e-38, %v1751
      %v1753 = vsel %vm1750, %v1752, %v1748
      %v1754 = vmul.f32 1.0, %v1753
      %v1755 = vrcp.pop %v1569
      %v1756 = vmul.f32 %v1569, %v1755
      %v1757 = vsub.f32 1.0, %v1756
      %v1758 = vmul.f32 %v1755, %v1757
      %v1759 = vadd.f32 %v1755, %v1758
      %vm1760 = vweird.f32 %v1569
      %vm1761 = vweird.f32 %v1755
      %vm1762 = vmor %vm1760, %vm1761
      %v1763 = vsel %vm1762, %v1755, %v1759
      %v1764 = vand.u32 2147483647, %v1569
      %vm1765 = vcmp.eq.f32.partialorder %v1764, 8.507059e+37
      %v1766 = vand.u32 %v1569, 2147483648
      %v1767 = vor.u32 1.1754944e-38, %v1766
      %v1768 = vsel %vm1765, %v1767, %v1763
      %v1769 = vmul.f32 1.0, %v1768
      %v1770 = vrcp.pop %v1570
      %v1771 = vmul.f32 %v1570, %v1770
      %v1772 = vsub.f32 1.0, %v1771
      %v1773 = vmul.f32 %v1770, %v1772
      %v1774 = vadd.f32 %v1770, %v1773
      %vm1775 = vweird.f32 %v1570
      %vm1776 = vweird.f32 %v1770
      %vm1777 = vmor %vm1775, %vm1776
      %v1778 = vsel %vm1777, %v1770, %v1774
      %v1779 = vand.u32 2147483647, %v1570
      %vm1780 = vcmp.eq.f32.partialorder %v1779, 8.507059e+37
      %v1781 = vand.u32 %v1570, 2147483648
      %v1782 = vor.u32 1.1754944e-38, %v1781
      %v1783 = vsel %vm1780, %v1782, %v1778
      %v1784 = vmul.f32 1.0, %v1783
      %v1785 = vrcp.pop %v1571
      %v1786 = vmul.f32 %v1571, %v1785
      %v1787 = vsub.f32 1.0, %v1786
      %v1788 = vmul.f32 %v1785, %v1787
      %v1789 = vadd.f32 %v1785, %v1788
      %vm1790 = vweird.f32 %v1571
      %vm1791 = vweird.f32 %v1785
      %vm1792 = vmor %vm1790, %vm1791
      %v1793 = vsel %vm1792, %v1785, %v1789
      %v1794 = vand.u32 2147483647, %v1571
      %vm1795 = vcmp.eq.f32.partialorder %v1794, 8.507059e+37
      %v1796 = vand.u32 %v1571, 2147483648
      %v1797 = vor.u32 1.1754944e-38, %v1796
      %v1798 = vsel %vm1795, %v1797, %v1793
      %v1799 = vmul.f32 1.0, %v1798
      %v1800 = vrcp.pop %v1572
      %v1801 = vmul.f32 %v1572, %v1800
      %v1802 = vsub.f32 1.0, %v1801
      %v1803 = vmul.f32 %v1800, %v1802
      %v1804 = vadd.f32 %v1800, %v1803
      %vm1805 = vweird.f32 %v1572
      %vm1806 = vweird.f32 %v1800
      %vm1807 = vmor %vm1805, %vm1806
      %v1808 = vsel %vm1807, %v1800, %v1804
      %v1809 = vand.u32 2147483647, %v1572
      %vm1810 = vcmp.eq.f32.partialorder %v1809, 8.507059e+37
      %v1811 = vand.u32 %v1572, 2147483648
      %v1812 = vor.u32 1.1754944e-38, %v1811
      %v1813 = vsel %vm1810, %v1812, %v1808
      %v1814 = vmul.f32 1.0, %v1813
      %v1815 = vrcp.pop %v1573
      %v1816 = vmul.f32 %v1573, %v1815
      %v1817 = vsub.f32 1.0, %v1816
      %v1818 = vmul.f32 %v1815, %v1817
      %v1819 = vadd.f32 %v1815, %v1818
      %vm1820 = vweird.f32 %v1573
      %vm1821 = vweird.f32 %v1815
      %vm1822 = vmor %vm1820, %vm1821
      %v1823 = vsel %vm1822, %v1815, %v1819
      %v1824 = vand.u32 2147483647, %v1573
      %vm1825 = vcmp.eq.f32.partialorder %v1824, 8.507059e+37
      %v1826 = vand.u32 %v1573, 2147483648
      %v1827 = vor.u32 1.1754944e-38, %v1826
      %v1828 = vsel %vm1825, %v1827, %v1823
      %v1829 = vmul.f32 1.0, %v1828
      %v1830 = vrcp.pop %v1574
      %v1831 = vmul.f32 %v1574, %v1830
      %v1832 = vsub.f32 1.0, %v1831
      %v1833 = vmul.f32 %v1830, %v1832
      %v1834 = vadd.f32 %v1830, %v1833
      %vm1835 = vweird.f32 %v1574
      %vm1836 = vweird.f32 %v1830
      %vm1837 = vmor %vm1835, %vm1836
      %v1838 = vsel %vm1837, %v1830, %v1834
      %v1839 = vand.u32 2147483647, %v1574
      %vm1840 = vcmp.eq.f32.partialorder %v1839, 8.507059e+37
      %v1841 = vand.u32 %v1574, 2147483648
      %v1842 = vor.u32 1.1754944e-38, %v1841
      %v1843 = vsel %vm1840, %v1842, %v1838
      %v1844 = vmul.f32 1.0, %v1843
      %v1845 = vrcp.pop %v1575
      %v1846 = vmul.f32 %v1575, %v1845
      %v1847 = vsub.f32 1.0, %v1846
      %v1848 = vmul.f32 %v1845, %v1847
      %v1849 = vadd.f32 %v1845, %v1848
      %vm1850 = vweird.f32 %v1575
      %vm1851 = vweird.f32 %v1845
      %vm1852 = vmor %vm1850, %vm1851
      %v1853 = vsel %vm1852, %v1845, %v1849
      %v1854 = vand.u32 2147483647, %v1575
      %vm1855 = vcmp.eq.f32.partialorder %v1854, 8.507059e+37
      %v1856 = vand.u32 %v1575, 2147483648
      %v1857 = vor.u32 1.1754944e-38, %v1856
      %v1858 = vsel %vm1855, %v1857, %v1853
      %v1859 = vmul.f32 1.0, %v1858
      %v1860 = vrcp.pop %v1576
      %v1861 = vmul.f32 %v1576, %v1860
      %v1862 = vsub.f32 1.0, %v1861
      %v1863 = vmul.f32 %v1860, %v1862
      %v1864 = vadd.f32 %v1860, %v1863
      %vm1865 = vweird.f32 %v1576
      %vm1866 = vweird.f32 %v1860
      %vm1867 = vmor %vm1865, %vm1866
      %v1868 = vsel %vm1867, %v1860, %v1864
      %v1869 = vand.u32 2147483647, %v1576
      %vm1870 = vcmp.eq.f32.partialorder %v1869, 8.507059e+37
      %v1871 = vand.u32 %v1576, 2147483648
      %v1872 = vor.u32 1.1754944e-38, %v1871
      %v1873 = vsel %vm1870, %v1872, %v1868
      %v1874 = vmul.f32 1.0, %v1873
      %v1875 = vrcp.pop %v1577
      %v1876 = vmul.f32 %v1577, %v1875
      %v1877 = vsub.f32 1.0, %v1876
      %v1878 = vmul.f32 %v1875, %v1877
      %v1879 = vadd.f32 %v1875, %v1878
      %vm1880 = vweird.f32 %v1577
      %vm1881 = vweird.f32 %v1875
      %vm1882 = vmor %vm1880, %vm1881
      %v1883 = vsel %vm1882, %v1875, %v1879
      %v1884 = vand.u32 2147483647, %v1577
      %vm1885 = vcmp.eq.f32.partialorder %v1884, 8.507059e+37
      %v1886 = vand.u32 %v1577, 2147483648
      %v1887 = vor.u32 1.1754944e-38, %v1886
      %v1888 = vsel %vm1885, %v1887, %v1883
      %v1889 = vmul.f32 1.0, %v1888
      %v1890 = vrcp.pop %v1578
      %v1891 = vmul.f32 %v1578, %v1890
      %v1892 = vsub.f32 1.0, %v1891
      %v1893 = vmul.f32 %v1890, %v1892
      %v1894 = vadd.f32 %v1890, %v1893
      %vm1895 = vweird.f32 %v1578
      %vm1896 = vweird.f32 %v1890
      %vm1897 = vmor %vm1895, %vm1896
      %v1898 = vsel %vm1897, %v1890, %v1894
      %v1899 = vand.u32 2147483647, %v1578
      %vm1900 = vcmp.eq.f32.partialorder %v1899, 8.507059e+37
      %v1901 = vand.u32 %v1578, 2147483648
      %v1902 = vor.u32 1.1754944e-38, %v1901
      %v1903 = vsel %vm1900, %v1902, %v1898
      %v1904 = vmul.f32 1.0, %v1903
      %v1905 = vrcp.pop %v1579
      %v1906 = vmul.f32 %v1579, %v1905
      %v1907 = vsub.f32 1.0, %v1906
      %v1908 = vmul.f32 %v1905, %v1907
      %v1909 = vadd.f32 %v1905, %v1908
      %vm1910 = vweird.f32 %v1579
      %vm1911 = vweird.f32 %v1905
      %vm1912 = vmor %vm1910, %vm1911
      %v1913 = vsel %vm1912, %v1905, %v1909
      %v1914 = vand.u32 2147483647, %v1579
      %vm1915 = vcmp.eq.f32.partialorder %v1914, 8.507059e+37
      %v1916 = vand.u32 %v1579, 2147483648
      %v1917 = vor.u32 1.1754944e-38, %v1916
      %v1918 = vsel %vm1915, %v1917, %v1913
      %v1919 = vmul.f32 1.0, %v1918
      %v1920 = vrcp.pop %v1580
      %v1921 = vmul.f32 %v1580, %v1920
      %v1922 = vsub.f32 1.0, %v1921
      %v1923 = vmul.f32 %v1920, %v1922
      %v1924 = vadd.f32 %v1920, %v1923
      %vm1925 = vweird.f32 %v1580
      %vm1926 = vweird.f32 %v1920
      %vm1927 = vmor %vm1925, %vm1926
      %v1928 = vsel %vm1927, %v1920, %v1924
      %v1929 = vand.u32 2147483647, %v1580
      %vm1930 = vcmp.eq.f32.partialorder %v1929, 8.507059e+37
      %v1931 = vand.u32 %v1580, 2147483648
      %v1932 = vor.u32 1.1754944e-38, %v1931
      %v1933 = vsel %vm1930, %v1932, %v1928
      %v1934 = vmul.f32 1.0, %v1933
      %v1935 = vrcp.pop %v1581
      %v1936 = vmul.f32 %v1581, %v1935
      %v1937 = vsub.f32 1.0, %v1936
      %v1938 = vmul.f32 %v1935, %v1937
      %v1939 = vadd.f32 %v1935, %v1938
      %vm1940 = vweird.f32 %v1581
      %vm1941 = vweird.f32 %v1935
      %vm1942 = vmor %vm1940, %vm1941
      %v1943 = vsel %vm1942, %v1935, %v1939
      %v1944 = vand.u32 2147483647, %v1581
      %vm1945 = vcmp.eq.f32.partialorder %v1944, 8.507059e+37
      %v1946 = vand.u32 %v1581, 2147483648
      %v1947 = vor.u32 1.1754944e-38, %v1946
      %v1948 = vsel %vm1945, %v1947, %v1943
      %v1949 = vmul.f32 1.0, %v1948
      %v1950 = vrcp.pop %v1582
      %v1951 = vmul.f32 %v1582, %v1950
      %v1952 = vsub.f32 1.0, %v1951
      %v1953 = vmul.f32 %v1950, %v1952
      %v1954 = vadd.f32 %v1950, %v1953
      %vm1955 = vweird.f32 %v1582
      %vm1956 = vweird.f32 %v1950
      %vm1957 = vmor %vm1955, %vm1956
      %v1958 = vsel %vm1957, %v1950, %v1954
      %v1959 = vand.u32 2147483647, %v1582
      %vm1960 = vcmp.eq.f32.partialorder %v1959, 8.507059e+37
      %v1961 = vand.u32 %v1582, 2147483648
      %v1962 = vor.u32 1.1754944e-38, %v1961
      %v1963 = vsel %vm1960, %v1962, %v1958
      %v1964 = vmul.f32 1.0, %v1963
      %v1965 = vrcp.pop %v1583
      %v1966 = vmul.f32 %v1583, %v1965
      %v1967 = vsub.f32 1.0, %v1966
      %v1968 = vmul.f32 %v1965, %v1967
      %v1969 = vadd.f32 %v1965, %v1968
      %vm1970 = vweird.f32 %v1583
      %vm1971 = vweird.f32 %v1965
      %vm1972 = vmor %vm1970, %vm1971
      %v1973 = vsel %vm1972, %v1965, %v1969
      %v1974 = vand.u32 2147483647, %v1583
      %vm1975 = vcmp.eq.f32.partialorder %v1974, 8.507059e+37
      %v1976 = vand.u32 %v1583, 2147483648
      %v1977 = vor.u32 1.1754944e-38, %v1976
      %v1978 = vsel %vm1975, %v1977, %v1973
      %v1979 = vmul.f32 1.0, %v1978
      %v1980 = vrcp.pop %v1584
      %v1981 = vmul.f32 %v1584, %v1980
      %v1982 = vsub.f32 1.0, %v1981
      %v1983 = vmul.f32 %v1980, %v1982
      %v1984 = vadd.f32 %v1980, %v1983
      %vm1985 = vweird.f32 %v1584
      %vm1986 = vweird.f32 %v1980
      %vm1987 = vmor %vm1985, %vm1986
      %v1988 = vsel %vm1987, %v1980, %v1984
      %v1989 = vand.u32 2147483647, %v1584
      %vm1990 = vcmp.eq.f32.partialorder %v1989, 8.507059e+37
      %v1991 = vand.u32 %v1584, 2147483648
      %v1992 = vor.u32 1.1754944e-38, %v1991
      %v1993 = vsel %vm1990, %v1992, %v1988
      %v1994 = vmul.f32 1.0, %v1993
      %v1995 = vrcp.pop %v1585
      %v1996 = vmul.f32 %v1585, %v1995
      %v1997 = vsub.f32 1.0, %v1996
      %v1998 = vmul.f32 %v1995, %v1997
      %v1999 = vadd.f32 %v1995, %v1998
      %vm2000 = vweird.f32 %v1585
      %vm2001 = vweird.f32 %v1995
      %vm2002 = vmor %vm2000, %vm2001
      %v2003 = vsel %vm2002, %v1995, %v1999
      %v2004 = vand.u32 2147483647, %v1585
      %vm2005 = vcmp.eq.f32.partialorder %v2004, 8.507059e+37
      %v2006 = vand.u32 %v1585, 2147483648
      %v2007 = vor.u32 1.1754944e-38, %v2006
      %v2008 = vsel %vm2005, %v2007, %v2003
      %v2009 = vmul.f32 1.0, %v2008
      %v2010 = vrcp.pop %v1586
      %v2011 = vmul.f32 %v1586, %v2010
      %v2012 = vsub.f32 1.0, %v2011
      %v2013 = vmul.f32 %v2010, %v2012
      %v2014 = vadd.f32 %v2010, %v2013
      %vm2015 = vweird.f32 %v1586
      %vm2016 = vweird.f32 %v2010
      %vm2017 = vmor %vm2015, %vm2016
      %v2018 = vsel %vm2017, %v2010, %v2014
      %v2019 = vand.u32 2147483647, %v1586
      %vm2020 = vcmp.eq.f32.partialorder %v2019, 8.507059e+37
      %v2021 = vand.u32 %v1586, 2147483648
      %v2022 = vor.u32 1.1754944e-38, %v2021
      %v2023 = vsel %vm2020, %v2022, %v2018
      %v2024 = vmul.f32 1.0, %v2023
      %v2025 = vrcp.pop %v1587
      %v2026 = vmul.f32 %v1587, %v2025
      %v2027 = vsub.f32 1.0, %v2026
      %v2028 = vmul.f32 %v2025, %v2027
      %v2029 = vadd.f32 %v2025, %v2028
      %vm2030 = vweird.f32 %v1587
      %vm2031 = vweird.f32 %v2025
      %vm2032 = vmor %vm2030, %vm2031
      %v2033 = vsel %vm2032, %v2025, %v2029
      %v2034 = vand.u32 2147483647, %v1587
      %vm2035 = vcmp.eq.f32.partialorder %v2034, 8.507059e+37
      %v2036 = vand.u32 %v1587, 2147483648
      %v2037 = vor.u32 1.1754944e-38, %v2036
      %v2038 = vsel %vm2035, %v2037, %v2033
      %v2039 = vmul.f32 1.0, %v2038
      %v2040 = vrcp.pop %v1588
      %v2041 = vmul.f32 %v1588, %v2040
      %v2042 = vsub.f32 1.0, %v2041
      %v2043 = vmul.f32 %v2040, %v2042
      %v2044 = vadd.f32 %v2040, %v2043
      %vm2045 = vweird.f32 %v1588
      %vm2046 = vweird.f32 %v2040
      %vm2047 = vmor %vm2045, %vm2046
      %v2048 = vsel %vm2047, %v2040, %v2044
      %v2049 = vand.u32 2147483647, %v1588
      %vm2050 = vcmp.eq.f32.partialorder %v2049, 8.507059e+37
      %v2051 = vand.u32 %v1588, 2147483648
      %v2052 = vor.u32 1.1754944e-38, %v2051
      %v2053 = vsel %vm2050, %v2052, %v2048
      %v2054 = vmul.f32 1.0, %v2053
      %v2055 = vrcp.pop %v1589
      %v2056 = vmul.f32 %v1589, %v2055
      %v2057 = vsub.f32 1.0, %v2056
      %v2058 = vmul.f32 %v2055, %v2057
      %v2059 = vadd.f32 %v2055, %v2058
      %vm2060 = vweird.f32 %v1589
      %vm2061 = vweird.f32 %v2055
      %vm2062 = vmor %vm2060, %vm2061
      %v2063 = vsel %vm2062, %v2055, %v2059
      %v2064 = vand.u32 2147483647, %v1589
      %vm2065 = vcmp.eq.f32.partialorder %v2064, 8.507059e+37
      %v2066 = vand.u32 %v1589, 2147483648
      %v2067 = vor.u32 1.1754944e-38, %v2066
      %v2068 = vsel %vm2065, %v2067, %v2063
      %v2069 = vmul.f32 1.0, %v2068
      %vm2070 = vcmask 7168
      %2071 = vst.msk [vmem:[%s177] sm:$0xff] %vm2070, %v1604
      %2072 = vst.msk [vmem:[%s177 + $0x8] sm:$0xff] %vm2070, %v1619
      %2073 = vst.msk [vmem:[%s177 + $0x10] sm:$0xff] %vm2070, %v1634
      %2074 = vst.msk [vmem:[%s177 + $0x18] sm:$0xff] %vm2070, %v1649
      %2075 = vst.msk [vmem:[%s177 + $0x20] sm:$0xff] %vm2070, %v1664
      %2076 = vst.msk [vmem:[%s177 + $0x28] sm:$0xff] %vm2070, %v1679
      %2077 = vst.msk [vmem:[%s177 + $0x30] sm:$0xff] %vm2070, %v1694
      %2078 = vst.msk [vmem:[%s177 + $0x38] sm:$0xff] %vm2070, %v1709
      %2079 = vst.msk [vmem:[%s177 + $0x40] sm:$0xff] %vm2070, %v1724
      %2080 = vst.msk [vmem:[%s177 + $0x48] sm:$0xff] %vm2070, %v1739
      %2081 = vst.msk [vmem:[%s177 + $0x50] sm:$0xff] %vm2070, %v1754
      %2082 = vst.msk [vmem:[%s177 + $0x58] sm:$0xff] %vm2070, %v1769
      %2083 = vst.msk [vmem:[%s177 + $0x60] sm:$0xff] %vm2070, %v1784
      %2084 = vst.msk [vmem:[%s177 + $0x68] sm:$0xff] %vm2070, %v1799
      %2085 = vst.msk [vmem:[%s177 + $0x70] sm:$0xff] %vm2070, %v1814
      %2086 = vst.msk [vmem:[%s177 + $0x78] sm:$0xff] %vm2070, %v1829
      %2087 = vst.msk [vmem:[%s177 + $0x80] sm:$0xff] %vm2070, %v1844
      %2088 = vst.msk [vmem:[%s177 + $0x88] sm:$0xff] %vm2070, %v1859
      %2089 = vst.msk [vmem:[%s177 + $0x90] sm:$0xff] %vm2070, %v1874
      %2090 = vst.msk [vmem:[%s177 + $0x98] sm:$0xff] %vm2070, %v1889
      %2091 = vst.msk [vmem:[%s177 + $0xa0] sm:$0xff] %vm2070, %v1904
      %2092 = vst.msk [vmem:[%s177 + $0xa8] sm:$0xff] %vm2070, %v1919
      %2093 = vst.msk [vmem:[%s177 + $0xb0] sm:$0xff] %vm2070, %v1934
      %2094 = vst.msk [vmem:[%s177 + $0xb8] sm:$0xff] %vm2070, %v1949
      %2095 = vst.msk [vmem:[%s177 + $0xc0] sm:$0xff] %vm2070, %v1964
      %2096 = vst.msk [vmem:[%s177 + $0xc8] sm:$0xff] %vm2070, %v1979
      %2097 = vst.msk [vmem:[%s177 + $0xd0] sm:$0xff] %vm2070, %v1994
      %2098 = vst.msk [vmem:[%s177 + $0xd8] sm:$0xff] %vm2070, %v2009
      %2099 = vst.msk [vmem:[%s177 + $0xe0] sm:$0xff] %vm2070, %v2024
      %2100 = vst.msk [vmem:[%s177 + $0xe8] sm:$0xff] %vm2070, %v2039
      %2101 = vst.msk [vmem:[%s177 + $0xf0] sm:$0xff] %vm2070, %v2054
      %2102 = vst.msk [vmem:[%s177 + $0xf8] sm:$0xff] %vm2070, %v2069
      %s2103 = smul.u32 32, %s16
      %p2104 = scmp.lt.s32.totalorder %s2103, 63
      %s2105 = scalar_select %p2104, %s2103, 63
      %s2106 = smul.addr %s2105, 8
      %s2107 = scalar_lea.vmem %s3, %s2106
      // Predicated region
      $region33: #{depth_star_forward.27} parent=31 // pred_check
        %p2108 = pneg %p102
      $region34: #{depth_star_forward.27} parent=31 // pred_check_branch
        %2110 = sbr.rel (%p2108) target = $region36
      $region35: #{depth_star_forward.27} parent=31 // pred_region
        %s2111 = smul.u32 32, %s16
      $region36: #{depth_star_forward.27} parent=31 // pred_fallthru
        _
    $region32: #{depth_star_forward.27} parent=5 // pred_fallthru
      _
    %p2112 = scmp.le.s32.totalorder 2, %s11
    // Predicated region
    $region37: #{depth_star_forward.27} parent=5 // pred_check
      %p2113 = pneg %p2112
    $region38: #{depth_star_forward.27} parent=5 // pred_check_branch
      %2115 = sbr.rel (%p2113) target = $region40
    $region39: #{depth_star_forward.27} parent=5 // pred_region
      %s2116 = ssub.s32 %s11, 2
      // Predicated region
      $region41: #{depth_star_forward.27} parent=39 // pred_check
        %p2117 = pneg %p108
      $region42: #{depth_star_forward.27} parent=39 // pred_check_branch
        %2119 = sbr.rel (%p2117) target = $region44
      $region43: #{depth_star_forward.27} parent=39 // pred_region
        %s2120 = smul.u32 32, %s17
        %p2121 = scmp.lt.s32.totalorder %s2120, 63
        %s2122 = scalar_select %p2121, %s2120, 63
        %s2123 = smul.addr %s2122, 8
        %s2124 = scalar_lea.vmem %s3, %s2123
      $region44: #{depth_star_forward.27} parent=39 // pred_fallthru
        _
    $region40: #{depth_star_forward.27} parent=5 // pred_fallthru
      _
  $region6: #{depth_star_forward.27} parent=0 // loop_footer
    %s15 = sadd.s32 1, %s11
  $region7: #{depth_star_forward.27} parent=0 // loop_footer_branch
    %10 = sbr.rel target = $region3
  $region8: #{depth_star_forward.27} parent=0 // loop_exit
    _

</llo_original>
